<compile_context>
chip_gen: v6e
topology: v6e:2x2x1
jax: 0.10.0
libtpu: 0.0.40
codegen_flags: <defaults>
</compile_context>

<pallas_src>
import math

import jax
import jax.numpy as jnp
from jax.experimental import pallas as pl
from jax.experimental.pallas import tpu as pltpu

# ----------------------------- problem sizes (small, consistent with the module) -------
B = 2            # batch
S = 8            # token sequence length
L = S + 1        # +1 for the CLS token
BL = B * L       # flattened rows
BS = B * S       # flattened tokens
D = 40           # d_model (divisible by n_heads = 5)
H = 5            # n_heads
DK = D // H      # d_k per head
FF = 128         # ff_units
N_LAYERS = 4     # n_layers
N_OUT = 1        # n_outputs (binary sentiment logit)
OUT_PAD = 128    # lane-dense padded classifier output width
VOCAB = 12       # small synthetic vocab, token 0 == PAD
MAX_LEN = 300
EPS = 1e-5       # nn.LayerNorm default eps
NEG = -1e9
SQRT_D = math.sqrt(D)
INV_SQRT_DK = 1.0 / math.sqrt(DK)


def _layernorm(x, g, b):
    mu = jnp.mean(x, axis=-1, keepdims=True)
    var = jnp.mean((x - mu) ** 2, axis=-1, keepdims=True)
    return (x - mu) * jax.lax.rsqrt(var + EPS) * g + b


# ----------------------------- fused Pallas kernel --------------------------------------
def transf_classifier_kernel(tokc_ref, tokr_ref, emb_ref, cls_ref, pe_ref,
                             wqkv_ref, bqkv_ref, wo_ref, bo_ref,
                             ln1g_ref, ln1b_ref, ln2g_ref, ln2b_ref,
                             w1_ref, b1_ref, w2_ref, b2_ref,
                             ng_ref, nb_ref, mw_ref, mb_ref,
                             out_ref):
    f32 = jnp.float32

    # ---------------- preprocess: embedding (one-hot matmul), CLS, scale, PE -----------
    tok_col = tokc_ref[...]                                            # (BS, 1)  int32
    tok_row = tokr_ref[...]                                            # (1, BS)  int32
    vocab_ids = jax.lax.broadcasted_iota(jnp.int32, (BS, VOCAB), 1)    # (BS, VOCAB)
    onehot = (vocab_ids == tok_col).astype(f32)                        # (BS, VOCAB)
    emb2 = jnp.dot(onehot, emb_ref[...], preferred_element_type=f32)   # (BS, D)

    cls = cls_ref[...]                                                 # (1, D)
    rows = []
    for b in range(B):
        rows.append(jnp.concatenate([cls, emb2[b * S:(b + 1) * S, :]], axis=0))  # (L, D)
    x = jnp.concatenate(rows, axis=0)                                  # (BL, D)
    pe = jnp.concatenate([pe_ref[...]] * B, axis=0)                    # (BL, D)
    x = x * SQRT_D + pe

    # ---------------- additive attention mask (block-diag over batch + key padding) ----
    padrow = (tok_row > 0).astype(f32)                                 # (1, BS)
    mask_rows = []
    for b in range(B):
        km_b = jnp.concatenate(
            [jnp.ones((1, 1), f32), padrow[:, b * S:(b + 1) * S]], axis=1)  # (1, L)
        negkey_b = (1.0 - km_b) * NEG                                  # (1, L)
        blocks = []
        for b2 in range(B):
            if b2 == b:
                blocks.append(jnp.broadcast_to(negkey_b, (L, L)))
            else:
                blocks.append(jnp.full((L, L), NEG, f32))
        mask_rows.append(jnp.concatenate(blocks, axis=1))              # (L, BL)
    negmask = jnp.concatenate(mask_rows, axis=0)                       # (BL, BL)

    # ---------------- N_LAYERS pre-LN encoder layers (fully unrolled) ------------------
    for l in range(N_LAYERS):
        # --- multi-head self-attention sublayer ---
        nq = _layernorm(x, ln1g_ref[l], ln1b_ref[l])                   # (BL, D)
        qkv = jnp.dot(nq, wqkv_ref[l], preferred_element_type=f32) + bqkv_ref[l]  # (BL, 3D)
        ctx_heads = []
        for h in range(H):
            qh = qkv[:, h * DK:(h + 1) * DK]                           # (BL, DK)
            kh = qkv[:, D + h * DK: D + (h + 1) * DK]                  # (BL, DK)
            vh = qkv[:, 2 * D + h * DK: 2 * D + (h + 1) * DK]          # (BL, DK)
            s = jax.lax.dot_general(qh, kh, (((1,), (1,)), ((), ())),
                                    preferred_element_type=f32)        # (BL, BL)
            s = s * INV_SQRT_DK + negmask
            s = s - jnp.max(s, axis=-1, keepdims=True)
            e = jnp.exp(s)
            p = e * pl.reciprocal(jnp.sum(e, axis=-1, keepdims=True), approx=True)
            ctx_heads.append(jnp.dot(p, vh, preferred_element_type=f32))  # (BL, DK)
        ctx = jnp.concatenate(ctx_heads, axis=1)                       # (BL, D)
        x = x + jnp.dot(ctx, wo_ref[l], preferred_element_type=f32) + bo_ref[l]

        # --- feed-forward sublayer ---
        na = _layernorm(x, ln2g_ref[l], ln2b_ref[l])
        h1 = jnp.maximum(jnp.dot(na, w1_ref[l], preferred_element_type=f32) + b1_ref[l], 0.0)
        x = x + jnp.dot(h1, w2_ref[l], preferred_element_type=f32) + b2_ref[l]

    # ---------------- head: final LayerNorm on CLS rows + classifier -------------------
    cls_rows = jnp.concatenate([x[b * L:b * L + 1, :] for b in range(B)], axis=0)  # (B, D)
    nrm = _layernorm(cls_rows, ng_ref[...], nb_ref[...])
    out_ref[...] = jnp.dot(nrm, mw_ref[...], preferred_element_type=f32) + mb_ref[...]


def _full_spec(shape):
    return pl.BlockSpec(shape, lambda i, _n=len(shape): (0,) * _n)


def forward_pallas(X, params):
    p = params
    tok_col = X.reshape(BS, 1).astype(jnp.int32)
    tok_row = X.reshape(1, BS).astype(jnp.int32)
    inputs = (tok_col, tok_row, p["emb"], p["cls"], p["pe"],
              p["Wqkv"], p["bqkv"], p["Wo"], p["bo"],
              p["ln1_g"], p["ln1_b"], p["ln2_g"], p["ln2_b"],
              p["W1"], p["b1"], p["W2"], p["b2"],
              p["norm_g"], p["norm_b"], p["mlp_w_pad"], p["mlp_b_pad"])
    logits_pad = pl.pallas_call(
        transf_classifier_kernel,
        out_shape=jax.ShapeDtypeStruct((B, OUT_PAD), jnp.float32),
        grid=(1,),
        in_specs=[_full_spec(a.shape) for a in inputs],
        out_specs=pl.BlockSpec((B, OUT_PAD), lambda i: (0, 0)),
        compiler_params=pltpu.CompilerParams(dimension_semantics=("arbitrary",)),
    )(*inputs)
    return logits_pad[:, :N_OUT]                                       # (B, N_OUT)


forward_pallas = jax.jit(forward_pallas)


# ----------------------------- pure-JAX reference (sanity check) ------------------------
def forward_ref(X, params):
    with jax.default_matmul_precision("float32"):
        p = params
        src = p["emb"][X]                                              # (B, S, D)
        cls = jnp.broadcast_to(p["cls"][None], (B, 1, D))
        x = jnp.concatenate([cls, src], axis=1) * SQRT_D + p["pe"][None]
        mask = jnp.concatenate(
            [jnp.ones((B, 1), jnp.float32), (X > 0).astype(jnp.float32)], axis=1)  # (B, L)
        neg = (1.0 - mask)[:, None, None, :] * NEG
        split = lambda t: t.reshape(B, L, H, DK).transpose(0, 2, 1, 3)
        for l in range(N_LAYERS):
            nq = _layernorm(x, p["ln1_g"][l], p["ln1_b"][l])
            qkv = nq @ p["Wqkv"][l] + p["bqkv"][l]
            q, k, v = qkv[..., :D], qkv[..., D:2 * D], qkv[..., 2 * D:]
            s = jnp.einsum("bhqd,bhkd->bhqk", split(q), split(k)) / math.sqrt(DK) + neg
            a = jax.nn.softmax(s, axis=-1)
            ctx = jnp.einsum("bhqk,bhkd->bhqd", a, split(v)).transpose(0, 2, 1, 3)
            x = x + ctx.reshape(B, L, D) @ p["Wo"][l] + p["bo"][l]
            na = _layernorm(x, p["ln2_g"][l], p["ln2_b"][l])
            x = x + jnp.maximum(na @ p["W1"][l] + p["b1"][l], 0.0) @ p["W2"][l] + p["b2"][l]
        states = _layernorm(x, p["norm_g"], p["norm_b"])
        return states[:, 0] @ p["mlp_w"] + p["mlp_b"]


# ----------------------------- deterministic parameter init -----------------------------
def positional_encoding_table():
    pos = jnp.arange(MAX_LEN, dtype=jnp.float32)[:, None]
    ang = jnp.exp(jnp.arange(0, D, 2, dtype=jnp.float32) * (-math.log(10000.0) / D))
    pe = jnp.zeros((MAX_LEN, D), jnp.float32)
    pe = pe.at[:, 0::2].set(jnp.sin(pos * ang))
    pe = pe.at[:, 1::2].set(jnp.cos(pos * ang))
    return pe


def init_params(key):
    def nrm(k, shape, scale=0.05):
        return scale * jax.random.normal(k, shape, dtype=jnp.float32)

    k = jax.random.split(key, 8)
    params = {
        "emb": nrm(k[0], (VOCAB, D), scale=0.1),        # pretrained-style embedding table
        "cls": jnp.zeros((1, D), jnp.float32),          # nn.Parameter(torch.zeros(1,1,d_model))
        "pe": positional_encoding_table()[:L],          # (L, D)
        # per-layer weights, stacked along a leading N_LAYERS axis (kernel layout)
        "Wqkv": nrm(k[1], (N_LAYERS, D, 3 * D)),
        "bqkv": nrm(k[2], (N_LAYERS, 1, 3 * D)),
        "Wo": nrm(k[3], (N_LAYERS, D, D)),
        "bo": nrm(k[4], (N_LAYERS, 1, D)),
        "ln1_g": jnp.ones((N_LAYERS, 1, D), jnp.float32),
        "ln1_b": jnp.zeros((N_LAYERS, 1, D), jnp.float32),
        "ln2_g": jnp.ones((N_LAYERS, 1, D), jnp.float32),
        "ln2_b": jnp.zeros((N_LAYERS, 1, D), jnp.float32),
        "W1": nrm(k[5], (N_LAYERS, D, FF)),
        "b1": jnp.zeros((N_LAYERS, 1, FF), jnp.float32),
        "W2": nrm(k[6], (N_LAYERS, FF, D)),
        "b2": jnp.zeros((N_LAYERS, 1, D), jnp.float32),
        # final encoder LayerNorm + classifier head
        "norm_g": jnp.ones((1, D), jnp.float32),
        "norm_b": jnp.zeros((1, D), jnp.float32),
        "mlp_w": nrm(k[7], (D, N_OUT)),
        "mlp_b": jnp.zeros((1, N_OUT), jnp.float32),
    }
    # lane-dense (128-wide, zero-padded) classifier weights -> unmasked output store
    params["mlp_w_pad"] = jnp.zeros((D, OUT_PAD), jnp.float32).at[:, :N_OUT].set(params["mlp_w"])
    params["mlp_b_pad"] = jnp.zeros((1, OUT_PAD), jnp.float32).at[:, :N_OUT].set(params["mlp_b"])
    return params


# ----------------------------- main ------------------------------------------------------
if __name__ == "__main__":
    key = jax.random.PRNGKey(0)
    pkey, xkey = jax.random.split(key)
    params = init_params(pkey)

    X = jax.random.randint(xkey, (B, S), 0, VOCAB, dtype=jnp.int32)
    X = X.at[0, -2:].set(0)   # add padding tokens to exercise the source mask

    out = jax.block_until_ready(forward_pallas(X, params))
    ref = jax.block_until_ready(forward_ref(X, params))

    assert out.shape == (B, N_OUT), out.shape
    assert bool(jnp.all(jnp.isfinite(out)))
    assert bool(jnp.allclose(out, ref, rtol=2e-3, atol=2e-3)), (out, ref)

    print("KERNEL_OK")
</pallas_src>

<mosaic_0001>
module attributes {stable_mosaic.version = 11 : i64} {
  func.func @transf_classifier_kernel(%arg0: i32, %arg1: memref<16x1xi32, #tpu.memory_space<vmem>>, %arg2: memref<1x16xi32, #tpu.memory_space<vmem>>, %arg3: memref<12x40xf32, #tpu.memory_space<vmem>>, %arg4: memref<1x40xf32, #tpu.memory_space<vmem>>, %arg5: memref<9x40xf32, #tpu.memory_space<vmem>>, %arg6: memref<4x40x120xf32, #tpu.memory_space<vmem>>, %arg7: memref<4x1x120xf32, #tpu.memory_space<vmem>>, %arg8: memref<4x40x40xf32, #tpu.memory_space<vmem>>, %arg9: memref<4x1x40xf32, #tpu.memory_space<vmem>>, %arg10: memref<4x1x40xf32, #tpu.memory_space<vmem>>, %arg11: memref<4x1x40xf32, #tpu.memory_space<vmem>>, %arg12: memref<4x1x40xf32, #tpu.memory_space<vmem>>, %arg13: memref<4x1x40xf32, #tpu.memory_space<vmem>>, %arg14: memref<4x40x128xf32, #tpu.memory_space<vmem>>, %arg15: memref<4x1x128xf32, #tpu.memory_space<vmem>>, %arg16: memref<4x128x40xf32, #tpu.memory_space<vmem>>, %arg17: memref<4x1x40xf32, #tpu.memory_space<vmem>>, %arg18: memref<1x40xf32, #tpu.memory_space<vmem>>, %arg19: memref<1x40xf32, #tpu.memory_space<vmem>>, %arg20: memref<40x128xf32, #tpu.memory_space<vmem>>, %arg21: memref<1x128xf32, #tpu.memory_space<vmem>>, %arg22: memref<2x128xf32, #tpu.memory_space<vmem>>) attributes {dimension_semantics = [#tpu.dimension_semantics<arbitrary>], iteration_bounds = array<i64: 1>, scalar_prefetch = 0 : i64, scratch_operands = 0 : i64, tpu.core_type = #tpu.core_type<tc>, window_params = [{pipeline_mode = #tpu.pipeline_mode<synchronous>, transform_indices = @transform_0, window_bounds = array<i64: 16, 1>}, {pipeline_mode = #tpu.pipeline_mode<synchronous>, transform_indices = @transform_1, window_bounds = array<i64: 1, 16>}, {pipeline_mode = #tpu.pipeline_mode<synchronous>, transform_indices = @transform_2, window_bounds = array<i64: 12, 40>}, {pipeline_mode = #tpu.pipeline_mode<synchronous>, transform_indices = @transform_3, window_bounds = array<i64: 1, 40>}, {pipeline_mode = #tpu.pipeline_mode<synchronous>, transform_indices = @transform_4, window_bounds = array<i64: 9, 40>}, {pipeline_mode = #tpu.pipeline_mode<synchronous>, transform_indices = @transform_5, window_bounds = array<i64: 4, 40, 120>}, {pipeline_mode = #tpu.pipeline_mode<synchronous>, transform_indices = @transform_6, window_bounds = array<i64: 4, 1, 120>}, {pipeline_mode = #tpu.pipeline_mode<synchronous>, transform_indices = @transform_7, window_bounds = array<i64: 4, 40, 40>}, {pipeline_mode = #tpu.pipeline_mode<synchronous>, transform_indices = @transform_8, window_bounds = array<i64: 4, 1, 40>}, {pipeline_mode = #tpu.pipeline_mode<synchronous>, transform_indices = @transform_9, window_bounds = array<i64: 4, 1, 40>}, {pipeline_mode = #tpu.pipeline_mode<synchronous>, transform_indices = @transform_10, window_bounds = array<i64: 4, 1, 40>}, {pipeline_mode = #tpu.pipeline_mode<synchronous>, transform_indices = @transform_11, window_bounds = array<i64: 4, 1, 40>}, {pipeline_mode = #tpu.pipeline_mode<synchronous>, transform_indices = @transform_12, window_bounds = array<i64: 4, 1, 40>}, {pipeline_mode = #tpu.pipeline_mode<synchronous>, transform_indices = @transform_13, window_bounds = array<i64: 4, 40, 128>}, {pipeline_mode = #tpu.pipeline_mode<synchronous>, transform_indices = @transform_14, window_bounds = array<i64: 4, 1, 128>}, {pipeline_mode = #tpu.pipeline_mode<synchronous>, transform_indices = @transform_15, window_bounds = array<i64: 4, 128, 40>}, {pipeline_mode = #tpu.pipeline_mode<synchronous>, transform_indices = @transform_16, window_bounds = array<i64: 4, 1, 40>}, {pipeline_mode = #tpu.pipeline_mode<synchronous>, transform_indices = @transform_17, window_bounds = array<i64: 1, 40>}, {pipeline_mode = #tpu.pipeline_mode<synchronous>, transform_indices = @transform_18, window_bounds = array<i64: 1, 40>}, {pipeline_mode = #tpu.pipeline_mode<synchronous>, transform_indices = @transform_19, window_bounds = array<i64: 40, 128>}, {pipeline_mode = #tpu.pipeline_mode<synchronous>, transform_indices = @transform_20, window_bounds = array<i64: 1, 128>}, {pipeline_mode = #tpu.pipeline_mode<synchronous>, transform_indices = @transform_21, window_bounds = array<i64: 2, 128>}]} {
    %c0 = arith.constant 0 : index
    %c0_0 = arith.constant 0 : index
    %0 = vector.load %arg1[%c0, %c0_0] : memref<16x1xi32, #tpu.memory_space<vmem>>, vector<16x1xi32>
    %c0_1 = arith.constant 0 : index
    %c0_2 = arith.constant 0 : index
    %1 = vector.load %arg2[%c0_1, %c0_2] : memref<1x16xi32, #tpu.memory_space<vmem>>, vector<1x16xi32>
    %2 = tpu.iota {dimensions = array<i32: 1>} : vector<16x12xi32>
    %3 = vector.broadcast %0 : vector<16x1xi32> to vector<16x12xi32>
    %4 = arith.cmpi eq, %2, %3 : vector<16x12xi32>
    %5 = arith.extui %4 : vector<16x12xi1> to vector<16x12xi32>
    %6 = arith.sitofp %5 : vector<16x12xi32> to vector<16x12xf32>
    %c0_3 = arith.constant 0 : index
    %c0_4 = arith.constant 0 : index
    %7 = vector.load %arg3[%c0_3, %c0_4] : memref<12x40xf32, #tpu.memory_space<vmem>>, vector<12x40xf32>
    %cst = arith.constant dense<0.000000e+00> : vector<16x40xf32>
    %8 = tpu.matmul %6, %7, %cst {dimension_numbers = #tpu.dot_dimension_numbers<[1], [0], [0], [1], [0, 0, 1, 1], [], []>} : vector<16x12xf32>, vector<12x40xf32>, vector<16x40xf32> -> vector<16x40xf32>
    %c0_5 = arith.constant 0 : index
    %c0_6 = arith.constant 0 : index
    %9 = vector.load %arg4[%c0_5, %c0_6] : memref<1x40xf32, #tpu.memory_space<vmem>>, vector<1x40xf32>
    %10 = vector.extract_strided_slice %8 {offsets = [0, 0], sizes = [8, 40], strides = [1, 1]} : vector<16x40xf32> to vector<8x40xf32>
    %11 = tpu.concatenate %9, %10 in 0 : vector<1x40xf32>, vector<8x40xf32> -> vector<9x40xf32>
    %12 = vector.extract_strided_slice %8 {offsets = [8, 0], sizes = [8, 40], strides = [1, 1]} : vector<16x40xf32> to vector<8x40xf32>
    %13 = tpu.concatenate %9, %12 in 0 : vector<1x40xf32>, vector<8x40xf32> -> vector<9x40xf32>
    %14 = tpu.concatenate %11, %13 in 0 : vector<9x40xf32>, vector<9x40xf32> -> vector<18x40xf32>
    %c0_7 = arith.constant 0 : index
    %c0_8 = arith.constant 0 : index
    %15 = vector.load %arg5[%c0_7, %c0_8] : memref<9x40xf32, #tpu.memory_space<vmem>>, vector<9x40xf32>
    %16 = tpu.concatenate %15, %15 in 0 : vector<9x40xf32>, vector<9x40xf32> -> vector<18x40xf32>
    %cst_9 = arith.constant 6.32455539 : f32
    %17 = vector.broadcast %cst_9 : f32 to vector<18x40xf32>
    %18 = arith.mulf %14, %17 : vector<18x40xf32>
    %19 = arith.addf %18, %16 : vector<18x40xf32>
    %c0_i32 = arith.constant 0 : i32
    %20 = vector.broadcast %c0_i32 : i32 to vector<1x16xi32>
    %21 = arith.cmpi sgt, %1, %20 : vector<1x16xi32>
    %22 = arith.extui %21 : vector<1x16xi1> to vector<1x16xi32>
    %23 = arith.sitofp %22 : vector<1x16xi32> to vector<1x16xf32>
    %cst_10 = arith.constant 1.000000e+00 : f32
    %24 = vector.broadcast %cst_10 : f32 to vector<1x1xf32>
    %25 = vector.extract_strided_slice %23 {offsets = [0, 0], sizes = [1, 8], strides = [1, 1]} : vector<1x16xf32> to vector<1x8xf32>
    %26 = tpu.concatenate %24, %25 in 1 : vector<1x1xf32>, vector<1x8xf32> -> vector<1x9xf32>
    %cst_11 = arith.constant 1.000000e+00 : f32
    %27 = vector.broadcast %cst_11 : f32 to vector<1x9xf32>
    %28 = arith.subf %27, %26 : vector<1x9xf32>
    %cst_12 = arith.constant -1.000000e+09 : f32
    %29 = vector.broadcast %cst_12 : f32 to vector<1x9xf32>
    %30 = arith.mulf %28, %29 : vector<1x9xf32>
    %31 = vector.shape_cast %30 : vector<1x9xf32> to vector<1x9xf32>
    %32 = vector.broadcast %31 : vector<1x9xf32> to vector<9x9xf32>
    %cst_13 = arith.constant -1.000000e+09 : f32
    %33 = vector.broadcast %cst_13 : f32 to vector<9x9xf32>
    %34 = tpu.concatenate %32, %33 in 1 : vector<9x9xf32>, vector<9x9xf32> -> vector<9x18xf32>
    %cst_14 = arith.constant 1.000000e+00 : f32
    %35 = vector.broadcast %cst_14 : f32 to vector<1x1xf32>
    %36 = vector.extract_strided_slice %23 {offsets = [0, 8], sizes = [1, 8], strides = [1, 1]} : vector<1x16xf32> to vector<1x8xf32>
    %37 = tpu.concatenate %35, %36 in 1 : vector<1x1xf32>, vector<1x8xf32> -> vector<1x9xf32>
    %cst_15 = arith.constant 1.000000e+00 : f32
    %38 = vector.broadcast %cst_15 : f32 to vector<1x9xf32>
    %39 = arith.subf %38, %37 : vector<1x9xf32>
    %cst_16 = arith.constant -1.000000e+09 : f32
    %40 = vector.broadcast %cst_16 : f32 to vector<1x9xf32>
    %41 = arith.mulf %39, %40 : vector<1x9xf32>
    %cst_17 = arith.constant -1.000000e+09 : f32
    %42 = vector.broadcast %cst_17 : f32 to vector<9x9xf32>
    %43 = vector.shape_cast %41 : vector<1x9xf32> to vector<1x9xf32>
    %44 = vector.broadcast %43 : vector<1x9xf32> to vector<9x9xf32>
    %45 = tpu.concatenate %42, %44 in 1 : vector<9x9xf32>, vector<9x9xf32> -> vector<9x18xf32>
    %46 = tpu.concatenate %34, %45 in 0 : vector<9x18xf32>, vector<9x18xf32> -> vector<18x18xf32>
    %c0_18 = arith.constant 0 : index
    %c0_19 = arith.constant 0 : index
    %c0_20 = arith.constant 0 : index
    %47 = vector.load %arg10[%c0_18, %c0_19, %c0_20] : memref<4x1x40xf32, #tpu.memory_space<vmem>>, vector<1x1x40xf32>
    %48 = vector.shape_cast %47 : vector<1x1x40xf32> to vector<1x40xf32>
    %c0_21 = arith.constant 0 : index
    %c0_22 = arith.constant 0 : index
    %c0_23 = arith.constant 0 : index
    %49 = vector.load %arg11[%c0_21, %c0_22, %c0_23] : memref<4x1x40xf32, #tpu.memory_space<vmem>>, vector<1x1x40xf32>
    %50 = vector.shape_cast %49 : vector<1x1x40xf32> to vector<1x40xf32>
    %cst_24 = arith.constant dense<0.000000e+00> : vector<18xf32>
    %51 = vector.multi_reduction <add>, %19, %cst_24 [1] : vector<18x40xf32> to vector<18xf32>
    %52 = vector.shape_cast %51 : vector<18xf32> to vector<18x1xf32>
    %cst_25 = arith.constant 4.000000e+01 : f32
    %53 = vector.broadcast %cst_25 : f32 to vector<18x1xf32>
    %54 = arith.divf %52, %53 : vector<18x1xf32>
    %55 = vector.broadcast %54 : vector<18x1xf32> to vector<18x40xf32>
    %56 = arith.subf %19, %55 : vector<18x40xf32>
    %57 = arith.mulf %56, %56 : vector<18x40xf32>
    %cst_26 = arith.constant dense<0.000000e+00> : vector<18xf32>
    %58 = vector.multi_reduction <add>, %57, %cst_26 [1] : vector<18x40xf32> to vector<18xf32>
    %59 = vector.shape_cast %58 : vector<18xf32> to vector<18x1xf32>
    %cst_27 = arith.constant 4.000000e+01 : f32
    %60 = vector.broadcast %cst_27 : f32 to vector<18x1xf32>
    %61 = arith.divf %59, %60 : vector<18x1xf32>
    %62 = vector.broadcast %54 : vector<18x1xf32> to vector<18x40xf32>
    %63 = arith.subf %19, %62 : vector<18x40xf32>
    %cst_28 = arith.constant 9.99999974E-6 : f32
    %64 = vector.broadcast %cst_28 : f32 to vector<18x1xf32>
    %65 = arith.addf %61, %64 : vector<18x1xf32>
    %66 = math.rsqrt %65 : vector<18x1xf32>
    %67 = vector.broadcast %66 : vector<18x1xf32> to vector<18x40xf32>
    %68 = arith.mulf %63, %67 : vector<18x40xf32>
    %69 = vector.broadcast %48 : vector<1x40xf32> to vector<18x40xf32>
    %70 = arith.mulf %68, %69 : vector<18x40xf32>
    %71 = vector.broadcast %50 : vector<1x40xf32> to vector<18x40xf32>
    %72 = arith.addf %70, %71 : vector<18x40xf32>
    %c0_29 = arith.constant 0 : index
    %c0_30 = arith.constant 0 : index
    %c0_31 = arith.constant 0 : index
    %73 = vector.load %arg6[%c0_29, %c0_30, %c0_31] : memref<4x40x120xf32, #tpu.memory_space<vmem>>, vector<1x40x120xf32>
    %74 = vector.shape_cast %73 : vector<1x40x120xf32> to vector<40x120xf32>
    %cst_32 = arith.constant dense<0.000000e+00> : vector<18x120xf32>
    %75 = tpu.matmul %72, %74, %cst_32 {dimension_numbers = #tpu.dot_dimension_numbers<[1], [0], [0], [1], [0, 0, 1, 1], [], []>} : vector<18x40xf32>, vector<40x120xf32>, vector<18x120xf32> -> vector<18x120xf32>
    %c0_33 = arith.constant 0 : index
    %c0_34 = arith.constant 0 : index
    %c0_35 = arith.constant 0 : index
    %76 = vector.load %arg7[%c0_33, %c0_34, %c0_35] : memref<4x1x120xf32, #tpu.memory_space<vmem>>, vector<1x1x120xf32>
    %77 = vector.shape_cast %76 : vector<1x1x120xf32> to vector<1x120xf32>
    %78 = vector.broadcast %77 : vector<1x120xf32> to vector<18x120xf32>
    %79 = arith.addf %75, %78 : vector<18x120xf32>
    %80 = vector.extract_strided_slice %79 {offsets = [0, 0], sizes = [18, 8], strides = [1, 1]} : vector<18x120xf32> to vector<18x8xf32>
    %81 = vector.extract_strided_slice %79 {offsets = [0, 40], sizes = [18, 8], strides = [1, 1]} : vector<18x120xf32> to vector<18x8xf32>
    %82 = vector.extract_strided_slice %79 {offsets = [0, 80], sizes = [18, 8], strides = [1, 1]} : vector<18x120xf32> to vector<18x8xf32>
    %cst_36 = arith.constant dense<0.000000e+00> : vector<18x18xf32>
    %83 = tpu.matmul %80, %81, %cst_36 {dimension_numbers = #tpu.dot_dimension_numbers<[1], [1], [0], [0], [0, 0, 1, 0], [], []>} : vector<18x8xf32>, vector<18x8xf32>, vector<18x18xf32> -> vector<18x18xf32>
    %cst_37 = arith.constant 0.353553385 : f32
    %84 = vector.broadcast %cst_37 : f32 to vector<18x18xf32>
    %85 = arith.mulf %83, %84 : vector<18x18xf32>
    %86 = arith.addf %85, %46 : vector<18x18xf32>
    %cst_38 = arith.constant dense<0xFF800000> : vector<18xf32>
    %87 = vector.multi_reduction <maximumf>, %86, %cst_38 [1] : vector<18x18xf32> to vector<18xf32>
    %88 = vector.shape_cast %87 : vector<18xf32> to vector<18x1xf32>
    %89 = vector.broadcast %88 : vector<18x1xf32> to vector<18x18xf32>
    %90 = arith.subf %86, %89 : vector<18x18xf32>
    %91 = math.exp %90 : vector<18x18xf32>
    %cst_39 = arith.constant dense<0.000000e+00> : vector<18xf32>
    %92 = vector.multi_reduction <add>, %91, %cst_39 [1] : vector<18x18xf32> to vector<18xf32>
    %93 = vector.shape_cast %92 : vector<18xf32> to vector<18x1xf32>
    %94 = tpu.reciprocal %93 {approx = true} : vector<18x1xf32> -> vector<18x1xf32>
    %95 = vector.broadcast %94 : vector<18x1xf32> to vector<18x18xf32>
    %96 = arith.mulf %91, %95 : vector<18x18xf32>
    %cst_40 = arith.constant dense<0.000000e+00> : vector<18x8xf32>
    %97 = tpu.matmul %96, %82, %cst_40 {dimension_numbers = #tpu.dot_dimension_numbers<[1], [0], [0], [1], [0, 0, 1, 1], [], []>} : vector<18x18xf32>, vector<18x8xf32>, vector<18x8xf32> -> vector<18x8xf32>
    %98 = vector.extract_strided_slice %79 {offsets = [0, 8], sizes = [18, 8], strides = [1, 1]} : vector<18x120xf32> to vector<18x8xf32>
    %99 = vector.extract_strided_slice %79 {offsets = [0, 48], sizes = [18, 8], strides = [1, 1]} : vector<18x120xf32> to vector<18x8xf32>
    %100 = vector.extract_strided_slice %79 {offsets = [0, 88], sizes = [18, 8], strides = [1, 1]} : vector<18x120xf32> to vector<18x8xf32>
    %cst_41 = arith.constant dense<0.000000e+00> : vector<18x18xf32>
    %101 = tpu.matmul %98, %99, %cst_41 {dimension_numbers = #tpu.dot_dimension_numbers<[1], [1], [0], [0], [0, 0, 1, 0], [], []>} : vector<18x8xf32>, vector<18x8xf32>, vector<18x18xf32> -> vector<18x18xf32>
    %cst_42 = arith.constant 0.353553385 : f32
    %102 = vector.broadcast %cst_42 : f32 to vector<18x18xf32>
    %103 = arith.mulf %101, %102 : vector<18x18xf32>
    %104 = arith.addf %103, %46 : vector<18x18xf32>
    %cst_43 = arith.constant dense<0xFF800000> : vector<18xf32>
    %105 = vector.multi_reduction <maximumf>, %104, %cst_43 [1] : vector<18x18xf32> to vector<18xf32>
    %106 = vector.shape_cast %105 : vector<18xf32> to vector<18x1xf32>
    %107 = vector.broadcast %106 : vector<18x1xf32> to vector<18x18xf32>
    %108 = arith.subf %104, %107 : vector<18x18xf32>
    %109 = math.exp %108 : vector<18x18xf32>
    %cst_44 = arith.constant dense<0.000000e+00> : vector<18xf32>
    %110 = vector.multi_reduction <add>, %109, %cst_44 [1] : vector<18x18xf32> to vector<18xf32>
    %111 = vector.shape_cast %110 : vector<18xf32> to vector<18x1xf32>
    %112 = tpu.reciprocal %111 {approx = true} : vector<18x1xf32> -> vector<18x1xf32>
    %113 = vector.broadcast %112 : vector<18x1xf32> to vector<18x18xf32>
    %114 = arith.mulf %109, %113 : vector<18x18xf32>
    %cst_45 = arith.constant dense<0.000000e+00> : vector<18x8xf32>
    %115 = tpu.matmul %114, %100, %cst_45 {dimension_numbers = #tpu.dot_dimension_numbers<[1], [0], [0], [1], [0, 0, 1, 1], [], []>} : vector<18x18xf32>, vector<18x8xf32>, vector<18x8xf32> -> vector<18x8xf32>
    %116 = vector.extract_strided_slice %79 {offsets = [0, 16], sizes = [18, 8], strides = [1, 1]} : vector<18x120xf32> to vector<18x8xf32>
    %117 = vector.extract_strided_slice %79 {offsets = [0, 56], sizes = [18, 8], strides = [1, 1]} : vector<18x120xf32> to vector<18x8xf32>
    %118 = vector.extract_strided_slice %79 {offsets = [0, 96], sizes = [18, 8], strides = [1, 1]} : vector<18x120xf32> to vector<18x8xf32>
    %cst_46 = arith.constant dense<0.000000e+00> : vector<18x18xf32>
    %119 = tpu.matmul %116, %117, %cst_46 {dimension_numbers = #tpu.dot_dimension_numbers<[1], [1], [0], [0], [0, 0, 1, 0], [], []>} : vector<18x8xf32>, vector<18x8xf32>, vector<18x18xf32> -> vector<18x18xf32>
    %cst_47 = arith.constant 0.353553385 : f32
    %120 = vector.broadcast %cst_47 : f32 to vector<18x18xf32>
    %121 = arith.mulf %119, %120 : vector<18x18xf32>
    %122 = arith.addf %121, %46 : vector<18x18xf32>
    %cst_48 = arith.constant dense<0xFF800000> : vector<18xf32>
    %123 = vector.multi_reduction <maximumf>, %122, %cst_48 [1] : vector<18x18xf32> to vector<18xf32>
    %124 = vector.shape_cast %123 : vector<18xf32> to vector<18x1xf32>
    %125 = vector.broadcast %124 : vector<18x1xf32> to vector<18x18xf32>
    %126 = arith.subf %122, %125 : vector<18x18xf32>
    %127 = math.exp %126 : vector<18x18xf32>
    %cst_49 = arith.constant dense<0.000000e+00> : vector<18xf32>
    %128 = vector.multi_reduction <add>, %127, %cst_49 [1] : vector<18x18xf32> to vector<18xf32>
    %129 = vector.shape_cast %128 : vector<18xf32> to vector<18x1xf32>
    %130 = tpu.reciprocal %129 {approx = true} : vector<18x1xf32> -> vector<18x1xf32>
    %131 = vector.broadcast %130 : vector<18x1xf32> to vector<18x18xf32>
    %132 = arith.mulf %127, %131 : vector<18x18xf32>
    %cst_50 = arith.constant dense<0.000000e+00> : vector<18x8xf32>
    %133 = tpu.matmul %132, %118, %cst_50 {dimension_numbers = #tpu.dot_dimension_numbers<[1], [0], [0], [1], [0, 0, 1, 1], [], []>} : vector<18x18xf32>, vector<18x8xf32>, vector<18x8xf32> -> vector<18x8xf32>
    %134 = vector.extract_strided_slice %79 {offsets = [0, 24], sizes = [18, 8], strides = [1, 1]} : vector<18x120xf32> to vector<18x8xf32>
    %135 = vector.extract_strided_slice %79 {offsets = [0, 64], sizes = [18, 8], strides = [1, 1]} : vector<18x120xf32> to vector<18x8xf32>
    %136 = vector.extract_strided_slice %79 {offsets = [0, 104], sizes = [18, 8], strides = [1, 1]} : vector<18x120xf32> to vector<18x8xf32>
    %cst_51 = arith.constant dense<0.000000e+00> : vector<18x18xf32>
    %137 = tpu.matmul %134, %135, %cst_51 {dimension_numbers = #tpu.dot_dimension_numbers<[1], [1], [0], [0], [0, 0, 1, 0], [], []>} : vector<18x8xf32>, vector<18x8xf32>, vector<18x18xf32> -> vector<18x18xf32>
    %cst_52 = arith.constant 0.353553385 : f32
    %138 = vector.broadcast %cst_52 : f32 to vector<18x18xf32>
    %139 = arith.mulf %137, %138 : vector<18x18xf32>
    %140 = arith.addf %139, %46 : vector<18x18xf32>
    %cst_53 = arith.constant dense<0xFF800000> : vector<18xf32>
    %141 = vector.multi_reduction <maximumf>, %140, %cst_53 [1] : vector<18x18xf32> to vector<18xf32>
    %142 = vector.shape_cast %141 : vector<18xf32> to vector<18x1xf32>
    %143 = vector.broadcast %142 : vector<18x1xf32> to vector<18x18xf32>
    %144 = arith.subf %140, %143 : vector<18x18xf32>
    %145 = math.exp %144 : vector<18x18xf32>
    %cst_54 = arith.constant dense<0.000000e+00> : vector<18xf32>
    %146 = vector.multi_reduction <add>, %145, %cst_54 [1] : vector<18x18xf32> to vector<18xf32>
    %147 = vector.shape_cast %146 : vector<18xf32> to vector<18x1xf32>
    %148 = tpu.reciprocal %147 {approx = true} : vector<18x1xf32> -> vector<18x1xf32>
    %149 = vector.broadcast %148 : vector<18x1xf32> to vector<18x18xf32>
    %150 = arith.mulf %145, %149 : vector<18x18xf32>
    %cst_55 = arith.constant dense<0.000000e+00> : vector<18x8xf32>
    %151 = tpu.matmul %150, %136, %cst_55 {dimension_numbers = #tpu.dot_dimension_numbers<[1], [0], [0], [1], [0, 0, 1, 1], [], []>} : vector<18x18xf32>, vector<18x8xf32>, vector<18x8xf32> -> vector<18x8xf32>
    %152 = vector.extract_strided_slice %79 {offsets = [0, 32], sizes = [18, 8], strides = [1, 1]} : vector<18x120xf32> to vector<18x8xf32>
    %153 = vector.extract_strided_slice %79 {offsets = [0, 72], sizes = [18, 8], strides = [1, 1]} : vector<18x120xf32> to vector<18x8xf32>
    %154 = vector.extract_strided_slice %79 {offsets = [0, 112], sizes = [18, 8], strides = [1, 1]} : vector<18x120xf32> to vector<18x8xf32>
    %cst_56 = arith.constant dense<0.000000e+00> : vector<18x18xf32>
    %155 = tpu.matmul %152, %153, %cst_56 {dimension_numbers = #tpu.dot_dimension_numbers<[1], [1], [0], [0], [0, 0, 1, 0], [], []>} : vector<18x8xf32>, vector<18x8xf32>, vector<18x18xf32> -> vector<18x18xf32>
    %cst_57 = arith.constant 0.353553385 : f32
    %156 = vector.broadcast %cst_57 : f32 to vector<18x18xf32>
    %157 = arith.mulf %155, %156 : vector<18x18xf32>
    %158 = arith.addf %157, %46 : vector<18x18xf32>
    %cst_58 = arith.constant dense<0xFF800000> : vector<18xf32>
    %159 = vector.multi_reduction <maximumf>, %158, %cst_58 [1] : vector<18x18xf32> to vector<18xf32>
    %160 = vector.shape_cast %159 : vector<18xf32> to vector<18x1xf32>
    %161 = vector.broadcast %160 : vector<18x1xf32> to vector<18x18xf32>
    %162 = arith.subf %158, %161 : vector<18x18xf32>
    %163 = math.exp %162 : vector<18x18xf32>
    %cst_59 = arith.constant dense<0.000000e+00> : vector<18xf32>
    %164 = vector.multi_reduction <add>, %163, %cst_59 [1] : vector<18x18xf32> to vector<18xf32>
    %165 = vector.shape_cast %164 : vector<18xf32> to vector<18x1xf32>
    %166 = tpu.reciprocal %165 {approx = true} : vector<18x1xf32> -> vector<18x1xf32>
    %167 = vector.broadcast %166 : vector<18x1xf32> to vector<18x18xf32>
    %168 = arith.mulf %163, %167 : vector<18x18xf32>
    %cst_60 = arith.constant dense<0.000000e+00> : vector<18x8xf32>
    %169 = tpu.matmul %168, %154, %cst_60 {dimension_numbers = #tpu.dot_dimension_numbers<[1], [0], [0], [1], [0, 0, 1, 1], [], []>} : vector<18x18xf32>, vector<18x8xf32>, vector<18x8xf32> -> vector<18x8xf32>
    %170 = tpu.concatenate %97, %115, %133, %151, %169 in 1 : vector<18x8xf32>, vector<18x8xf32>, vector<18x8xf32>, vector<18x8xf32>, vector<18x8xf32> -> vector<18x40xf32>
    %c0_61 = arith.constant 0 : index
    %c0_62 = arith.constant 0 : index
    %c0_63 = arith.constant 0 : index
    %171 = vector.load %arg8[%c0_61, %c0_62, %c0_63] : memref<4x40x40xf32, #tpu.memory_space<vmem>>, vector<1x40x40xf32>
    %172 = vector.shape_cast %171 : vector<1x40x40xf32> to vector<40x40xf32>
    %cst_64 = arith.constant dense<0.000000e+00> : vector<18x40xf32>
    %173 = tpu.matmul %170, %172, %cst_64 {dimension_numbers = #tpu.dot_dimension_numbers<[1], [0], [0], [1], [0, 0, 1, 1], [], []>} : vector<18x40xf32>, vector<40x40xf32>, vector<18x40xf32> -> vector<18x40xf32>
    %174 = arith.addf %19, %173 : vector<18x40xf32>
    %c0_65 = arith.constant 0 : index
    %c0_66 = arith.constant 0 : index
    %c0_67 = arith.constant 0 : index
    %175 = vector.load %arg9[%c0_65, %c0_66, %c0_67] : memref<4x1x40xf32, #tpu.memory_space<vmem>>, vector<1x1x40xf32>
    %176 = vector.shape_cast %175 : vector<1x1x40xf32> to vector<1x40xf32>
    %177 = vector.broadcast %176 : vector<1x40xf32> to vector<18x40xf32>
    %178 = arith.addf %174, %177 : vector<18x40xf32>
    %c0_68 = arith.constant 0 : index
    %c0_69 = arith.constant 0 : index
    %c0_70 = arith.constant 0 : index
    %179 = vector.load %arg12[%c0_68, %c0_69, %c0_70] : memref<4x1x40xf32, #tpu.memory_space<vmem>>, vector<1x1x40xf32>
    %180 = vector.shape_cast %179 : vector<1x1x40xf32> to vector<1x40xf32>
    %c0_71 = arith.constant 0 : index
    %c0_72 = arith.constant 0 : index
    %c0_73 = arith.constant 0 : index
    %181 = vector.load %arg13[%c0_71, %c0_72, %c0_73] : memref<4x1x40xf32, #tpu.memory_space<vmem>>, vector<1x1x40xf32>
    %182 = vector.shape_cast %181 : vector<1x1x40xf32> to vector<1x40xf32>
    %cst_74 = arith.constant dense<0.000000e+00> : vector<18xf32>
    %183 = vector.multi_reduction <add>, %178, %cst_74 [1] : vector<18x40xf32> to vector<18xf32>
    %184 = vector.shape_cast %183 : vector<18xf32> to vector<18x1xf32>
    %cst_75 = arith.constant 4.000000e+01 : f32
    %185 = vector.broadcast %cst_75 : f32 to vector<18x1xf32>
    %186 = arith.divf %184, %185 : vector<18x1xf32>
    %187 = vector.broadcast %186 : vector<18x1xf32> to vector<18x40xf32>
    %188 = arith.subf %178, %187 : vector<18x40xf32>
    %189 = arith.mulf %188, %188 : vector<18x40xf32>
    %cst_76 = arith.constant dense<0.000000e+00> : vector<18xf32>
    %190 = vector.multi_reduction <add>, %189, %cst_76 [1] : vector<18x40xf32> to vector<18xf32>
    %191 = vector.shape_cast %190 : vector<18xf32> to vector<18x1xf32>
    %cst_77 = arith.constant 4.000000e+01 : f32
    %192 = vector.broadcast %cst_77 : f32 to vector<18x1xf32>
    %193 = arith.divf %191, %192 : vector<18x1xf32>
    %194 = vector.broadcast %186 : vector<18x1xf32> to vector<18x40xf32>
    %195 = arith.subf %178, %194 : vector<18x40xf32>
    %cst_78 = arith.constant 9.99999974E-6 : f32
    %196 = vector.broadcast %cst_78 : f32 to vector<18x1xf32>
    %197 = arith.addf %193, %196 : vector<18x1xf32>
    %198 = math.rsqrt %197 : vector<18x1xf32>
    %199 = vector.broadcast %198 : vector<18x1xf32> to vector<18x40xf32>
    %200 = arith.mulf %195, %199 : vector<18x40xf32>
    %201 = vector.broadcast %180 : vector<1x40xf32> to vector<18x40xf32>
    %202 = arith.mulf %200, %201 : vector<18x40xf32>
    %203 = vector.broadcast %182 : vector<1x40xf32> to vector<18x40xf32>
    %204 = arith.addf %202, %203 : vector<18x40xf32>
    %c0_79 = arith.constant 0 : index
    %c0_80 = arith.constant 0 : index
    %c0_81 = arith.constant 0 : index
    %205 = vector.load %arg14[%c0_79, %c0_80, %c0_81] : memref<4x40x128xf32, #tpu.memory_space<vmem>>, vector<1x40x128xf32>
    %206 = vector.shape_cast %205 : vector<1x40x128xf32> to vector<40x128xf32>
    %cst_82 = arith.constant dense<0.000000e+00> : vector<18x128xf32>
    %207 = tpu.matmul %204, %206, %cst_82 {dimension_numbers = #tpu.dot_dimension_numbers<[1], [0], [0], [1], [0, 0, 1, 1], [], []>} : vector<18x40xf32>, vector<40x128xf32>, vector<18x128xf32> -> vector<18x128xf32>
    %c0_83 = arith.constant 0 : index
    %c0_84 = arith.constant 0 : index
    %c0_85 = arith.constant 0 : index
    %208 = vector.load %arg15[%c0_83, %c0_84, %c0_85] : memref<4x1x128xf32, #tpu.memory_space<vmem>>, vector<1x1x128xf32>
    %209 = vector.shape_cast %208 : vector<1x1x128xf32> to vector<1x128xf32>
    %210 = vector.broadcast %209 : vector<1x128xf32> to vector<18x128xf32>
    %211 = arith.addf %207, %210 : vector<18x128xf32>
    %cst_86 = arith.constant 0.000000e+00 : f32
    %212 = vector.broadcast %cst_86 : f32 to vector<18x128xf32>
    %213 = arith.maximumf %211, %212 : vector<18x128xf32>
    %c0_87 = arith.constant 0 : index
    %c0_88 = arith.constant 0 : index
    %c0_89 = arith.constant 0 : index
    %214 = vector.load %arg16[%c0_87, %c0_88, %c0_89] : memref<4x128x40xf32, #tpu.memory_space<vmem>>, vector<1x128x40xf32>
    %215 = vector.shape_cast %214 : vector<1x128x40xf32> to vector<128x40xf32>
    %cst_90 = arith.constant dense<0.000000e+00> : vector<18x40xf32>
    %216 = tpu.matmul %213, %215, %cst_90 {dimension_numbers = #tpu.dot_dimension_numbers<[1], [0], [0], [1], [0, 0, 1, 1], [], []>} : vector<18x128xf32>, vector<128x40xf32>, vector<18x40xf32> -> vector<18x40xf32>
    %217 = arith.addf %178, %216 : vector<18x40xf32>
    %c0_91 = arith.constant 0 : index
    %c0_92 = arith.constant 0 : index
    %c0_93 = arith.constant 0 : index
    %218 = vector.load %arg17[%c0_91, %c0_92, %c0_93] : memref<4x1x40xf32, #tpu.memory_space<vmem>>, vector<1x1x40xf32>
    %219 = vector.shape_cast %218 : vector<1x1x40xf32> to vector<1x40xf32>
    %220 = vector.broadcast %219 : vector<1x40xf32> to vector<18x40xf32>
    %221 = arith.addf %217, %220 : vector<18x40xf32>
    %c1 = arith.constant 1 : index
    %c0_94 = arith.constant 0 : index
    %c0_95 = arith.constant 0 : index
    %222 = vector.load %arg10[%c1, %c0_94, %c0_95] : memref<4x1x40xf32, #tpu.memory_space<vmem>>, vector<1x1x40xf32>
    %223 = vector.shape_cast %222 : vector<1x1x40xf32> to vector<1x40xf32>
    %c1_96 = arith.constant 1 : index
    %c0_97 = arith.constant 0 : index
    %c0_98 = arith.constant 0 : index
    %224 = vector.load %arg11[%c1_96, %c0_97, %c0_98] : memref<4x1x40xf32, #tpu.memory_space<vmem>>, vector<1x1x40xf32>
    %225 = vector.shape_cast %224 : vector<1x1x40xf32> to vector<1x40xf32>
    %cst_99 = arith.constant dense<0.000000e+00> : vector<18xf32>
    %226 = vector.multi_reduction <add>, %221, %cst_99 [1] : vector<18x40xf32> to vector<18xf32>
    %227 = vector.shape_cast %226 : vector<18xf32> to vector<18x1xf32>
    %cst_100 = arith.constant 4.000000e+01 : f32
    %228 = vector.broadcast %cst_100 : f32 to vector<18x1xf32>
    %229 = arith.divf %227, %228 : vector<18x1xf32>
    %230 = vector.broadcast %229 : vector<18x1xf32> to vector<18x40xf32>
    %231 = arith.subf %221, %230 : vector<18x40xf32>
    %232 = arith.mulf %231, %231 : vector<18x40xf32>
    %cst_101 = arith.constant dense<0.000000e+00> : vector<18xf32>
    %233 = vector.multi_reduction <add>, %232, %cst_101 [1] : vector<18x40xf32> to vector<18xf32>
    %234 = vector.shape_cast %233 : vector<18xf32> to vector<18x1xf32>
    %cst_102 = arith.constant 4.000000e+01 : f32
    %235 = vector.broadcast %cst_102 : f32 to vector<18x1xf32>
    %236 = arith.divf %234, %235 : vector<18x1xf32>
    %237 = vector.broadcast %229 : vector<18x1xf32> to vector<18x40xf32>
    %238 = arith.subf %221, %237 : vector<18x40xf32>
    %cst_103 = arith.constant 9.99999974E-6 : f32
    %239 = vector.broadcast %cst_103 : f32 to vector<18x1xf32>
    %240 = arith.addf %236, %239 : vector<18x1xf32>
    %241 = math.rsqrt %240 : vector<18x1xf32>
    %242 = vector.broadcast %241 : vector<18x1xf32> to vector<18x40xf32>
    %243 = arith.mulf %238, %242 : vector<18x40xf32>
    %244 = vector.broadcast %223 : vector<1x40xf32> to vector<18x40xf32>
    %245 = arith.mulf %243, %244 : vector<18x40xf32>
    %246 = vector.broadcast %225 : vector<1x40xf32> to vector<18x40xf32>
    %247 = arith.addf %245, %246 : vector<18x40xf32>
    %c1_104 = arith.constant 1 : index
    %c0_105 = arith.constant 0 : index
    %c0_106 = arith.constant 0 : index
    %248 = vector.load %arg6[%c1_104, %c0_105, %c0_106] : memref<4x40x120xf32, #tpu.memory_space<vmem>>, vector<1x40x120xf32>
    %249 = vector.shape_cast %248 : vector<1x40x120xf32> to vector<40x120xf32>
    %cst_107 = arith.constant dense<0.000000e+00> : vector<18x120xf32>
    %250 = tpu.matmul %247, %249, %cst_107 {dimension_numbers = #tpu.dot_dimension_numbers<[1], [0], [0], [1], [0, 0, 1, 1], [], []>} : vector<18x40xf32>, vector<40x120xf32>, vector<18x120xf32> -> vector<18x120xf32>
    %c1_108 = arith.constant 1 : index
    %c0_109 = arith.constant 0 : index
    %c0_110 = arith.constant 0 : index
    %251 = vector.load %arg7[%c1_108, %c0_109, %c0_110] : memref<4x1x120xf32, #tpu.memory_space<vmem>>, vector<1x1x120xf32>
    %252 = vector.shape_cast %251 : vector<1x1x120xf32> to vector<1x120xf32>
    %253 = vector.broadcast %252 : vector<1x120xf32> to vector<18x120xf32>
    %254 = arith.addf %250, %253 : vector<18x120xf32>
    %255 = vector.extract_strided_slice %254 {offsets = [0, 0], sizes = [18, 8], strides = [1, 1]} : vector<18x120xf32> to vector<18x8xf32>
    %256 = vector.extract_strided_slice %254 {offsets = [0, 40], sizes = [18, 8], strides = [1, 1]} : vector<18x120xf32> to vector<18x8xf32>
    %257 = vector.extract_strided_slice %254 {offsets = [0, 80], sizes = [18, 8], strides = [1, 1]} : vector<18x120xf32> to vector<18x8xf32>
    %cst_111 = arith.constant dense<0.000000e+00> : vector<18x18xf32>
    %258 = tpu.matmul %255, %256, %cst_111 {dimension_numbers = #tpu.dot_dimension_numbers<[1], [1], [0], [0], [0, 0, 1, 0], [], []>} : vector<18x8xf32>, vector<18x8xf32>, vector<18x18xf32> -> vector<18x18xf32>
    %cst_112 = arith.constant 0.353553385 : f32
    %259 = vector.broadcast %cst_112 : f32 to vector<18x18xf32>
    %260 = arith.mulf %258, %259 : vector<18x18xf32>
    %261 = arith.addf %260, %46 : vector<18x18xf32>
    %cst_113 = arith.constant dense<0xFF800000> : vector<18xf32>
    %262 = vector.multi_reduction <maximumf>, %261, %cst_113 [1] : vector<18x18xf32> to vector<18xf32>
    %263 = vector.shape_cast %262 : vector<18xf32> to vector<18x1xf32>
    %264 = vector.broadcast %263 : vector<18x1xf32> to vector<18x18xf32>
    %265 = arith.subf %261, %264 : vector<18x18xf32>
    %266 = math.exp %265 : vector<18x18xf32>
    %cst_114 = arith.constant dense<0.000000e+00> : vector<18xf32>
    %267 = vector.multi_reduction <add>, %266, %cst_114 [1] : vector<18x18xf32> to vector<18xf32>
    %268 = vector.shape_cast %267 : vector<18xf32> to vector<18x1xf32>
    %269 = tpu.reciprocal %268 {approx = true} : vector<18x1xf32> -> vector<18x1xf32>
    %270 = vector.broadcast %269 : vector<18x1xf32> to vector<18x18xf32>
    %271 = arith.mulf %266, %270 : vector<18x18xf32>
    %cst_115 = arith.constant dense<0.000000e+00> : vector<18x8xf32>
    %272 = tpu.matmul %271, %257, %cst_115 {dimension_numbers = #tpu.dot_dimension_numbers<[1], [0], [0], [1], [0, 0, 1, 1], [], []>} : vector<18x18xf32>, vector<18x8xf32>, vector<18x8xf32> -> vector<18x8xf32>
    %273 = vector.extract_strided_slice %254 {offsets = [0, 8], sizes = [18, 8], strides = [1, 1]} : vector<18x120xf32> to vector<18x8xf32>
    %274 = vector.extract_strided_slice %254 {offsets = [0, 48], sizes = [18, 8], strides = [1, 1]} : vector<18x120xf32> to vector<18x8xf32>
    %275 = vector.extract_strided_slice %254 {offsets = [0, 88], sizes = [18, 8], strides = [1, 1]} : vector<18x120xf32> to vector<18x8xf32>
    %cst_116 = arith.constant dense<0.000000e+00> : vector<18x18xf32>
    %276 = tpu.matmul %273, %274, %cst_116 {dimension_numbers = #tpu.dot_dimension_numbers<[1], [1], [0], [0], [0, 0, 1, 0], [], []>} : vector<18x8xf32>, vector<18x8xf32>, vector<18x18xf32> -> vector<18x18xf32>
    %cst_117 = arith.constant 0.353553385 : f32
    %277 = vector.broadcast %cst_117 : f32 to vector<18x18xf32>
    %278 = arith.mulf %276, %277 : vector<18x18xf32>
    %279 = arith.addf %278, %46 : vector<18x18xf32>
    %cst_118 = arith.constant dense<0xFF800000> : vector<18xf32>
    %280 = vector.multi_reduction <maximumf>, %279, %cst_118 [1] : vector<18x18xf32> to vector<18xf32>
    %281 = vector.shape_cast %280 : vector<18xf32> to vector<18x1xf32>
    %282 = vector.broadcast %281 : vector<18x1xf32> to vector<18x18xf32>
    %283 = arith.subf %279, %282 : vector<18x18xf32>
    %284 = math.exp %283 : vector<18x18xf32>
    %cst_119 = arith.constant dense<0.000000e+00> : vector<18xf32>
    %285 = vector.multi_reduction <add>, %284, %cst_119 [1] : vector<18x18xf32> to vector<18xf32>
    %286 = vector.shape_cast %285 : vector<18xf32> to vector<18x1xf32>
    %287 = tpu.reciprocal %286 {approx = true} : vector<18x1xf32> -> vector<18x1xf32>
    %288 = vector.broadcast %287 : vector<18x1xf32> to vector<18x18xf32>
    %289 = arith.mulf %284, %288 : vector<18x18xf32>
    %cst_120 = arith.constant dense<0.000000e+00> : vector<18x8xf32>
    %290 = tpu.matmul %289, %275, %cst_120 {dimension_numbers = #tpu.dot_dimension_numbers<[1], [0], [0], [1], [0, 0, 1, 1], [], []>} : vector<18x18xf32>, vector<18x8xf32>, vector<18x8xf32> -> vector<18x8xf32>
    %291 = vector.extract_strided_slice %254 {offsets = [0, 16], sizes = [18, 8], strides = [1, 1]} : vector<18x120xf32> to vector<18x8xf32>
    %292 = vector.extract_strided_slice %254 {offsets = [0, 56], sizes = [18, 8], strides = [1, 1]} : vector<18x120xf32> to vector<18x8xf32>
    %293 = vector.extract_strided_slice %254 {offsets = [0, 96], sizes = [18, 8], strides = [1, 1]} : vector<18x120xf32> to vector<18x8xf32>
    %cst_121 = arith.constant dense<0.000000e+00> : vector<18x18xf32>
    %294 = tpu.matmul %291, %292, %cst_121 {dimension_numbers = #tpu.dot_dimension_numbers<[1], [1], [0], [0], [0, 0, 1, 0], [], []>} : vector<18x8xf32>, vector<18x8xf32>, vector<18x18xf32> -> vector<18x18xf32>
    %cst_122 = arith.constant 0.353553385 : f32
    %295 = vector.broadcast %cst_122 : f32 to vector<18x18xf32>
    %296 = arith.mulf %294, %295 : vector<18x18xf32>
    %297 = arith.addf %296, %46 : vector<18x18xf32>
    %cst_123 = arith.constant dense<0xFF800000> : vector<18xf32>
    %298 = vector.multi_reduction <maximumf>, %297, %cst_123 [1] : vector<18x18xf32> to vector<18xf32>
    %299 = vector.shape_cast %298 : vector<18xf32> to vector<18x1xf32>
    %300 = vector.broadcast %299 : vector<18x1xf32> to vector<18x18xf32>
    %301 = arith.subf %297, %300 : vector<18x18xf32>
    %302 = math.exp %301 : vector<18x18xf32>
    %cst_124 = arith.constant dense<0.000000e+00> : vector<18xf32>
    %303 = vector.multi_reduction <add>, %302, %cst_124 [1] : vector<18x18xf32> to vector<18xf32>
    %304 = vector.shape_cast %303 : vector<18xf32> to vector<18x1xf32>
    %305 = tpu.reciprocal %304 {approx = true} : vector<18x1xf32> -> vector<18x1xf32>
    %306 = vector.broadcast %305 : vector<18x1xf32> to vector<18x18xf32>
    %307 = arith.mulf %302, %306 : vector<18x18xf32>
    %cst_125 = arith.constant dense<0.000000e+00> : vector<18x8xf32>
    %308 = tpu.matmul %307, %293, %cst_125 {dimension_numbers = #tpu.dot_dimension_numbers<[1], [0], [0], [1], [0, 0, 1, 1], [], []>} : vector<18x18xf32>, vector<18x8xf32>, vector<18x8xf32> -> vector<18x8xf32>
    %309 = vector.extract_strided_slice %254 {offsets = [0, 24], sizes = [18, 8], strides = [1, 1]} : vector<18x120xf32> to vector<18x8xf32>
    %310 = vector.extract_strided_slice %254 {offsets = [0, 64], sizes = [18, 8], strides = [1, 1]} : vector<18x120xf32> to vector<18x8xf32>
    %311 = vector.extract_strided_slice %254 {offsets = [0, 104], sizes = [18, 8], strides = [1, 1]} : vector<18x120xf32> to vector<18x8xf32>
    %cst_126 = arith.constant dense<0.000000e+00> : vector<18x18xf32>
    %312 = tpu.matmul %309, %310, %cst_126 {dimension_numbers = #tpu.dot_dimension_numbers<[1], [1], [0], [0], [0, 0, 1, 0], [], []>} : vector<18x8xf32>, vector<18x8xf32>, vector<18x18xf32> -> vector<18x18xf32>
    %cst_127 = arith.constant 0.353553385 : f32
    %313 = vector.broadcast %cst_127 : f32 to vector<18x18xf32>
    %314 = arith.mulf %312, %313 : vector<18x18xf32>
    %315 = arith.addf %314, %46 : vector<18x18xf32>
    %cst_128 = arith.constant dense<0xFF800000> : vector<18xf32>
    %316 = vector.multi_reduction <maximumf>, %315, %cst_128 [1] : vector<18x18xf32> to vector<18xf32>
    %317 = vector.shape_cast %316 : vector<18xf32> to vector<18x1xf32>
    %318 = vector.broadcast %317 : vector<18x1xf32> to vector<18x18xf32>
    %319 = arith.subf %315, %318 : vector<18x18xf32>
    %320 = math.exp %319 : vector<18x18xf32>
    %cst_129 = arith.constant dense<0.000000e+00> : vector<18xf32>
    %321 = vector.multi_reduction <add>, %320, %cst_129 [1] : vector<18x18xf32> to vector<18xf32>
    %322 = vector.shape_cast %321 : vector<18xf32> to vector<18x1xf32>
    %323 = tpu.reciprocal %322 {approx = true} : vector<18x1xf32> -> vector<18x1xf32>
    %324 = vector.broadcast %323 : vector<18x1xf32> to vector<18x18xf32>
    %325 = arith.mulf %320, %324 : vector<18x18xf32>
    %cst_130 = arith.constant dense<0.000000e+00> : vector<18x8xf32>
    %326 = tpu.matmul %325, %311, %cst_130 {dimension_numbers = #tpu.dot_dimension_numbers<[1], [0], [0], [1], [0, 0, 1, 1], [], []>} : vector<18x18xf32>, vector<18x8xf32>, vector<18x8xf32> -> vector<18x8xf32>
    %327 = vector.extract_strided_slice %254 {offsets = [0, 32], sizes = [18, 8], strides = [1, 1]} : vector<18x120xf32> to vector<18x8xf32>
    %328 = vector.extract_strided_slice %254 {offsets = [0, 72], sizes = [18, 8], strides = [1, 1]} : vector<18x120xf32> to vector<18x8xf32>
    %329 = vector.extract_strided_slice %254 {offsets = [0, 112], sizes = [18, 8], strides = [1, 1]} : vector<18x120xf32> to vector<18x8xf32>
    %cst_131 = arith.constant dense<0.000000e+00> : vector<18x18xf32>
    %330 = tpu.matmul %327, %328, %cst_131 {dimension_numbers = #tpu.dot_dimension_numbers<[1], [1], [0], [0], [0, 0, 1, 0], [], []>} : vector<18x8xf32>, vector<18x8xf32>, vector<18x18xf32> -> vector<18x18xf32>
    %cst_132 = arith.constant 0.353553385 : f32
    %331 = vector.broadcast %cst_132 : f32 to vector<18x18xf32>
    %332 = arith.mulf %330, %331 : vector<18x18xf32>
    %333 = arith.addf %332, %46 : vector<18x18xf32>
    %cst_133 = arith.constant dense<0xFF800000> : vector<18xf32>
    %334 = vector.multi_reduction <maximumf>, %333, %cst_133 [1] : vector<18x18xf32> to vector<18xf32>
    %335 = vector.shape_cast %334 : vector<18xf32> to vector<18x1xf32>
    %336 = vector.broadcast %335 : vector<18x1xf32> to vector<18x18xf32>
    %337 = arith.subf %333, %336 : vector<18x18xf32>
    %338 = math.exp %337 : vector<18x18xf32>
    %cst_134 = arith.constant dense<0.000000e+00> : vector<18xf32>
    %339 = vector.multi_reduction <add>, %338, %cst_134 [1] : vector<18x18xf32> to vector<18xf32>
    %340 = vector.shape_cast %339 : vector<18xf32> to vector<18x1xf32>
    %341 = tpu.reciprocal %340 {approx = true} : vector<18x1xf32> -> vector<18x1xf32>
    %342 = vector.broadcast %341 : vector<18x1xf32> to vector<18x18xf32>
    %343 = arith.mulf %338, %342 : vector<18x18xf32>
    %cst_135 = arith.constant dense<0.000000e+00> : vector<18x8xf32>
    %344 = tpu.matmul %343, %329, %cst_135 {dimension_numbers = #tpu.dot_dimension_numbers<[1], [0], [0], [1], [0, 0, 1, 1], [], []>} : vector<18x18xf32>, vector<18x8xf32>, vector<18x8xf32> -> vector<18x8xf32>
    %345 = tpu.concatenate %272, %290, %308, %326, %344 in 1 : vector<18x8xf32>, vector<18x8xf32>, vector<18x8xf32>, vector<18x8xf32>, vector<18x8xf32> -> vector<18x40xf32>
    %c1_136 = arith.constant 1 : index
    %c0_137 = arith.constant 0 : index
    %c0_138 = arith.constant 0 : index
    %346 = vector.load %arg8[%c1_136, %c0_137, %c0_138] : memref<4x40x40xf32, #tpu.memory_space<vmem>>, vector<1x40x40xf32>
    %347 = vector.shape_cast %346 : vector<1x40x40xf32> to vector<40x40xf32>
    %cst_139 = arith.constant dense<0.000000e+00> : vector<18x40xf32>
    %348 = tpu.matmul %345, %347, %cst_139 {dimension_numbers = #tpu.dot_dimension_numbers<[1], [0], [0], [1], [0, 0, 1, 1], [], []>} : vector<18x40xf32>, vector<40x40xf32>, vector<18x40xf32> -> vector<18x40xf32>
    %349 = arith.addf %221, %348 : vector<18x40xf32>
    %c1_140 = arith.constant 1 : index
    %c0_141 = arith.constant 0 : index
    %c0_142 = arith.constant 0 : index
    %350 = vector.load %arg9[%c1_140, %c0_141, %c0_142] : memref<4x1x40xf32, #tpu.memory_space<vmem>>, vector<1x1x40xf32>
    %351 = vector.shape_cast %350 : vector<1x1x40xf32> to vector<1x40xf32>
    %352 = vector.broadcast %351 : vector<1x40xf32> to vector<18x40xf32>
    %353 = arith.addf %349, %352 : vector<18x40xf32>
    %c1_143 = arith.constant 1 : index
    %c0_144 = arith.constant 0 : index
    %c0_145 = arith.constant 0 : index
    %354 = vector.load %arg12[%c1_143, %c0_144, %c0_145] : memref<4x1x40xf32, #tpu.memory_space<vmem>>, vector<1x1x40xf32>
    %355 = vector.shape_cast %354 : vector<1x1x40xf32> to vector<1x40xf32>
    %c1_146 = arith.constant 1 : index
    %c0_147 = arith.constant 0 : index
    %c0_148 = arith.constant 0 : index
    %356 = vector.load %arg13[%c1_146, %c0_147, %c0_148] : memref<4x1x40xf32, #tpu.memory_space<vmem>>, vector<1x1x40xf32>
    %357 = vector.shape_cast %356 : vector<1x1x40xf32> to vector<1x40xf32>
    %cst_149 = arith.constant dense<0.000000e+00> : vector<18xf32>
    %358 = vector.multi_reduction <add>, %353, %cst_149 [1] : vector<18x40xf32> to vector<18xf32>
    %359 = vector.shape_cast %358 : vector<18xf32> to vector<18x1xf32>
    %cst_150 = arith.constant 4.000000e+01 : f32
    %360 = vector.broadcast %cst_150 : f32 to vector<18x1xf32>
    %361 = arith.divf %359, %360 : vector<18x1xf32>
    %362 = vector.broadcast %361 : vector<18x1xf32> to vector<18x40xf32>
    %363 = arith.subf %353, %362 : vector<18x40xf32>
    %364 = arith.mulf %363, %363 : vector<18x40xf32>
    %cst_151 = arith.constant dense<0.000000e+00> : vector<18xf32>
    %365 = vector.multi_reduction <add>, %364, %cst_151 [1] : vector<18x40xf32> to vector<18xf32>
    %366 = vector.shape_cast %365 : vector<18xf32> to vector<18x1xf32>
    %cst_152 = arith.constant 4.000000e+01 : f32
    %367 = vector.broadcast %cst_152 : f32 to vector<18x1xf32>
    %368 = arith.divf %366, %367 : vector<18x1xf32>
    %369 = vector.broadcast %361 : vector<18x1xf32> to vector<18x40xf32>
    %370 = arith.subf %353, %369 : vector<18x40xf32>
    %cst_153 = arith.constant 9.99999974E-6 : f32
    %371 = vector.broadcast %cst_153 : f32 to vector<18x1xf32>
    %372 = arith.addf %368, %371 : vector<18x1xf32>
    %373 = math.rsqrt %372 : vector<18x1xf32>
    %374 = vector.broadcast %373 : vector<18x1xf32> to vector<18x40xf32>
    %375 = arith.mulf %370, %374 : vector<18x40xf32>
    %376 = vector.broadcast %355 : vector<1x40xf32> to vector<18x40xf32>
    %377 = arith.mulf %375, %376 : vector<18x40xf32>
    %378 = vector.broadcast %357 : vector<1x40xf32> to vector<18x40xf32>
    %379 = arith.addf %377, %378 : vector<18x40xf32>
    %c1_154 = arith.constant 1 : index
    %c0_155 = arith.constant 0 : index
    %c0_156 = arith.constant 0 : index
    %380 = vector.load %arg14[%c1_154, %c0_155, %c0_156] : memref<4x40x128xf32, #tpu.memory_space<vmem>>, vector<1x40x128xf32>
    %381 = vector.shape_cast %380 : vector<1x40x128xf32> to vector<40x128xf32>
    %cst_157 = arith.constant dense<0.000000e+00> : vector<18x128xf32>
    %382 = tpu.matmul %379, %381, %cst_157 {dimension_numbers = #tpu.dot_dimension_numbers<[1], [0], [0], [1], [0, 0, 1, 1], [], []>} : vector<18x40xf32>, vector<40x128xf32>, vector<18x128xf32> -> vector<18x128xf32>
    %c1_158 = arith.constant 1 : index
    %c0_159 = arith.constant 0 : index
    %c0_160 = arith.constant 0 : index
    %383 = vector.load %arg15[%c1_158, %c0_159, %c0_160] : memref<4x1x128xf32, #tpu.memory_space<vmem>>, vector<1x1x128xf32>
    %384 = vector.shape_cast %383 : vector<1x1x128xf32> to vector<1x128xf32>
    %385 = vector.broadcast %384 : vector<1x128xf32> to vector<18x128xf32>
    %386 = arith.addf %382, %385 : vector<18x128xf32>
    %cst_161 = arith.constant 0.000000e+00 : f32
    %387 = vector.broadcast %cst_161 : f32 to vector<18x128xf32>
    %388 = arith.maximumf %386, %387 : vector<18x128xf32>
    %c1_162 = arith.constant 1 : index
    %c0_163 = arith.constant 0 : index
    %c0_164 = arith.constant 0 : index
    %389 = vector.load %arg16[%c1_162, %c0_163, %c0_164] : memref<4x128x40xf32, #tpu.memory_space<vmem>>, vector<1x128x40xf32>
    %390 = vector.shape_cast %389 : vector<1x128x40xf32> to vector<128x40xf32>
    %cst_165 = arith.constant dense<0.000000e+00> : vector<18x40xf32>
    %391 = tpu.matmul %388, %390, %cst_165 {dimension_numbers = #tpu.dot_dimension_numbers<[1], [0], [0], [1], [0, 0, 1, 1], [], []>} : vector<18x128xf32>, vector<128x40xf32>, vector<18x40xf32> -> vector<18x40xf32>
    %392 = arith.addf %353, %391 : vector<18x40xf32>
    %c1_166 = arith.constant 1 : index
    %c0_167 = arith.constant 0 : index
    %c0_168 = arith.constant 0 : index
    %393 = vector.load %arg17[%c1_166, %c0_167, %c0_168] : memref<4x1x40xf32, #tpu.memory_space<vmem>>, vector<1x1x40xf32>
    %394 = vector.shape_cast %393 : vector<1x1x40xf32> to vector<1x40xf32>
    %395 = vector.broadcast %394 : vector<1x40xf32> to vector<18x40xf32>
    %396 = arith.addf %392, %395 : vector<18x40xf32>
    %c2 = arith.constant 2 : index
    %c0_169 = arith.constant 0 : index
    %c0_170 = arith.constant 0 : index
    %397 = vector.load %arg10[%c2, %c0_169, %c0_170] : memref<4x1x40xf32, #tpu.memory_space<vmem>>, vector<1x1x40xf32>
    %398 = vector.shape_cast %397 : vector<1x1x40xf32> to vector<1x40xf32>
    %c2_171 = arith.constant 2 : index
    %c0_172 = arith.constant 0 : index
    %c0_173 = arith.constant 0 : index
    %399 = vector.load %arg11[%c2_171, %c0_172, %c0_173] : memref<4x1x40xf32, #tpu.memory_space<vmem>>, vector<1x1x40xf32>
    %400 = vector.shape_cast %399 : vector<1x1x40xf32> to vector<1x40xf32>
    %cst_174 = arith.constant dense<0.000000e+00> : vector<18xf32>
    %401 = vector.multi_reduction <add>, %396, %cst_174 [1] : vector<18x40xf32> to vector<18xf32>
    %402 = vector.shape_cast %401 : vector<18xf32> to vector<18x1xf32>
    %cst_175 = arith.constant 4.000000e+01 : f32
    %403 = vector.broadcast %cst_175 : f32 to vector<18x1xf32>
    %404 = arith.divf %402, %403 : vector<18x1xf32>
    %405 = vector.broadcast %404 : vector<18x1xf32> to vector<18x40xf32>
    %406 = arith.subf %396, %405 : vector<18x40xf32>
    %407 = arith.mulf %406, %406 : vector<18x40xf32>
    %cst_176 = arith.constant dense<0.000000e+00> : vector<18xf32>
    %408 = vector.multi_reduction <add>, %407, %cst_176 [1] : vector<18x40xf32> to vector<18xf32>
    %409 = vector.shape_cast %408 : vector<18xf32> to vector<18x1xf32>
    %cst_177 = arith.constant 4.000000e+01 : f32
    %410 = vector.broadcast %cst_177 : f32 to vector<18x1xf32>
    %411 = arith.divf %409, %410 : vector<18x1xf32>
    %412 = vector.broadcast %404 : vector<18x1xf32> to vector<18x40xf32>
    %413 = arith.subf %396, %412 : vector<18x40xf32>
    %cst_178 = arith.constant 9.99999974E-6 : f32
    %414 = vector.broadcast %cst_178 : f32 to vector<18x1xf32>
    %415 = arith.addf %411, %414 : vector<18x1xf32>
    %416 = math.rsqrt %415 : vector<18x1xf32>
    %417 = vector.broadcast %416 : vector<18x1xf32> to vector<18x40xf32>
    %418 = arith.mulf %413, %417 : vector<18x40xf32>
    %419 = vector.broadcast %398 : vector<1x40xf32> to vector<18x40xf32>
    %420 = arith.mulf %418, %419 : vector<18x40xf32>
    %421 = vector.broadcast %400 : vector<1x40xf32> to vector<18x40xf32>
    %422 = arith.addf %420, %421 : vector<18x40xf32>
    %c2_179 = arith.constant 2 : index
    %c0_180 = arith.constant 0 : index
    %c0_181 = arith.constant 0 : index
    %423 = vector.load %arg6[%c2_179, %c0_180, %c0_181] : memref<4x40x120xf32, #tpu.memory_space<vmem>>, vector<1x40x120xf32>
    %424 = vector.shape_cast %423 : vector<1x40x120xf32> to vector<40x120xf32>
    %cst_182 = arith.constant dense<0.000000e+00> : vector<18x120xf32>
    %425 = tpu.matmul %422, %424, %cst_182 {dimension_numbers = #tpu.dot_dimension_numbers<[1], [0], [0], [1], [0, 0, 1, 1], [], []>} : vector<18x40xf32>, vector<40x120xf32>, vector<18x120xf32> -> vector<18x120xf32>
    %c2_183 = arith.constant 2 : index
    %c0_184 = arith.constant 0 : index
    %c0_185 = arith.constant 0 : index
    %426 = vector.load %arg7[%c2_183, %c0_184, %c0_185] : memref<4x1x120xf32, #tpu.memory_space<vmem>>, vector<1x1x120xf32>
    %427 = vector.shape_cast %426 : vector<1x1x120xf32> to vector<1x120xf32>
    %428 = vector.broadcast %427 : vector<1x120xf32> to vector<18x120xf32>
    %429 = arith.addf %425, %428 : vector<18x120xf32>
    %430 = vector.extract_strided_slice %429 {offsets = [0, 0], sizes = [18, 8], strides = [1, 1]} : vector<18x120xf32> to vector<18x8xf32>
    %431 = vector.extract_strided_slice %429 {offsets = [0, 40], sizes = [18, 8], strides = [1, 1]} : vector<18x120xf32> to vector<18x8xf32>
    %432 = vector.extract_strided_slice %429 {offsets = [0, 80], sizes = [18, 8], strides = [1, 1]} : vector<18x120xf32> to vector<18x8xf32>
    %cst_186 = arith.constant dense<0.000000e+00> : vector<18x18xf32>
    %433 = tpu.matmul %430, %431, %cst_186 {dimension_numbers = #tpu.dot_dimension_numbers<[1], [1], [0], [0], [0, 0, 1, 0], [], []>} : vector<18x8xf32>, vector<18x8xf32>, vector<18x18xf32> -> vector<18x18xf32>
    %cst_187 = arith.constant 0.353553385 : f32
    %434 = vector.broadcast %cst_187 : f32 to vector<18x18xf32>
    %435 = arith.mulf %433, %434 : vector<18x18xf32>
    %436 = arith.addf %435, %46 : vector<18x18xf32>
    %cst_188 = arith.constant dense<0xFF800000> : vector<18xf32>
    %437 = vector.multi_reduction <maximumf>, %436, %cst_188 [1] : vector<18x18xf32> to vector<18xf32>
    %438 = vector.shape_cast %437 : vector<18xf32> to vector<18x1xf32>
    %439 = vector.broadcast %438 : vector<18x1xf32> to vector<18x18xf32>
    %440 = arith.subf %436, %439 : vector<18x18xf32>
    %441 = math.exp %440 : vector<18x18xf32>
    %cst_189 = arith.constant dense<0.000000e+00> : vector<18xf32>
    %442 = vector.multi_reduction <add>, %441, %cst_189 [1] : vector<18x18xf32> to vector<18xf32>
    %443 = vector.shape_cast %442 : vector<18xf32> to vector<18x1xf32>
    %444 = tpu.reciprocal %443 {approx = true} : vector<18x1xf32> -> vector<18x1xf32>
    %445 = vector.broadcast %444 : vector<18x1xf32> to vector<18x18xf32>
    %446 = arith.mulf %441, %445 : vector<18x18xf32>
    %cst_190 = arith.constant dense<0.000000e+00> : vector<18x8xf32>
    %447 = tpu.matmul %446, %432, %cst_190 {dimension_numbers = #tpu.dot_dimension_numbers<[1], [0], [0], [1], [0, 0, 1, 1], [], []>} : vector<18x18xf32>, vector<18x8xf32>, vector<18x8xf32> -> vector<18x8xf32>
    %448 = vector.extract_strided_slice %429 {offsets = [0, 8], sizes = [18, 8], strides = [1, 1]} : vector<18x120xf32> to vector<18x8xf32>
    %449 = vector.extract_strided_slice %429 {offsets = [0, 48], sizes = [18, 8], strides = [1, 1]} : vector<18x120xf32> to vector<18x8xf32>
    %450 = vector.extract_strided_slice %429 {offsets = [0, 88], sizes = [18, 8], strides = [1, 1]} : vector<18x120xf32> to vector<18x8xf32>
    %cst_191 = arith.constant dense<0.000000e+00> : vector<18x18xf32>
    %451 = tpu.matmul %448, %449, %cst_191 {dimension_numbers = #tpu.dot_dimension_numbers<[1], [1], [0], [0], [0, 0, 1, 0], [], []>} : vector<18x8xf32>, vector<18x8xf32>, vector<18x18xf32> -> vector<18x18xf32>
    %cst_192 = arith.constant 0.353553385 : f32
    %452 = vector.broadcast %cst_192 : f32 to vector<18x18xf32>
    %453 = arith.mulf %451, %452 : vector<18x18xf32>
    %454 = arith.addf %453, %46 : vector<18x18xf32>
    %cst_193 = arith.constant dense<0xFF800000> : vector<18xf32>
    %455 = vector.multi_reduction <maximumf>, %454, %cst_193 [1] : vector<18x18xf32> to vector<18xf32>
    %456 = vector.shape_cast %455 : vector<18xf32> to vector<18x1xf32>
    %457 = vector.broadcast %456 : vector<18x1xf32> to vector<18x18xf32>
    %458 = arith.subf %454, %457 : vector<18x18xf32>
    %459 = math.exp %458 : vector<18x18xf32>
    %cst_194 = arith.constant dense<0.000000e+00> : vector<18xf32>
    %460 = vector.multi_reduction <add>, %459, %cst_194 [1] : vector<18x18xf32> to vector<18xf32>
    %461 = vector.shape_cast %460 : vector<18xf32> to vector<18x1xf32>
    %462 = tpu.reciprocal %461 {approx = true} : vector<18x1xf32> -> vector<18x1xf32>
    %463 = vector.broadcast %462 : vector<18x1xf32> to vector<18x18xf32>
    %464 = arith.mulf %459, %463 : vector<18x18xf32>
    %cst_195 = arith.constant dense<0.000000e+00> : vector<18x8xf32>
    %465 = tpu.matmul %464, %450, %cst_195 {dimension_numbers = #tpu.dot_dimension_numbers<[1], [0], [0], [1], [0, 0, 1, 1], [], []>} : vector<18x18xf32>, vector<18x8xf32>, vector<18x8xf32> -> vector<18x8xf32>
    %466 = vector.extract_strided_slice %429 {offsets = [0, 16], sizes = [18, 8], strides = [1, 1]} : vector<18x120xf32> to vector<18x8xf32>
    %467 = vector.extract_strided_slice %429 {offsets = [0, 56], sizes = [18, 8], strides = [1, 1]} : vector<18x120xf32> to vector<18x8xf32>
    %468 = vector.extract_strided_slice %429 {offsets = [0, 96], sizes = [18, 8], strides = [1, 1]} : vector<18x120xf32> to vector<18x8xf32>
    %cst_196 = arith.constant dense<0.000000e+00> : vector<18x18xf32>
    %469 = tpu.matmul %466, %467, %cst_196 {dimension_numbers = #tpu.dot_dimension_numbers<[1], [1], [0], [0], [0, 0, 1, 0], [], []>} : vector<18x8xf32>, vector<18x8xf32>, vector<18x18xf32> -> vector<18x18xf32>
    %cst_197 = arith.constant 0.353553385 : f32
    %470 = vector.broadcast %cst_197 : f32 to vector<18x18xf32>
    %471 = arith.mulf %469, %470 : vector<18x18xf32>
    %472 = arith.addf %471, %46 : vector<18x18xf32>
    %cst_198 = arith.constant dense<0xFF800000> : vector<18xf32>
    %473 = vector.multi_reduction <maximumf>, %472, %cst_198 [1] : vector<18x18xf32> to vector<18xf32>
    %474 = vector.shape_cast %473 : vector<18xf32> to vector<18x1xf32>
    %475 = vector.broadcast %474 : vector<18x1xf32> to vector<18x18xf32>
    %476 = arith.subf %472, %475 : vector<18x18xf32>
    %477 = math.exp %476 : vector<18x18xf32>
    %cst_199 = arith.constant dense<0.000000e+00> : vector<18xf32>
    %478 = vector.multi_reduction <add>, %477, %cst_199 [1] : vector<18x18xf32> to vector<18xf32>
    %479 = vector.shape_cast %478 : vector<18xf32> to vector<18x1xf32>
    %480 = tpu.reciprocal %479 {approx = true} : vector<18x1xf32> -> vector<18x1xf32>
    %481 = vector.broadcast %480 : vector<18x1xf32> to vector<18x18xf32>
    %482 = arith.mulf %477, %481 : vector<18x18xf32>
    %cst_200 = arith.constant dense<0.000000e+00> : vector<18x8xf32>
    %483 = tpu.matmul %482, %468, %cst_200 {dimension_numbers = #tpu.dot_dimension_numbers<[1], [0], [0], [1], [0, 0, 1, 1], [], []>} : vector<18x18xf32>, vector<18x8xf32>, vector<18x8xf32> -> vector<18x8xf32>
    %484 = vector.extract_strided_slice %429 {offsets = [0, 24], sizes = [18, 8], strides = [1, 1]} : vector<18x120xf32> to vector<18x8xf32>
    %485 = vector.extract_strided_slice %429 {offsets = [0, 64], sizes = [18, 8], strides = [1, 1]} : vector<18x120xf32> to vector<18x8xf32>
    %486 = vector.extract_strided_slice %429 {offsets = [0, 104], sizes = [18, 8], strides = [1, 1]} : vector<18x120xf32> to vector<18x8xf32>
    %cst_201 = arith.constant dense<0.000000e+00> : vector<18x18xf32>
    %487 = tpu.matmul %484, %485, %cst_201 {dimension_numbers = #tpu.dot_dimension_numbers<[1], [1], [0], [0], [0, 0, 1, 0], [], []>} : vector<18x8xf32>, vector<18x8xf32>, vector<18x18xf32> -> vector<18x18xf32>
    %cst_202 = arith.constant 0.353553385 : f32
    %488 = vector.broadcast %cst_202 : f32 to vector<18x18xf32>
    %489 = arith.mulf %487, %488 : vector<18x18xf32>
    %490 = arith.addf %489, %46 : vector<18x18xf32>
    %cst_203 = arith.constant dense<0xFF800000> : vector<18xf32>
    %491 = vector.multi_reduction <maximumf>, %490, %cst_203 [1] : vector<18x18xf32> to vector<18xf32>
    %492 = vector.shape_cast %491 : vector<18xf32> to vector<18x1xf32>
    %493 = vector.broadcast %492 : vector<18x1xf32> to vector<18x18xf32>
    %494 = arith.subf %490, %493 : vector<18x18xf32>
    %495 = math.exp %494 : vector<18x18xf32>
    %cst_204 = arith.constant dense<0.000000e+00> : vector<18xf32>
    %496 = vector.multi_reduction <add>, %495, %cst_204 [1] : vector<18x18xf32> to vector<18xf32>
    %497 = vector.shape_cast %496 : vector<18xf32> to vector<18x1xf32>
    %498 = tpu.reciprocal %497 {approx = true} : vector<18x1xf32> -> vector<18x1xf32>
    %499 = vector.broadcast %498 : vector<18x1xf32> to vector<18x18xf32>
    %500 = arith.mulf %495, %499 : vector<18x18xf32>
    %cst_205 = arith.constant dense<0.000000e+00> : vector<18x8xf32>
    %501 = tpu.matmul %500, %486, %cst_205 {dimension_numbers = #tpu.dot_dimension_numbers<[1], [0], [0], [1], [0, 0, 1, 1], [], []>} : vector<18x18xf32>, vector<18x8xf32>, vector<18x8xf32> -> vector<18x8xf32>
    %502 = vector.extract_strided_slice %429 {offsets = [0, 32], sizes = [18, 8], strides = [1, 1]} : vector<18x120xf32> to vector<18x8xf32>
    %503 = vector.extract_strided_slice %429 {offsets = [0, 72], sizes = [18, 8], strides = [1, 1]} : vector<18x120xf32> to vector<18x8xf32>
    %504 = vector.extract_strided_slice %429 {offsets = [0, 112], sizes = [18, 8], strides = [1, 1]} : vector<18x120xf32> to vector<18x8xf32>
    %cst_206 = arith.constant dense<0.000000e+00> : vector<18x18xf32>
    %505 = tpu.matmul %502, %503, %cst_206 {dimension_numbers = #tpu.dot_dimension_numbers<[1], [1], [0], [0], [0, 0, 1, 0], [], []>} : vector<18x8xf32>, vector<18x8xf32>, vector<18x18xf32> -> vector<18x18xf32>
    %cst_207 = arith.constant 0.353553385 : f32
    %506 = vector.broadcast %cst_207 : f32 to vector<18x18xf32>
    %507 = arith.mulf %505, %506 : vector<18x18xf32>
    %508 = arith.addf %507, %46 : vector<18x18xf32>
    %cst_208 = arith.constant dense<0xFF800000> : vector<18xf32>
    %509 = vector.multi_reduction <maximumf>, %508, %cst_208 [1] : vector<18x18xf32> to vector<18xf32>
    %510 = vector.shape_cast %509 : vector<18xf32> to vector<18x1xf32>
    %511 = vector.broadcast %510 : vector<18x1xf32> to vector<18x18xf32>
    %512 = arith.subf %508, %511 : vector<18x18xf32>
    %513 = math.exp %512 : vector<18x18xf32>
    %cst_209 = arith.constant dense<0.000000e+00> : vector<18xf32>
    %514 = vector.multi_reduction <add>, %513, %cst_209 [1] : vector<18x18xf32> to vector<18xf32>
    %515 = vector.shape_cast %514 : vector<18xf32> to vector<18x1xf32>
    %516 = tpu.reciprocal %515 {approx = true} : vector<18x1xf32> -> vector<18x1xf32>
    %517 = vector.broadcast %516 : vector<18x1xf32> to vector<18x18xf32>
    %518 = arith.mulf %513, %517 : vector<18x18xf32>
    %cst_210 = arith.constant dense<0.000000e+00> : vector<18x8xf32>
    %519 = tpu.matmul %518, %504, %cst_210 {dimension_numbers = #tpu.dot_dimension_numbers<[1], [0], [0], [1], [0, 0, 1, 1], [], []>} : vector<18x18xf32>, vector<18x8xf32>, vector<18x8xf32> -> vector<18x8xf32>
    %520 = tpu.concatenate %447, %465, %483, %501, %519 in 1 : vector<18x8xf32>, vector<18x8xf32>, vector<18x8xf32>, vector<18x8xf32>, vector<18x8xf32> -> vector<18x40xf32>
    %c2_211 = arith.constant 2 : index
    %c0_212 = arith.constant 0 : index
    %c0_213 = arith.constant 0 : index
    %521 = vector.load %arg8[%c2_211, %c0_212, %c0_213] : memref<4x40x40xf32, #tpu.memory_space<vmem>>, vector<1x40x40xf32>
    %522 = vector.shape_cast %521 : vector<1x40x40xf32> to vector<40x40xf32>
    %cst_214 = arith.constant dense<0.000000e+00> : vector<18x40xf32>
    %523 = tpu.matmul %520, %522, %cst_214 {dimension_numbers = #tpu.dot_dimension_numbers<[1], [0], [0], [1], [0, 0, 1, 1], [], []>} : vector<18x40xf32>, vector<40x40xf32>, vector<18x40xf32> -> vector<18x40xf32>
    %524 = arith.addf %396, %523 : vector<18x40xf32>
    %c2_215 = arith.constant 2 : index
    %c0_216 = arith.constant 0 : index
    %c0_217 = arith.constant 0 : index
    %525 = vector.load %arg9[%c2_215, %c0_216, %c0_217] : memref<4x1x40xf32, #tpu.memory_space<vmem>>, vector<1x1x40xf32>
    %526 = vector.shape_cast %525 : vector<1x1x40xf32> to vector<1x40xf32>
    %527 = vector.broadcast %526 : vector<1x40xf32> to vector<18x40xf32>
    %528 = arith.addf %524, %527 : vector<18x40xf32>
    %c2_218 = arith.constant 2 : index
    %c0_219 = arith.constant 0 : index
    %c0_220 = arith.constant 0 : index
    %529 = vector.load %arg12[%c2_218, %c0_219, %c0_220] : memref<4x1x40xf32, #tpu.memory_space<vmem>>, vector<1x1x40xf32>
    %530 = vector.shape_cast %529 : vector<1x1x40xf32> to vector<1x40xf32>
    %c2_221 = arith.constant 2 : index
    %c0_222 = arith.constant 0 : index
    %c0_223 = arith.constant 0 : index
    %531 = vector.load %arg13[%c2_221, %c0_222, %c0_223] : memref<4x1x40xf32, #tpu.memory_space<vmem>>, vector<1x1x40xf32>
    %532 = vector.shape_cast %531 : vector<1x1x40xf32> to vector<1x40xf32>
    %cst_224 = arith.constant dense<0.000000e+00> : vector<18xf32>
    %533 = vector.multi_reduction <add>, %528, %cst_224 [1] : vector<18x40xf32> to vector<18xf32>
    %534 = vector.shape_cast %533 : vector<18xf32> to vector<18x1xf32>
    %cst_225 = arith.constant 4.000000e+01 : f32
    %535 = vector.broadcast %cst_225 : f32 to vector<18x1xf32>
    %536 = arith.divf %534, %535 : vector<18x1xf32>
    %537 = vector.broadcast %536 : vector<18x1xf32> to vector<18x40xf32>
    %538 = arith.subf %528, %537 : vector<18x40xf32>
    %539 = arith.mulf %538, %538 : vector<18x40xf32>
    %cst_226 = arith.constant dense<0.000000e+00> : vector<18xf32>
    %540 = vector.multi_reduction <add>, %539, %cst_226 [1] : vector<18x40xf32> to vector<18xf32>
    %541 = vector.shape_cast %540 : vector<18xf32> to vector<18x1xf32>
    %cst_227 = arith.constant 4.000000e+01 : f32
    %542 = vector.broadcast %cst_227 : f32 to vector<18x1xf32>
    %543 = arith.divf %541, %542 : vector<18x1xf32>
    %544 = vector.broadcast %536 : vector<18x1xf32> to vector<18x40xf32>
    %545 = arith.subf %528, %544 : vector<18x40xf32>
    %cst_228 = arith.constant 9.99999974E-6 : f32
    %546 = vector.broadcast %cst_228 : f32 to vector<18x1xf32>
    %547 = arith.addf %543, %546 : vector<18x1xf32>
    %548 = math.rsqrt %547 : vector<18x1xf32>
    %549 = vector.broadcast %548 : vector<18x1xf32> to vector<18x40xf32>
    %550 = arith.mulf %545, %549 : vector<18x40xf32>
    %551 = vector.broadcast %530 : vector<1x40xf32> to vector<18x40xf32>
    %552 = arith.mulf %550, %551 : vector<18x40xf32>
    %553 = vector.broadcast %532 : vector<1x40xf32> to vector<18x40xf32>
    %554 = arith.addf %552, %553 : vector<18x40xf32>
    %c2_229 = arith.constant 2 : index
    %c0_230 = arith.constant 0 : index
    %c0_231 = arith.constant 0 : index
    %555 = vector.load %arg14[%c2_229, %c0_230, %c0_231] : memref<4x40x128xf32, #tpu.memory_space<vmem>>, vector<1x40x128xf32>
    %556 = vector.shape_cast %555 : vector<1x40x128xf32> to vector<40x128xf32>
    %cst_232 = arith.constant dense<0.000000e+00> : vector<18x128xf32>
    %557 = tpu.matmul %554, %556, %cst_232 {dimension_numbers = #tpu.dot_dimension_numbers<[1], [0], [0], [1], [0, 0, 1, 1], [], []>} : vector<18x40xf32>, vector<40x128xf32>, vector<18x128xf32> -> vector<18x128xf32>
    %c2_233 = arith.constant 2 : index
    %c0_234 = arith.constant 0 : index
    %c0_235 = arith.constant 0 : index
    %558 = vector.load %arg15[%c2_233, %c0_234, %c0_235] : memref<4x1x128xf32, #tpu.memory_space<vmem>>, vector<1x1x128xf32>
    %559 = vector.shape_cast %558 : vector<1x1x128xf32> to vector<1x128xf32>
    %560 = vector.broadcast %559 : vector<1x128xf32> to vector<18x128xf32>
    %561 = arith.addf %557, %560 : vector<18x128xf32>
    %cst_236 = arith.constant 0.000000e+00 : f32
    %562 = vector.broadcast %cst_236 : f32 to vector<18x128xf32>
    %563 = arith.maximumf %561, %562 : vector<18x128xf32>
    %c2_237 = arith.constant 2 : index
    %c0_238 = arith.constant 0 : index
    %c0_239 = arith.constant 0 : index
    %564 = vector.load %arg16[%c2_237, %c0_238, %c0_239] : memref<4x128x40xf32, #tpu.memory_space<vmem>>, vector<1x128x40xf32>
    %565 = vector.shape_cast %564 : vector<1x128x40xf32> to vector<128x40xf32>
    %cst_240 = arith.constant dense<0.000000e+00> : vector<18x40xf32>
    %566 = tpu.matmul %563, %565, %cst_240 {dimension_numbers = #tpu.dot_dimension_numbers<[1], [0], [0], [1], [0, 0, 1, 1], [], []>} : vector<18x128xf32>, vector<128x40xf32>, vector<18x40xf32> -> vector<18x40xf32>
    %567 = arith.addf %528, %566 : vector<18x40xf32>
    %c2_241 = arith.constant 2 : index
    %c0_242 = arith.constant 0 : index
    %c0_243 = arith.constant 0 : index
    %568 = vector.load %arg17[%c2_241, %c0_242, %c0_243] : memref<4x1x40xf32, #tpu.memory_space<vmem>>, vector<1x1x40xf32>
    %569 = vector.shape_cast %568 : vector<1x1x40xf32> to vector<1x40xf32>
    %570 = vector.broadcast %569 : vector<1x40xf32> to vector<18x40xf32>
    %571 = arith.addf %567, %570 : vector<18x40xf32>
    %c3 = arith.constant 3 : index
    %c0_244 = arith.constant 0 : index
    %c0_245 = arith.constant 0 : index
    %572 = vector.load %arg10[%c3, %c0_244, %c0_245] : memref<4x1x40xf32, #tpu.memory_space<vmem>>, vector<1x1x40xf32>
    %573 = vector.shape_cast %572 : vector<1x1x40xf32> to vector<1x40xf32>
    %c3_246 = arith.constant 3 : index
    %c0_247 = arith.constant 0 : index
    %c0_248 = arith.constant 0 : index
    %574 = vector.load %arg11[%c3_246, %c0_247, %c0_248] : memref<4x1x40xf32, #tpu.memory_space<vmem>>, vector<1x1x40xf32>
    %575 = vector.shape_cast %574 : vector<1x1x40xf32> to vector<1x40xf32>
    %cst_249 = arith.constant dense<0.000000e+00> : vector<18xf32>
    %576 = vector.multi_reduction <add>, %571, %cst_249 [1] : vector<18x40xf32> to vector<18xf32>
    %577 = vector.shape_cast %576 : vector<18xf32> to vector<18x1xf32>
    %cst_250 = arith.constant 4.000000e+01 : f32
    %578 = vector.broadcast %cst_250 : f32 to vector<18x1xf32>
    %579 = arith.divf %577, %578 : vector<18x1xf32>
    %580 = vector.broadcast %579 : vector<18x1xf32> to vector<18x40xf32>
    %581 = arith.subf %571, %580 : vector<18x40xf32>
    %582 = arith.mulf %581, %581 : vector<18x40xf32>
    %cst_251 = arith.constant dense<0.000000e+00> : vector<18xf32>
    %583 = vector.multi_reduction <add>, %582, %cst_251 [1] : vector<18x40xf32> to vector<18xf32>
    %584 = vector.shape_cast %583 : vector<18xf32> to vector<18x1xf32>
    %cst_252 = arith.constant 4.000000e+01 : f32
    %585 = vector.broadcast %cst_252 : f32 to vector<18x1xf32>
    %586 = arith.divf %584, %585 : vector<18x1xf32>
    %587 = vector.broadcast %579 : vector<18x1xf32> to vector<18x40xf32>
    %588 = arith.subf %571, %587 : vector<18x40xf32>
    %cst_253 = arith.constant 9.99999974E-6 : f32
    %589 = vector.broadcast %cst_253 : f32 to vector<18x1xf32>
    %590 = arith.addf %586, %589 : vector<18x1xf32>
    %591 = math.rsqrt %590 : vector<18x1xf32>
    %592 = vector.broadcast %591 : vector<18x1xf32> to vector<18x40xf32>
    %593 = arith.mulf %588, %592 : vector<18x40xf32>
    %594 = vector.broadcast %573 : vector<1x40xf32> to vector<18x40xf32>
    %595 = arith.mulf %593, %594 : vector<18x40xf32>
    %596 = vector.broadcast %575 : vector<1x40xf32> to vector<18x40xf32>
    %597 = arith.addf %595, %596 : vector<18x40xf32>
    %c3_254 = arith.constant 3 : index
    %c0_255 = arith.constant 0 : index
    %c0_256 = arith.constant 0 : index
    %598 = vector.load %arg6[%c3_254, %c0_255, %c0_256] : memref<4x40x120xf32, #tpu.memory_space<vmem>>, vector<1x40x120xf32>
    %599 = vector.shape_cast %598 : vector<1x40x120xf32> to vector<40x120xf32>
    %cst_257 = arith.constant dense<0.000000e+00> : vector<18x120xf32>
    %600 = tpu.matmul %597, %599, %cst_257 {dimension_numbers = #tpu.dot_dimension_numbers<[1], [0], [0], [1], [0, 0, 1, 1], [], []>} : vector<18x40xf32>, vector<40x120xf32>, vector<18x120xf32> -> vector<18x120xf32>
    %c3_258 = arith.constant 3 : index
    %c0_259 = arith.constant 0 : index
    %c0_260 = arith.constant 0 : index
    %601 = vector.load %arg7[%c3_258, %c0_259, %c0_260] : memref<4x1x120xf32, #tpu.memory_space<vmem>>, vector<1x1x120xf32>
    %602 = vector.shape_cast %601 : vector<1x1x120xf32> to vector<1x120xf32>
    %603 = vector.broadcast %602 : vector<1x120xf32> to vector<18x120xf32>
    %604 = arith.addf %600, %603 : vector<18x120xf32>
    %605 = vector.extract_strided_slice %604 {offsets = [0, 0], sizes = [18, 8], strides = [1, 1]} : vector<18x120xf32> to vector<18x8xf32>
    %606 = vector.extract_strided_slice %604 {offsets = [0, 40], sizes = [18, 8], strides = [1, 1]} : vector<18x120xf32> to vector<18x8xf32>
    %607 = vector.extract_strided_slice %604 {offsets = [0, 80], sizes = [18, 8], strides = [1, 1]} : vector<18x120xf32> to vector<18x8xf32>
    %cst_261 = arith.constant dense<0.000000e+00> : vector<18x18xf32>
    %608 = tpu.matmul %605, %606, %cst_261 {dimension_numbers = #tpu.dot_dimension_numbers<[1], [1], [0], [0], [0, 0, 1, 0], [], []>} : vector<18x8xf32>, vector<18x8xf32>, vector<18x18xf32> -> vector<18x18xf32>
    %cst_262 = arith.constant 0.353553385 : f32
    %609 = vector.broadcast %cst_262 : f32 to vector<18x18xf32>
    %610 = arith.mulf %608, %609 : vector<18x18xf32>
    %611 = arith.addf %610, %46 : vector<18x18xf32>
    %cst_263 = arith.constant dense<0xFF800000> : vector<18xf32>
    %612 = vector.multi_reduction <maximumf>, %611, %cst_263 [1] : vector<18x18xf32> to vector<18xf32>
    %613 = vector.shape_cast %612 : vector<18xf32> to vector<18x1xf32>
    %614 = vector.broadcast %613 : vector<18x1xf32> to vector<18x18xf32>
    %615 = arith.subf %611, %614 : vector<18x18xf32>
    %616 = math.exp %615 : vector<18x18xf32>
    %cst_264 = arith.constant dense<0.000000e+00> : vector<18xf32>
    %617 = vector.multi_reduction <add>, %616, %cst_264 [1] : vector<18x18xf32> to vector<18xf32>
    %618 = vector.shape_cast %617 : vector<18xf32> to vector<18x1xf32>
    %619 = tpu.reciprocal %618 {approx = true} : vector<18x1xf32> -> vector<18x1xf32>
    %620 = vector.broadcast %619 : vector<18x1xf32> to vector<18x18xf32>
    %621 = arith.mulf %616, %620 : vector<18x18xf32>
    %cst_265 = arith.constant dense<0.000000e+00> : vector<18x8xf32>
    %622 = tpu.matmul %621, %607, %cst_265 {dimension_numbers = #tpu.dot_dimension_numbers<[1], [0], [0], [1], [0, 0, 1, 1], [], []>} : vector<18x18xf32>, vector<18x8xf32>, vector<18x8xf32> -> vector<18x8xf32>
    %623 = vector.extract_strided_slice %604 {offsets = [0, 8], sizes = [18, 8], strides = [1, 1]} : vector<18x120xf32> to vector<18x8xf32>
    %624 = vector.extract_strided_slice %604 {offsets = [0, 48], sizes = [18, 8], strides = [1, 1]} : vector<18x120xf32> to vector<18x8xf32>
    %625 = vector.extract_strided_slice %604 {offsets = [0, 88], sizes = [18, 8], strides = [1, 1]} : vector<18x120xf32> to vector<18x8xf32>
    %cst_266 = arith.constant dense<0.000000e+00> : vector<18x18xf32>
    %626 = tpu.matmul %623, %624, %cst_266 {dimension_numbers = #tpu.dot_dimension_numbers<[1], [1], [0], [0], [0, 0, 1, 0], [], []>} : vector<18x8xf32>, vector<18x8xf32>, vector<18x18xf32> -> vector<18x18xf32>
    %cst_267 = arith.constant 0.353553385 : f32
    %627 = vector.broadcast %cst_267 : f32 to vector<18x18xf32>
    %628 = arith.mulf %626, %627 : vector<18x18xf32>
    %629 = arith.addf %628, %46 : vector<18x18xf32>
    %cst_268 = arith.constant dense<0xFF800000> : vector<18xf32>
    %630 = vector.multi_reduction <maximumf>, %629, %cst_268 [1] : vector<18x18xf32> to vector<18xf32>
    %631 = vector.shape_cast %630 : vector<18xf32> to vector<18x1xf32>
    %632 = vector.broadcast %631 : vector<18x1xf32> to vector<18x18xf32>
    %633 = arith.subf %629, %632 : vector<18x18xf32>
    %634 = math.exp %633 : vector<18x18xf32>
    %cst_269 = arith.constant dense<0.000000e+00> : vector<18xf32>
    %635 = vector.multi_reduction <add>, %634, %cst_269 [1] : vector<18x18xf32> to vector<18xf32>
    %636 = vector.shape_cast %635 : vector<18xf32> to vector<18x1xf32>
    %637 = tpu.reciprocal %636 {approx = true} : vector<18x1xf32> -> vector<18x1xf32>
    %638 = vector.broadcast %637 : vector<18x1xf32> to vector<18x18xf32>
    %639 = arith.mulf %634, %638 : vector<18x18xf32>
    %cst_270 = arith.constant dense<0.000000e+00> : vector<18x8xf32>
    %640 = tpu.matmul %639, %625, %cst_270 {dimension_numbers = #tpu.dot_dimension_numbers<[1], [0], [0], [1], [0, 0, 1, 1], [], []>} : vector<18x18xf32>, vector<18x8xf32>, vector<18x8xf32> -> vector<18x8xf32>
    %641 = vector.extract_strided_slice %604 {offsets = [0, 16], sizes = [18, 8], strides = [1, 1]} : vector<18x120xf32> to vector<18x8xf32>
    %642 = vector.extract_strided_slice %604 {offsets = [0, 56], sizes = [18, 8], strides = [1, 1]} : vector<18x120xf32> to vector<18x8xf32>
    %643 = vector.extract_strided_slice %604 {offsets = [0, 96], sizes = [18, 8], strides = [1, 1]} : vector<18x120xf32> to vector<18x8xf32>
    %cst_271 = arith.constant dense<0.000000e+00> : vector<18x18xf32>
    %644 = tpu.matmul %641, %642, %cst_271 {dimension_numbers = #tpu.dot_dimension_numbers<[1], [1], [0], [0], [0, 0, 1, 0], [], []>} : vector<18x8xf32>, vector<18x8xf32>, vector<18x18xf32> -> vector<18x18xf32>
    %cst_272 = arith.constant 0.353553385 : f32
    %645 = vector.broadcast %cst_272 : f32 to vector<18x18xf32>
    %646 = arith.mulf %644, %645 : vector<18x18xf32>
    %647 = arith.addf %646, %46 : vector<18x18xf32>
    %cst_273 = arith.constant dense<0xFF800000> : vector<18xf32>
    %648 = vector.multi_reduction <maximumf>, %647, %cst_273 [1] : vector<18x18xf32> to vector<18xf32>
    %649 = vector.shape_cast %648 : vector<18xf32> to vector<18x1xf32>
    %650 = vector.broadcast %649 : vector<18x1xf32> to vector<18x18xf32>
    %651 = arith.subf %647, %650 : vector<18x18xf32>
    %652 = math.exp %651 : vector<18x18xf32>
    %cst_274 = arith.constant dense<0.000000e+00> : vector<18xf32>
    %653 = vector.multi_reduction <add>, %652, %cst_274 [1] : vector<18x18xf32> to vector<18xf32>
    %654 = vector.shape_cast %653 : vector<18xf32> to vector<18x1xf32>
    %655 = tpu.reciprocal %654 {approx = true} : vector<18x1xf32> -> vector<18x1xf32>
    %656 = vector.broadcast %655 : vector<18x1xf32> to vector<18x18xf32>
    %657 = arith.mulf %652, %656 : vector<18x18xf32>
    %cst_275 = arith.constant dense<0.000000e+00> : vector<18x8xf32>
    %658 = tpu.matmul %657, %643, %cst_275 {dimension_numbers = #tpu.dot_dimension_numbers<[1], [0], [0], [1], [0, 0, 1, 1], [], []>} : vector<18x18xf32>, vector<18x8xf32>, vector<18x8xf32> -> vector<18x8xf32>
    %659 = vector.extract_strided_slice %604 {offsets = [0, 24], sizes = [18, 8], strides = [1, 1]} : vector<18x120xf32> to vector<18x8xf32>
    %660 = vector.extract_strided_slice %604 {offsets = [0, 64], sizes = [18, 8], strides = [1, 1]} : vector<18x120xf32> to vector<18x8xf32>
    %661 = vector.extract_strided_slice %604 {offsets = [0, 104], sizes = [18, 8], strides = [1, 1]} : vector<18x120xf32> to vector<18x8xf32>
    %cst_276 = arith.constant dense<0.000000e+00> : vector<18x18xf32>
    %662 = tpu.matmul %659, %660, %cst_276 {dimension_numbers = #tpu.dot_dimension_numbers<[1], [1], [0], [0], [0, 0, 1, 0], [], []>} : vector<18x8xf32>, vector<18x8xf32>, vector<18x18xf32> -> vector<18x18xf32>
    %cst_277 = arith.constant 0.353553385 : f32
    %663 = vector.broadcast %cst_277 : f32 to vector<18x18xf32>
    %664 = arith.mulf %662, %663 : vector<18x18xf32>
    %665 = arith.addf %664, %46 : vector<18x18xf32>
    %cst_278 = arith.constant dense<0xFF800000> : vector<18xf32>
    %666 = vector.multi_reduction <maximumf>, %665, %cst_278 [1] : vector<18x18xf32> to vector<18xf32>
    %667 = vector.shape_cast %666 : vector<18xf32> to vector<18x1xf32>
    %668 = vector.broadcast %667 : vector<18x1xf32> to vector<18x18xf32>
    %669 = arith.subf %665, %668 : vector<18x18xf32>
    %670 = math.exp %669 : vector<18x18xf32>
    %cst_279 = arith.constant dense<0.000000e+00> : vector<18xf32>
    %671 = vector.multi_reduction <add>, %670, %cst_279 [1] : vector<18x18xf32> to vector<18xf32>
    %672 = vector.shape_cast %671 : vector<18xf32> to vector<18x1xf32>
    %673 = tpu.reciprocal %672 {approx = true} : vector<18x1xf32> -> vector<18x1xf32>
    %674 = vector.broadcast %673 : vector<18x1xf32> to vector<18x18xf32>
    %675 = arith.mulf %670, %674 : vector<18x18xf32>
    %cst_280 = arith.constant dense<0.000000e+00> : vector<18x8xf32>
    %676 = tpu.matmul %675, %661, %cst_280 {dimension_numbers = #tpu.dot_dimension_numbers<[1], [0], [0], [1], [0, 0, 1, 1], [], []>} : vector<18x18xf32>, vector<18x8xf32>, vector<18x8xf32> -> vector<18x8xf32>
    %677 = vector.extract_strided_slice %604 {offsets = [0, 32], sizes = [18, 8], strides = [1, 1]} : vector<18x120xf32> to vector<18x8xf32>
    %678 = vector.extract_strided_slice %604 {offsets = [0, 72], sizes = [18, 8], strides = [1, 1]} : vector<18x120xf32> to vector<18x8xf32>
    %679 = vector.extract_strided_slice %604 {offsets = [0, 112], sizes = [18, 8], strides = [1, 1]} : vector<18x120xf32> to vector<18x8xf32>
    %cst_281 = arith.constant dense<0.000000e+00> : vector<18x18xf32>
    %680 = tpu.matmul %677, %678, %cst_281 {dimension_numbers = #tpu.dot_dimension_numbers<[1], [1], [0], [0], [0, 0, 1, 0], [], []>} : vector<18x8xf32>, vector<18x8xf32>, vector<18x18xf32> -> vector<18x18xf32>
    %cst_282 = arith.constant 0.353553385 : f32
    %681 = vector.broadcast %cst_282 : f32 to vector<18x18xf32>
    %682 = arith.mulf %680, %681 : vector<18x18xf32>
    %683 = arith.addf %682, %46 : vector<18x18xf32>
    %cst_283 = arith.constant dense<0xFF800000> : vector<18xf32>
    %684 = vector.multi_reduction <maximumf>, %683, %cst_283 [1] : vector<18x18xf32> to vector<18xf32>
    %685 = vector.shape_cast %684 : vector<18xf32> to vector<18x1xf32>
    %686 = vector.broadcast %685 : vector<18x1xf32> to vector<18x18xf32>
    %687 = arith.subf %683, %686 : vector<18x18xf32>
    %688 = math.exp %687 : vector<18x18xf32>
    %cst_284 = arith.constant dense<0.000000e+00> : vector<18xf32>
    %689 = vector.multi_reduction <add>, %688, %cst_284 [1] : vector<18x18xf32> to vector<18xf32>
    %690 = vector.shape_cast %689 : vector<18xf32> to vector<18x1xf32>
    %691 = tpu.reciprocal %690 {approx = true} : vector<18x1xf32> -> vector<18x1xf32>
    %692 = vector.broadcast %691 : vector<18x1xf32> to vector<18x18xf32>
    %693 = arith.mulf %688, %692 : vector<18x18xf32>
    %cst_285 = arith.constant dense<0.000000e+00> : vector<18x8xf32>
    %694 = tpu.matmul %693, %679, %cst_285 {dimension_numbers = #tpu.dot_dimension_numbers<[1], [0], [0], [1], [0, 0, 1, 1], [], []>} : vector<18x18xf32>, vector<18x8xf32>, vector<18x8xf32> -> vector<18x8xf32>
    %695 = tpu.concatenate %622, %640, %658, %676, %694 in 1 : vector<18x8xf32>, vector<18x8xf32>, vector<18x8xf32>, vector<18x8xf32>, vector<18x8xf32> -> vector<18x40xf32>
    %c3_286 = arith.constant 3 : index
    %c0_287 = arith.constant 0 : index
    %c0_288 = arith.constant 0 : index
    %696 = vector.load %arg8[%c3_286, %c0_287, %c0_288] : memref<4x40x40xf32, #tpu.memory_space<vmem>>, vector<1x40x40xf32>
    %697 = vector.shape_cast %696 : vector<1x40x40xf32> to vector<40x40xf32>
    %cst_289 = arith.constant dense<0.000000e+00> : vector<18x40xf32>
    %698 = tpu.matmul %695, %697, %cst_289 {dimension_numbers = #tpu.dot_dimension_numbers<[1], [0], [0], [1], [0, 0, 1, 1], [], []>} : vector<18x40xf32>, vector<40x40xf32>, vector<18x40xf32> -> vector<18x40xf32>
    %699 = arith.addf %571, %698 : vector<18x40xf32>
    %c3_290 = arith.constant 3 : index
    %c0_291 = arith.constant 0 : index
    %c0_292 = arith.constant 0 : index
    %700 = vector.load %arg9[%c3_290, %c0_291, %c0_292] : memref<4x1x40xf32, #tpu.memory_space<vmem>>, vector<1x1x40xf32>
    %701 = vector.shape_cast %700 : vector<1x1x40xf32> to vector<1x40xf32>
    %702 = vector.broadcast %701 : vector<1x40xf32> to vector<18x40xf32>
    %703 = arith.addf %699, %702 : vector<18x40xf32>
    %c3_293 = arith.constant 3 : index
    %c0_294 = arith.constant 0 : index
    %c0_295 = arith.constant 0 : index
    %704 = vector.load %arg12[%c3_293, %c0_294, %c0_295] : memref<4x1x40xf32, #tpu.memory_space<vmem>>, vector<1x1x40xf32>
    %705 = vector.shape_cast %704 : vector<1x1x40xf32> to vector<1x40xf32>
    %c3_296 = arith.constant 3 : index
    %c0_297 = arith.constant 0 : index
    %c0_298 = arith.constant 0 : index
    %706 = vector.load %arg13[%c3_296, %c0_297, %c0_298] : memref<4x1x40xf32, #tpu.memory_space<vmem>>, vector<1x1x40xf32>
    %707 = vector.shape_cast %706 : vector<1x1x40xf32> to vector<1x40xf32>
    %cst_299 = arith.constant dense<0.000000e+00> : vector<18xf32>
    %708 = vector.multi_reduction <add>, %703, %cst_299 [1] : vector<18x40xf32> to vector<18xf32>
    %709 = vector.shape_cast %708 : vector<18xf32> to vector<18x1xf32>
    %cst_300 = arith.constant 4.000000e+01 : f32
    %710 = vector.broadcast %cst_300 : f32 to vector<18x1xf32>
    %711 = arith.divf %709, %710 : vector<18x1xf32>
    %712 = vector.broadcast %711 : vector<18x1xf32> to vector<18x40xf32>
    %713 = arith.subf %703, %712 : vector<18x40xf32>
    %714 = arith.mulf %713, %713 : vector<18x40xf32>
    %cst_301 = arith.constant dense<0.000000e+00> : vector<18xf32>
    %715 = vector.multi_reduction <add>, %714, %cst_301 [1] : vector<18x40xf32> to vector<18xf32>
    %716 = vector.shape_cast %715 : vector<18xf32> to vector<18x1xf32>
    %cst_302 = arith.constant 4.000000e+01 : f32
    %717 = vector.broadcast %cst_302 : f32 to vector<18x1xf32>
    %718 = arith.divf %716, %717 : vector<18x1xf32>
    %719 = vector.broadcast %711 : vector<18x1xf32> to vector<18x40xf32>
    %720 = arith.subf %703, %719 : vector<18x40xf32>
    %cst_303 = arith.constant 9.99999974E-6 : f32
    %721 = vector.broadcast %cst_303 : f32 to vector<18x1xf32>
    %722 = arith.addf %718, %721 : vector<18x1xf32>
    %723 = math.rsqrt %722 : vector<18x1xf32>
    %724 = vector.broadcast %723 : vector<18x1xf32> to vector<18x40xf32>
    %725 = arith.mulf %720, %724 : vector<18x40xf32>
    %726 = vector.broadcast %705 : vector<1x40xf32> to vector<18x40xf32>
    %727 = arith.mulf %725, %726 : vector<18x40xf32>
    %728 = vector.broadcast %707 : vector<1x40xf32> to vector<18x40xf32>
    %729 = arith.addf %727, %728 : vector<18x40xf32>
    %c3_304 = arith.constant 3 : index
    %c0_305 = arith.constant 0 : index
    %c0_306 = arith.constant 0 : index
    %730 = vector.load %arg14[%c3_304, %c0_305, %c0_306] : memref<4x40x128xf32, #tpu.memory_space<vmem>>, vector<1x40x128xf32>
    %731 = vector.shape_cast %730 : vector<1x40x128xf32> to vector<40x128xf32>
    %cst_307 = arith.constant dense<0.000000e+00> : vector<18x128xf32>
    %732 = tpu.matmul %729, %731, %cst_307 {dimension_numbers = #tpu.dot_dimension_numbers<[1], [0], [0], [1], [0, 0, 1, 1], [], []>} : vector<18x40xf32>, vector<40x128xf32>, vector<18x128xf32> -> vector<18x128xf32>
    %c3_308 = arith.constant 3 : index
    %c0_309 = arith.constant 0 : index
    %c0_310 = arith.constant 0 : index
    %733 = vector.load %arg15[%c3_308, %c0_309, %c0_310] : memref<4x1x128xf32, #tpu.memory_space<vmem>>, vector<1x1x128xf32>
    %734 = vector.shape_cast %733 : vector<1x1x128xf32> to vector<1x128xf32>
    %735 = vector.broadcast %734 : vector<1x128xf32> to vector<18x128xf32>
    %736 = arith.addf %732, %735 : vector<18x128xf32>
    %cst_311 = arith.constant 0.000000e+00 : f32
    %737 = vector.broadcast %cst_311 : f32 to vector<18x128xf32>
    %738 = arith.maximumf %736, %737 : vector<18x128xf32>
    %c3_312 = arith.constant 3 : index
    %c0_313 = arith.constant 0 : index
    %c0_314 = arith.constant 0 : index
    %739 = vector.load %arg16[%c3_312, %c0_313, %c0_314] : memref<4x128x40xf32, #tpu.memory_space<vmem>>, vector<1x128x40xf32>
    %740 = vector.shape_cast %739 : vector<1x128x40xf32> to vector<128x40xf32>
    %cst_315 = arith.constant dense<0.000000e+00> : vector<18x40xf32>
    %741 = tpu.matmul %738, %740, %cst_315 {dimension_numbers = #tpu.dot_dimension_numbers<[1], [0], [0], [1], [0, 0, 1, 1], [], []>} : vector<18x128xf32>, vector<128x40xf32>, vector<18x40xf32> -> vector<18x40xf32>
    %742 = arith.addf %703, %741 : vector<18x40xf32>
    %c3_316 = arith.constant 3 : index
    %c0_317 = arith.constant 0 : index
    %c0_318 = arith.constant 0 : index
    %743 = vector.load %arg17[%c3_316, %c0_317, %c0_318] : memref<4x1x40xf32, #tpu.memory_space<vmem>>, vector<1x1x40xf32>
    %744 = vector.shape_cast %743 : vector<1x1x40xf32> to vector<1x40xf32>
    %745 = vector.broadcast %744 : vector<1x40xf32> to vector<18x40xf32>
    %746 = arith.addf %742, %745 : vector<18x40xf32>
    %747 = vector.extract_strided_slice %746 {offsets = [0, 0], sizes = [1, 40], strides = [1, 1]} : vector<18x40xf32> to vector<1x40xf32>
    %748 = vector.extract_strided_slice %746 {offsets = [9, 0], sizes = [1, 40], strides = [1, 1]} : vector<18x40xf32> to vector<1x40xf32>
    %749 = tpu.concatenate %747, %748 in 0 : vector<1x40xf32>, vector<1x40xf32> -> vector<2x40xf32>
    %c0_319 = arith.constant 0 : index
    %c0_320 = arith.constant 0 : index
    %750 = vector.load %arg18[%c0_319, %c0_320] : memref<1x40xf32, #tpu.memory_space<vmem>>, vector<1x40xf32>
    %c0_321 = arith.constant 0 : index
    %c0_322 = arith.constant 0 : index
    %751 = vector.load %arg19[%c0_321, %c0_322] : memref<1x40xf32, #tpu.memory_space<vmem>>, vector<1x40xf32>
    %cst_323 = arith.constant dense<0.000000e+00> : vector<2xf32>
    %752 = vector.multi_reduction <add>, %749, %cst_323 [1] : vector<2x40xf32> to vector<2xf32>
    %753 = vector.shape_cast %752 : vector<2xf32> to vector<2x1xf32>
    %cst_324 = arith.constant 4.000000e+01 : f32
    %754 = vector.broadcast %cst_324 : f32 to vector<2x1xf32>
    %755 = arith.divf %753, %754 : vector<2x1xf32>
    %756 = vector.broadcast %755 : vector<2x1xf32> to vector<2x40xf32>
    %757 = arith.subf %749, %756 : vector<2x40xf32>
    %758 = arith.mulf %757, %757 : vector<2x40xf32>
    %cst_325 = arith.constant dense<0.000000e+00> : vector<2xf32>
    %759 = vector.multi_reduction <add>, %758, %cst_325 [1] : vector<2x40xf32> to vector<2xf32>
    %760 = vector.shape_cast %759 : vector<2xf32> to vector<2x1xf32>
    %cst_326 = arith.constant 4.000000e+01 : f32
    %761 = vector.broadcast %cst_326 : f32 to vector<2x1xf32>
    %762 = arith.divf %760, %761 : vector<2x1xf32>
    %763 = vector.broadcast %755 : vector<2x1xf32> to vector<2x40xf32>
    %764 = arith.subf %749, %763 : vector<2x40xf32>
    %cst_327 = arith.constant 9.99999974E-6 : f32
    %765 = vector.broadcast %cst_327 : f32 to vector<2x1xf32>
    %766 = arith.addf %762, %765 : vector<2x1xf32>
    %767 = math.rsqrt %766 : vector<2x1xf32>
    %768 = vector.broadcast %767 : vector<2x1xf32> to vector<2x40xf32>
    %769 = arith.mulf %764, %768 : vector<2x40xf32>
    %770 = vector.broadcast %750 : vector<1x40xf32> to vector<2x40xf32>
    %771 = arith.mulf %769, %770 : vector<2x40xf32>
    %772 = vector.broadcast %751 : vector<1x40xf32> to vector<2x40xf32>
    %773 = arith.addf %771, %772 : vector<2x40xf32>
    %c0_328 = arith.constant 0 : index
    %c0_329 = arith.constant 0 : index
    %774 = vector.load %arg20[%c0_328, %c0_329] : memref<40x128xf32, #tpu.memory_space<vmem>>, vector<40x128xf32>
    %cst_330 = arith.constant dense<0.000000e+00> : vector<2x128xf32>
    %775 = tpu.matmul %773, %774, %cst_330 {dimension_numbers = #tpu.dot_dimension_numbers<[1], [0], [0], [1], [0, 0, 1, 1], [], []>} : vector<2x40xf32>, vector<40x128xf32>, vector<2x128xf32> -> vector<2x128xf32>
    %c0_331 = arith.constant 0 : index
    %c0_332 = arith.constant 0 : index
    %776 = vector.load %arg21[%c0_331, %c0_332] : memref<1x128xf32, #tpu.memory_space<vmem>>, vector<1x128xf32>
    %777 = vector.broadcast %776 : vector<1x128xf32> to vector<2x128xf32>
    %778 = arith.addf %775, %777 : vector<2x128xf32>
    %c0_333 = arith.constant 0 : index
    %c0_334 = arith.constant 0 : index
    %779 = vector.load %arg22[%c0_333, %c0_334] : memref<2x128xf32, #tpu.memory_space<vmem>>, vector<2x128xf32>
    tpu.vector_store %arg22[%c0_333, %c0_334], %778 {strides = array<i32>} : memref<2x128xf32, #tpu.memory_space<vmem>>, vector<2x128xf32>,
    return
  }
  func.func @transform_0(%arg0: i32) -> (i32, i32) {
    %c0_i32 = arith.constant 0 : i32
    %c0_i32_0 = arith.constant 0 : i32
    %c0_i32_1 = arith.constant 0 : i32
    return %c0_i32, %c0_i32_0 : i32, i32
  }
  func.func @transform_1(%arg0: i32) -> (i32, i32) {
    %c0_i32 = arith.constant 0 : i32
    %c0_i32_0 = arith.constant 0 : i32
    %c0_i32_1 = arith.constant 0 : i32
    return %c0_i32, %c0_i32_0 : i32, i32
  }
  func.func @transform_2(%arg0: i32) -> (i32, i32) {
    %c0_i32 = arith.constant 0 : i32
    %c0_i32_0 = arith.constant 0 : i32
    %c0_i32_1 = arith.constant 0 : i32
    return %c0_i32, %c0_i32_0 : i32, i32
  }
  func.func @transform_3(%arg0: i32) -> (i32, i32) {
    %c0_i32 = arith.constant 0 : i32
    %c0_i32_0 = arith.constant 0 : i32
    %c0_i32_1 = arith.constant 0 : i32
    return %c0_i32, %c0_i32_0 : i32, i32
  }
  func.func @transform_4(%arg0: i32) -> (i32, i32) {
    %c0_i32 = arith.constant 0 : i32
    %c0_i32_0 = arith.constant 0 : i32
    %c0_i32_1 = arith.constant 0 : i32
    return %c0_i32, %c0_i32_0 : i32, i32
  }
  func.func @transform_5(%arg0: i32) -> (i32, i32, i32) {
    %c0_i32 = arith.constant 0 : i32
    %c0_i32_0 = arith.constant 0 : i32
    %c0_i32_1 = arith.constant 0 : i32
    %c0_i32_2 = arith.constant 0 : i32
    return %c0_i32, %c0_i32_0, %c0_i32_1 : i32, i32, i32
  }
  func.func @transform_6(%arg0: i32) -> (i32, i32, i32) {
    %c0_i32 = arith.constant 0 : i32
    %c0_i32_0 = arith.constant 0 : i32
    %c0_i32_1 = arith.constant 0 : i32
    %c0_i32_2 = arith.constant 0 : i32
    return %c0_i32, %c0_i32_0, %c0_i32_1 : i32, i32, i32
  }
  func.func @transform_7(%arg0: i32) -> (i32, i32, i32) {
    %c0_i32 = arith.constant 0 : i32
    %c0_i32_0 = arith.constant 0 : i32
    %c0_i32_1 = arith.constant 0 : i32
    %c0_i32_2 = arith.constant 0 : i32
    return %c0_i32, %c0_i32_0, %c0_i32_1 : i32, i32, i32
  }
  func.func @transform_8(%arg0: i32) -> (i32, i32, i32) {
    %c0_i32 = arith.constant 0 : i32
    %c0_i32_0 = arith.constant 0 : i32
    %c0_i32_1 = arith.constant 0 : i32
    %c0_i32_2 = arith.constant 0 : i32
    return %c0_i32, %c0_i32_0, %c0_i32_1 : i32, i32, i32
  }
  func.func @transform_9(%arg0: i32) -> (i32, i32, i32) {
    %c0_i32 = arith.constant 0 : i32
    %c0_i32_0 = arith.constant 0 : i32
    %c0_i32_1 = arith.constant 0 : i32
    %c0_i32_2 = arith.constant 0 : i32
    return %c0_i32, %c0_i32_0, %c0_i32_1 : i32, i32, i32
  }
  func.func @transform_10(%arg0: i32) -> (i32, i32, i32) {
    %c0_i32 = arith.constant 0 : i32
    %c0_i32_0 = arith.constant 0 : i32
    %c0_i32_1 = arith.constant 0 : i32
    %c0_i32_2 = arith.constant 0 : i32
    return %c0_i32, %c0_i32_0, %c0_i32_1 : i32, i32, i32
  }
  func.func @transform_11(%arg0: i32) -> (i32, i32, i32) {
    %c0_i32 = arith.constant 0 : i32
    %c0_i32_0 = arith.constant 0 : i32
    %c0_i32_1 = arith.constant 0 : i32
    %c0_i32_2 = arith.constant 0 : i32
    return %c0_i32, %c0_i32_0, %c0_i32_1 : i32, i32, i32
  }
  func.func @transform_12(%arg0: i32) -> (i32, i32, i32) {
    %c0_i32 = arith.constant 0 : i32
    %c0_i32_0 = arith.constant 0 : i32
    %c0_i32_1 = arith.constant 0 : i32
    %c0_i32_2 = arith.constant 0 : i32
    return %c0_i32, %c0_i32_0, %c0_i32_1 : i32, i32, i32
  }
  func.func @transform_13(%arg0: i32) -> (i32, i32, i32) {
    %c0_i32 = arith.constant 0 : i32
    %c0_i32_0 = arith.constant 0 : i32
    %c0_i32_1 = arith.constant 0 : i32
    %c0_i32_2 = arith.constant 0 : i32
    return %c0_i32, %c0_i32_0, %c0_i32_1 : i32, i32, i32
  }
  func.func @transform_14(%arg0: i32) -> (i32, i32, i32) {
    %c0_i32 = arith.constant 0 : i32
    %c0_i32_0 = arith.constant 0 : i32
    %c0_i32_1 = arith.constant 0 : i32
    %c0_i32_2 = arith.constant 0 : i32
    return %c0_i32, %c0_i32_0, %c0_i32_1 : i32, i32, i32
  }
  func.func @transform_15(%arg0: i32) -> (i32, i32, i32) {
    %c0_i32 = arith.constant 0 : i32
    %c0_i32_0 = arith.constant 0 : i32
    %c0_i32_1 = arith.constant 0 : i32
    %c0_i32_2 = arith.constant 0 : i32
    return %c0_i32, %c0_i32_0, %c0_i32_1 : i32, i32, i32
  }
  func.func @transform_16(%arg0: i32) -> (i32, i32, i32) {
    %c0_i32 = arith.constant 0 : i32
    %c0_i32_0 = arith.constant 0 : i32
    %c0_i32_1 = arith.constant 0 : i32
    %c0_i32_2 = arith.constant 0 : i32
    return %c0_i32, %c0_i32_0, %c0_i32_1 : i32, i32, i32
  }
  func.func @transform_17(%arg0: i32) -> (i32, i32) {
    %c0_i32 = arith.constant 0 : i32
    %c0_i32_0 = arith.constant 0 : i32
    %c0_i32_1 = arith.constant 0 : i32
    return %c0_i32, %c0_i32_0 : i32, i32
  }
  func.func @transform_18(%arg0: i32) -> (i32, i32) {
    %c0_i32 = arith.constant 0 : i32
    %c0_i32_0 = arith.constant 0 : i32
    %c0_i32_1 = arith.constant 0 : i32
    return %c0_i32, %c0_i32_0 : i32, i32
  }
  func.func @transform_19(%arg0: i32) -> (i32, i32) {
    %c0_i32 = arith.constant 0 : i32
    %c0_i32_0 = arith.constant 0 : i32
    %c0_i32_1 = arith.constant 0 : i32
    return %c0_i32, %c0_i32_0 : i32, i32
  }
  func.func @transform_20(%arg0: i32) -> (i32, i32) {
    %c0_i32 = arith.constant 0 : i32
    %c0_i32_0 = arith.constant 0 : i32
    %c0_i32_1 = arith.constant 0 : i32
    return %c0_i32, %c0_i32_0 : i32, i32
  }
  func.func @transform_21(%arg0: i32) -> (i32, i32) {
    %c0_i32 = arith.constant 0 : i32
    %c0_i32_0 = arith.constant 0 : i32
    %c0_i32_1 = arith.constant 0 : i32
    return %c0_i32, %c0_i32_0 : i32, i32
  }
}

</mosaic_0001>

<llo_original>
// kernel: forward_pallas.1
$region0: #{forward_pallas.1}
  #allocation0 [shape = 'u32[]', space=smem, size = 0x4, offset = 0x4, fixed_abs, tag = 'smem constant byte address 0x4 - core index']
  #allocation1 [shape = 'u32[144,128]{1,0:T(1,128)}', space=vmem, size = 0x12000, scoped, tag = 'internal scratch']
  %s0 = inlined_call_operand.vmem [shape: s32[16,1], index: 0, kind: input, shape index: {}]
  %s1 = inlined_call_operand.vmem [shape: s32[1,16], index: 1, kind: input, shape index: {}]
  %s2 = inlined_call_operand.vmem [shape: f32[12,40], index: 2, kind: input, shape index: {}]
  %s3 = inlined_call_operand.vmem [shape: f32[1,40], index: 3, kind: input, shape index: {}]
  %s4 = inlined_call_operand.vmem [shape: f32[9,40], index: 4, kind: input, shape index: {}]
  %s5 = inlined_call_operand.vmem [shape: f32[4,40,120], index: 5, kind: input, shape index: {}]
  %s6 = inlined_call_operand.vmem [shape: f32[4,1,120], index: 6, kind: input, shape index: {}]
  %s7 = inlined_call_operand.vmem [shape: f32[4,40,40], index: 7, kind: input, shape index: {}]
  %s8 = inlined_call_operand.vmem [shape: f32[4,1,40], index: 8, kind: input, shape index: {}]
  %s9 = inlined_call_operand.vmem [shape: f32[4,1,40], index: 9, kind: input, shape index: {}]
  %s10 = inlined_call_operand.vmem [shape: f32[4,1,40], index: 10, kind: input, shape index: {}]
  %s11 = inlined_call_operand.vmem [shape: f32[4,1,40], index: 11, kind: input, shape index: {}]
  %s12 = inlined_call_operand.vmem [shape: f32[4,1,40], index: 12, kind: input, shape index: {}]
  %s13 = inlined_call_operand.vmem [shape: f32[4,40,128], index: 13, kind: input, shape index: {}]
  %s14 = inlined_call_operand.vmem [shape: f32[4,1,128], index: 14, kind: input, shape index: {}]
  %s15 = inlined_call_operand.vmem [shape: f32[4,128,40], index: 15, kind: input, shape index: {}]
  %s16 = inlined_call_operand.vmem [shape: f32[4,1,40], index: 16, kind: input, shape index: {}]
  %s17 = inlined_call_operand.vmem [shape: f32[1,40], index: 17, kind: input, shape index: {}]
  %s18 = inlined_call_operand.vmem [shape: f32[1,40], index: 18, kind: input, shape index: {}]
  %s19 = inlined_call_operand.vmem [shape: f32[40,128], index: 19, kind: input, shape index: {}]
  %s20 = inlined_call_operand.vmem [shape: f32[1,128], index: 20, kind: input, shape index: {}]
  %s21 = inlined_call_operand.vmem [shape: f32[2,128], index: 21, kind: output, shape index: {}]
  %s22 = sld [smem:[#allocation0]]
  $region94: #{forward_pallas.1} parent=0
    _
  %s24 = ssub.s32 1, %s22
  %s25 = scalar_select 0, %s24, %s22
  // Predicated region
  $region2: #{forward_pallas.1} parent=0 // pred_check
    _
  $region3: #{forward_pallas.1} parent=0 // pred_check_branch
    %27 = sbr.rel (0) target = $region5
  $region4: #{forward_pallas.1} parent=0 // pred_region
    _
  $region5: #{forward_pallas.1} parent=0 // pred_fallthru
    _
  // Predicated region
  $region6: #{forward_pallas.1} parent=0 // pred_check
    _
  $region7: #{forward_pallas.1} parent=0 // pred_check_branch
    %29 = sbr.rel (0) target = $region9
  $region8: #{forward_pallas.1} parent=0 // pred_region
    _
  $region9: #{forward_pallas.1} parent=0 // pred_fallthru
    _
  // Predicated region
  $region10: #{forward_pallas.1} parent=0 // pred_check
    _
  $region11: #{forward_pallas.1} parent=0 // pred_check_branch
    %31 = sbr.rel (0) target = $region13
  $region12: #{forward_pallas.1} parent=0 // pred_region
    _
  $region13: #{forward_pallas.1} parent=0 // pred_fallthru
    _
  // Predicated region
  $region14: #{forward_pallas.1} parent=0 // pred_check
    _
  $region15: #{forward_pallas.1} parent=0 // pred_check_branch
    %33 = sbr.rel (0) target = $region17
  $region16: #{forward_pallas.1} parent=0 // pred_region
    _
  $region17: #{forward_pallas.1} parent=0 // pred_fallthru
    _
  // Predicated region
  $region18: #{forward_pallas.1} parent=0 // pred_check
    _
  $region19: #{forward_pallas.1} parent=0 // pred_check_branch
    %35 = sbr.rel (0) target = $region21
  $region20: #{forward_pallas.1} parent=0 // pred_region
    _
  $region21: #{forward_pallas.1} parent=0 // pred_fallthru
    _
  // Predicated region
  $region22: #{forward_pallas.1} parent=0 // pred_check
    _
  $region23: #{forward_pallas.1} parent=0 // pred_check_branch
    %37 = sbr.rel (0) target = $region25
  $region24: #{forward_pallas.1} parent=0 // pred_region
    _
  $region25: #{forward_pallas.1} parent=0 // pred_fallthru
    _
  // Predicated region
  $region26: #{forward_pallas.1} parent=0 // pred_check
    _
  $region27: #{forward_pallas.1} parent=0 // pred_check_branch
    %39 = sbr.rel (0) target = $region29
  $region28: #{forward_pallas.1} parent=0 // pred_region
    _
  $region29: #{forward_pallas.1} parent=0 // pred_fallthru
    _
  // Predicated region
  $region30: #{forward_pallas.1} parent=0 // pred_check
    _
  $region31: #{forward_pallas.1} parent=0 // pred_check_branch
    %41 = sbr.rel (0) target = $region33
  $region32: #{forward_pallas.1} parent=0 // pred_region
    _
  $region33: #{forward_pallas.1} parent=0 // pred_fallthru
    _
  // Predicated region
  $region34: #{forward_pallas.1} parent=0 // pred_check
    _
  $region35: #{forward_pallas.1} parent=0 // pred_check_branch
    %43 = sbr.rel (0) target = $region37
  $region36: #{forward_pallas.1} parent=0 // pred_region
    _
  $region37: #{forward_pallas.1} parent=0 // pred_fallthru
    _
  // Predicated region
  $region38: #{forward_pallas.1} parent=0 // pred_check
    _
  $region39: #{forward_pallas.1} parent=0 // pred_check_branch
    %45 = sbr.rel (0) target = $region41
  $region40: #{forward_pallas.1} parent=0 // pred_region
    _
  $region41: #{forward_pallas.1} parent=0 // pred_fallthru
    _
  // Predicated region
  $region42: #{forward_pallas.1} parent=0 // pred_check
    _
  $region43: #{forward_pallas.1} parent=0 // pred_check_branch
    %47 = sbr.rel (0) target = $region45
  $region44: #{forward_pallas.1} parent=0 // pred_region
    _
  $region45: #{forward_pallas.1} parent=0 // pred_fallthru
    _
  // Predicated region
  $region46: #{forward_pallas.1} parent=0 // pred_check
    _
  $region47: #{forward_pallas.1} parent=0 // pred_check_branch
    %49 = sbr.rel (0) target = $region49
  $region48: #{forward_pallas.1} parent=0 // pred_region
    _
  $region49: #{forward_pallas.1} parent=0 // pred_fallthru
    _
  // Predicated region
  $region50: #{forward_pallas.1} parent=0 // pred_check
    _
  $region51: #{forward_pallas.1} parent=0 // pred_check_branch
    %51 = sbr.rel (0) target = $region53
  $region52: #{forward_pallas.1} parent=0 // pred_region
    _
  $region53: #{forward_pallas.1} parent=0 // pred_fallthru
    _
  // Predicated region
  $region54: #{forward_pallas.1} parent=0 // pred_check
    _
  $region55: #{forward_pallas.1} parent=0 // pred_check_branch
    %53 = sbr.rel (0) target = $region57
  $region56: #{forward_pallas.1} parent=0 // pred_region
    _
  $region57: #{forward_pallas.1} parent=0 // pred_fallthru
    _
  // Predicated region
  $region58: #{forward_pallas.1} parent=0 // pred_check
    _
  $region59: #{forward_pallas.1} parent=0 // pred_check_branch
    %55 = sbr.rel (0) target = $region61
  $region60: #{forward_pallas.1} parent=0 // pred_region
    _
  $region61: #{forward_pallas.1} parent=0 // pred_fallthru
    _
  // Predicated region
  $region62: #{forward_pallas.1} parent=0 // pred_check
    _
  $region63: #{forward_pallas.1} parent=0 // pred_check_branch
    %57 = sbr.rel (0) target = $region65
  $region64: #{forward_pallas.1} parent=0 // pred_region
    _
  $region65: #{forward_pallas.1} parent=0 // pred_fallthru
    _
  // Predicated region
  $region66: #{forward_pallas.1} parent=0 // pred_check
    _
  $region67: #{forward_pallas.1} parent=0 // pred_check_branch
    %59 = sbr.rel (0) target = $region69
  $region68: #{forward_pallas.1} parent=0 // pred_region
    _
  $region69: #{forward_pallas.1} parent=0 // pred_fallthru
    _
  // Predicated region
  $region70: #{forward_pallas.1} parent=0 // pred_check
    _
  $region71: #{forward_pallas.1} parent=0 // pred_check_branch
    %61 = sbr.rel (0) target = $region73
  $region72: #{forward_pallas.1} parent=0 // pred_region
    _
  $region73: #{forward_pallas.1} parent=0 // pred_fallthru
    _
  // Predicated region
  $region74: #{forward_pallas.1} parent=0 // pred_check
    _
  $region75: #{forward_pallas.1} parent=0 // pred_check_branch
    %63 = sbr.rel (0) target = $region77
  $region76: #{forward_pallas.1} parent=0 // pred_region
    _
  $region77: #{forward_pallas.1} parent=0 // pred_fallthru
    _
  // Predicated region
  $region78: #{forward_pallas.1} parent=0 // pred_check
    _
  $region79: #{forward_pallas.1} parent=0 // pred_check_branch
    %65 = sbr.rel (0) target = $region81
  $region80: #{forward_pallas.1} parent=0 // pred_region
    _
  $region81: #{forward_pallas.1} parent=0 // pred_fallthru
    _
  // Predicated region
  $region82: #{forward_pallas.1} parent=0 // pred_check
    _
  $region83: #{forward_pallas.1} parent=0 // pred_check_branch
    %67 = sbr.rel (0) target = $region85
  $region84: #{forward_pallas.1} parent=0 // pred_region
    _
  $region85: #{forward_pallas.1} parent=0 // pred_fallthru
    _
  %v68 = vld [vmem:[%s0] sm:$0xff]
  %v69 = vld [vmem:[%s0 + $0x8] sm:$0xff]
  %v70 = vld [vmem:[%s1] sm:$0x1]
  %v71 = vlaneseq
  %v72 = vand.u32 %v71, 127
  %73 = vset.pattern.permute.xlu0 0
  %74 = vperm.xlu0 %73, %v68
  %v75 = vpop.permute.xlu0 %74
  %76 = vset.pattern.permute.xlu0 0
  %77 = vperm.xlu0 %76, %v69
  %v78 = vpop.permute.xlu0 %77
  %vm79 = vcmp.eq.s32.totalorder %v72, %v75
  %vm80 = vcmp.eq.s32.totalorder %v72, %v78
  %v81 = vsel %vm79, 1, 0
  %v82 = vsel %vm80, 1, 0
  %v83 = vcvt.s32.f32 %v81
  %v84 = vcvt.s32.f32 %v82
  %v85 = vld [vmem:[%s2] sm:$0xff]
  %v86 = vld [vmem:[%s2 + $0x8] sm:$0xf]
  %vm87 = vcmask 97280
  %v89 = vsel %vm87, %v83, 0
  %v92 = vsel %vm87, %v84, 0
  %vm94 = vcmask 1043456
  %v96 = vsel %vm94, %v86, 0
  %98 = vmatprep.subr.mxu0 0.0
  %99 = vmatpush1.msra.mxu0 0.0
  %100 = vmatprep.subr.mxu0 0.0
  %101 = vmatpush1.msra.mxu0 0.0
  %102 = vmatprep.subr.mxu0 0.0
  %103 = vmatpush1.msra.mxu0 0.0
  %104 = vmatprep.subr.mxu0 0.0
  %105 = vmatpush1.msra.mxu0 0.0
  %106 = vmatprep.subr.mxu0 0.0
  %107 = vmatpush1.msra.mxu0 0.0
  %108 = vmatprep.subr.mxu0 0.0
  %109 = vmatpush1.msra.mxu0 0.0
  %110 = vmatprep.subr.mxu0 0.0
  %111 = vmatpush1.msra.mxu0 0.0
  %112 = vmatprep.subr.mxu0 0.0
  %113 = vmatpush1.msra.mxu0 0.0
  %114 = vmatprep.subr.mxu0 0.0
  %115 = vmatpush1.msra.mxu0 0.0
  %116 = vmatprep.subr.mxu0 0.0
  %117 = vmatpush1.msra.mxu0 0.0
  %118 = vmatprep.subr.mxu0 0.0
  %119 = vmatpush1.msra.mxu0 0.0
  %120 = vmatprep.subr.mxu0 0.0
  %121 = vmatpush1.msra.mxu0 0.0
  %122 = vmatprep.subr.mxu0 0.0
  %123 = vmatpush1.msra.mxu0 0.0
  %124 = vmatprep.subr.mxu0 0.0
  %125 = vmatpush1.msra.mxu0 0.0
  %126 = vmatprep.subr.mxu0 0.0
  %127 = vmatpush1.msra.mxu0 %v96
  %128 = vmatprep.subr.mxu0 0.0
  %129 = vmatpush1.msra.mxu0 %v85
  %130 = vmatprep.subr.mxu0 0.0
  %131 = vmatpush2.msra.mxu0 0.0
  %132 = vmatprep.subr.mxu0 0.0
  %133 = vmatpush2.msra.mxu0 0.0
  %134 = vmatprep.subr.mxu0 0.0
  %135 = vmatpush2.msra.mxu0 0.0
  %136 = vmatprep.subr.mxu0 0.0
  %137 = vmatpush2.msra.mxu0 0.0
  %138 = vmatprep.subr.mxu0 0.0
  %139 = vmatpush2.msra.mxu0 0.0
  %140 = vmatprep.subr.mxu0 0.0
  %141 = vmatpush2.msra.mxu0 0.0
  %142 = vmatprep.subr.mxu0 0.0
  %143 = vmatpush2.msra.mxu0 0.0
  %144 = vmatprep.subr.mxu0 0.0
  %145 = vmatpush2.msra.mxu0 0.0
  %146 = vmatprep.subr.mxu0 0.0
  %147 = vmatpush2.msra.mxu0 0.0
  %148 = vmatprep.subr.mxu0 0.0
  %149 = vmatpush2.msra.mxu0 0.0
  %150 = vmatprep.subr.mxu0 0.0
  %151 = vmatpush2.msra.mxu0 0.0
  %152 = vmatprep.subr.mxu0 0.0
  %153 = vmatpush2.msra.mxu0 0.0
  %154 = vmatprep.subr.mxu0 0.0
  %155 = vmatpush2.msra.mxu0 0.0
  %156 = vmatprep.subr.mxu0 0.0
  %157 = vmatpush2.msra.mxu0 0.0
  %158 = vmatprep.subr.mxu0 0.0
  %159 = vmatpush2.msra.mxu0 0.0
  %160 = vmatprep.subr.mxu0 0.0
  %161 = vmatpush2.msra.mxu0 0.0
  %162 = vmatprep.mubr.f32.mxu0 0.0
  %163 = vmatmul.mubr.f32.gmra.mxu0 %v89
  %v164 = vpop.f32.mrf.mxu0
  %v165 = vadd.f32 0.0, %v164
  %v166 = vpop.f32.mrf.mxu0
  %167 = vmatprep.mubr.f32.mxu0 0.0
  %168 = vmatmul.mubr.f32.gmra.mxu0 %v92
  %v169 = vpop.f32.mrf.mxu0
  %v170 = vadd.f32 0.0, %v169
  %v171 = vpop.f32.mrf.mxu0
  %172 = vdwg.mxu0
  %v173 = vld [vmem:[%s3] sm:$0x1]
  %v175 = vrot.slane %v165, 7
  %vm177 = vcmask 1040384
  %v178 = vsel %vm177, %v173, %v175
  %v180 = vrot.slane %v170, 7
  %v182 = vsel %vm177, %v173, %v180
  %v184 = vrot.slane %v182, 7
  %v185 = vrot.slane %v180, 7
  %v186 = vsel %vm177, %v184, %v185
  %v189 = vsel %vm177, %v175, %v184
  %v190 = vld [vmem:[%s4] sm:$0xff]
  %v191 = vld [vmem:[%s4 + $0x8] sm:$0x1]
  %v194 = vrot.slane %v190, 7
  %v195 = vrot.slane %v191, 7
  %v196 = vsel %vm177, %v194, %v195
  %v199 = vsel %vm177, %v191, %v194
  %v200 = vmul.f32 %v178, 6.3245554
  %v201 = vmul.f32 %v189, 6.3245554
  %v202 = vmul.f32 %v186, 6.3245554
  %v203 = vadd.f32 %v200, %v190
  %v204 = vadd.f32 %v201, %v199
  %v205 = vadd.f32 %v202, %v196
  %vm206 = vcmp.gt.s32.totalorder %v70, 0
  %v207 = vsel %vm206, 1, 0
  %v208 = vcvt.s32.f32 %v207
  %v210 = vlaneseq
  %v211 = vshrl.u32 %v210, 7
  %v212 = vsub.s32 0, %v211
  %v213 = vrot.slane %v208, %v212
  %214 = vrot.lane.b32.xlu0 %v213, 1
  %v215 = vpop.permute.xlu0 %214
  %vm217 = vcmask 7168
  %v218 = vsel %vm217, 1.0, %v215
  %v219 = vsub.f32 1.0, %v218
  %v220 = vmul.f32 %v219, -1e+09
  %v221 = vlaneseq
  %v222 = vshrl.u32 %v221, 7
  %v223 = vsub.s32 0, %v222
  %v224 = vrot.slane %v220, %v223
  %vm225 = vcmask 72704
  %v226 = vsel %vm225, %v224, -1e+09
  %227 = vrot.lane.b32.xlu0 %v213, 121
  %v228 = vpop.permute.xlu0 %227
  %v230 = vsel %vm217, 1.0, %v228
  %v231 = vsub.f32 1.0, %v230
  %v232 = vmul.f32 %v231, -1e+09
  %v233 = vlaneseq
  %v234 = vshrl.u32 %v233, 7
  %v235 = vsub.s32 0, %v234
  %v236 = vrot.slane %v232, %v235
  %238 = vrot.lane.b32.xlu0 %v236, 9
  %v239 = vpop.permute.xlu0 %238
  %v241 = vsel %vm225, -1e+09, %v239
  %v243 = vrot.slane %v241, 7
  %v244 = vsel %vm177, %v243, %v243
  %v247 = vsel %vm177, %v226, %v243
  %v248 = vld [vmem:[%s9] sm:$0x1]
  %v249 = vld [vmem:[%s10] sm:$0x1]
  %vm250 = vcmask 326656
  %v251 = vsel %vm250, %v203, 0.0
  %252 = vadd.xlane.f32.xlu0 %v251
  %v253 = vpop.xlane.xlu0 %252
  %v254 = vsel %vm250, %v204, 0.0
  %255 = vadd.xlane.f32.xlu0 %v254
  %v256 = vpop.xlane.xlu0 %255
  %vm257 = vcmask 320512
  %v258 = vsel %vm257, %v205, 0.0
  %259 = vadd.xlane.f32.xlu0 %v258
  %v260 = vpop.xlane.xlu0 %259
  %v261 = vrcp.pop 40.0
  %v262 = vmul.f32 %v253, %v261
  %v263 = vmul.f32 %v256, %v261
  %v264 = vmul.f32 %v260, %v261
  %v265 = vsub.f32 %v203, %v262
  %v266 = vsub.f32 %v204, %v263
  %v267 = vsub.f32 %v205, %v264
  %v268 = vmul.f32 %v265, %v265
  %v269 = vmul.f32 %v266, %v266
  %v270 = vmul.f32 %v267, %v267
  %v271 = vsel %vm250, %v268, 0.0
  %272 = vadd.xlane.f32.xlu0 %v271
  %v273 = vpop.xlane.xlu0 %272
  %v274 = vsel %vm250, %v269, 0.0
  %275 = vadd.xlane.f32.xlu0 %v274
  %v276 = vpop.xlane.xlu0 %275
  %v277 = vsel %vm257, %v270, 0.0
  %278 = vadd.xlane.f32.xlu0 %v277
  %v279 = vpop.xlane.xlu0 %278
  %v280 = vmul.f32 %v273, %v261
  %v281 = vmul.f32 %v276, %v261
  %v282 = vmul.f32 %v279, %v261
  %v283 = vadd.f32 %v280, 1e-05
  %v284 = vadd.f32 %v281, 1e-05
  %v285 = vadd.f32 %v282, 1e-05
  %v286 = vrsqrt.pop %v283
  %v287 = vrsqrt.pop %v284
  %v288 = vrsqrt.pop %v285
  %v289 = vmul.f32 %v265, %v286
  %v290 = vmul.f32 %v266, %v287
  %v291 = vmul.f32 %v267, %v288
  %v293 = vlaneseq
  %v294 = vshrl.u32 %v293, 7
  %v295 = vsub.s32 0, %v294
  %v296 = vrot.slane %v248, %v295
  %v298 = vmul.f32 %v289, %v296
  %v299 = vmul.f32 %v290, %v296
  %v300 = vmul.f32 %v291, %v296
  %v302 = vlaneseq
  %v303 = vshrl.u32 %v302, 7
  %v304 = vsub.s32 0, %v303
  %v305 = vrot.slane %v249, %v304
  %v307 = vadd.f32 %v298, %v305
  %v308 = vadd.f32 %v299, %v305
  %v309 = vadd.f32 %v300, %v305
  %v310 = vld [vmem:[%s5] sm:$0xff]
  %v311 = vld [vmem:[%s5 + $0x8] sm:$0xff]
  %v312 = vld [vmem:[%s5 + $0x10] sm:$0xff]
  %v313 = vld [vmem:[%s5 + $0x18] sm:$0xff]
  %v314 = vld [vmem:[%s5 + $0x20] sm:$0xff]
  %v315 = vld [vmem:[%s6] sm:$0x1]
  %v317 = vlaneseq
  %v318 = vshrl.u32 %v317, 7
  %v319 = vsub.s32 0, %v318
  %v320 = vrot.slane %v315, %v319
  %v323 = vsel %vm250, %v307, 0
  %v326 = vsel %vm250, %v308, 0
  %v329 = vsel %vm250, %v309, 0
  %331 = vmatprep.subr.mxu0 0.0
  %332 = vmatpush1.msra.mxu0 0.0
  %333 = vmatprep.subr.mxu0 0.0
  %334 = vmatpush1.msra.mxu0 0.0
  %335 = vmatprep.subr.mxu0 0.0
  %336 = vmatpush1.msra.mxu0 0.0
  %337 = vmatprep.subr.mxu0 0.0
  %338 = vmatpush1.msra.mxu0 0.0
  %339 = vmatprep.subr.mxu0 0.0
  %340 = vmatpush1.msra.mxu0 0.0
  %341 = vmatprep.subr.mxu0 0.0
  %342 = vmatpush1.msra.mxu0 0.0
  %343 = vmatprep.subr.mxu0 0.0
  %344 = vmatpush1.msra.mxu0 0.0
  %345 = vmatprep.subr.mxu0 0.0
  %346 = vmatpush1.msra.mxu0 0.0
  %347 = vmatprep.subr.mxu0 0.0
  %348 = vmatpush1.msra.mxu0 0.0
  %349 = vmatprep.subr.mxu0 0.0
  %350 = vmatpush1.msra.mxu0 0.0
  %351 = vmatprep.subr.mxu0 0.0
  %352 = vmatpush1.msra.mxu0 0.0
  %353 = vmatprep.subr.mxu0 0.0
  %354 = vmatpush1.msra.mxu0 %v314
  %355 = vmatprep.subr.mxu0 0.0
  %356 = vmatpush1.msra.mxu0 %v313
  %357 = vmatprep.subr.mxu0 0.0
  %358 = vmatpush1.msra.mxu0 %v312
  %359 = vmatprep.subr.mxu0 0.0
  %360 = vmatpush1.msra.mxu0 %v311
  %361 = vmatprep.subr.mxu0 0.0
  %362 = vmatpush1.msra.mxu0 %v310
  %363 = vmatprep.subr.mxu0 0.0
  %364 = vmatpush2.msra.mxu0 0.0
  %365 = vmatprep.subr.mxu0 0.0
  %366 = vmatpush2.msra.mxu0 0.0
  %367 = vmatprep.subr.mxu0 0.0
  %368 = vmatpush2.msra.mxu0 0.0
  %369 = vmatprep.subr.mxu0 0.0
  %370 = vmatpush2.msra.mxu0 0.0
  %371 = vmatprep.subr.mxu0 0.0
  %372 = vmatpush2.msra.mxu0 0.0
  %373 = vmatprep.subr.mxu0 0.0
  %374 = vmatpush2.msra.mxu0 0.0
  %375 = vmatprep.subr.mxu0 0.0
  %376 = vmatpush2.msra.mxu0 0.0
  %377 = vmatprep.subr.mxu0 0.0
  %378 = vmatpush2.msra.mxu0 0.0
  %379 = vmatprep.subr.mxu0 0.0
  %380 = vmatpush2.msra.mxu0 0.0
  %381 = vmatprep.subr.mxu0 0.0
  %382 = vmatpush2.msra.mxu0 0.0
  %383 = vmatprep.subr.mxu0 0.0
  %384 = vmatpush2.msra.mxu0 0.0
  %385 = vmatprep.subr.mxu0 0.0
  %386 = vmatpush2.msra.mxu0 0.0
  %387 = vmatprep.subr.mxu0 0.0
  %388 = vmatpush2.msra.mxu0 0.0
  %389 = vmatprep.subr.mxu0 0.0
  %390 = vmatpush2.msra.mxu0 0.0
  %391 = vmatprep.subr.mxu0 0.0
  %392 = vmatpush2.msra.mxu0 0.0
  %393 = vmatprep.subr.mxu0 0.0
  %394 = vmatpush2.msra.mxu0 0.0
  %395 = vmatprep.mubr.f32.mxu0 0.0
  %396 = vmatmul.mubr.f32.gmra.mxu0 %v323
  %v397 = vpop.f32.mrf.mxu0
  %v398 = vadd.f32 %v320, %v397
  %v399 = vpop.f32.mrf.mxu0
  %400 = vmatprep.mubr.f32.mxu0 0.0
  %401 = vmatmul.mubr.f32.gmra.mxu0 %v326
  %v402 = vpop.f32.mrf.mxu0
  %v403 = vadd.f32 %v320, %v402
  %v404 = vpop.f32.mrf.mxu0
  %405 = vmatprep.mubr.f32.mxu0 0.0
  %406 = vmatmul.mubr.f32.gmra.mxu0 %v329
  %v407 = vpop.f32.mrf.mxu0
  %v408 = vadd.f32 %v320, %v407
  %v409 = vpop.f32.mrf.mxu0
  %410 = vdwg.mxu0
  %414 = vrot.lane.b32.xlu0 %v398, 88
  %v415 = vpop.permute.xlu0 %414
  %416 = vrot.lane.b32.xlu0 %v403, 88
  %v417 = vpop.permute.xlu0 %416
  %418 = vrot.lane.b32.xlu0 %v408, 88
  %v419 = vpop.permute.xlu0 %418
  %vm420 = vcmask 64512
  %v421 = vsel %vm420, %v398, 0
  %v423 = vsel %vm420, %v403, 0
  %v425 = vsel %vm420, %v408, 0
  %v427 = vsel %vm420, %v415, 0
  %v429 = vsel %vm420, %v417, 0
  %v431 = vsel %vm420, %v419, 0
  %433 = vmatprep.subr.mxu0 0.0
  %434 = vmatpush1.xpose.msra.mxu0 0.0
  %435 = vmatprep.subr.mxu0 0.0
  %436 = vmatpush1.xpose.msra.mxu0 0.0
  %437 = vmatprep.subr.mxu0 0.0
  %438 = vmatpush1.xpose.msra.mxu0 0.0
  %439 = vmatprep.subr.mxu0 0.0
  %440 = vmatpush1.xpose.msra.mxu0 0.0
  %441 = vmatprep.subr.mxu0 0.0
  %442 = vmatpush1.xpose.msra.mxu0 0.0
  %443 = vmatprep.subr.mxu0 0.0
  %444 = vmatpush1.xpose.msra.mxu0 0.0
  %445 = vmatprep.subr.mxu0 0.0
  %446 = vmatpush1.xpose.msra.mxu0 0.0
  %447 = vmatprep.subr.mxu0 0.0
  %448 = vmatpush1.xpose.msra.mxu0 0.0
  %449 = vmatprep.subr.mxu0 0.0
  %450 = vmatpush1.xpose.msra.mxu0 0.0
  %451 = vmatprep.subr.mxu0 0.0
  %452 = vmatpush1.xpose.msra.mxu0 0.0
  %453 = vmatprep.subr.mxu0 0.0
  %454 = vmatpush1.xpose.msra.mxu0 0.0
  %455 = vmatprep.subr.mxu0 0.0
  %456 = vmatpush1.xpose.msra.mxu0 0.0
  %457 = vmatprep.subr.mxu0 0.0
  %458 = vmatpush1.xpose.msra.mxu0 0.0
  %459 = vmatprep.subr.mxu0 0.0
  %460 = vmatpush1.xpose.msra.mxu0 %v431
  %461 = vmatprep.subr.mxu0 0.0
  %462 = vmatpush1.xpose.msra.mxu0 %v429
  %463 = vmatprep.subr.mxu0 0.0
  %464 = vmatpush1.xpose.msra.mxu0 %v427
  %465 = vmatprep.subr.mxu0 0.0
  %466 = vmatpush2.xpose.msra.mxu0 0.0
  %467 = vmatprep.subr.mxu0 0.0
  %468 = vmatpush2.xpose.msra.mxu0 0.0
  %469 = vmatprep.subr.mxu0 0.0
  %470 = vmatpush2.xpose.msra.mxu0 0.0
  %471 = vmatprep.subr.mxu0 0.0
  %472 = vmatpush2.xpose.msra.mxu0 0.0
  %473 = vmatprep.subr.mxu0 0.0
  %474 = vmatpush2.xpose.msra.mxu0 0.0
  %475 = vmatprep.subr.mxu0 0.0
  %476 = vmatpush2.xpose.msra.mxu0 0.0
  %477 = vmatprep.subr.mxu0 0.0
  %478 = vmatpush2.xpose.msra.mxu0 0.0
  %479 = vmatprep.subr.mxu0 0.0
  %480 = vmatpush2.xpose.msra.mxu0 0.0
  %481 = vmatprep.subr.mxu0 0.0
  %482 = vmatpush2.xpose.msra.mxu0 0.0
  %483 = vmatprep.subr.mxu0 0.0
  %484 = vmatpush2.xpose.msra.mxu0 0.0
  %485 = vmatprep.subr.mxu0 0.0
  %486 = vmatpush2.xpose.msra.mxu0 0.0
  %487 = vmatprep.subr.mxu0 0.0
  %488 = vmatpush2.xpose.msra.mxu0 0.0
  %489 = vmatprep.subr.mxu0 0.0
  %490 = vmatpush2.xpose.msra.mxu0 0.0
  %491 = vmatprep.subr.mxu0 0.0
  %492 = vmatpush2.xpose.msra.mxu0 0.0
  %493 = vmatprep.subr.mxu0 0.0
  %494 = vmatpush2.xpose.msra.mxu0 0.0
  %495 = vmatprep.subr.mxu0 0.0
  %496 = vmatpush2.xpose.msra.mxu0 0.0
  %497 = vmatprep.mubr.f32.mxu0 0.0
  %498 = vmatmul.mubr.f32.gmra.mxu0 %v421
  %v499 = vpop.f32.mrf.mxu0
  %v500 = vadd.f32 0.0, %v499
  %v501 = vpop.f32.mrf.mxu0
  %502 = vmatprep.mubr.f32.mxu0 0.0
  %503 = vmatmul.mubr.f32.gmra.mxu0 %v423
  %v504 = vpop.f32.mrf.mxu0
  %v505 = vadd.f32 0.0, %v504
  %v506 = vpop.f32.mrf.mxu0
  %507 = vmatprep.mubr.f32.mxu0 0.0
  %508 = vmatmul.mubr.f32.gmra.mxu0 %v425
  %v509 = vpop.f32.mrf.mxu0
  %v510 = vadd.f32 0.0, %v509
  %v511 = vpop.f32.mrf.mxu0
  %512 = vdwg.mxu0
  %v513 = vmul.f32 %v500, 0.35355338
  %v514 = vmul.f32 %v505, 0.35355338
  %v515 = vmul.f32 %v510, 0.35355338
  %v516 = vadd.f32 %v513, %v226
  %v517 = vadd.f32 %v514, %v247
  %v518 = vadd.f32 %v515, %v244
  %vm519 = vcmask 146432
  %v520 = vsel %vm519, %v516, -inf
  %521 = vmax.xlane.f32.xlu0 %v520
  %v522 = vpop.xlane.xlu0 %521
  %v523 = vsel %vm519, %v517, -inf
  %524 = vmax.xlane.f32.xlu0 %v523
  %v525 = vpop.xlane.xlu0 %524
  %vm526 = vcmask 140288
  %v527 = vsel %vm526, %v518, -inf
  %528 = vmax.xlane.f32.xlu0 %v527
  %v529 = vpop.xlane.xlu0 %528
  %v530 = vsub.f32 %v516, %v522
  %v531 = vsub.f32 %v517, %v525
  %v532 = vsub.f32 %v518, %v529
  %v533 = vmul.f32 %v530, 1.442695
  %v534 = vpow.pop %v533
  %v535 = vmul.f32 %v531, 1.442695
  %v536 = vpow.pop %v535
  %v537 = vmul.f32 %v532, 1.442695
  %v538 = vpow.pop %v537
  %v539 = vsel %vm519, %v534, 0.0
  %540 = vadd.xlane.f32.xlu0 %v539
  %v541 = vpop.xlane.xlu0 %540
  %v542 = vsel %vm519, %v536, 0.0
  %543 = vadd.xlane.f32.xlu0 %v542
  %v544 = vpop.xlane.xlu0 %543
  %v545 = vsel %vm526, %v538, 0.0
  %546 = vadd.xlane.f32.xlu0 %v545
  %v547 = vpop.xlane.xlu0 %546
  %v548 = vrcp.pop %v541
  %v549 = vrcp.pop %v544
  %v550 = vrcp.pop %v547
  %v551 = vmul.f32 %v534, %v548
  %v552 = vmul.f32 %v536, %v549
  %v553 = vmul.f32 %v538, %v550
  %554 = vrot.lane.b32.xlu0 %v398, 48
  %v555 = vpop.permute.xlu0 %554
  %556 = vrot.lane.b32.xlu0 %v403, 48
  %v557 = vpop.permute.xlu0 %556
  %558 = vrot.lane.b32.xlu0 %v408, 48
  %v559 = vpop.permute.xlu0 %558
  %v563 = vsel %vm519, %v551, 0
  %v566 = vsel %vm519, %v552, 0
  %v569 = vsel %vm519, %v553, 0
  %vm571 = vcmask 1041408
  %v572 = vsel %vm571, %v559, 0
  %574 = vmatprep.subr.mxu0 0.0
  %575 = vmatpush1.msra.mxu0 0.0
  %576 = vmatprep.subr.mxu0 0.0
  %577 = vmatpush1.msra.mxu0 0.0
  %578 = vmatprep.subr.mxu0 0.0
  %579 = vmatpush1.msra.mxu0 0.0
  %580 = vmatprep.subr.mxu0 0.0
  %581 = vmatpush1.msra.mxu0 0.0
  %582 = vmatprep.subr.mxu0 0.0
  %583 = vmatpush1.msra.mxu0 0.0
  %584 = vmatprep.subr.mxu0 0.0
  %585 = vmatpush1.msra.mxu0 0.0
  %586 = vmatprep.subr.mxu0 0.0
  %587 = vmatpush1.msra.mxu0 0.0
  %588 = vmatprep.subr.mxu0 0.0
  %589 = vmatpush1.msra.mxu0 0.0
  %590 = vmatprep.subr.mxu0 0.0
  %591 = vmatpush1.msra.mxu0 0.0
  %592 = vmatprep.subr.mxu0 0.0
  %593 = vmatpush1.msra.mxu0 0.0
  %594 = vmatprep.subr.mxu0 0.0
  %595 = vmatpush1.msra.mxu0 0.0
  %596 = vmatprep.subr.mxu0 0.0
  %597 = vmatpush1.msra.mxu0 0.0
  %598 = vmatprep.subr.mxu0 0.0
  %599 = vmatpush1.msra.mxu0 0.0
  %600 = vmatprep.subr.mxu0 0.0
  %601 = vmatpush1.msra.mxu0 %v572
  %602 = vmatprep.subr.mxu0 0.0
  %603 = vmatpush1.msra.mxu0 %v557
  %604 = vmatprep.subr.mxu0 0.0
  %605 = vmatpush1.msra.mxu0 %v555
  %606 = vmatprep.subr.mxu0 0.0
  %607 = vmatpush2.msra.mxu0 0.0
  %608 = vmatprep.subr.mxu0 0.0
  %609 = vmatpush2.msra.mxu0 0.0
  %610 = vmatprep.subr.mxu0 0.0
  %611 = vmatpush2.msra.mxu0 0.0
  %612 = vmatprep.subr.mxu0 0.0
  %613 = vmatpush2.msra.mxu0 0.0
  %614 = vmatprep.subr.mxu0 0.0
  %615 = vmatpush2.msra.mxu0 0.0
  %616 = vmatprep.subr.mxu0 0.0
  %617 = vmatpush2.msra.mxu0 0.0
  %618 = vmatprep.subr.mxu0 0.0
  %619 = vmatpush2.msra.mxu0 0.0
  %620 = vmatprep.subr.mxu0 0.0
  %621 = vmatpush2.msra.mxu0 0.0
  %622 = vmatprep.subr.mxu0 0.0
  %623 = vmatpush2.msra.mxu0 0.0
  %624 = vmatprep.subr.mxu0 0.0
  %625 = vmatpush2.msra.mxu0 0.0
  %626 = vmatprep.subr.mxu0 0.0
  %627 = vmatpush2.msra.mxu0 0.0
  %628 = vmatprep.subr.mxu0 0.0
  %629 = vmatpush2.msra.mxu0 0.0
  %630 = vmatprep.subr.mxu0 0.0
  %631 = vmatpush2.msra.mxu0 0.0
  %632 = vmatprep.subr.mxu0 0.0
  %633 = vmatpush2.msra.mxu0 0.0
  %634 = vmatprep.subr.mxu0 0.0
  %635 = vmatpush2.msra.mxu0 0.0
  %636 = vmatprep.subr.mxu0 0.0
  %637 = vmatpush2.msra.mxu0 0.0
  %638 = vmatprep.mubr.f32.mxu0 0.0
  %639 = vmatmul.mubr.f32.gmra.mxu0 %v563
  %v640 = vpop.f32.mrf.mxu0
  %v641 = vadd.f32 0.0, %v640
  %v642 = vpop.f32.mrf.mxu0
  %643 = vmatprep.mubr.f32.mxu0 0.0
  %644 = vmatmul.mubr.f32.gmra.mxu0 %v566
  %v645 = vpop.f32.mrf.mxu0
  %v646 = vadd.f32 0.0, %v645
  %v647 = vpop.f32.mrf.mxu0
  %648 = vmatprep.mubr.f32.mxu0 0.0
  %649 = vmatmul.mubr.f32.gmra.mxu0 %v569
  %v650 = vpop.f32.mrf.mxu0
  %v651 = vadd.f32 0.0, %v650
  %v652 = vpop.f32.mrf.mxu0
  %653 = vdwg.mxu0
  %654 = vrot.lane.b32.xlu0 %v398, 120
  %v655 = vpop.permute.xlu0 %654
  %656 = vrot.lane.b32.xlu0 %v403, 120
  %v657 = vpop.permute.xlu0 %656
  %658 = vrot.lane.b32.xlu0 %v408, 120
  %v659 = vpop.permute.xlu0 %658
  %660 = vrot.lane.b32.xlu0 %v398, 80
  %v661 = vpop.permute.xlu0 %660
  %662 = vrot.lane.b32.xlu0 %v403, 80
  %v663 = vpop.permute.xlu0 %662
  %664 = vrot.lane.b32.xlu0 %v408, 80
  %v665 = vpop.permute.xlu0 %664
  %v666 = vsel %vm420, %v655, 0
  %v668 = vsel %vm420, %v657, 0
  %v670 = vsel %vm420, %v659, 0
  %v672 = vsel %vm420, %v661, 0
  %v674 = vsel %vm420, %v663, 0
  %v676 = vsel %vm420, %v665, 0
  %678 = vmatprep.subr.mxu0 0.0
  %679 = vmatpush1.xpose.msra.mxu0 0.0
  %680 = vmatprep.subr.mxu0 0.0
  %681 = vmatpush1.xpose.msra.mxu0 0.0
  %682 = vmatprep.subr.mxu0 0.0
  %683 = vmatpush1.xpose.msra.mxu0 0.0
  %684 = vmatprep.subr.mxu0 0.0
  %685 = vmatpush1.xpose.msra.mxu0 0.0
  %686 = vmatprep.subr.mxu0 0.0
  %687 = vmatpush1.xpose.msra.mxu0 0.0
  %688 = vmatprep.subr.mxu0 0.0
  %689 = vmatpush1.xpose.msra.mxu0 0.0
  %690 = vmatprep.subr.mxu0 0.0
  %691 = vmatpush1.xpose.msra.mxu0 0.0
  %692 = vmatprep.subr.mxu0 0.0
  %693 = vmatpush1.xpose.msra.mxu0 0.0
  %694 = vmatprep.subr.mxu0 0.0
  %695 = vmatpush1.xpose.msra.mxu0 0.0
  %696 = vmatprep.subr.mxu0 0.0
  %697 = vmatpush1.xpose.msra.mxu0 0.0
  %698 = vmatprep.subr.mxu0 0.0
  %699 = vmatpush1.xpose.msra.mxu0 0.0
  %700 = vmatprep.subr.mxu0 0.0
  %701 = vmatpush1.xpose.msra.mxu0 0.0
  %702 = vmatprep.subr.mxu0 0.0
  %703 = vmatpush1.xpose.msra.mxu0 0.0
  %704 = vmatprep.subr.mxu0 0.0
  %705 = vmatpush1.xpose.msra.mxu0 %v676
  %706 = vmatprep.subr.mxu0 0.0
  %707 = vmatpush1.xpose.msra.mxu0 %v674
  %708 = vmatprep.subr.mxu0 0.0
  %709 = vmatpush1.xpose.msra.mxu0 %v672
  %710 = vmatprep.subr.mxu0 0.0
  %711 = vmatpush2.xpose.msra.mxu0 0.0
  %712 = vmatprep.subr.mxu0 0.0
  %713 = vmatpush2.xpose.msra.mxu0 0.0
  %714 = vmatprep.subr.mxu0 0.0
  %715 = vmatpush2.xpose.msra.mxu0 0.0
  %716 = vmatprep.subr.mxu0 0.0
  %717 = vmatpush2.xpose.msra.mxu0 0.0
  %718 = vmatprep.subr.mxu0 0.0
  %719 = vmatpush2.xpose.msra.mxu0 0.0
  %720 = vmatprep.subr.mxu0 0.0
  %721 = vmatpush2.xpose.msra.mxu0 0.0
  %722 = vmatprep.subr.mxu0 0.0
  %723 = vmatpush2.xpose.msra.mxu0 0.0
  %724 = vmatprep.subr.mxu0 0.0
  %725 = vmatpush2.xpose.msra.mxu0 0.0
  %726 = vmatprep.subr.mxu0 0.0
  %727 = vmatpush2.xpose.msra.mxu0 0.0
  %728 = vmatprep.subr.mxu0 0.0
  %729 = vmatpush2.xpose.msra.mxu0 0.0
  %730 = vmatprep.subr.mxu0 0.0
  %731 = vmatpush2.xpose.msra.mxu0 0.0
  %732 = vmatprep.subr.mxu0 0.0
  %733 = vmatpush2.xpose.msra.mxu0 0.0
  %734 = vmatprep.subr.mxu0 0.0
  %735 = vmatpush2.xpose.msra.mxu0 0.0
  %736 = vmatprep.subr.mxu0 0.0
  %737 = vmatpush2.xpose.msra.mxu0 0.0
  %738 = vmatprep.subr.mxu0 0.0
  %739 = vmatpush2.xpose.msra.mxu0 0.0
  %740 = vmatprep.subr.mxu0 0.0
  %741 = vmatpush2.xpose.msra.mxu0 0.0
  %742 = vmatprep.mubr.f32.mxu0 0.0
  %743 = vmatmul.mubr.f32.gmra.mxu0 %v666
  %v744 = vpop.f32.mrf.mxu0
  %v745 = vadd.f32 0.0, %v744
  %v746 = vpop.f32.mrf.mxu0
  %747 = vmatprep.mubr.f32.mxu0 0.0
  %748 = vmatmul.mubr.f32.gmra.mxu0 %v668
  %v749 = vpop.f32.mrf.mxu0
  %v750 = vadd.f32 0.0, %v749
  %v751 = vpop.f32.mrf.mxu0
  %752 = vmatprep.mubr.f32.mxu0 0.0
  %753 = vmatmul.mubr.f32.gmra.mxu0 %v670
  %v754 = vpop.f32.mrf.mxu0
  %v755 = vadd.f32 0.0, %v754
  %v756 = vpop.f32.mrf.mxu0
  %757 = vdwg.mxu0
  %v758 = vmul.f32 %v745, 0.35355338
  %v759 = vmul.f32 %v750, 0.35355338
  %v760 = vmul.f32 %v755, 0.35355338
  %v761 = vadd.f32 %v758, %v226
  %v762 = vadd.f32 %v759, %v247
  %v763 = vadd.f32 %v760, %v244
  %v764 = vsel %vm519, %v761, -inf
  %765 = vmax.xlane.f32.xlu0 %v764
  %v766 = vpop.xlane.xlu0 %765
  %v767 = vsel %vm519, %v762, -inf
  %768 = vmax.xlane.f32.xlu0 %v767
  %v769 = vpop.xlane.xlu0 %768
  %v770 = vsel %vm526, %v763, -inf
  %771 = vmax.xlane.f32.xlu0 %v770
  %v772 = vpop.xlane.xlu0 %771
  %v773 = vsub.f32 %v761, %v766
  %v774 = vsub.f32 %v762, %v769
  %v775 = vsub.f32 %v763, %v772
  %v776 = vmul.f32 %v773, 1.442695
  %v777 = vpow.pop %v776
  %v778 = vmul.f32 %v774, 1.442695
  %v779 = vpow.pop %v778
  %v780 = vmul.f32 %v775, 1.442695
  %v781 = vpow.pop %v780
  %v782 = vsel %vm519, %v777, 0.0
  %783 = vadd.xlane.f32.xlu0 %v782
  %v784 = vpop.xlane.xlu0 %783
  %v785 = vsel %vm519, %v779, 0.0
  %786 = vadd.xlane.f32.xlu0 %v785
  %v787 = vpop.xlane.xlu0 %786
  %v788 = vsel %vm526, %v781, 0.0
  %789 = vadd.xlane.f32.xlu0 %v788
  %v790 = vpop.xlane.xlu0 %789
  %v791 = vrcp.pop %v784
  %v792 = vrcp.pop %v787
  %v793 = vrcp.pop %v790
  %v794 = vmul.f32 %v777, %v791
  %v795 = vmul.f32 %v779, %v792
  %v796 = vmul.f32 %v781, %v793
  %797 = vrot.lane.b32.xlu0 %v398, 40
  %v798 = vpop.permute.xlu0 %797
  %799 = vrot.lane.b32.xlu0 %v403, 40
  %v800 = vpop.permute.xlu0 %799
  %801 = vrot.lane.b32.xlu0 %v408, 40
  %v802 = vpop.permute.xlu0 %801
  %v806 = vsel %vm519, %v794, 0
  %v809 = vsel %vm519, %v795, 0
  %v812 = vsel %vm519, %v796, 0
  %v814 = vsel %vm571, %v802, 0
  %816 = vmatprep.subr.mxu0 0.0
  %817 = vmatpush1.msra.mxu0 0.0
  %818 = vmatprep.subr.mxu0 0.0
  %819 = vmatpush1.msra.mxu0 0.0
  %820 = vmatprep.subr.mxu0 0.0
  %821 = vmatpush1.msra.mxu0 0.0
  %822 = vmatprep.subr.mxu0 0.0
  %823 = vmatpush1.msra.mxu0 0.0
  %824 = vmatprep.subr.mxu0 0.0
  %825 = vmatpush1.msra.mxu0 0.0
  %826 = vmatprep.subr.mxu0 0.0
  %827 = vmatpush1.msra.mxu0 0.0
  %828 = vmatprep.subr.mxu0 0.0
  %829 = vmatpush1.msra.mxu0 0.0
  %830 = vmatprep.subr.mxu0 0.0
  %831 = vmatpush1.msra.mxu0 0.0
  %832 = vmatprep.subr.mxu0 0.0
  %833 = vmatpush1.msra.mxu0 0.0
  %834 = vmatprep.subr.mxu0 0.0
  %835 = vmatpush1.msra.mxu0 0.0
  %836 = vmatprep.subr.mxu0 0.0
  %837 = vmatpush1.msra.mxu0 0.0
  %838 = vmatprep.subr.mxu0 0.0
  %839 = vmatpush1.msra.mxu0 0.0
  %840 = vmatprep.subr.mxu0 0.0
  %841 = vmatpush1.msra.mxu0 0.0
  %842 = vmatprep.subr.mxu0 0.0
  %843 = vmatpush1.msra.mxu0 %v814
  %844 = vmatprep.subr.mxu0 0.0
  %845 = vmatpush1.msra.mxu0 %v800
  %846 = vmatprep.subr.mxu0 0.0
  %847 = vmatpush1.msra.mxu0 %v798
  %848 = vmatprep.subr.mxu0 0.0
  %849 = vmatpush2.msra.mxu0 0.0
  %850 = vmatprep.subr.mxu0 0.0
  %851 = vmatpush2.msra.mxu0 0.0
  %852 = vmatprep.subr.mxu0 0.0
  %853 = vmatpush2.msra.mxu0 0.0
  %854 = vmatprep.subr.mxu0 0.0
  %855 = vmatpush2.msra.mxu0 0.0
  %856 = vmatprep.subr.mxu0 0.0
  %857 = vmatpush2.msra.mxu0 0.0
  %858 = vmatprep.subr.mxu0 0.0
  %859 = vmatpush2.msra.mxu0 0.0
  %860 = vmatprep.subr.mxu0 0.0
  %861 = vmatpush2.msra.mxu0 0.0
  %862 = vmatprep.subr.mxu0 0.0
  %863 = vmatpush2.msra.mxu0 0.0
  %864 = vmatprep.subr.mxu0 0.0
  %865 = vmatpush2.msra.mxu0 0.0
  %866 = vmatprep.subr.mxu0 0.0
  %867 = vmatpush2.msra.mxu0 0.0
  %868 = vmatprep.subr.mxu0 0.0
  %869 = vmatpush2.msra.mxu0 0.0
  %870 = vmatprep.subr.mxu0 0.0
  %871 = vmatpush2.msra.mxu0 0.0
  %872 = vmatprep.subr.mxu0 0.0
  %873 = vmatpush2.msra.mxu0 0.0
  %874 = vmatprep.subr.mxu0 0.0
  %875 = vmatpush2.msra.mxu0 0.0
  %876 = vmatprep.subr.mxu0 0.0
  %877 = vmatpush2.msra.mxu0 0.0
  %878 = vmatprep.subr.mxu0 0.0
  %879 = vmatpush2.msra.mxu0 0.0
  %880 = vmatprep.mubr.f32.mxu0 0.0
  %881 = vmatmul.mubr.f32.gmra.mxu0 %v806
  %v882 = vpop.f32.mrf.mxu0
  %v883 = vadd.f32 0.0, %v882
  %v884 = vpop.f32.mrf.mxu0
  %885 = vmatprep.mubr.f32.mxu0 0.0
  %886 = vmatmul.mubr.f32.gmra.mxu0 %v809
  %v887 = vpop.f32.mrf.mxu0
  %v888 = vadd.f32 0.0, %v887
  %v889 = vpop.f32.mrf.mxu0
  %890 = vmatprep.mubr.f32.mxu0 0.0
  %891 = vmatmul.mubr.f32.gmra.mxu0 %v812
  %v892 = vpop.f32.mrf.mxu0
  %v893 = vadd.f32 0.0, %v892
  %v894 = vpop.f32.mrf.mxu0
  %895 = vdwg.mxu0
  %896 = vrot.lane.b32.xlu0 %v398, 112
  %v897 = vpop.permute.xlu0 %896
  %898 = vrot.lane.b32.xlu0 %v403, 112
  %v899 = vpop.permute.xlu0 %898
  %900 = vrot.lane.b32.xlu0 %v408, 112
  %v901 = vpop.permute.xlu0 %900
  %902 = vrot.lane.b32.xlu0 %v398, 72
  %v903 = vpop.permute.xlu0 %902
  %904 = vrot.lane.b32.xlu0 %v403, 72
  %v905 = vpop.permute.xlu0 %904
  %906 = vrot.lane.b32.xlu0 %v408, 72
  %v907 = vpop.permute.xlu0 %906
  %v908 = vsel %vm420, %v897, 0
  %v910 = vsel %vm420, %v899, 0
  %v912 = vsel %vm420, %v901, 0
  %v914 = vsel %vm420, %v903, 0
  %v916 = vsel %vm420, %v905, 0
  %v918 = vsel %vm420, %v907, 0
  %920 = vmatprep.subr.mxu0 0.0
  %921 = vmatpush1.xpose.msra.mxu0 0.0
  %922 = vmatprep.subr.mxu0 0.0
  %923 = vmatpush1.xpose.msra.mxu0 0.0
  %924 = vmatprep.subr.mxu0 0.0
  %925 = vmatpush1.xpose.msra.mxu0 0.0
  %926 = vmatprep.subr.mxu0 0.0
  %927 = vmatpush1.xpose.msra.mxu0 0.0
  %928 = vmatprep.subr.mxu0 0.0
  %929 = vmatpush1.xpose.msra.mxu0 0.0
  %930 = vmatprep.subr.mxu0 0.0
  %931 = vmatpush1.xpose.msra.mxu0 0.0
  %932 = vmatprep.subr.mxu0 0.0
  %933 = vmatpush1.xpose.msra.mxu0 0.0
  %934 = vmatprep.subr.mxu0 0.0
  %935 = vmatpush1.xpose.msra.mxu0 0.0
  %936 = vmatprep.subr.mxu0 0.0
  %937 = vmatpush1.xpose.msra.mxu0 0.0
  %938 = vmatprep.subr.mxu0 0.0
  %939 = vmatpush1.xpose.msra.mxu0 0.0
  %940 = vmatprep.subr.mxu0 0.0
  %941 = vmatpush1.xpose.msra.mxu0 0.0
  %942 = vmatprep.subr.mxu0 0.0
  %943 = vmatpush1.xpose.msra.mxu0 0.0
  %944 = vmatprep.subr.mxu0 0.0
  %945 = vmatpush1.xpose.msra.mxu0 0.0
  %946 = vmatprep.subr.mxu0 0.0
  %947 = vmatpush1.xpose.msra.mxu0 %v918
  %948 = vmatprep.subr.mxu0 0.0
  %949 = vmatpush1.xpose.msra.mxu0 %v916
  %950 = vmatprep.subr.mxu0 0.0
  %951 = vmatpush1.xpose.msra.mxu0 %v914
  %952 = vmatprep.subr.mxu0 0.0
  %953 = vmatpush2.xpose.msra.mxu0 0.0
  %954 = vmatprep.subr.mxu0 0.0
  %955 = vmatpush2.xpose.msra.mxu0 0.0
  %956 = vmatprep.subr.mxu0 0.0
  %957 = vmatpush2.xpose.msra.mxu0 0.0
  %958 = vmatprep.subr.mxu0 0.0
  %959 = vmatpush2.xpose.msra.mxu0 0.0
  %960 = vmatprep.subr.mxu0 0.0
  %961 = vmatpush2.xpose.msra.mxu0 0.0
  %962 = vmatprep.subr.mxu0 0.0
  %963 = vmatpush2.xpose.msra.mxu0 0.0
  %964 = vmatprep.subr.mxu0 0.0
  %965 = vmatpush2.xpose.msra.mxu0 0.0
  %966 = vmatprep.subr.mxu0 0.0
  %967 = vmatpush2.xpose.msra.mxu0 0.0
  %968 = vmatprep.subr.mxu0 0.0
  %969 = vmatpush2.xpose.msra.mxu0 0.0
  %970 = vmatprep.subr.mxu0 0.0
  %971 = vmatpush2.xpose.msra.mxu0 0.0
  %972 = vmatprep.subr.mxu0 0.0
  %973 = vmatpush2.xpose.msra.mxu0 0.0
  %974 = vmatprep.subr.mxu0 0.0
  %975 = vmatpush2.xpose.msra.mxu0 0.0
  %976 = vmatprep.subr.mxu0 0.0
  %977 = vmatpush2.xpose.msra.mxu0 0.0
  %978 = vmatprep.subr.mxu0 0.0
  %979 = vmatpush2.xpose.msra.mxu0 0.0
  %980 = vmatprep.subr.mxu0 0.0
  %981 = vmatpush2.xpose.msra.mxu0 0.0
  %982 = vmatprep.subr.mxu0 0.0
  %983 = vmatpush2.xpose.msra.mxu0 0.0
  %984 = vmatprep.mubr.f32.mxu0 0.0
  %985 = vmatmul.mubr.f32.gmra.mxu0 %v908
  %v986 = vpop.f32.mrf.mxu0
  %v987 = vadd.f32 0.0, %v986
  %v988 = vpop.f32.mrf.mxu0
  %989 = vmatprep.mubr.f32.mxu0 0.0
  %990 = vmatmul.mubr.f32.gmra.mxu0 %v910
  %v991 = vpop.f32.mrf.mxu0
  %v992 = vadd.f32 0.0, %v991
  %v993 = vpop.f32.mrf.mxu0
  %994 = vmatprep.mubr.f32.mxu0 0.0
  %995 = vmatmul.mubr.f32.gmra.mxu0 %v912
  %v996 = vpop.f32.mrf.mxu0
  %v997 = vadd.f32 0.0, %v996
  %v998 = vpop.f32.mrf.mxu0
  %999 = vdwg.mxu0
  %v1000 = vmul.f32 %v987, 0.35355338
  %v1001 = vmul.f32 %v992, 0.35355338
  %v1002 = vmul.f32 %v997, 0.35355338
  %v1003 = vadd.f32 %v1000, %v226
  %v1004 = vadd.f32 %v1001, %v247
  %v1005 = vadd.f32 %v1002, %v244
  %v1006 = vsel %vm519, %v1003, -inf
  %1007 = vmax.xlane.f32.xlu0 %v1006
  %v1008 = vpop.xlane.xlu0 %1007
  %v1009 = vsel %vm519, %v1004, -inf
  %1010 = vmax.xlane.f32.xlu0 %v1009
  %v1011 = vpop.xlane.xlu0 %1010
  %v1012 = vsel %vm526, %v1005, -inf
  %1013 = vmax.xlane.f32.xlu0 %v1012
  %v1014 = vpop.xlane.xlu0 %1013
  %v1015 = vsub.f32 %v1003, %v1008
  %v1016 = vsub.f32 %v1004, %v1011
  %v1017 = vsub.f32 %v1005, %v1014
  %v1018 = vmul.f32 %v1015, 1.442695
  %v1019 = vpow.pop %v1018
  %v1020 = vmul.f32 %v1016, 1.442695
  %v1021 = vpow.pop %v1020
  %v1022 = vmul.f32 %v1017, 1.442695
  %v1023 = vpow.pop %v1022
  %v1024 = vsel %vm519, %v1019, 0.0
  %1025 = vadd.xlane.f32.xlu0 %v1024
  %v1026 = vpop.xlane.xlu0 %1025
  %v1027 = vsel %vm519, %v1021, 0.0
  %1028 = vadd.xlane.f32.xlu0 %v1027
  %v1029 = vpop.xlane.xlu0 %1028
  %v1030 = vsel %vm526, %v1023, 0.0
  %1031 = vadd.xlane.f32.xlu0 %v1030
  %v1032 = vpop.xlane.xlu0 %1031
  %v1033 = vrcp.pop %v1026
  %v1034 = vrcp.pop %v1029
  %v1035 = vrcp.pop %v1032
  %v1036 = vmul.f32 %v1019, %v1033
  %v1037 = vmul.f32 %v1021, %v1034
  %v1038 = vmul.f32 %v1023, %v1035
  %1039 = vrot.lane.b32.xlu0 %v398, 32
  %v1040 = vpop.permute.xlu0 %1039
  %1041 = vrot.lane.b32.xlu0 %v403, 32
  %v1042 = vpop.permute.xlu0 %1041
  %1043 = vrot.lane.b32.xlu0 %v408, 32
  %v1044 = vpop.permute.xlu0 %1043
  %v1048 = vsel %vm519, %v1036, 0
  %v1051 = vsel %vm519, %v1037, 0
  %v1054 = vsel %vm519, %v1038, 0
  %v1056 = vsel %vm571, %v1044, 0
  %1058 = vmatprep.subr.mxu0 0.0
  %1059 = vmatpush1.msra.mxu0 0.0
  %1060 = vmatprep.subr.mxu0 0.0
  %1061 = vmatpush1.msra.mxu0 0.0
  %1062 = vmatprep.subr.mxu0 0.0
  %1063 = vmatpush1.msra.mxu0 0.0
  %1064 = vmatprep.subr.mxu0 0.0
  %1065 = vmatpush1.msra.mxu0 0.0
  %1066 = vmatprep.subr.mxu0 0.0
  %1067 = vmatpush1.msra.mxu0 0.0
  %1068 = vmatprep.subr.mxu0 0.0
  %1069 = vmatpush1.msra.mxu0 0.0
  %1070 = vmatprep.subr.mxu0 0.0
  %1071 = vmatpush1.msra.mxu0 0.0
  %1072 = vmatprep.subr.mxu0 0.0
  %1073 = vmatpush1.msra.mxu0 0.0
  %1074 = vmatprep.subr.mxu0 0.0
  %1075 = vmatpush1.msra.mxu0 0.0
  %1076 = vmatprep.subr.mxu0 0.0
  %1077 = vmatpush1.msra.mxu0 0.0
  %1078 = vmatprep.subr.mxu0 0.0
  %1079 = vmatpush1.msra.mxu0 0.0
  %1080 = vmatprep.subr.mxu0 0.0
  %1081 = vmatpush1.msra.mxu0 0.0
  %1082 = vmatprep.subr.mxu0 0.0
  %1083 = vmatpush1.msra.mxu0 0.0
  %1084 = vmatprep.subr.mxu0 0.0
  %1085 = vmatpush1.msra.mxu0 %v1056
  %1086 = vmatprep.subr.mxu0 0.0
  %1087 = vmatpush1.msra.mxu0 %v1042
  %1088 = vmatprep.subr.mxu0 0.0
  %1089 = vmatpush1.msra.mxu0 %v1040
  %1090 = vmatprep.subr.mxu0 0.0
  %1091 = vmatpush2.msra.mxu0 0.0
  %1092 = vmatprep.subr.mxu0 0.0
  %1093 = vmatpush2.msra.mxu0 0.0
  %1094 = vmatprep.subr.mxu0 0.0
  %1095 = vmatpush2.msra.mxu0 0.0
  %1096 = vmatprep.subr.mxu0 0.0
  %1097 = vmatpush2.msra.mxu0 0.0
  %1098 = vmatprep.subr.mxu0 0.0
  %1099 = vmatpush2.msra.mxu0 0.0
  %1100 = vmatprep.subr.mxu0 0.0
  %1101 = vmatpush2.msra.mxu0 0.0
  %1102 = vmatprep.subr.mxu0 0.0
  %1103 = vmatpush2.msra.mxu0 0.0
  %1104 = vmatprep.subr.mxu0 0.0
  %1105 = vmatpush2.msra.mxu0 0.0
  %1106 = vmatprep.subr.mxu0 0.0
  %1107 = vmatpush2.msra.mxu0 0.0
  %1108 = vmatprep.subr.mxu0 0.0
  %1109 = vmatpush2.msra.mxu0 0.0
  %1110 = vmatprep.subr.mxu0 0.0
  %1111 = vmatpush2.msra.mxu0 0.0
  %1112 = vmatprep.subr.mxu0 0.0
  %1113 = vmatpush2.msra.mxu0 0.0
  %1114 = vmatprep.subr.mxu0 0.0
  %1115 = vmatpush2.msra.mxu0 0.0
  %1116 = vmatprep.subr.mxu0 0.0
  %1117 = vmatpush2.msra.mxu0 0.0
  %1118 = vmatprep.subr.mxu0 0.0
  %1119 = vmatpush2.msra.mxu0 0.0
  %1120 = vmatprep.subr.mxu0 0.0
  %1121 = vmatpush2.msra.mxu0 0.0
  %1122 = vmatprep.mubr.f32.mxu0 0.0
  %1123 = vmatmul.mubr.f32.gmra.mxu0 %v1048
  %v1124 = vpop.f32.mrf.mxu0
  %v1125 = vadd.f32 0.0, %v1124
  %v1126 = vpop.f32.mrf.mxu0
  %1127 = vmatprep.mubr.f32.mxu0 0.0
  %1128 = vmatmul.mubr.f32.gmra.mxu0 %v1051
  %v1129 = vpop.f32.mrf.mxu0
  %v1130 = vadd.f32 0.0, %v1129
  %v1131 = vpop.f32.mrf.mxu0
  %1132 = vmatprep.mubr.f32.mxu0 0.0
  %1133 = vmatmul.mubr.f32.gmra.mxu0 %v1054
  %v1134 = vpop.f32.mrf.mxu0
  %v1135 = vadd.f32 0.0, %v1134
  %v1136 = vpop.f32.mrf.mxu0
  %1137 = vdwg.mxu0
  %1138 = vrot.lane.b32.xlu0 %v398, 104
  %v1139 = vpop.permute.xlu0 %1138
  %1140 = vrot.lane.b32.xlu0 %v403, 104
  %v1141 = vpop.permute.xlu0 %1140
  %1142 = vrot.lane.b32.xlu0 %v408, 104
  %v1143 = vpop.permute.xlu0 %1142
  %1144 = vrot.lane.b32.xlu0 %v398, 64
  %v1145 = vpop.permute.xlu0 %1144
  %1146 = vrot.lane.b32.xlu0 %v403, 64
  %v1147 = vpop.permute.xlu0 %1146
  %1148 = vrot.lane.b32.xlu0 %v408, 64
  %v1149 = vpop.permute.xlu0 %1148
  %v1150 = vsel %vm420, %v1139, 0
  %v1152 = vsel %vm420, %v1141, 0
  %v1154 = vsel %vm420, %v1143, 0
  %v1156 = vsel %vm420, %v1145, 0
  %v1158 = vsel %vm420, %v1147, 0
  %v1160 = vsel %vm420, %v1149, 0
  %1162 = vmatprep.subr.mxu0 0.0
  %1163 = vmatpush1.xpose.msra.mxu0 0.0
  %1164 = vmatprep.subr.mxu0 0.0
  %1165 = vmatpush1.xpose.msra.mxu0 0.0
  %1166 = vmatprep.subr.mxu0 0.0
  %1167 = vmatpush1.xpose.msra.mxu0 0.0
  %1168 = vmatprep.subr.mxu0 0.0
  %1169 = vmatpush1.xpose.msra.mxu0 0.0
  %1170 = vmatprep.subr.mxu0 0.0
  %1171 = vmatpush1.xpose.msra.mxu0 0.0
  %1172 = vmatprep.subr.mxu0 0.0
  %1173 = vmatpush1.xpose.msra.mxu0 0.0
  %1174 = vmatprep.subr.mxu0 0.0
  %1175 = vmatpush1.xpose.msra.mxu0 0.0
  %1176 = vmatprep.subr.mxu0 0.0
  %1177 = vmatpush1.xpose.msra.mxu0 0.0
  %1178 = vmatprep.subr.mxu0 0.0
  %1179 = vmatpush1.xpose.msra.mxu0 0.0
  %1180 = vmatprep.subr.mxu0 0.0
  %1181 = vmatpush1.xpose.msra.mxu0 0.0
  %1182 = vmatprep.subr.mxu0 0.0
  %1183 = vmatpush1.xpose.msra.mxu0 0.0
  %1184 = vmatprep.subr.mxu0 0.0
  %1185 = vmatpush1.xpose.msra.mxu0 0.0
  %1186 = vmatprep.subr.mxu0 0.0
  %1187 = vmatpush1.xpose.msra.mxu0 0.0
  %1188 = vmatprep.subr.mxu0 0.0
  %1189 = vmatpush1.xpose.msra.mxu0 %v1160
  %1190 = vmatprep.subr.mxu0 0.0
  %1191 = vmatpush1.xpose.msra.mxu0 %v1158
  %1192 = vmatprep.subr.mxu0 0.0
  %1193 = vmatpush1.xpose.msra.mxu0 %v1156
  %1194 = vmatprep.subr.mxu0 0.0
  %1195 = vmatpush2.xpose.msra.mxu0 0.0
  %1196 = vmatprep.subr.mxu0 0.0
  %1197 = vmatpush2.xpose.msra.mxu0 0.0
  %1198 = vmatprep.subr.mxu0 0.0
  %1199 = vmatpush2.xpose.msra.mxu0 0.0
  %1200 = vmatprep.subr.mxu0 0.0
  %1201 = vmatpush2.xpose.msra.mxu0 0.0
  %1202 = vmatprep.subr.mxu0 0.0
  %1203 = vmatpush2.xpose.msra.mxu0 0.0
  %1204 = vmatprep.subr.mxu0 0.0
  %1205 = vmatpush2.xpose.msra.mxu0 0.0
  %1206 = vmatprep.subr.mxu0 0.0
  %1207 = vmatpush2.xpose.msra.mxu0 0.0
  %1208 = vmatprep.subr.mxu0 0.0
  %1209 = vmatpush2.xpose.msra.mxu0 0.0
  %1210 = vmatprep.subr.mxu0 0.0
  %1211 = vmatpush2.xpose.msra.mxu0 0.0
  %1212 = vmatprep.subr.mxu0 0.0
  %1213 = vmatpush2.xpose.msra.mxu0 0.0
  %1214 = vmatprep.subr.mxu0 0.0
  %1215 = vmatpush2.xpose.msra.mxu0 0.0
  %1216 = vmatprep.subr.mxu0 0.0
  %1217 = vmatpush2.xpose.msra.mxu0 0.0
  %1218 = vmatprep.subr.mxu0 0.0
  %1219 = vmatpush2.xpose.msra.mxu0 0.0
  %1220 = vmatprep.subr.mxu0 0.0
  %1221 = vmatpush2.xpose.msra.mxu0 0.0
  %1222 = vmatprep.subr.mxu0 0.0
  %1223 = vmatpush2.xpose.msra.mxu0 0.0
  %1224 = vmatprep.subr.mxu0 0.0
  %1225 = vmatpush2.xpose.msra.mxu0 0.0
  %1226 = vmatprep.mubr.f32.mxu0 0.0
  %1227 = vmatmul.mubr.f32.gmra.mxu0 %v1150
  %v1228 = vpop.f32.mrf.mxu0
  %v1229 = vadd.f32 0.0, %v1228
  %v1230 = vpop.f32.mrf.mxu0
  %1231 = vmatprep.mubr.f32.mxu0 0.0
  %1232 = vmatmul.mubr.f32.gmra.mxu0 %v1152
  %v1233 = vpop.f32.mrf.mxu0
  %v1234 = vadd.f32 0.0, %v1233
  %v1235 = vpop.f32.mrf.mxu0
  %1236 = vmatprep.mubr.f32.mxu0 0.0
  %1237 = vmatmul.mubr.f32.gmra.mxu0 %v1154
  %v1238 = vpop.f32.mrf.mxu0
  %v1239 = vadd.f32 0.0, %v1238
  %v1240 = vpop.f32.mrf.mxu0
  %1241 = vdwg.mxu0
  %v1242 = vmul.f32 %v1229, 0.35355338
  %v1243 = vmul.f32 %v1234, 0.35355338
  %v1244 = vmul.f32 %v1239, 0.35355338
  %v1245 = vadd.f32 %v1242, %v226
  %v1246 = vadd.f32 %v1243, %v247
  %v1247 = vadd.f32 %v1244, %v244
  %v1248 = vsel %vm519, %v1245, -inf
  %1249 = vmax.xlane.f32.xlu0 %v1248
  %v1250 = vpop.xlane.xlu0 %1249
  %v1251 = vsel %vm519, %v1246, -inf
  %1252 = vmax.xlane.f32.xlu0 %v1251
  %v1253 = vpop.xlane.xlu0 %1252
  %v1254 = vsel %vm526, %v1247, -inf
  %1255 = vmax.xlane.f32.xlu0 %v1254
  %v1256 = vpop.xlane.xlu0 %1255
  %v1257 = vsub.f32 %v1245, %v1250
  %v1258 = vsub.f32 %v1246, %v1253
  %v1259 = vsub.f32 %v1247, %v1256
  %v1260 = vmul.f32 %v1257, 1.442695
  %v1261 = vpow.pop %v1260
  %v1262 = vmul.f32 %v1258, 1.442695
  %v1263 = vpow.pop %v1262
  %v1264 = vmul.f32 %v1259, 1.442695
  %v1265 = vpow.pop %v1264
  %v1266 = vsel %vm519, %v1261, 0.0
  %1267 = vadd.xlane.f32.xlu0 %v1266
  %v1268 = vpop.xlane.xlu0 %1267
  %v1269 = vsel %vm519, %v1263, 0.0
  %1270 = vadd.xlane.f32.xlu0 %v1269
  %v1271 = vpop.xlane.xlu0 %1270
  %v1272 = vsel %vm526, %v1265, 0.0
  %1273 = vadd.xlane.f32.xlu0 %v1272
  %v1274 = vpop.xlane.xlu0 %1273
  %v1275 = vrcp.pop %v1268
  %v1276 = vrcp.pop %v1271
  %v1277 = vrcp.pop %v1274
  %v1278 = vmul.f32 %v1261, %v1275
  %v1279 = vmul.f32 %v1263, %v1276
  %v1280 = vmul.f32 %v1265, %v1277
  %1281 = vrot.lane.b32.xlu0 %v398, 24
  %v1282 = vpop.permute.xlu0 %1281
  %1283 = vrot.lane.b32.xlu0 %v403, 24
  %v1284 = vpop.permute.xlu0 %1283
  %1285 = vrot.lane.b32.xlu0 %v408, 24
  %v1286 = vpop.permute.xlu0 %1285
  %v1290 = vsel %vm519, %v1278, 0
  %v1293 = vsel %vm519, %v1279, 0
  %v1296 = vsel %vm519, %v1280, 0
  %v1298 = vsel %vm571, %v1286, 0
  %1300 = vmatprep.subr.mxu0 0.0
  %1301 = vmatpush1.msra.mxu0 0.0
  %1302 = vmatprep.subr.mxu0 0.0
  %1303 = vmatpush1.msra.mxu0 0.0
  %1304 = vmatprep.subr.mxu0 0.0
  %1305 = vmatpush1.msra.mxu0 0.0
  %1306 = vmatprep.subr.mxu0 0.0
  %1307 = vmatpush1.msra.mxu0 0.0
  %1308 = vmatprep.subr.mxu0 0.0
  %1309 = vmatpush1.msra.mxu0 0.0
  %1310 = vmatprep.subr.mxu0 0.0
  %1311 = vmatpush1.msra.mxu0 0.0
  %1312 = vmatprep.subr.mxu0 0.0
  %1313 = vmatpush1.msra.mxu0 0.0
  %1314 = vmatprep.subr.mxu0 0.0
  %1315 = vmatpush1.msra.mxu0 0.0
  %1316 = vmatprep.subr.mxu0 0.0
  %1317 = vmatpush1.msra.mxu0 0.0
  %1318 = vmatprep.subr.mxu0 0.0
  %1319 = vmatpush1.msra.mxu0 0.0
  %1320 = vmatprep.subr.mxu0 0.0
  %1321 = vmatpush1.msra.mxu0 0.0
  %1322 = vmatprep.subr.mxu0 0.0
  %1323 = vmatpush1.msra.mxu0 0.0
  %1324 = vmatprep.subr.mxu0 0.0
  %1325 = vmatpush1.msra.mxu0 0.0
  %1326 = vmatprep.subr.mxu0 0.0
  %1327 = vmatpush1.msra.mxu0 %v1298
  %1328 = vmatprep.subr.mxu0 0.0
  %1329 = vmatpush1.msra.mxu0 %v1284
  %1330 = vmatprep.subr.mxu0 0.0
  %1331 = vmatpush1.msra.mxu0 %v1282
  %1332 = vmatprep.subr.mxu0 0.0
  %1333 = vmatpush2.msra.mxu0 0.0
  %1334 = vmatprep.subr.mxu0 0.0
  %1335 = vmatpush2.msra.mxu0 0.0
  %1336 = vmatprep.subr.mxu0 0.0
  %1337 = vmatpush2.msra.mxu0 0.0
  %1338 = vmatprep.subr.mxu0 0.0
  %1339 = vmatpush2.msra.mxu0 0.0
  %1340 = vmatprep.subr.mxu0 0.0
  %1341 = vmatpush2.msra.mxu0 0.0
  %1342 = vmatprep.subr.mxu0 0.0
  %1343 = vmatpush2.msra.mxu0 0.0
  %1344 = vmatprep.subr.mxu0 0.0
  %1345 = vmatpush2.msra.mxu0 0.0
  %1346 = vmatprep.subr.mxu0 0.0
  %1347 = vmatpush2.msra.mxu0 0.0
  %1348 = vmatprep.subr.mxu0 0.0
  %1349 = vmatpush2.msra.mxu0 0.0
  %1350 = vmatprep.subr.mxu0 0.0
  %1351 = vmatpush2.msra.mxu0 0.0
  %1352 = vmatprep.subr.mxu0 0.0
  %1353 = vmatpush2.msra.mxu0 0.0
  %1354 = vmatprep.subr.mxu0 0.0
  %1355 = vmatpush2.msra.mxu0 0.0
  %1356 = vmatprep.subr.mxu0 0.0
  %1357 = vmatpush2.msra.mxu0 0.0
  %1358 = vmatprep.subr.mxu0 0.0
  %1359 = vmatpush2.msra.mxu0 0.0
  %1360 = vmatprep.subr.mxu0 0.0
  %1361 = vmatpush2.msra.mxu0 0.0
  %1362 = vmatprep.subr.mxu0 0.0
  %1363 = vmatpush2.msra.mxu0 0.0
  %1364 = vmatprep.mubr.f32.mxu0 0.0
  %1365 = vmatmul.mubr.f32.gmra.mxu0 %v1290
  %v1366 = vpop.f32.mrf.mxu0
  %v1367 = vadd.f32 0.0, %v1366
  %v1368 = vpop.f32.mrf.mxu0
  %1369 = vmatprep.mubr.f32.mxu0 0.0
  %1370 = vmatmul.mubr.f32.gmra.mxu0 %v1293
  %v1371 = vpop.f32.mrf.mxu0
  %v1372 = vadd.f32 0.0, %v1371
  %v1373 = vpop.f32.mrf.mxu0
  %1374 = vmatprep.mubr.f32.mxu0 0.0
  %1375 = vmatmul.mubr.f32.gmra.mxu0 %v1296
  %v1376 = vpop.f32.mrf.mxu0
  %v1377 = vadd.f32 0.0, %v1376
  %v1378 = vpop.f32.mrf.mxu0
  %1379 = vdwg.mxu0
  %1380 = vrot.lane.b32.xlu0 %v398, 96
  %v1381 = vpop.permute.xlu0 %1380
  %1382 = vrot.lane.b32.xlu0 %v403, 96
  %v1383 = vpop.permute.xlu0 %1382
  %1384 = vrot.lane.b32.xlu0 %v408, 96
  %v1385 = vpop.permute.xlu0 %1384
  %1386 = vrot.lane.b32.xlu0 %v398, 56
  %v1387 = vpop.permute.xlu0 %1386
  %1388 = vrot.lane.b32.xlu0 %v403, 56
  %v1389 = vpop.permute.xlu0 %1388
  %1390 = vrot.lane.b32.xlu0 %v408, 56
  %v1391 = vpop.permute.xlu0 %1390
  %v1392 = vsel %vm420, %v1381, 0
  %v1394 = vsel %vm420, %v1383, 0
  %v1396 = vsel %vm420, %v1385, 0
  %v1398 = vsel %vm420, %v1387, 0
  %v1400 = vsel %vm420, %v1389, 0
  %v1402 = vsel %vm420, %v1391, 0
  %1404 = vmatprep.subr.mxu0 0.0
  %1405 = vmatpush1.xpose.msra.mxu0 0.0
  %1406 = vmatprep.subr.mxu0 0.0
  %1407 = vmatpush1.xpose.msra.mxu0 0.0
  %1408 = vmatprep.subr.mxu0 0.0
  %1409 = vmatpush1.xpose.msra.mxu0 0.0
  %1410 = vmatprep.subr.mxu0 0.0
  %1411 = vmatpush1.xpose.msra.mxu0 0.0
  %1412 = vmatprep.subr.mxu0 0.0
  %1413 = vmatpush1.xpose.msra.mxu0 0.0
  %1414 = vmatprep.subr.mxu0 0.0
  %1415 = vmatpush1.xpose.msra.mxu0 0.0
  %1416 = vmatprep.subr.mxu0 0.0
  %1417 = vmatpush1.xpose.msra.mxu0 0.0
  %1418 = vmatprep.subr.mxu0 0.0
  %1419 = vmatpush1.xpose.msra.mxu0 0.0
  %1420 = vmatprep.subr.mxu0 0.0
  %1421 = vmatpush1.xpose.msra.mxu0 0.0
  %1422 = vmatprep.subr.mxu0 0.0
  %1423 = vmatpush1.xpose.msra.mxu0 0.0
  %1424 = vmatprep.subr.mxu0 0.0
  %1425 = vmatpush1.xpose.msra.mxu0 0.0
  %1426 = vmatprep.subr.mxu0 0.0
  %1427 = vmatpush1.xpose.msra.mxu0 0.0
  %1428 = vmatprep.subr.mxu0 0.0
  %1429 = vmatpush1.xpose.msra.mxu0 0.0
  %1430 = vmatprep.subr.mxu0 0.0
  %1431 = vmatpush1.xpose.msra.mxu0 %v1402
  %1432 = vmatprep.subr.mxu0 0.0
  %1433 = vmatpush1.xpose.msra.mxu0 %v1400
  %1434 = vmatprep.subr.mxu0 0.0
  %1435 = vmatpush1.xpose.msra.mxu0 %v1398
  %1436 = vmatprep.subr.mxu0 0.0
  %1437 = vmatpush2.xpose.msra.mxu0 0.0
  %1438 = vmatprep.subr.mxu0 0.0
  %1439 = vmatpush2.xpose.msra.mxu0 0.0
  %1440 = vmatprep.subr.mxu0 0.0
  %1441 = vmatpush2.xpose.msra.mxu0 0.0
  %1442 = vmatprep.subr.mxu0 0.0
  %1443 = vmatpush2.xpose.msra.mxu0 0.0
  %1444 = vmatprep.subr.mxu0 0.0
  %1445 = vmatpush2.xpose.msra.mxu0 0.0
  %1446 = vmatprep.subr.mxu0 0.0
  %1447 = vmatpush2.xpose.msra.mxu0 0.0
  %1448 = vmatprep.subr.mxu0 0.0
  %1449 = vmatpush2.xpose.msra.mxu0 0.0
  %1450 = vmatprep.subr.mxu0 0.0
  %1451 = vmatpush2.xpose.msra.mxu0 0.0
  %1452 = vmatprep.subr.mxu0 0.0
  %1453 = vmatpush2.xpose.msra.mxu0 0.0
  %1454 = vmatprep.subr.mxu0 0.0
  %1455 = vmatpush2.xpose.msra.mxu0 0.0
  %1456 = vmatprep.subr.mxu0 0.0
  %1457 = vmatpush2.xpose.msra.mxu0 0.0
  %1458 = vmatprep.subr.mxu0 0.0
  %1459 = vmatpush2.xpose.msra.mxu0 0.0
  %1460 = vmatprep.subr.mxu0 0.0
  %1461 = vmatpush2.xpose.msra.mxu0 0.0
  %1462 = vmatprep.subr.mxu0 0.0
  %1463 = vmatpush2.xpose.msra.mxu0 0.0
  %1464 = vmatprep.subr.mxu0 0.0
  %1465 = vmatpush2.xpose.msra.mxu0 0.0
  %1466 = vmatprep.subr.mxu0 0.0
  %1467 = vmatpush2.xpose.msra.mxu0 0.0
  %1468 = vmatprep.mubr.f32.mxu0 0.0
  %1469 = vmatmul.mubr.f32.gmra.mxu0 %v1392
  %v1470 = vpop.f32.mrf.mxu0
  %v1471 = vadd.f32 0.0, %v1470
  %v1472 = vpop.f32.mrf.mxu0
  %1473 = vmatprep.mubr.f32.mxu0 0.0
  %1474 = vmatmul.mubr.f32.gmra.mxu0 %v1394
  %v1475 = vpop.f32.mrf.mxu0
  %v1476 = vadd.f32 0.0, %v1475
  %v1477 = vpop.f32.mrf.mxu0
  %1478 = vmatprep.mubr.f32.mxu0 0.0
  %1479 = vmatmul.mubr.f32.gmra.mxu0 %v1396
  %v1480 = vpop.f32.mrf.mxu0
  %v1481 = vadd.f32 0.0, %v1480
  %v1482 = vpop.f32.mrf.mxu0
  %1483 = vdwg.mxu0
  %v1484 = vmul.f32 %v1471, 0.35355338
  %v1485 = vmul.f32 %v1476, 0.35355338
  %v1486 = vmul.f32 %v1481, 0.35355338
  %v1487 = vadd.f32 %v1484, %v226
  %v1488 = vadd.f32 %v1485, %v247
  %v1489 = vadd.f32 %v1486, %v244
  %v1490 = vsel %vm519, %v1487, -inf
  %1491 = vmax.xlane.f32.xlu0 %v1490
  %v1492 = vpop.xlane.xlu0 %1491
  %v1493 = vsel %vm519, %v1488, -inf
  %1494 = vmax.xlane.f32.xlu0 %v1493
  %v1495 = vpop.xlane.xlu0 %1494
  %v1496 = vsel %vm526, %v1489, -inf
  %1497 = vmax.xlane.f32.xlu0 %v1496
  %v1498 = vpop.xlane.xlu0 %1497
  %v1499 = vsub.f32 %v1487, %v1492
  %v1500 = vsub.f32 %v1488, %v1495
  %v1501 = vsub.f32 %v1489, %v1498
  %v1502 = vmul.f32 %v1499, 1.442695
  %v1503 = vpow.pop %v1502
  %v1504 = vmul.f32 %v1500, 1.442695
  %v1505 = vpow.pop %v1504
  %v1506 = vmul.f32 %v1501, 1.442695
  %v1507 = vpow.pop %v1506
  %v1508 = vsel %vm519, %v1503, 0.0
  %1509 = vadd.xlane.f32.xlu0 %v1508
  %v1510 = vpop.xlane.xlu0 %1509
  %v1511 = vsel %vm519, %v1505, 0.0
  %1512 = vadd.xlane.f32.xlu0 %v1511
  %v1513 = vpop.xlane.xlu0 %1512
  %v1514 = vsel %vm526, %v1507, 0.0
  %1515 = vadd.xlane.f32.xlu0 %v1514
  %v1516 = vpop.xlane.xlu0 %1515
  %v1517 = vrcp.pop %v1510
  %v1518 = vrcp.pop %v1513
  %v1519 = vrcp.pop %v1516
  %v1520 = vmul.f32 %v1503, %v1517
  %v1521 = vmul.f32 %v1505, %v1518
  %v1522 = vmul.f32 %v1507, %v1519
  %1523 = vrot.lane.b32.xlu0 %v398, 16
  %v1524 = vpop.permute.xlu0 %1523
  %1525 = vrot.lane.b32.xlu0 %v403, 16
  %v1526 = vpop.permute.xlu0 %1525
  %1527 = vrot.lane.b32.xlu0 %v408, 16
  %v1528 = vpop.permute.xlu0 %1527
  %v1532 = vsel %vm519, %v1520, 0
  %v1535 = vsel %vm519, %v1521, 0
  %v1538 = vsel %vm519, %v1522, 0
  %v1540 = vsel %vm571, %v1528, 0
  %1542 = vmatprep.subr.mxu0 0.0
  %1543 = vmatpush1.msra.mxu0 0.0
  %1544 = vmatprep.subr.mxu0 0.0
  %1545 = vmatpush1.msra.mxu0 0.0
  %1546 = vmatprep.subr.mxu0 0.0
  %1547 = vmatpush1.msra.mxu0 0.0
  %1548 = vmatprep.subr.mxu0 0.0
  %1549 = vmatpush1.msra.mxu0 0.0
  %1550 = vmatprep.subr.mxu0 0.0
  %1551 = vmatpush1.msra.mxu0 0.0
  %1552 = vmatprep.subr.mxu0 0.0
  %1553 = vmatpush1.msra.mxu0 0.0
  %1554 = vmatprep.subr.mxu0 0.0
  %1555 = vmatpush1.msra.mxu0 0.0
  %1556 = vmatprep.subr.mxu0 0.0
  %1557 = vmatpush1.msra.mxu0 0.0
  %1558 = vmatprep.subr.mxu0 0.0
  %1559 = vmatpush1.msra.mxu0 0.0
  %1560 = vmatprep.subr.mxu0 0.0
  %1561 = vmatpush1.msra.mxu0 0.0
  %1562 = vmatprep.subr.mxu0 0.0
  %1563 = vmatpush1.msra.mxu0 0.0
  %1564 = vmatprep.subr.mxu0 0.0
  %1565 = vmatpush1.msra.mxu0 0.0
  %1566 = vmatprep.subr.mxu0 0.0
  %1567 = vmatpush1.msra.mxu0 0.0
  %1568 = vmatprep.subr.mxu0 0.0
  %1569 = vmatpush1.msra.mxu0 %v1540
  %1570 = vmatprep.subr.mxu0 0.0
  %1571 = vmatpush1.msra.mxu0 %v1526
  %1572 = vmatprep.subr.mxu0 0.0
  %1573 = vmatpush1.msra.mxu0 %v1524
  %1574 = vmatprep.subr.mxu0 0.0
  %1575 = vmatpush2.msra.mxu0 0.0
  %1576 = vmatprep.subr.mxu0 0.0
  %1577 = vmatpush2.msra.mxu0 0.0
  %1578 = vmatprep.subr.mxu0 0.0
  %1579 = vmatpush2.msra.mxu0 0.0
  %1580 = vmatprep.subr.mxu0 0.0
  %1581 = vmatpush2.msra.mxu0 0.0
  %1582 = vmatprep.subr.mxu0 0.0
  %1583 = vmatpush2.msra.mxu0 0.0
  %1584 = vmatprep.subr.mxu0 0.0
  %1585 = vmatpush2.msra.mxu0 0.0
  %1586 = vmatprep.subr.mxu0 0.0
  %1587 = vmatpush2.msra.mxu0 0.0
  %1588 = vmatprep.subr.mxu0 0.0
  %1589 = vmatpush2.msra.mxu0 0.0
  %1590 = vmatprep.subr.mxu0 0.0
  %1591 = vmatpush2.msra.mxu0 0.0
  %1592 = vmatprep.subr.mxu0 0.0
  %1593 = vmatpush2.msra.mxu0 0.0
  %1594 = vmatprep.subr.mxu0 0.0
  %1595 = vmatpush2.msra.mxu0 0.0
  %1596 = vmatprep.subr.mxu0 0.0
  %1597 = vmatpush2.msra.mxu0 0.0
  %1598 = vmatprep.subr.mxu0 0.0
  %1599 = vmatpush2.msra.mxu0 0.0
  %1600 = vmatprep.subr.mxu0 0.0
  %1601 = vmatpush2.msra.mxu0 0.0
  %1602 = vmatprep.subr.mxu0 0.0
  %1603 = vmatpush2.msra.mxu0 0.0
  %1604 = vmatprep.subr.mxu0 0.0
  %1605 = vmatpush2.msra.mxu0 0.0
  %1606 = vmatprep.mubr.f32.mxu0 0.0
  %1607 = vmatmul.mubr.f32.gmra.mxu0 %v1532
  %v1608 = vpop.f32.mrf.mxu0
  %v1609 = vadd.f32 0.0, %v1608
  %v1610 = vpop.f32.mrf.mxu0
  %1611 = vmatprep.mubr.f32.mxu0 0.0
  %1612 = vmatmul.mubr.f32.gmra.mxu0 %v1535
  %v1613 = vpop.f32.mrf.mxu0
  %v1614 = vadd.f32 0.0, %v1613
  %v1615 = vpop.f32.mrf.mxu0
  %1616 = vmatprep.mubr.f32.mxu0 0.0
  %1617 = vmatmul.mubr.f32.gmra.mxu0 %v1538
  %v1618 = vpop.f32.mrf.mxu0
  %v1619 = vadd.f32 0.0, %v1618
  %v1620 = vpop.f32.mrf.mxu0
  %1621 = vdwg.mxu0
  %1625 = vrot.lane.b32.xlu0 %v883, 8
  %v1626 = vpop.permute.xlu0 %1625
  %1627 = vrot.lane.b32.xlu0 %v888, 8
  %v1628 = vpop.permute.xlu0 %1627
  %1629 = vrot.lane.b32.xlu0 %v893, 8
  %v1630 = vpop.permute.xlu0 %1629
  %1637 = vrot.lane.b32.xlu0 %v1125, 16
  %v1638 = vpop.permute.xlu0 %1637
  %1639 = vrot.lane.b32.xlu0 %v1130, 16
  %v1640 = vpop.permute.xlu0 %1639
  %1641 = vrot.lane.b32.xlu0 %v1135, 16
  %v1642 = vpop.permute.xlu0 %1641
  %1649 = vrot.lane.b32.xlu0 %v1367, 24
  %v1650 = vpop.permute.xlu0 %1649
  %1651 = vrot.lane.b32.xlu0 %v1372, 24
  %v1652 = vpop.permute.xlu0 %1651
  %1653 = vrot.lane.b32.xlu0 %v1377, 24
  %v1654 = vpop.permute.xlu0 %1653
  %1661 = vrot.lane.b32.xlu0 %v1609, 32
  %v1662 = vpop.permute.xlu0 %1661
  %1663 = vrot.lane.b32.xlu0 %v1614, 32
  %v1664 = vpop.permute.xlu0 %1663
  %1665 = vrot.lane.b32.xlu0 %v1619, 32
  %v1666 = vpop.permute.xlu0 %1665
  %v1670 = vsel %vm420, %v641, %v1626
  %v1671 = vsel %vm420, %v646, %v1628
  %v1672 = vsel %vm420, %v651, %v1630
  %vm1673 = vcmask 130048
  %v1674 = vsel %vm1673, %v1670, %v1638
  %v1675 = vsel %vm1673, %v1671, %v1640
  %v1676 = vsel %vm1673, %v1672, %v1642
  %vm1677 = vcmask 195584
  %v1678 = vsel %vm1677, %v1674, %v1650
  %v1679 = vsel %vm1677, %v1675, %v1652
  %v1680 = vsel %vm1677, %v1676, %v1654
  %vm1681 = vcmask 261120
  %v1682 = vsel %vm1681, %v1678, %v1662
  %v1683 = vsel %vm1681, %v1679, %v1664
  %v1684 = vsel %vm1681, %v1680, %v1666
  %v1685 = vld [vmem:[%s7] sm:$0xff]
  %v1686 = vld [vmem:[%s7 + $0x8] sm:$0xff]
  %v1687 = vld [vmem:[%s7 + $0x10] sm:$0xff]
  %v1688 = vld [vmem:[%s7 + $0x18] sm:$0xff]
  %v1689 = vld [vmem:[%s7 + $0x20] sm:$0xff]
  %v1691 = vsel %vm250, %v1682, 0
  %v1694 = vsel %vm250, %v1683, 0
  %v1697 = vsel %vm250, %v1684, 0
  %1699 = vmatprep.subr.mxu0 0.0
  %1700 = vmatpush1.msra.mxu0 0.0
  %1701 = vmatprep.subr.mxu0 0.0
  %1702 = vmatpush1.msra.mxu0 0.0
  %1703 = vmatprep.subr.mxu0 0.0
  %1704 = vmatpush1.msra.mxu0 0.0
  %1705 = vmatprep.subr.mxu0 0.0
  %1706 = vmatpush1.msra.mxu0 0.0
  %1707 = vmatprep.subr.mxu0 0.0
  %1708 = vmatpush1.msra.mxu0 0.0
  %1709 = vmatprep.subr.mxu0 0.0
  %1710 = vmatpush1.msra.mxu0 0.0
  %1711 = vmatprep.subr.mxu0 0.0
  %1712 = vmatpush1.msra.mxu0 0.0
  %1713 = vmatprep.subr.mxu0 0.0
  %1714 = vmatpush1.msra.mxu0 0.0
  %1715 = vmatprep.subr.mxu0 0.0
  %1716 = vmatpush1.msra.mxu0 0.0
  %1717 = vmatprep.subr.mxu0 0.0
  %1718 = vmatpush1.msra.mxu0 0.0
  %1719 = vmatprep.subr.mxu0 0.0
  %1720 = vmatpush1.msra.mxu0 0.0
  %1721 = vmatprep.subr.mxu0 0.0
  %1722 = vmatpush1.msra.mxu0 %v1689
  %1723 = vmatprep.subr.mxu0 0.0
  %1724 = vmatpush1.msra.mxu0 %v1688
  %1725 = vmatprep.subr.mxu0 0.0
  %1726 = vmatpush1.msra.mxu0 %v1687
  %1727 = vmatprep.subr.mxu0 0.0
  %1728 = vmatpush1.msra.mxu0 %v1686
  %1729 = vmatprep.subr.mxu0 0.0
  %1730 = vmatpush1.msra.mxu0 %v1685
  %1731 = vmatprep.subr.mxu0 0.0
  %1732 = vmatpush2.msra.mxu0 0.0
  %1733 = vmatprep.subr.mxu0 0.0
  %1734 = vmatpush2.msra.mxu0 0.0
  %1735 = vmatprep.subr.mxu0 0.0
  %1736 = vmatpush2.msra.mxu0 0.0
  %1737 = vmatprep.subr.mxu0 0.0
  %1738 = vmatpush2.msra.mxu0 0.0
  %1739 = vmatprep.subr.mxu0 0.0
  %1740 = vmatpush2.msra.mxu0 0.0
  %1741 = vmatprep.subr.mxu0 0.0
  %1742 = vmatpush2.msra.mxu0 0.0
  %1743 = vmatprep.subr.mxu0 0.0
  %1744 = vmatpush2.msra.mxu0 0.0
  %1745 = vmatprep.subr.mxu0 0.0
  %1746 = vmatpush2.msra.mxu0 0.0
  %1747 = vmatprep.subr.mxu0 0.0
  %1748 = vmatpush2.msra.mxu0 0.0
  %1749 = vmatprep.subr.mxu0 0.0
  %1750 = vmatpush2.msra.mxu0 0.0
  %1751 = vmatprep.subr.mxu0 0.0
  %1752 = vmatpush2.msra.mxu0 0.0
  %1753 = vmatprep.subr.mxu0 0.0
  %1754 = vmatpush2.msra.mxu0 0.0
  %1755 = vmatprep.subr.mxu0 0.0
  %1756 = vmatpush2.msra.mxu0 0.0
  %1757 = vmatprep.subr.mxu0 0.0
  %1758 = vmatpush2.msra.mxu0 0.0
  %1759 = vmatprep.subr.mxu0 0.0
  %1760 = vmatpush2.msra.mxu0 0.0
  %1761 = vmatprep.subr.mxu0 0.0
  %1762 = vmatpush2.msra.mxu0 0.0
  %1763 = vmatprep.mubr.f32.mxu0 0.0
  %1764 = vmatmul.mubr.f32.gmra.mxu0 %v1691
  %v1765 = vpop.f32.mrf.mxu0
  %v1766 = vadd.f32 0.0, %v1765
  %v1767 = vpop.f32.mrf.mxu0
  %1768 = vmatprep.mubr.f32.mxu0 0.0
  %1769 = vmatmul.mubr.f32.gmra.mxu0 %v1694
  %v1770 = vpop.f32.mrf.mxu0
  %v1771 = vadd.f32 0.0, %v1770
  %v1772 = vpop.f32.mrf.mxu0
  %1773 = vmatprep.mubr.f32.mxu0 0.0
  %1774 = vmatmul.mubr.f32.gmra.mxu0 %v1697
  %v1775 = vpop.f32.mrf.mxu0
  %v1776 = vadd.f32 0.0, %v1775
  %v1777 = vpop.f32.mrf.mxu0
  %1778 = vdwg.mxu0
  %v1779 = vadd.f32 %v203, %v1766
  %v1780 = vadd.f32 %v204, %v1771
  %v1781 = vadd.f32 %v205, %v1776
  %v1782 = vld [vmem:[%s8] sm:$0x1]
  %v1784 = vlaneseq
  %v1785 = vshrl.u32 %v1784, 7
  %v1786 = vsub.s32 0, %v1785
  %v1787 = vrot.slane %v1782, %v1786
  %v1789 = vadd.f32 %v1779, %v1787
  %v1790 = vadd.f32 %v1780, %v1787
  %v1791 = vadd.f32 %v1781, %v1787
  %v1792 = vld [vmem:[%s11] sm:$0x1]
  %v1793 = vld [vmem:[%s12] sm:$0x1]
  %v1794 = vsel %vm250, %v1789, 0.0
  %1795 = vadd.xlane.f32.xlu0 %v1794
  %v1796 = vpop.xlane.xlu0 %1795
  %v1797 = vsel %vm250, %v1790, 0.0
  %1798 = vadd.xlane.f32.xlu0 %v1797
  %v1799 = vpop.xlane.xlu0 %1798
  %v1800 = vsel %vm257, %v1791, 0.0
  %1801 = vadd.xlane.f32.xlu0 %v1800
  %v1802 = vpop.xlane.xlu0 %1801
  %v1803 = vmul.f32 %v1796, %v261
  %v1804 = vmul.f32 %v1799, %v261
  %v1805 = vmul.f32 %v1802, %v261
  %v1806 = vsub.f32 %v1789, %v1803
  %v1807 = vsub.f32 %v1790, %v1804
  %v1808 = vsub.f32 %v1791, %v1805
  %v1809 = vmul.f32 %v1806, %v1806
  %v1810 = vmul.f32 %v1807, %v1807
  %v1811 = vmul.f32 %v1808, %v1808
  %v1812 = vsel %vm250, %v1809, 0.0
  %1813 = vadd.xlane.f32.xlu0 %v1812
  %v1814 = vpop.xlane.xlu0 %1813
  %v1815 = vsel %vm250, %v1810, 0.0
  %1816 = vadd.xlane.f32.xlu0 %v1815
  %v1817 = vpop.xlane.xlu0 %1816
  %v1818 = vsel %vm257, %v1811, 0.0
  %1819 = vadd.xlane.f32.xlu0 %v1818
  %v1820 = vpop.xlane.xlu0 %1819
  %v1821 = vmul.f32 %v1814, %v261
  %v1822 = vmul.f32 %v1817, %v261
  %v1823 = vmul.f32 %v1820, %v261
  %v1824 = vadd.f32 %v1821, 1e-05
  %v1825 = vadd.f32 %v1822, 1e-05
  %v1826 = vadd.f32 %v1823, 1e-05
  %v1827 = vrsqrt.pop %v1824
  %v1828 = vrsqrt.pop %v1825
  %v1829 = vrsqrt.pop %v1826
  %v1830 = vmul.f32 %v1806, %v1827
  %v1831 = vmul.f32 %v1807, %v1828
  %v1832 = vmul.f32 %v1808, %v1829
  %v1834 = vlaneseq
  %v1835 = vshrl.u32 %v1834, 7
  %v1836 = vsub.s32 0, %v1835
  %v1837 = vrot.slane %v1792, %v1836
  %v1839 = vmul.f32 %v1830, %v1837
  %v1840 = vmul.f32 %v1831, %v1837
  %v1841 = vmul.f32 %v1832, %v1837
  %v1843 = vlaneseq
  %v1844 = vshrl.u32 %v1843, 7
  %v1845 = vsub.s32 0, %v1844
  %v1846 = vrot.slane %v1793, %v1845
  %v1848 = vadd.f32 %v1839, %v1846
  %v1849 = vadd.f32 %v1840, %v1846
  %v1850 = vadd.f32 %v1841, %v1846
  %v1851 = vld [vmem:[%s13] sm:$0xff]
  %v1852 = vld [vmem:[%s13 + $0x8] sm:$0xff]
  %v1853 = vld [vmem:[%s13 + $0x10] sm:$0xff]
  %v1854 = vld [vmem:[%s13 + $0x18] sm:$0xff]
  %v1855 = vld [vmem:[%s13 + $0x20] sm:$0xff]
  %v1856 = vld [vmem:[%s14] sm:$0x1]
  %v1858 = vlaneseq
  %v1859 = vshrl.u32 %v1858, 7
  %v1860 = vsub.s32 0, %v1859
  %v1861 = vrot.slane %v1856, %v1860
  %v1864 = vsel %vm250, %v1848, 0
  %v1867 = vsel %vm250, %v1849, 0
  %v1870 = vsel %vm250, %v1850, 0
  %1872 = vmatprep.subr.mxu0 0.0
  %1873 = vmatpush1.msra.mxu0 0.0
  %1874 = vmatprep.subr.mxu0 0.0
  %1875 = vmatpush1.msra.mxu0 0.0
  %1876 = vmatprep.subr.mxu0 0.0
  %1877 = vmatpush1.msra.mxu0 0.0
  %1878 = vmatprep.subr.mxu0 0.0
  %1879 = vmatpush1.msra.mxu0 0.0
  %1880 = vmatprep.subr.mxu0 0.0
  %1881 = vmatpush1.msra.mxu0 0.0
  %1882 = vmatprep.subr.mxu0 0.0
  %1883 = vmatpush1.msra.mxu0 0.0
  %1884 = vmatprep.subr.mxu0 0.0
  %1885 = vmatpush1.msra.mxu0 0.0
  %1886 = vmatprep.subr.mxu0 0.0
  %1887 = vmatpush1.msra.mxu0 0.0
  %1888 = vmatprep.subr.mxu0 0.0
  %1889 = vmatpush1.msra.mxu0 0.0
  %1890 = vmatprep.subr.mxu0 0.0
  %1891 = vmatpush1.msra.mxu0 0.0
  %1892 = vmatprep.subr.mxu0 0.0
  %1893 = vmatpush1.msra.mxu0 0.0
  %1894 = vmatprep.subr.mxu0 0.0
  %1895 = vmatpush1.msra.mxu0 %v1855
  %1896 = vmatprep.subr.mxu0 0.0
  %1897 = vmatpush1.msra.mxu0 %v1854
  %1898 = vmatprep.subr.mxu0 0.0
  %1899 = vmatpush1.msra.mxu0 %v1853
  %1900 = vmatprep.subr.mxu0 0.0
  %1901 = vmatpush1.msra.mxu0 %v1852
  %1902 = vmatprep.subr.mxu0 0.0
  %1903 = vmatpush1.msra.mxu0 %v1851
  %1904 = vmatprep.subr.mxu0 0.0
  %1905 = vmatpush2.msra.mxu0 0.0
  %1906 = vmatprep.subr.mxu0 0.0
  %1907 = vmatpush2.msra.mxu0 0.0
  %1908 = vmatprep.subr.mxu0 0.0
  %1909 = vmatpush2.msra.mxu0 0.0
  %1910 = vmatprep.subr.mxu0 0.0
  %1911 = vmatpush2.msra.mxu0 0.0
  %1912 = vmatprep.subr.mxu0 0.0
  %1913 = vmatpush2.msra.mxu0 0.0
  %1914 = vmatprep.subr.mxu0 0.0
  %1915 = vmatpush2.msra.mxu0 0.0
  %1916 = vmatprep.subr.mxu0 0.0
  %1917 = vmatpush2.msra.mxu0 0.0
  %1918 = vmatprep.subr.mxu0 0.0
  %1919 = vmatpush2.msra.mxu0 0.0
  %1920 = vmatprep.subr.mxu0 0.0
  %1921 = vmatpush2.msra.mxu0 0.0
  %1922 = vmatprep.subr.mxu0 0.0
  %1923 = vmatpush2.msra.mxu0 0.0
  %1924 = vmatprep.subr.mxu0 0.0
  %1925 = vmatpush2.msra.mxu0 0.0
  %1926 = vmatprep.subr.mxu0 0.0
  %1927 = vmatpush2.msra.mxu0 0.0
  %1928 = vmatprep.subr.mxu0 0.0
  %1929 = vmatpush2.msra.mxu0 0.0
  %1930 = vmatprep.subr.mxu0 0.0
  %1931 = vmatpush2.msra.mxu0 0.0
  %1932 = vmatprep.subr.mxu0 0.0
  %1933 = vmatpush2.msra.mxu0 0.0
  %1934 = vmatprep.subr.mxu0 0.0
  %1935 = vmatpush2.msra.mxu0 0.0
  %1936 = vmatprep.mubr.f32.mxu0 0.0
  %1937 = vmatmul.mubr.f32.gmra.mxu0 %v1864
  %v1938 = vpop.f32.mrf.mxu0
  %v1939 = vadd.f32 %v1861, %v1938
  %v1940 = vpop.f32.mrf.mxu0
  %1941 = vmatprep.mubr.f32.mxu0 0.0
  %1942 = vmatmul.mubr.f32.gmra.mxu0 %v1867
  %v1943 = vpop.f32.mrf.mxu0
  %v1944 = vadd.f32 %v1861, %v1943
  %v1945 = vpop.f32.mrf.mxu0
  %1946 = vmatprep.mubr.f32.mxu0 0.0
  %1947 = vmatmul.mubr.f32.gmra.mxu0 %v1870
  %v1948 = vpop.f32.mrf.mxu0
  %v1949 = vadd.f32 %v1861, %v1948
  %v1950 = vpop.f32.mrf.mxu0
  %1951 = vdwg.mxu0
  %v1952 = vmax.f32 %v1939, 0.0
  %v1953 = vmax.f32 %v1944, 0.0
  %v1954 = vmax.f32 %v1949, 0.0
  %v1955 = vld [vmem:[%s15] sm:$0xff]
  %v1956 = vld [vmem:[%s15 + $0x8] sm:$0xff]
  %v1957 = vld [vmem:[%s15 + $0x10] sm:$0xff]
  %v1958 = vld [vmem:[%s15 + $0x18] sm:$0xff]
  %v1959 = vld [vmem:[%s15 + $0x20] sm:$0xff]
  %v1960 = vld [vmem:[%s15 + $0x28] sm:$0xff]
  %v1961 = vld [vmem:[%s15 + $0x30] sm:$0xff]
  %v1962 = vld [vmem:[%s15 + $0x38] sm:$0xff]
  %v1963 = vld [vmem:[%s15 + $0x40] sm:$0xff]
  %v1964 = vld [vmem:[%s15 + $0x48] sm:$0xff]
  %v1965 = vld [vmem:[%s15 + $0x50] sm:$0xff]
  %v1966 = vld [vmem:[%s15 + $0x58] sm:$0xff]
  %v1967 = vld [vmem:[%s15 + $0x60] sm:$0xff]
  %v1968 = vld [vmem:[%s15 + $0x68] sm:$0xff]
  %v1969 = vld [vmem:[%s15 + $0x70] sm:$0xff]
  %v1970 = vld [vmem:[%s15 + $0x78] sm:$0xff]
  %1971 = vmatprep.subr.mxu0 0.0
  %1972 = vmatpush1.msra.mxu0 %v1970
  %1973 = vmatprep.subr.mxu0 0.0
  %1974 = vmatpush1.msra.mxu0 %v1969
  %1975 = vmatprep.subr.mxu0 0.0
  %1976 = vmatpush1.msra.mxu0 %v1968
  %1977 = vmatprep.subr.mxu0 0.0
  %1978 = vmatpush1.msra.mxu0 %v1967
  %1979 = vmatprep.subr.mxu0 0.0
  %1980 = vmatpush1.msra.mxu0 %v1966
  %1981 = vmatprep.subr.mxu0 0.0
  %1982 = vmatpush1.msra.mxu0 %v1965
  %1983 = vmatprep.subr.mxu0 0.0
  %1984 = vmatpush1.msra.mxu0 %v1964
  %1985 = vmatprep.subr.mxu0 0.0
  %1986 = vmatpush1.msra.mxu0 %v1963
  %1987 = vmatprep.subr.mxu0 0.0
  %1988 = vmatpush1.msra.mxu0 %v1962
  %1989 = vmatprep.subr.mxu0 0.0
  %1990 = vmatpush1.msra.mxu0 %v1961
  %1991 = vmatprep.subr.mxu0 0.0
  %1992 = vmatpush1.msra.mxu0 %v1960
  %1993 = vmatprep.subr.mxu0 0.0
  %1994 = vmatpush1.msra.mxu0 %v1959
  %1995 = vmatprep.subr.mxu0 0.0
  %1996 = vmatpush1.msra.mxu0 %v1958
  %1997 = vmatprep.subr.mxu0 0.0
  %1998 = vmatpush1.msra.mxu0 %v1957
  %1999 = vmatprep.subr.mxu0 0.0
  %2000 = vmatpush1.msra.mxu0 %v1956
  %2001 = vmatprep.subr.mxu0 0.0
  %2002 = vmatpush1.msra.mxu0 %v1955
  %2003 = vmatprep.subr.mxu0 0.0
  %2004 = vmatpush2.msra.mxu0 0.0
  %2005 = vmatprep.subr.mxu0 0.0
  %2006 = vmatpush2.msra.mxu0 0.0
  %2007 = vmatprep.subr.mxu0 0.0
  %2008 = vmatpush2.msra.mxu0 0.0
  %2009 = vmatprep.subr.mxu0 0.0
  %2010 = vmatpush2.msra.mxu0 0.0
  %2011 = vmatprep.subr.mxu0 0.0
  %2012 = vmatpush2.msra.mxu0 0.0
  %2013 = vmatprep.subr.mxu0 0.0
  %2014 = vmatpush2.msra.mxu0 0.0
  %2015 = vmatprep.subr.mxu0 0.0
  %2016 = vmatpush2.msra.mxu0 0.0
  %2017 = vmatprep.subr.mxu0 0.0
  %2018 = vmatpush2.msra.mxu0 0.0
  %2019 = vmatprep.subr.mxu0 0.0
  %2020 = vmatpush2.msra.mxu0 0.0
  %2021 = vmatprep.subr.mxu0 0.0
  %2022 = vmatpush2.msra.mxu0 0.0
  %2023 = vmatprep.subr.mxu0 0.0
  %2024 = vmatpush2.msra.mxu0 0.0
  %2025 = vmatprep.subr.mxu0 0.0
  %2026 = vmatpush2.msra.mxu0 0.0
  %2027 = vmatprep.subr.mxu0 0.0
  %2028 = vmatpush2.msra.mxu0 0.0
  %2029 = vmatprep.subr.mxu0 0.0
  %2030 = vmatpush2.msra.mxu0 0.0
  %2031 = vmatprep.subr.mxu0 0.0
  %2032 = vmatpush2.msra.mxu0 0.0
  %2033 = vmatprep.subr.mxu0 0.0
  %2034 = vmatpush2.msra.mxu0 0.0
  %2035 = vmatprep.mubr.f32.mxu0 0.0
  %2036 = vmatmul.mubr.f32.gmra.mxu0 %v1952
  %v2037 = vpop.f32.mrf.mxu0
  %v2038 = vadd.f32 0.0, %v2037
  %v2039 = vpop.f32.mrf.mxu0
  %2040 = vmatprep.mubr.f32.mxu0 0.0
  %2041 = vmatmul.mubr.f32.gmra.mxu0 %v1953
  %v2042 = vpop.f32.mrf.mxu0
  %v2043 = vadd.f32 0.0, %v2042
  %v2044 = vpop.f32.mrf.mxu0
  %2045 = vmatprep.mubr.f32.mxu0 0.0
  %2046 = vmatmul.mubr.f32.gmra.mxu0 %v1954
  %v2047 = vpop.f32.mrf.mxu0
  %v2048 = vadd.f32 0.0, %v2047
  %v2049 = vpop.f32.mrf.mxu0
  %2050 = vdwg.mxu0
  %v2051 = vadd.f32 %v1789, %v2038
  %v2052 = vadd.f32 %v1790, %v2043
  %v2053 = vadd.f32 %v1791, %v2048
  %v2054 = vld [vmem:[%s16] sm:$0x1]
  %v2056 = vlaneseq
  %v2057 = vshrl.u32 %v2056, 7
  %v2058 = vsub.s32 0, %v2057
  %v2059 = vrot.slane %v2054, %v2058
  %v2061 = vadd.f32 %v2051, %v2059
  %v2062 = vadd.f32 %v2052, %v2059
  %v2063 = vadd.f32 %v2053, %v2059
  %s2064 = scalar_lea.vmem %s9, 1
  %v2065 = vld [vmem:[%s2064] sm:$0x1]
  %s2066 = scalar_lea.vmem %s10, 1
  %v2067 = vld [vmem:[%s2066] sm:$0x1]
  %v2068 = vsel %vm250, %v2061, 0.0
  %2069 = vadd.xlane.f32.xlu0 %v2068
  %v2070 = vpop.xlane.xlu0 %2069
  %v2071 = vsel %vm250, %v2062, 0.0
  %2072 = vadd.xlane.f32.xlu0 %v2071
  %v2073 = vpop.xlane.xlu0 %2072
  %v2074 = vsel %vm257, %v2063, 0.0
  %2075 = vadd.xlane.f32.xlu0 %v2074
  %v2076 = vpop.xlane.xlu0 %2075
  %v2077 = vmul.f32 %v2070, %v261
  %v2078 = vmul.f32 %v2073, %v261
  %v2079 = vmul.f32 %v2076, %v261
  %v2080 = vsub.f32 %v2061, %v2077
  %v2081 = vsub.f32 %v2062, %v2078
  %v2082 = vsub.f32 %v2063, %v2079
  %v2083 = vmul.f32 %v2080, %v2080
  %v2084 = vmul.f32 %v2081, %v2081
  %v2085 = vmul.f32 %v2082, %v2082
  %v2086 = vsel %vm250, %v2083, 0.0
  %2087 = vadd.xlane.f32.xlu0 %v2086
  %v2088 = vpop.xlane.xlu0 %2087
  %v2089 = vsel %vm250, %v2084, 0.0
  %2090 = vadd.xlane.f32.xlu0 %v2089
  %v2091 = vpop.xlane.xlu0 %2090
  %v2092 = vsel %vm257, %v2085, 0.0
  %2093 = vadd.xlane.f32.xlu0 %v2092
  %v2094 = vpop.xlane.xlu0 %2093
  %v2095 = vmul.f32 %v2088, %v261
  %v2096 = vmul.f32 %v2091, %v261
  %v2097 = vmul.f32 %v2094, %v261
  %v2098 = vadd.f32 %v2095, 1e-05
  %v2099 = vadd.f32 %v2096, 1e-05
  %v2100 = vadd.f32 %v2097, 1e-05
  %v2101 = vrsqrt.pop %v2098
  %v2102 = vrsqrt.pop %v2099
  %v2103 = vrsqrt.pop %v2100
  %v2104 = vmul.f32 %v2080, %v2101
  %v2105 = vmul.f32 %v2081, %v2102
  %v2106 = vmul.f32 %v2082, %v2103
  %v2108 = vlaneseq
  %v2109 = vshrl.u32 %v2108, 7
  %v2110 = vsub.s32 0, %v2109
  %v2111 = vrot.slane %v2065, %v2110
  %v2113 = vmul.f32 %v2104, %v2111
  %v2114 = vmul.f32 %v2105, %v2111
  %v2115 = vmul.f32 %v2106, %v2111
  %v2117 = vlaneseq
  %v2118 = vshrl.u32 %v2117, 7
  %v2119 = vsub.s32 0, %v2118
  %v2120 = vrot.slane %v2067, %v2119
  %v2122 = vadd.f32 %v2113, %v2120
  %v2123 = vadd.f32 %v2114, %v2120
  %v2124 = vadd.f32 %v2115, %v2120
  %s2125 = scalar_lea.vmem %s5, 40
  %v2126 = vld [vmem:[%s2125] sm:$0xff]
  %v2127 = vld [vmem:[%s2125 + $0x8] sm:$0xff]
  %v2128 = vld [vmem:[%s2125 + $0x10] sm:$0xff]
  %v2129 = vld [vmem:[%s2125 + $0x18] sm:$0xff]
  %v2130 = vld [vmem:[%s2125 + $0x20] sm:$0xff]
  %s2131 = scalar_lea.vmem %s6, 1
  %v2132 = vld [vmem:[%s2131] sm:$0x1]
  %v2134 = vlaneseq
  %v2135 = vshrl.u32 %v2134, 7
  %v2136 = vsub.s32 0, %v2135
  %v2137 = vrot.slane %v2132, %v2136
  %v2140 = vsel %vm250, %v2122, 0
  %v2143 = vsel %vm250, %v2123, 0
  %v2146 = vsel %vm250, %v2124, 0
  %2148 = vmatprep.subr.mxu0 0.0
  %2149 = vmatpush1.msra.mxu0 0.0
  %2150 = vmatprep.subr.mxu0 0.0
  %2151 = vmatpush1.msra.mxu0 0.0
  %2152 = vmatprep.subr.mxu0 0.0
  %2153 = vmatpush1.msra.mxu0 0.0
  %2154 = vmatprep.subr.mxu0 0.0
  %2155 = vmatpush1.msra.mxu0 0.0
  %2156 = vmatprep.subr.mxu0 0.0
  %2157 = vmatpush1.msra.mxu0 0.0
  %2158 = vmatprep.subr.mxu0 0.0
  %2159 = vmatpush1.msra.mxu0 0.0
  %2160 = vmatprep.subr.mxu0 0.0
  %2161 = vmatpush1.msra.mxu0 0.0
  %2162 = vmatprep.subr.mxu0 0.0
  %2163 = vmatpush1.msra.mxu0 0.0
  %2164 = vmatprep.subr.mxu0 0.0
  %2165 = vmatpush1.msra.mxu0 0.0
  %2166 = vmatprep.subr.mxu0 0.0
  %2167 = vmatpush1.msra.mxu0 0.0
  %2168 = vmatprep.subr.mxu0 0.0
  %2169 = vmatpush1.msra.mxu0 0.0
  %2170 = vmatprep.subr.mxu0 0.0
  %2171 = vmatpush1.msra.mxu0 %v2130
  %2172 = vmatprep.subr.mxu0 0.0
  %2173 = vmatpush1.msra.mxu0 %v2129
  %2174 = vmatprep.subr.mxu0 0.0
  %2175 = vmatpush1.msra.mxu0 %v2128
  %2176 = vmatprep.subr.mxu0 0.0
  %2177 = vmatpush1.msra.mxu0 %v2127
  %2178 = vmatprep.subr.mxu0 0.0
  %2179 = vmatpush1.msra.mxu0 %v2126
  %2180 = vmatprep.subr.mxu0 0.0
  %2181 = vmatpush2.msra.mxu0 0.0
  %2182 = vmatprep.subr.mxu0 0.0
  %2183 = vmatpush2.msra.mxu0 0.0
  %2184 = vmatprep.subr.mxu0 0.0
  %2185 = vmatpush2.msra.mxu0 0.0
  %2186 = vmatprep.subr.mxu0 0.0
  %2187 = vmatpush2.msra.mxu0 0.0
  %2188 = vmatprep.subr.mxu0 0.0
  %2189 = vmatpush2.msra.mxu0 0.0
  %2190 = vmatprep.subr.mxu0 0.0
  %2191 = vmatpush2.msra.mxu0 0.0
  %2192 = vmatprep.subr.mxu0 0.0
  %2193 = vmatpush2.msra.mxu0 0.0
  %2194 = vmatprep.subr.mxu0 0.0
  %2195 = vmatpush2.msra.mxu0 0.0
  %2196 = vmatprep.subr.mxu0 0.0
  %2197 = vmatpush2.msra.mxu0 0.0
  %2198 = vmatprep.subr.mxu0 0.0
  %2199 = vmatpush2.msra.mxu0 0.0
  %2200 = vmatprep.subr.mxu0 0.0
  %2201 = vmatpush2.msra.mxu0 0.0
  %2202 = vmatprep.subr.mxu0 0.0
  %2203 = vmatpush2.msra.mxu0 0.0
  %2204 = vmatprep.subr.mxu0 0.0
  %2205 = vmatpush2.msra.mxu0 0.0
  %2206 = vmatprep.subr.mxu0 0.0
  %2207 = vmatpush2.msra.mxu0 0.0
  %2208 = vmatprep.subr.mxu0 0.0
  %2209 = vmatpush2.msra.mxu0 0.0
  %2210 = vmatprep.subr.mxu0 0.0
  %2211 = vmatpush2.msra.mxu0 0.0
  %2212 = vmatprep.mubr.f32.mxu0 0.0
  %2213 = vmatmul.mubr.f32.gmra.mxu0 %v2140
  %v2214 = vpop.f32.mrf.mxu0
  %v2215 = vadd.f32 %v2137, %v2214
  %v2216 = vpop.f32.mrf.mxu0
  %2217 = vmatprep.mubr.f32.mxu0 0.0
  %2218 = vmatmul.mubr.f32.gmra.mxu0 %v2143
  %v2219 = vpop.f32.mrf.mxu0
  %v2220 = vadd.f32 %v2137, %v2219
  %v2221 = vpop.f32.mrf.mxu0
  %2222 = vmatprep.mubr.f32.mxu0 0.0
  %2223 = vmatmul.mubr.f32.gmra.mxu0 %v2146
  %v2224 = vpop.f32.mrf.mxu0
  %v2225 = vadd.f32 %v2137, %v2224
  %v2226 = vpop.f32.mrf.mxu0
  %2227 = vdwg.mxu0
  %2231 = vrot.lane.b32.xlu0 %v2215, 88
  %v2232 = vpop.permute.xlu0 %2231
  %2233 = vrot.lane.b32.xlu0 %v2220, 88
  %v2234 = vpop.permute.xlu0 %2233
  %2235 = vrot.lane.b32.xlu0 %v2225, 88
  %v2236 = vpop.permute.xlu0 %2235
  %v2237 = vsel %vm420, %v2215, 0
  %v2239 = vsel %vm420, %v2220, 0
  %v2241 = vsel %vm420, %v2225, 0
  %v2243 = vsel %vm420, %v2232, 0
  %v2245 = vsel %vm420, %v2234, 0
  %v2247 = vsel %vm420, %v2236, 0
  %2249 = vmatprep.subr.mxu0 0.0
  %2250 = vmatpush1.xpose.msra.mxu0 0.0
  %2251 = vmatprep.subr.mxu0 0.0
  %2252 = vmatpush1.xpose.msra.mxu0 0.0
  %2253 = vmatprep.subr.mxu0 0.0
  %2254 = vmatpush1.xpose.msra.mxu0 0.0
  %2255 = vmatprep.subr.mxu0 0.0
  %2256 = vmatpush1.xpose.msra.mxu0 0.0
  %2257 = vmatprep.subr.mxu0 0.0
  %2258 = vmatpush1.xpose.msra.mxu0 0.0
  %2259 = vmatprep.subr.mxu0 0.0
  %2260 = vmatpush1.xpose.msra.mxu0 0.0
  %2261 = vmatprep.subr.mxu0 0.0
  %2262 = vmatpush1.xpose.msra.mxu0 0.0
  %2263 = vmatprep.subr.mxu0 0.0
  %2264 = vmatpush1.xpose.msra.mxu0 0.0
  %2265 = vmatprep.subr.mxu0 0.0
  %2266 = vmatpush1.xpose.msra.mxu0 0.0
  %2267 = vmatprep.subr.mxu0 0.0
  %2268 = vmatpush1.xpose.msra.mxu0 0.0
  %2269 = vmatprep.subr.mxu0 0.0
  %2270 = vmatpush1.xpose.msra.mxu0 0.0
  %2271 = vmatprep.subr.mxu0 0.0
  %2272 = vmatpush1.xpose.msra.mxu0 0.0
  %2273 = vmatprep.subr.mxu0 0.0
  %2274 = vmatpush1.xpose.msra.mxu0 0.0
  %2275 = vmatprep.subr.mxu0 0.0
  %2276 = vmatpush1.xpose.msra.mxu0 %v2247
  %2277 = vmatprep.subr.mxu0 0.0
  %2278 = vmatpush1.xpose.msra.mxu0 %v2245
  %2279 = vmatprep.subr.mxu0 0.0
  %2280 = vmatpush1.xpose.msra.mxu0 %v2243
  %2281 = vmatprep.subr.mxu0 0.0
  %2282 = vmatpush2.xpose.msra.mxu0 0.0
  %2283 = vmatprep.subr.mxu0 0.0
  %2284 = vmatpush2.xpose.msra.mxu0 0.0
  %2285 = vmatprep.subr.mxu0 0.0
  %2286 = vmatpush2.xpose.msra.mxu0 0.0
  %2287 = vmatprep.subr.mxu0 0.0
  %2288 = vmatpush2.xpose.msra.mxu0 0.0
  %2289 = vmatprep.subr.mxu0 0.0
  %2290 = vmatpush2.xpose.msra.mxu0 0.0
  %2291 = vmatprep.subr.mxu0 0.0
  %2292 = vmatpush2.xpose.msra.mxu0 0.0
  %2293 = vmatprep.subr.mxu0 0.0
  %2294 = vmatpush2.xpose.msra.mxu0 0.0
  %2295 = vmatprep.subr.mxu0 0.0
  %2296 = vmatpush2.xpose.msra.mxu0 0.0
  %2297 = vmatprep.subr.mxu0 0.0
  %2298 = vmatpush2.xpose.msra.mxu0 0.0
  %2299 = vmatprep.subr.mxu0 0.0
  %2300 = vmatpush2.xpose.msra.mxu0 0.0
  %2301 = vmatprep.subr.mxu0 0.0
  %2302 = vmatpush2.xpose.msra.mxu0 0.0
  %2303 = vmatprep.subr.mxu0 0.0
  %2304 = vmatpush2.xpose.msra.mxu0 0.0
  %2305 = vmatprep.subr.mxu0 0.0
  %2306 = vmatpush2.xpose.msra.mxu0 0.0
  %2307 = vmatprep.subr.mxu0 0.0
  %2308 = vmatpush2.xpose.msra.mxu0 0.0
  %2309 = vmatprep.subr.mxu0 0.0
  %2310 = vmatpush2.xpose.msra.mxu0 0.0
  %2311 = vmatprep.subr.mxu0 0.0
  %2312 = vmatpush2.xpose.msra.mxu0 0.0
  %2313 = vmatprep.mubr.f32.mxu0 0.0
  %2314 = vmatmul.mubr.f32.gmra.mxu0 %v2237
  %v2315 = vpop.f32.mrf.mxu0
  %v2316 = vadd.f32 0.0, %v2315
  %v2317 = vpop.f32.mrf.mxu0
  %2318 = vmatprep.mubr.f32.mxu0 0.0
  %2319 = vmatmul.mubr.f32.gmra.mxu0 %v2239
  %v2320 = vpop.f32.mrf.mxu0
  %v2321 = vadd.f32 0.0, %v2320
  %v2322 = vpop.f32.mrf.mxu0
  %2323 = vmatprep.mubr.f32.mxu0 0.0
  %2324 = vmatmul.mubr.f32.gmra.mxu0 %v2241
  %v2325 = vpop.f32.mrf.mxu0
  %v2326 = vadd.f32 0.0, %v2325
  %v2327 = vpop.f32.mrf.mxu0
  %2328 = vdwg.mxu0
  %v2329 = vmul.f32 %v2316, 0.35355338
  %v2330 = vmul.f32 %v2321, 0.35355338
  %v2331 = vmul.f32 %v2326, 0.35355338
  %v2332 = vadd.f32 %v2329, %v226
  %v2333 = vadd.f32 %v2330, %v247
  %v2334 = vadd.f32 %v2331, %v244
  %v2335 = vsel %vm519, %v2332, -inf
  %2336 = vmax.xlane.f32.xlu0 %v2335
  %v2337 = vpop.xlane.xlu0 %2336
  %v2338 = vsel %vm519, %v2333, -inf
  %2339 = vmax.xlane.f32.xlu0 %v2338
  %v2340 = vpop.xlane.xlu0 %2339
  %v2341 = vsel %vm526, %v2334, -inf
  %2342 = vmax.xlane.f32.xlu0 %v2341
  %v2343 = vpop.xlane.xlu0 %2342
  %v2344 = vsub.f32 %v2332, %v2337
  %v2345 = vsub.f32 %v2333, %v2340
  %v2346 = vsub.f32 %v2334, %v2343
  %v2347 = vmul.f32 %v2344, 1.442695
  %v2348 = vpow.pop %v2347
  %v2349 = vmul.f32 %v2345, 1.442695
  %v2350 = vpow.pop %v2349
  %v2351 = vmul.f32 %v2346, 1.442695
  %v2352 = vpow.pop %v2351
  %v2353 = vsel %vm519, %v2348, 0.0
  %2354 = vadd.xlane.f32.xlu0 %v2353
  %v2355 = vpop.xlane.xlu0 %2354
  %v2356 = vsel %vm519, %v2350, 0.0
  %2357 = vadd.xlane.f32.xlu0 %v2356
  %v2358 = vpop.xlane.xlu0 %2357
  %v2359 = vsel %vm526, %v2352, 0.0
  %2360 = vadd.xlane.f32.xlu0 %v2359
  %v2361 = vpop.xlane.xlu0 %2360
  %v2362 = vrcp.pop %v2355
  %v2363 = vrcp.pop %v2358
  %v2364 = vrcp.pop %v2361
  %v2365 = vmul.f32 %v2348, %v2362
  %v2366 = vmul.f32 %v2350, %v2363
  %v2367 = vmul.f32 %v2352, %v2364
  %2368 = vrot.lane.b32.xlu0 %v2215, 48
  %v2369 = vpop.permute.xlu0 %2368
  %2370 = vrot.lane.b32.xlu0 %v2220, 48
  %v2371 = vpop.permute.xlu0 %2370
  %2372 = vrot.lane.b32.xlu0 %v2225, 48
  %v2373 = vpop.permute.xlu0 %2372
  %v2377 = vsel %vm519, %v2365, 0
  %v2380 = vsel %vm519, %v2366, 0
  %v2383 = vsel %vm519, %v2367, 0
  %v2385 = vsel %vm571, %v2373, 0
  %2387 = vmatprep.subr.mxu0 0.0
  %2388 = vmatpush1.msra.mxu0 0.0
  %2389 = vmatprep.subr.mxu0 0.0
  %2390 = vmatpush1.msra.mxu0 0.0
  %2391 = vmatprep.subr.mxu0 0.0
  %2392 = vmatpush1.msra.mxu0 0.0
  %2393 = vmatprep.subr.mxu0 0.0
  %2394 = vmatpush1.msra.mxu0 0.0
  %2395 = vmatprep.subr.mxu0 0.0
  %2396 = vmatpush1.msra.mxu0 0.0
  %2397 = vmatprep.subr.mxu0 0.0
  %2398 = vmatpush1.msra.mxu0 0.0
  %2399 = vmatprep.subr.mxu0 0.0
  %2400 = vmatpush1.msra.mxu0 0.0
  %2401 = vmatprep.subr.mxu0 0.0
  %2402 = vmatpush1.msra.mxu0 0.0
  %2403 = vmatprep.subr.mxu0 0.0
  %2404 = vmatpush1.msra.mxu0 0.0
  %2405 = vmatprep.subr.mxu0 0.0
  %2406 = vmatpush1.msra.mxu0 0.0
  %2407 = vmatprep.subr.mxu0 0.0
  %2408 = vmatpush1.msra.mxu0 0.0
  %2409 = vmatprep.subr.mxu0 0.0
  %2410 = vmatpush1.msra.mxu0 0.0
  %2411 = vmatprep.subr.mxu0 0.0
  %2412 = vmatpush1.msra.mxu0 0.0
  %2413 = vmatprep.subr.mxu0 0.0
  %2414 = vmatpush1.msra.mxu0 %v2385
  %2415 = vmatprep.subr.mxu0 0.0
  %2416 = vmatpush1.msra.mxu0 %v2371
  %2417 = vmatprep.subr.mxu0 0.0
  %2418 = vmatpush1.msra.mxu0 %v2369
  %2419 = vmatprep.subr.mxu0 0.0
  %2420 = vmatpush2.msra.mxu0 0.0
  %2421 = vmatprep.subr.mxu0 0.0
  %2422 = vmatpush2.msra.mxu0 0.0
  %2423 = vmatprep.subr.mxu0 0.0
  %2424 = vmatpush2.msra.mxu0 0.0
  %2425 = vmatprep.subr.mxu0 0.0
  %2426 = vmatpush2.msra.mxu0 0.0
  %2427 = vmatprep.subr.mxu0 0.0
  %2428 = vmatpush2.msra.mxu0 0.0
  %2429 = vmatprep.subr.mxu0 0.0
  %2430 = vmatpush2.msra.mxu0 0.0
  %2431 = vmatprep.subr.mxu0 0.0
  %2432 = vmatpush2.msra.mxu0 0.0
  %2433 = vmatprep.subr.mxu0 0.0
  %2434 = vmatpush2.msra.mxu0 0.0
  %2435 = vmatprep.subr.mxu0 0.0
  %2436 = vmatpush2.msra.mxu0 0.0
  %2437 = vmatprep.subr.mxu0 0.0
  %2438 = vmatpush2.msra.mxu0 0.0
  %2439 = vmatprep.subr.mxu0 0.0
  %2440 = vmatpush2.msra.mxu0 0.0
  %2441 = vmatprep.subr.mxu0 0.0
  %2442 = vmatpush2.msra.mxu0 0.0
  %2443 = vmatprep.subr.mxu0 0.0
  %2444 = vmatpush2.msra.mxu0 0.0
  %2445 = vmatprep.subr.mxu0 0.0
  %2446 = vmatpush2.msra.mxu0 0.0
  %2447 = vmatprep.subr.mxu0 0.0
  %2448 = vmatpush2.msra.mxu0 0.0
  %2449 = vmatprep.subr.mxu0 0.0
  %2450 = vmatpush2.msra.mxu0 0.0
  %2451 = vmatprep.mubr.f32.mxu0 0.0
  %2452 = vmatmul.mubr.f32.gmra.mxu0 %v2377
  %v2453 = vpop.f32.mrf.mxu0
  %v2454 = vadd.f32 0.0, %v2453
  %v2455 = vpop.f32.mrf.mxu0
  %2456 = vmatprep.mubr.f32.mxu0 0.0
  %2457 = vmatmul.mubr.f32.gmra.mxu0 %v2380
  %v2458 = vpop.f32.mrf.mxu0
  %v2459 = vadd.f32 0.0, %v2458
  %v2460 = vpop.f32.mrf.mxu0
  %2461 = vmatprep.mubr.f32.mxu0 0.0
  %2462 = vmatmul.mubr.f32.gmra.mxu0 %v2383
  %v2463 = vpop.f32.mrf.mxu0
  %v2464 = vadd.f32 0.0, %v2463
  %v2465 = vpop.f32.mrf.mxu0
  %2466 = vdwg.mxu0
  %2467 = vrot.lane.b32.xlu0 %v2215, 120
  %v2468 = vpop.permute.xlu0 %2467
  %2469 = vrot.lane.b32.xlu0 %v2220, 120
  %v2470 = vpop.permute.xlu0 %2469
  %2471 = vrot.lane.b32.xlu0 %v2225, 120
  %v2472 = vpop.permute.xlu0 %2471
  %2473 = vrot.lane.b32.xlu0 %v2215, 80
  %v2474 = vpop.permute.xlu0 %2473
  %2475 = vrot.lane.b32.xlu0 %v2220, 80
  %v2476 = vpop.permute.xlu0 %2475
  %2477 = vrot.lane.b32.xlu0 %v2225, 80
  %v2478 = vpop.permute.xlu0 %2477
  %v2479 = vsel %vm420, %v2468, 0
  %v2481 = vsel %vm420, %v2470, 0
  %v2483 = vsel %vm420, %v2472, 0
  %v2485 = vsel %vm420, %v2474, 0
  %v2487 = vsel %vm420, %v2476, 0
  %v2489 = vsel %vm420, %v2478, 0
  %2491 = vmatprep.subr.mxu0 0.0
  %2492 = vmatpush1.xpose.msra.mxu0 0.0
  %2493 = vmatprep.subr.mxu0 0.0
  %2494 = vmatpush1.xpose.msra.mxu0 0.0
  %2495 = vmatprep.subr.mxu0 0.0
  %2496 = vmatpush1.xpose.msra.mxu0 0.0
  %2497 = vmatprep.subr.mxu0 0.0
  %2498 = vmatpush1.xpose.msra.mxu0 0.0
  %2499 = vmatprep.subr.mxu0 0.0
  %2500 = vmatpush1.xpose.msra.mxu0 0.0
  %2501 = vmatprep.subr.mxu0 0.0
  %2502 = vmatpush1.xpose.msra.mxu0 0.0
  %2503 = vmatprep.subr.mxu0 0.0
  %2504 = vmatpush1.xpose.msra.mxu0 0.0
  %2505 = vmatprep.subr.mxu0 0.0
  %2506 = vmatpush1.xpose.msra.mxu0 0.0
  %2507 = vmatprep.subr.mxu0 0.0
  %2508 = vmatpush1.xpose.msra.mxu0 0.0
  %2509 = vmatprep.subr.mxu0 0.0
  %2510 = vmatpush1.xpose.msra.mxu0 0.0
  %2511 = vmatprep.subr.mxu0 0.0
  %2512 = vmatpush1.xpose.msra.mxu0 0.0
  %2513 = vmatprep.subr.mxu0 0.0
  %2514 = vmatpush1.xpose.msra.mxu0 0.0
  %2515 = vmatprep.subr.mxu0 0.0
  %2516 = vmatpush1.xpose.msra.mxu0 0.0
  %2517 = vmatprep.subr.mxu0 0.0
  %2518 = vmatpush1.xpose.msra.mxu0 %v2489
  %2519 = vmatprep.subr.mxu0 0.0
  %2520 = vmatpush1.xpose.msra.mxu0 %v2487
  %2521 = vmatprep.subr.mxu0 0.0
  %2522 = vmatpush1.xpose.msra.mxu0 %v2485
  %2523 = vmatprep.subr.mxu0 0.0
  %2524 = vmatpush2.xpose.msra.mxu0 0.0
  %2525 = vmatprep.subr.mxu0 0.0
  %2526 = vmatpush2.xpose.msra.mxu0 0.0
  %2527 = vmatprep.subr.mxu0 0.0
  %2528 = vmatpush2.xpose.msra.mxu0 0.0
  %2529 = vmatprep.subr.mxu0 0.0
  %2530 = vmatpush2.xpose.msra.mxu0 0.0
  %2531 = vmatprep.subr.mxu0 0.0
  %2532 = vmatpush2.xpose.msra.mxu0 0.0
  %2533 = vmatprep.subr.mxu0 0.0
  %2534 = vmatpush2.xpose.msra.mxu0 0.0
  %2535 = vmatprep.subr.mxu0 0.0
  %2536 = vmatpush2.xpose.msra.mxu0 0.0
  %2537 = vmatprep.subr.mxu0 0.0
  %2538 = vmatpush2.xpose.msra.mxu0 0.0
  %2539 = vmatprep.subr.mxu0 0.0
  %2540 = vmatpush2.xpose.msra.mxu0 0.0
  %2541 = vmatprep.subr.mxu0 0.0
  %2542 = vmatpush2.xpose.msra.mxu0 0.0
  %2543 = vmatprep.subr.mxu0 0.0
  %2544 = vmatpush2.xpose.msra.mxu0 0.0
  %2545 = vmatprep.subr.mxu0 0.0
  %2546 = vmatpush2.xpose.msra.mxu0 0.0
  %2547 = vmatprep.subr.mxu0 0.0
  %2548 = vmatpush2.xpose.msra.mxu0 0.0
  %2549 = vmatprep.subr.mxu0 0.0
  %2550 = vmatpush2.xpose.msra.mxu0 0.0
  %2551 = vmatprep.subr.mxu0 0.0
  %2552 = vmatpush2.xpose.msra.mxu0 0.0
  %2553 = vmatprep.subr.mxu0 0.0
  %2554 = vmatpush2.xpose.msra.mxu0 0.0
  %2555 = vmatprep.mubr.f32.mxu0 0.0
  %2556 = vmatmul.mubr.f32.gmra.mxu0 %v2479
  %v2557 = vpop.f32.mrf.mxu0
  %v2558 = vadd.f32 0.0, %v2557
  %v2559 = vpop.f32.mrf.mxu0
  %2560 = vmatprep.mubr.f32.mxu0 0.0
  %2561 = vmatmul.mubr.f32.gmra.mxu0 %v2481
  %v2562 = vpop.f32.mrf.mxu0
  %v2563 = vadd.f32 0.0, %v2562
  %v2564 = vpop.f32.mrf.mxu0
  %2565 = vmatprep.mubr.f32.mxu0 0.0
  %2566 = vmatmul.mubr.f32.gmra.mxu0 %v2483
  %v2567 = vpop.f32.mrf.mxu0
  %v2568 = vadd.f32 0.0, %v2567
  %v2569 = vpop.f32.mrf.mxu0
  %2570 = vdwg.mxu0
  %v2571 = vmul.f32 %v2558, 0.35355338
  %v2572 = vmul.f32 %v2563, 0.35355338
  %v2573 = vmul.f32 %v2568, 0.35355338
  %v2574 = vadd.f32 %v2571, %v226
  %v2575 = vadd.f32 %v2572, %v247
  %v2576 = vadd.f32 %v2573, %v244
  %v2577 = vsel %vm519, %v2574, -inf
  %2578 = vmax.xlane.f32.xlu0 %v2577
  %v2579 = vpop.xlane.xlu0 %2578
  %v2580 = vsel %vm519, %v2575, -inf
  %2581 = vmax.xlane.f32.xlu0 %v2580
  %v2582 = vpop.xlane.xlu0 %2581
  %v2583 = vsel %vm526, %v2576, -inf
  %2584 = vmax.xlane.f32.xlu0 %v2583
  %v2585 = vpop.xlane.xlu0 %2584
  %v2586 = vsub.f32 %v2574, %v2579
  %v2587 = vsub.f32 %v2575, %v2582
  %v2588 = vsub.f32 %v2576, %v2585
  %v2589 = vmul.f32 %v2586, 1.442695
  %v2590 = vpow.pop %v2589
  %v2591 = vmul.f32 %v2587, 1.442695
  %v2592 = vpow.pop %v2591
  %v2593 = vmul.f32 %v2588, 1.442695
  %v2594 = vpow.pop %v2593
  %v2595 = vsel %vm519, %v2590, 0.0
  %2596 = vadd.xlane.f32.xlu0 %v2595
  %v2597 = vpop.xlane.xlu0 %2596
  %v2598 = vsel %vm519, %v2592, 0.0
  %2599 = vadd.xlane.f32.xlu0 %v2598
  %v2600 = vpop.xlane.xlu0 %2599
  %v2601 = vsel %vm526, %v2594, 0.0
  %2602 = vadd.xlane.f32.xlu0 %v2601
  %v2603 = vpop.xlane.xlu0 %2602
  %v2604 = vrcp.pop %v2597
  %v2605 = vrcp.pop %v2600
  %v2606 = vrcp.pop %v2603
  %v2607 = vmul.f32 %v2590, %v2604
  %v2608 = vmul.f32 %v2592, %v2605
  %v2609 = vmul.f32 %v2594, %v2606
  %2610 = vrot.lane.b32.xlu0 %v2215, 40
  %v2611 = vpop.permute.xlu0 %2610
  %2612 = vrot.lane.b32.xlu0 %v2220, 40
  %v2613 = vpop.permute.xlu0 %2612
  %2614 = vrot.lane.b32.xlu0 %v2225, 40
  %v2615 = vpop.permute.xlu0 %2614
  %v2619 = vsel %vm519, %v2607, 0
  %v2622 = vsel %vm519, %v2608, 0
  %v2625 = vsel %vm519, %v2609, 0
  %v2627 = vsel %vm571, %v2615, 0
  %2629 = vmatprep.subr.mxu0 0.0
  %2630 = vmatpush1.msra.mxu0 0.0
  %2631 = vmatprep.subr.mxu0 0.0
  %2632 = vmatpush1.msra.mxu0 0.0
  %2633 = vmatprep.subr.mxu0 0.0
  %2634 = vmatpush1.msra.mxu0 0.0
  %2635 = vmatprep.subr.mxu0 0.0
  %2636 = vmatpush1.msra.mxu0 0.0
  %2637 = vmatprep.subr.mxu0 0.0
  %2638 = vmatpush1.msra.mxu0 0.0
  %2639 = vmatprep.subr.mxu0 0.0
  %2640 = vmatpush1.msra.mxu0 0.0
  %2641 = vmatprep.subr.mxu0 0.0
  %2642 = vmatpush1.msra.mxu0 0.0
  %2643 = vmatprep.subr.mxu0 0.0
  %2644 = vmatpush1.msra.mxu0 0.0
  %2645 = vmatprep.subr.mxu0 0.0
  %2646 = vmatpush1.msra.mxu0 0.0
  %2647 = vmatprep.subr.mxu0 0.0
  %2648 = vmatpush1.msra.mxu0 0.0
  %2649 = vmatprep.subr.mxu0 0.0
  %2650 = vmatpush1.msra.mxu0 0.0
  %2651 = vmatprep.subr.mxu0 0.0
  %2652 = vmatpush1.msra.mxu0 0.0
  %2653 = vmatprep.subr.mxu0 0.0
  %2654 = vmatpush1.msra.mxu0 0.0
  %2655 = vmatprep.subr.mxu0 0.0
  %2656 = vmatpush1.msra.mxu0 %v2627
  %2657 = vmatprep.subr.mxu0 0.0
  %2658 = vmatpush1.msra.mxu0 %v2613
  %2659 = vmatprep.subr.mxu0 0.0
  %2660 = vmatpush1.msra.mxu0 %v2611
  %2661 = vmatprep.subr.mxu0 0.0
  %2662 = vmatpush2.msra.mxu0 0.0
  %2663 = vmatprep.subr.mxu0 0.0
  %2664 = vmatpush2.msra.mxu0 0.0
  %2665 = vmatprep.subr.mxu0 0.0
  %2666 = vmatpush2.msra.mxu0 0.0
  %2667 = vmatprep.subr.mxu0 0.0
  %2668 = vmatpush2.msra.mxu0 0.0
  %2669 = vmatprep.subr.mxu0 0.0
  %2670 = vmatpush2.msra.mxu0 0.0
  %2671 = vmatprep.subr.mxu0 0.0
  %2672 = vmatpush2.msra.mxu0 0.0
  %2673 = vmatprep.subr.mxu0 0.0
  %2674 = vmatpush2.msra.mxu0 0.0
  %2675 = vmatprep.subr.mxu0 0.0
  %2676 = vmatpush2.msra.mxu0 0.0
  %2677 = vmatprep.subr.mxu0 0.0
  %2678 = vmatpush2.msra.mxu0 0.0
  %2679 = vmatprep.subr.mxu0 0.0
  %2680 = vmatpush2.msra.mxu0 0.0
  %2681 = vmatprep.subr.mxu0 0.0
  %2682 = vmatpush2.msra.mxu0 0.0
  %2683 = vmatprep.subr.mxu0 0.0
  %2684 = vmatpush2.msra.mxu0 0.0
  %2685 = vmatprep.subr.mxu0 0.0
  %2686 = vmatpush2.msra.mxu0 0.0
  %2687 = vmatprep.subr.mxu0 0.0
  %2688 = vmatpush2.msra.mxu0 0.0
  %2689 = vmatprep.subr.mxu0 0.0
  %2690 = vmatpush2.msra.mxu0 0.0
  %2691 = vmatprep.subr.mxu0 0.0
  %2692 = vmatpush2.msra.mxu0 0.0
  %2693 = vmatprep.mubr.f32.mxu0 0.0
  %2694 = vmatmul.mubr.f32.gmra.mxu0 %v2619
  %v2695 = vpop.f32.mrf.mxu0
  %v2696 = vadd.f32 0.0, %v2695
  %v2697 = vpop.f32.mrf.mxu0
  %2698 = vmatprep.mubr.f32.mxu0 0.0
  %2699 = vmatmul.mubr.f32.gmra.mxu0 %v2622
  %v2700 = vpop.f32.mrf.mxu0
  %v2701 = vadd.f32 0.0, %v2700
  %v2702 = vpop.f32.mrf.mxu0
  %2703 = vmatprep.mubr.f32.mxu0 0.0
  %2704 = vmatmul.mubr.f32.gmra.mxu0 %v2625
  %v2705 = vpop.f32.mrf.mxu0
  %v2706 = vadd.f32 0.0, %v2705
  %v2707 = vpop.f32.mrf.mxu0
  %2708 = vdwg.mxu0
  %2709 = vrot.lane.b32.xlu0 %v2215, 112
  %v2710 = vpop.permute.xlu0 %2709
  %2711 = vrot.lane.b32.xlu0 %v2220, 112
  %v2712 = vpop.permute.xlu0 %2711
  %2713 = vrot.lane.b32.xlu0 %v2225, 112
  %v2714 = vpop.permute.xlu0 %2713
  %2715 = vrot.lane.b32.xlu0 %v2215, 72
  %v2716 = vpop.permute.xlu0 %2715
  %2717 = vrot.lane.b32.xlu0 %v2220, 72
  %v2718 = vpop.permute.xlu0 %2717
  %2719 = vrot.lane.b32.xlu0 %v2225, 72
  %v2720 = vpop.permute.xlu0 %2719
  %v2721 = vsel %vm420, %v2710, 0
  %v2723 = vsel %vm420, %v2712, 0
  %v2725 = vsel %vm420, %v2714, 0
  %v2727 = vsel %vm420, %v2716, 0
  %v2729 = vsel %vm420, %v2718, 0
  %v2731 = vsel %vm420, %v2720, 0
  %2733 = vmatprep.subr.mxu0 0.0
  %2734 = vmatpush1.xpose.msra.mxu0 0.0
  %2735 = vmatprep.subr.mxu0 0.0
  %2736 = vmatpush1.xpose.msra.mxu0 0.0
  %2737 = vmatprep.subr.mxu0 0.0
  %2738 = vmatpush1.xpose.msra.mxu0 0.0
  %2739 = vmatprep.subr.mxu0 0.0
  %2740 = vmatpush1.xpose.msra.mxu0 0.0
  %2741 = vmatprep.subr.mxu0 0.0
  %2742 = vmatpush1.xpose.msra.mxu0 0.0
  %2743 = vmatprep.subr.mxu0 0.0
  %2744 = vmatpush1.xpose.msra.mxu0 0.0
  %2745 = vmatprep.subr.mxu0 0.0
  %2746 = vmatpush1.xpose.msra.mxu0 0.0
  %2747 = vmatprep.subr.mxu0 0.0
  %2748 = vmatpush1.xpose.msra.mxu0 0.0
  %2749 = vmatprep.subr.mxu0 0.0
  %2750 = vmatpush1.xpose.msra.mxu0 0.0
  %2751 = vmatprep.subr.mxu0 0.0
  %2752 = vmatpush1.xpose.msra.mxu0 0.0
  %2753 = vmatprep.subr.mxu0 0.0
  %2754 = vmatpush1.xpose.msra.mxu0 0.0
  %2755 = vmatprep.subr.mxu0 0.0
  %2756 = vmatpush1.xpose.msra.mxu0 0.0
  %2757 = vmatprep.subr.mxu0 0.0
  %2758 = vmatpush1.xpose.msra.mxu0 0.0
  %2759 = vmatprep.subr.mxu0 0.0
  %2760 = vmatpush1.xpose.msra.mxu0 %v2731
  %2761 = vmatprep.subr.mxu0 0.0
  %2762 = vmatpush1.xpose.msra.mxu0 %v2729
  %2763 = vmatprep.subr.mxu0 0.0
  %2764 = vmatpush1.xpose.msra.mxu0 %v2727
  %2765 = vmatprep.subr.mxu0 0.0
  %2766 = vmatpush2.xpose.msra.mxu0 0.0
  %2767 = vmatprep.subr.mxu0 0.0
  %2768 = vmatpush2.xpose.msra.mxu0 0.0
  %2769 = vmatprep.subr.mxu0 0.0
  %2770 = vmatpush2.xpose.msra.mxu0 0.0
  %2771 = vmatprep.subr.mxu0 0.0
  %2772 = vmatpush2.xpose.msra.mxu0 0.0
  %2773 = vmatprep.subr.mxu0 0.0
  %2774 = vmatpush2.xpose.msra.mxu0 0.0
  %2775 = vmatprep.subr.mxu0 0.0
  %2776 = vmatpush2.xpose.msra.mxu0 0.0
  %2777 = vmatprep.subr.mxu0 0.0
  %2778 = vmatpush2.xpose.msra.mxu0 0.0
  %2779 = vmatprep.subr.mxu0 0.0
  %2780 = vmatpush2.xpose.msra.mxu0 0.0
  %2781 = vmatprep.subr.mxu0 0.0
  %2782 = vmatpush2.xpose.msra.mxu0 0.0
  %2783 = vmatprep.subr.mxu0 0.0
  %2784 = vmatpush2.xpose.msra.mxu0 0.0
  %2785 = vmatprep.subr.mxu0 0.0
  %2786 = vmatpush2.xpose.msra.mxu0 0.0
  %2787 = vmatprep.subr.mxu0 0.0
  %2788 = vmatpush2.xpose.msra.mxu0 0.0
  %2789 = vmatprep.subr.mxu0 0.0
  %2790 = vmatpush2.xpose.msra.mxu0 0.0
  %2791 = vmatprep.subr.mxu0 0.0
  %2792 = vmatpush2.xpose.msra.mxu0 0.0
  %2793 = vmatprep.subr.mxu0 0.0
  %2794 = vmatpush2.xpose.msra.mxu0 0.0
  %2795 = vmatprep.subr.mxu0 0.0
  %2796 = vmatpush2.xpose.msra.mxu0 0.0
  %2797 = vmatprep.mubr.f32.mxu0 0.0
  %2798 = vmatmul.mubr.f32.gmra.mxu0 %v2721
  %v2799 = vpop.f32.mrf.mxu0
  %v2800 = vadd.f32 0.0, %v2799
  %v2801 = vpop.f32.mrf.mxu0
  %2802 = vmatprep.mubr.f32.mxu0 0.0
  %2803 = vmatmul.mubr.f32.gmra.mxu0 %v2723
  %v2804 = vpop.f32.mrf.mxu0
  %v2805 = vadd.f32 0.0, %v2804
  %v2806 = vpop.f32.mrf.mxu0
  %2807 = vmatprep.mubr.f32.mxu0 0.0
  %2808 = vmatmul.mubr.f32.gmra.mxu0 %v2725
  %v2809 = vpop.f32.mrf.mxu0
  %v2810 = vadd.f32 0.0, %v2809
  %v2811 = vpop.f32.mrf.mxu0
  %2812 = vdwg.mxu0
  %v2813 = vmul.f32 %v2800, 0.35355338
  %v2814 = vmul.f32 %v2805, 0.35355338
  %v2815 = vmul.f32 %v2810, 0.35355338
  %v2816 = vadd.f32 %v2813, %v226
  %v2817 = vadd.f32 %v2814, %v247
  %v2818 = vadd.f32 %v2815, %v244
  %v2819 = vsel %vm519, %v2816, -inf
  %2820 = vmax.xlane.f32.xlu0 %v2819
  %v2821 = vpop.xlane.xlu0 %2820
  %v2822 = vsel %vm519, %v2817, -inf
  %2823 = vmax.xlane.f32.xlu0 %v2822
  %v2824 = vpop.xlane.xlu0 %2823
  %v2825 = vsel %vm526, %v2818, -inf
  %2826 = vmax.xlane.f32.xlu0 %v2825
  %v2827 = vpop.xlane.xlu0 %2826
  %v2828 = vsub.f32 %v2816, %v2821
  %v2829 = vsub.f32 %v2817, %v2824
  %v2830 = vsub.f32 %v2818, %v2827
  %v2831 = vmul.f32 %v2828, 1.442695
  %v2832 = vpow.pop %v2831
  %v2833 = vmul.f32 %v2829, 1.442695
  %v2834 = vpow.pop %v2833
  %v2835 = vmul.f32 %v2830, 1.442695
  %v2836 = vpow.pop %v2835
  %v2837 = vsel %vm519, %v2832, 0.0
  %2838 = vadd.xlane.f32.xlu0 %v2837
  %v2839 = vpop.xlane.xlu0 %2838
  %v2840 = vsel %vm519, %v2834, 0.0
  %2841 = vadd.xlane.f32.xlu0 %v2840
  %v2842 = vpop.xlane.xlu0 %2841
  %v2843 = vsel %vm526, %v2836, 0.0
  %2844 = vadd.xlane.f32.xlu0 %v2843
  %v2845 = vpop.xlane.xlu0 %2844
  %v2846 = vrcp.pop %v2839
  %v2847 = vrcp.pop %v2842
  %v2848 = vrcp.pop %v2845
  %v2849 = vmul.f32 %v2832, %v2846
  %v2850 = vmul.f32 %v2834, %v2847
  %v2851 = vmul.f32 %v2836, %v2848
  %2852 = vrot.lane.b32.xlu0 %v2215, 32
  %v2853 = vpop.permute.xlu0 %2852
  %2854 = vrot.lane.b32.xlu0 %v2220, 32
  %v2855 = vpop.permute.xlu0 %2854
  %2856 = vrot.lane.b32.xlu0 %v2225, 32
  %v2857 = vpop.permute.xlu0 %2856
  %v2861 = vsel %vm519, %v2849, 0
  %v2864 = vsel %vm519, %v2850, 0
  %v2867 = vsel %vm519, %v2851, 0
  %v2869 = vsel %vm571, %v2857, 0
  %2871 = vmatprep.subr.mxu0 0.0
  %2872 = vmatpush1.msra.mxu0 0.0
  %2873 = vmatprep.subr.mxu0 0.0
  %2874 = vmatpush1.msra.mxu0 0.0
  %2875 = vmatprep.subr.mxu0 0.0
  %2876 = vmatpush1.msra.mxu0 0.0
  %2877 = vmatprep.subr.mxu0 0.0
  %2878 = vmatpush1.msra.mxu0 0.0
  %2879 = vmatprep.subr.mxu0 0.0
  %2880 = vmatpush1.msra.mxu0 0.0
  %2881 = vmatprep.subr.mxu0 0.0
  %2882 = vmatpush1.msra.mxu0 0.0
  %2883 = vmatprep.subr.mxu0 0.0
  %2884 = vmatpush1.msra.mxu0 0.0
  %2885 = vmatprep.subr.mxu0 0.0
  %2886 = vmatpush1.msra.mxu0 0.0
  %2887 = vmatprep.subr.mxu0 0.0
  %2888 = vmatpush1.msra.mxu0 0.0
  %2889 = vmatprep.subr.mxu0 0.0
  %2890 = vmatpush1.msra.mxu0 0.0
  %2891 = vmatprep.subr.mxu0 0.0
  %2892 = vmatpush1.msra.mxu0 0.0
  %2893 = vmatprep.subr.mxu0 0.0
  %2894 = vmatpush1.msra.mxu0 0.0
  %2895 = vmatprep.subr.mxu0 0.0
  %2896 = vmatpush1.msra.mxu0 0.0
  %2897 = vmatprep.subr.mxu0 0.0
  %2898 = vmatpush1.msra.mxu0 %v2869
  %2899 = vmatprep.subr.mxu0 0.0
  %2900 = vmatpush1.msra.mxu0 %v2855
  %2901 = vmatprep.subr.mxu0 0.0
  %2902 = vmatpush1.msra.mxu0 %v2853
  %2903 = vmatprep.subr.mxu0 0.0
  %2904 = vmatpush2.msra.mxu0 0.0
  %2905 = vmatprep.subr.mxu0 0.0
  %2906 = vmatpush2.msra.mxu0 0.0
  %2907 = vmatprep.subr.mxu0 0.0
  %2908 = vmatpush2.msra.mxu0 0.0
  %2909 = vmatprep.subr.mxu0 0.0
  %2910 = vmatpush2.msra.mxu0 0.0
  %2911 = vmatprep.subr.mxu0 0.0
  %2912 = vmatpush2.msra.mxu0 0.0
  %2913 = vmatprep.subr.mxu0 0.0
  %2914 = vmatpush2.msra.mxu0 0.0
  %2915 = vmatprep.subr.mxu0 0.0
  %2916 = vmatpush2.msra.mxu0 0.0
  %2917 = vmatprep.subr.mxu0 0.0
  %2918 = vmatpush2.msra.mxu0 0.0
  %2919 = vmatprep.subr.mxu0 0.0
  %2920 = vmatpush2.msra.mxu0 0.0
  %2921 = vmatprep.subr.mxu0 0.0
  %2922 = vmatpush2.msra.mxu0 0.0
  %2923 = vmatprep.subr.mxu0 0.0
  %2924 = vmatpush2.msra.mxu0 0.0
  %2925 = vmatprep.subr.mxu0 0.0
  %2926 = vmatpush2.msra.mxu0 0.0
  %2927 = vmatprep.subr.mxu0 0.0
  %2928 = vmatpush2.msra.mxu0 0.0
  %2929 = vmatprep.subr.mxu0 0.0
  %2930 = vmatpush2.msra.mxu0 0.0
  %2931 = vmatprep.subr.mxu0 0.0
  %2932 = vmatpush2.msra.mxu0 0.0
  %2933 = vmatprep.subr.mxu0 0.0
  %2934 = vmatpush2.msra.mxu0 0.0
  %2935 = vmatprep.mubr.f32.mxu0 0.0
  %2936 = vmatmul.mubr.f32.gmra.mxu0 %v2861
  %v2937 = vpop.f32.mrf.mxu0
  %v2938 = vadd.f32 0.0, %v2937
  %v2939 = vpop.f32.mrf.mxu0
  %2940 = vmatprep.mubr.f32.mxu0 0.0
  %2941 = vmatmul.mubr.f32.gmra.mxu0 %v2864
  %v2942 = vpop.f32.mrf.mxu0
  %v2943 = vadd.f32 0.0, %v2942
  %v2944 = vpop.f32.mrf.mxu0
  %2945 = vmatprep.mubr.f32.mxu0 0.0
  %2946 = vmatmul.mubr.f32.gmra.mxu0 %v2867
  %v2947 = vpop.f32.mrf.mxu0
  %v2948 = vadd.f32 0.0, %v2947
  %v2949 = vpop.f32.mrf.mxu0
  %2950 = vdwg.mxu0
  %2951 = vrot.lane.b32.xlu0 %v2215, 104
  %v2952 = vpop.permute.xlu0 %2951
  %2953 = vrot.lane.b32.xlu0 %v2220, 104
  %v2954 = vpop.permute.xlu0 %2953
  %2955 = vrot.lane.b32.xlu0 %v2225, 104
  %v2956 = vpop.permute.xlu0 %2955
  %2957 = vrot.lane.b32.xlu0 %v2215, 64
  %v2958 = vpop.permute.xlu0 %2957
  %2959 = vrot.lane.b32.xlu0 %v2220, 64
  %v2960 = vpop.permute.xlu0 %2959
  %2961 = vrot.lane.b32.xlu0 %v2225, 64
  %v2962 = vpop.permute.xlu0 %2961
  %v2963 = vsel %vm420, %v2952, 0
  %v2965 = vsel %vm420, %v2954, 0
  %v2967 = vsel %vm420, %v2956, 0
  %v2969 = vsel %vm420, %v2958, 0
  %v2971 = vsel %vm420, %v2960, 0
  %v2973 = vsel %vm420, %v2962, 0
  %2975 = vmatprep.subr.mxu0 0.0
  %2976 = vmatpush1.xpose.msra.mxu0 0.0
  %2977 = vmatprep.subr.mxu0 0.0
  %2978 = vmatpush1.xpose.msra.mxu0 0.0
  %2979 = vmatprep.subr.mxu0 0.0
  %2980 = vmatpush1.xpose.msra.mxu0 0.0
  %2981 = vmatprep.subr.mxu0 0.0
  %2982 = vmatpush1.xpose.msra.mxu0 0.0
  %2983 = vmatprep.subr.mxu0 0.0
  %2984 = vmatpush1.xpose.msra.mxu0 0.0
  %2985 = vmatprep.subr.mxu0 0.0
  %2986 = vmatpush1.xpose.msra.mxu0 0.0
  %2987 = vmatprep.subr.mxu0 0.0
  %2988 = vmatpush1.xpose.msra.mxu0 0.0
  %2989 = vmatprep.subr.mxu0 0.0
  %2990 = vmatpush1.xpose.msra.mxu0 0.0
  %2991 = vmatprep.subr.mxu0 0.0
  %2992 = vmatpush1.xpose.msra.mxu0 0.0
  %2993 = vmatprep.subr.mxu0 0.0
  %2994 = vmatpush1.xpose.msra.mxu0 0.0
  %2995 = vmatprep.subr.mxu0 0.0
  %2996 = vmatpush1.xpose.msra.mxu0 0.0
  %2997 = vmatprep.subr.mxu0 0.0
  %2998 = vmatpush1.xpose.msra.mxu0 0.0
  %2999 = vmatprep.subr.mxu0 0.0
  %3000 = vmatpush1.xpose.msra.mxu0 0.0
  %3001 = vmatprep.subr.mxu0 0.0
  %3002 = vmatpush1.xpose.msra.mxu0 %v2973
  %3003 = vmatprep.subr.mxu0 0.0
  %3004 = vmatpush1.xpose.msra.mxu0 %v2971
  %3005 = vmatprep.subr.mxu0 0.0
  %3006 = vmatpush1.xpose.msra.mxu0 %v2969
  %3007 = vmatprep.subr.mxu0 0.0
  %3008 = vmatpush2.xpose.msra.mxu0 0.0
  %3009 = vmatprep.subr.mxu0 0.0
  %3010 = vmatpush2.xpose.msra.mxu0 0.0
  %3011 = vmatprep.subr.mxu0 0.0
  %3012 = vmatpush2.xpose.msra.mxu0 0.0
  %3013 = vmatprep.subr.mxu0 0.0
  %3014 = vmatpush2.xpose.msra.mxu0 0.0
  %3015 = vmatprep.subr.mxu0 0.0
  %3016 = vmatpush2.xpose.msra.mxu0 0.0
  %3017 = vmatprep.subr.mxu0 0.0
  %3018 = vmatpush2.xpose.msra.mxu0 0.0
  %3019 = vmatprep.subr.mxu0 0.0
  %3020 = vmatpush2.xpose.msra.mxu0 0.0
  %3021 = vmatprep.subr.mxu0 0.0
  %3022 = vmatpush2.xpose.msra.mxu0 0.0
  %3023 = vmatprep.subr.mxu0 0.0
  %3024 = vmatpush2.xpose.msra.mxu0 0.0
  %3025 = vmatprep.subr.mxu0 0.0
  %3026 = vmatpush2.xpose.msra.mxu0 0.0
  %3027 = vmatprep.subr.mxu0 0.0
  %3028 = vmatpush2.xpose.msra.mxu0 0.0
  %3029 = vmatprep.subr.mxu0 0.0
  %3030 = vmatpush2.xpose.msra.mxu0 0.0
  %3031 = vmatprep.subr.mxu0 0.0
  %3032 = vmatpush2.xpose.msra.mxu0 0.0
  %3033 = vmatprep.subr.mxu0 0.0
  %3034 = vmatpush2.xpose.msra.mxu0 0.0
  %3035 = vmatprep.subr.mxu0 0.0
  %3036 = vmatpush2.xpose.msra.mxu0 0.0
  %3037 = vmatprep.subr.mxu0 0.0
  %3038 = vmatpush2.xpose.msra.mxu0 0.0
  %3039 = vmatprep.mubr.f32.mxu0 0.0
  %3040 = vmatmul.mubr.f32.gmra.mxu0 %v2963
  %v3041 = vpop.f32.mrf.mxu0
  %v3042 = vadd.f32 0.0, %v3041
  %v3043 = vpop.f32.mrf.mxu0
  %3044 = vmatprep.mubr.f32.mxu0 0.0
  %3045 = vmatmul.mubr.f32.gmra.mxu0 %v2965
  %v3046 = vpop.f32.mrf.mxu0
  %v3047 = vadd.f32 0.0, %v3046
  %v3048 = vpop.f32.mrf.mxu0
  %3049 = vmatprep.mubr.f32.mxu0 0.0
  %3050 = vmatmul.mubr.f32.gmra.mxu0 %v2967
  %v3051 = vpop.f32.mrf.mxu0
  %v3052 = vadd.f32 0.0, %v3051
  %v3053 = vpop.f32.mrf.mxu0
  %3054 = vdwg.mxu0
  %v3055 = vmul.f32 %v3042, 0.35355338
  %v3056 = vmul.f32 %v3047, 0.35355338
  %v3057 = vmul.f32 %v3052, 0.35355338
  %v3058 = vadd.f32 %v3055, %v226
  %v3059 = vadd.f32 %v3056, %v247
  %v3060 = vadd.f32 %v3057, %v244
  %v3061 = vsel %vm519, %v3058, -inf
  %3062 = vmax.xlane.f32.xlu0 %v3061
  %v3063 = vpop.xlane.xlu0 %3062
  %v3064 = vsel %vm519, %v3059, -inf
  %3065 = vmax.xlane.f32.xlu0 %v3064
  %v3066 = vpop.xlane.xlu0 %3065
  %v3067 = vsel %vm526, %v3060, -inf
  %3068 = vmax.xlane.f32.xlu0 %v3067
  %v3069 = vpop.xlane.xlu0 %3068
  %v3070 = vsub.f32 %v3058, %v3063
  %v3071 = vsub.f32 %v3059, %v3066
  %v3072 = vsub.f32 %v3060, %v3069
  %v3073 = vmul.f32 %v3070, 1.442695
  %v3074 = vpow.pop %v3073
  %v3075 = vmul.f32 %v3071, 1.442695
  %v3076 = vpow.pop %v3075
  %v3077 = vmul.f32 %v3072, 1.442695
  %v3078 = vpow.pop %v3077
  %v3079 = vsel %vm519, %v3074, 0.0
  %3080 = vadd.xlane.f32.xlu0 %v3079
  %v3081 = vpop.xlane.xlu0 %3080
  %v3082 = vsel %vm519, %v3076, 0.0
  %3083 = vadd.xlane.f32.xlu0 %v3082
  %v3084 = vpop.xlane.xlu0 %3083
  %v3085 = vsel %vm526, %v3078, 0.0
  %3086 = vadd.xlane.f32.xlu0 %v3085
  %v3087 = vpop.xlane.xlu0 %3086
  %v3088 = vrcp.pop %v3081
  %v3089 = vrcp.pop %v3084
  %v3090 = vrcp.pop %v3087
  %v3091 = vmul.f32 %v3074, %v3088
  %v3092 = vmul.f32 %v3076, %v3089
  %v3093 = vmul.f32 %v3078, %v3090
  %3094 = vrot.lane.b32.xlu0 %v2215, 24
  %v3095 = vpop.permute.xlu0 %3094
  %3096 = vrot.lane.b32.xlu0 %v2220, 24
  %v3097 = vpop.permute.xlu0 %3096
  %3098 = vrot.lane.b32.xlu0 %v2225, 24
  %v3099 = vpop.permute.xlu0 %3098
  %v3103 = vsel %vm519, %v3091, 0
  %v3106 = vsel %vm519, %v3092, 0
  %v3109 = vsel %vm519, %v3093, 0
  %v3111 = vsel %vm571, %v3099, 0
  %3113 = vmatprep.subr.mxu0 0.0
  %3114 = vmatpush1.msra.mxu0 0.0
  %3115 = vmatprep.subr.mxu0 0.0
  %3116 = vmatpush1.msra.mxu0 0.0
  %3117 = vmatprep.subr.mxu0 0.0
  %3118 = vmatpush1.msra.mxu0 0.0
  %3119 = vmatprep.subr.mxu0 0.0
  %3120 = vmatpush1.msra.mxu0 0.0
  %3121 = vmatprep.subr.mxu0 0.0
  %3122 = vmatpush1.msra.mxu0 0.0
  %3123 = vmatprep.subr.mxu0 0.0
  %3124 = vmatpush1.msra.mxu0 0.0
  %3125 = vmatprep.subr.mxu0 0.0
  %3126 = vmatpush1.msra.mxu0 0.0
  %3127 = vmatprep.subr.mxu0 0.0
  %3128 = vmatpush1.msra.mxu0 0.0
  %3129 = vmatprep.subr.mxu0 0.0
  %3130 = vmatpush1.msra.mxu0 0.0
  %3131 = vmatprep.subr.mxu0 0.0
  %3132 = vmatpush1.msra.mxu0 0.0
  %3133 = vmatprep.subr.mxu0 0.0
  %3134 = vmatpush1.msra.mxu0 0.0
  %3135 = vmatprep.subr.mxu0 0.0
  %3136 = vmatpush1.msra.mxu0 0.0
  %3137 = vmatprep.subr.mxu0 0.0
  %3138 = vmatpush1.msra.mxu0 0.0
  %3139 = vmatprep.subr.mxu0 0.0
  %3140 = vmatpush1.msra.mxu0 %v3111
  %3141 = vmatprep.subr.mxu0 0.0
  %3142 = vmatpush1.msra.mxu0 %v3097
  %3143 = vmatprep.subr.mxu0 0.0
  %3144 = vmatpush1.msra.mxu0 %v3095
  %3145 = vmatprep.subr.mxu0 0.0
  %3146 = vmatpush2.msra.mxu0 0.0
  %3147 = vmatprep.subr.mxu0 0.0
  %3148 = vmatpush2.msra.mxu0 0.0
  %3149 = vmatprep.subr.mxu0 0.0
  %3150 = vmatpush2.msra.mxu0 0.0
  %3151 = vmatprep.subr.mxu0 0.0
  %3152 = vmatpush2.msra.mxu0 0.0
  %3153 = vmatprep.subr.mxu0 0.0
  %3154 = vmatpush2.msra.mxu0 0.0
  %3155 = vmatprep.subr.mxu0 0.0
  %3156 = vmatpush2.msra.mxu0 0.0
  %3157 = vmatprep.subr.mxu0 0.0
  %3158 = vmatpush2.msra.mxu0 0.0
  %3159 = vmatprep.subr.mxu0 0.0
  %3160 = vmatpush2.msra.mxu0 0.0
  %3161 = vmatprep.subr.mxu0 0.0
  %3162 = vmatpush2.msra.mxu0 0.0
  %3163 = vmatprep.subr.mxu0 0.0
  %3164 = vmatpush2.msra.mxu0 0.0
  %3165 = vmatprep.subr.mxu0 0.0
  %3166 = vmatpush2.msra.mxu0 0.0
  %3167 = vmatprep.subr.mxu0 0.0
  %3168 = vmatpush2.msra.mxu0 0.0
  %3169 = vmatprep.subr.mxu0 0.0
  %3170 = vmatpush2.msra.mxu0 0.0
  %3171 = vmatprep.subr.mxu0 0.0
  %3172 = vmatpush2.msra.mxu0 0.0
  %3173 = vmatprep.subr.mxu0 0.0
  %3174 = vmatpush2.msra.mxu0 0.0
  %3175 = vmatprep.subr.mxu0 0.0
  %3176 = vmatpush2.msra.mxu0 0.0
  %3177 = vmatprep.mubr.f32.mxu0 0.0
  %3178 = vmatmul.mubr.f32.gmra.mxu0 %v3103
  %v3179 = vpop.f32.mrf.mxu0
  %v3180 = vadd.f32 0.0, %v3179
  %v3181 = vpop.f32.mrf.mxu0
  %3182 = vmatprep.mubr.f32.mxu0 0.0
  %3183 = vmatmul.mubr.f32.gmra.mxu0 %v3106
  %v3184 = vpop.f32.mrf.mxu0
  %v3185 = vadd.f32 0.0, %v3184
  %v3186 = vpop.f32.mrf.mxu0
  %3187 = vmatprep.mubr.f32.mxu0 0.0
  %3188 = vmatmul.mubr.f32.gmra.mxu0 %v3109
  %v3189 = vpop.f32.mrf.mxu0
  %v3190 = vadd.f32 0.0, %v3189
  %v3191 = vpop.f32.mrf.mxu0
  %3192 = vdwg.mxu0
  %3193 = vrot.lane.b32.xlu0 %v2215, 96
  %v3194 = vpop.permute.xlu0 %3193
  %3195 = vrot.lane.b32.xlu0 %v2220, 96
  %v3196 = vpop.permute.xlu0 %3195
  %3197 = vrot.lane.b32.xlu0 %v2225, 96
  %v3198 = vpop.permute.xlu0 %3197
  %3199 = vrot.lane.b32.xlu0 %v2215, 56
  %v3200 = vpop.permute.xlu0 %3199
  %3201 = vrot.lane.b32.xlu0 %v2220, 56
  %v3202 = vpop.permute.xlu0 %3201
  %3203 = vrot.lane.b32.xlu0 %v2225, 56
  %v3204 = vpop.permute.xlu0 %3203
  %v3205 = vsel %vm420, %v3194, 0
  %v3207 = vsel %vm420, %v3196, 0
  %v3209 = vsel %vm420, %v3198, 0
  %v3211 = vsel %vm420, %v3200, 0
  %v3213 = vsel %vm420, %v3202, 0
  %v3215 = vsel %vm420, %v3204, 0
  %3217 = vmatprep.subr.mxu0 0.0
  %3218 = vmatpush1.xpose.msra.mxu0 0.0
  %3219 = vmatprep.subr.mxu0 0.0
  %3220 = vmatpush1.xpose.msra.mxu0 0.0
  %3221 = vmatprep.subr.mxu0 0.0
  %3222 = vmatpush1.xpose.msra.mxu0 0.0
  %3223 = vmatprep.subr.mxu0 0.0
  %3224 = vmatpush1.xpose.msra.mxu0 0.0
  %3225 = vmatprep.subr.mxu0 0.0
  %3226 = vmatpush1.xpose.msra.mxu0 0.0
  %3227 = vmatprep.subr.mxu0 0.0
  %3228 = vmatpush1.xpose.msra.mxu0 0.0
  %3229 = vmatprep.subr.mxu0 0.0
  %3230 = vmatpush1.xpose.msra.mxu0 0.0
  %3231 = vmatprep.subr.mxu0 0.0
  %3232 = vmatpush1.xpose.msra.mxu0 0.0
  %3233 = vmatprep.subr.mxu0 0.0
  %3234 = vmatpush1.xpose.msra.mxu0 0.0
  %3235 = vmatprep.subr.mxu0 0.0
  %3236 = vmatpush1.xpose.msra.mxu0 0.0
  %3237 = vmatprep.subr.mxu0 0.0
  %3238 = vmatpush1.xpose.msra.mxu0 0.0
  %3239 = vmatprep.subr.mxu0 0.0
  %3240 = vmatpush1.xpose.msra.mxu0 0.0
  %3241 = vmatprep.subr.mxu0 0.0
  %3242 = vmatpush1.xpose.msra.mxu0 0.0
  %3243 = vmatprep.subr.mxu0 0.0
  %3244 = vmatpush1.xpose.msra.mxu0 %v3215
  %3245 = vmatprep.subr.mxu0 0.0
  %3246 = vmatpush1.xpose.msra.mxu0 %v3213
  %3247 = vmatprep.subr.mxu0 0.0
  %3248 = vmatpush1.xpose.msra.mxu0 %v3211
  %3249 = vmatprep.subr.mxu0 0.0
  %3250 = vmatpush2.xpose.msra.mxu0 0.0
  %3251 = vmatprep.subr.mxu0 0.0
  %3252 = vmatpush2.xpose.msra.mxu0 0.0
  %3253 = vmatprep.subr.mxu0 0.0
  %3254 = vmatpush2.xpose.msra.mxu0 0.0
  %3255 = vmatprep.subr.mxu0 0.0
  %3256 = vmatpush2.xpose.msra.mxu0 0.0
  %3257 = vmatprep.subr.mxu0 0.0
  %3258 = vmatpush2.xpose.msra.mxu0 0.0
  %3259 = vmatprep.subr.mxu0 0.0
  %3260 = vmatpush2.xpose.msra.mxu0 0.0
  %3261 = vmatprep.subr.mxu0 0.0
  %3262 = vmatpush2.xpose.msra.mxu0 0.0
  %3263 = vmatprep.subr.mxu0 0.0
  %3264 = vmatpush2.xpose.msra.mxu0 0.0
  %3265 = vmatprep.subr.mxu0 0.0
  %3266 = vmatpush2.xpose.msra.mxu0 0.0
  %3267 = vmatprep.subr.mxu0 0.0
  %3268 = vmatpush2.xpose.msra.mxu0 0.0
  %3269 = vmatprep.subr.mxu0 0.0
  %3270 = vmatpush2.xpose.msra.mxu0 0.0
  %3271 = vmatprep.subr.mxu0 0.0
  %3272 = vmatpush2.xpose.msra.mxu0 0.0
  %3273 = vmatprep.subr.mxu0 0.0
  %3274 = vmatpush2.xpose.msra.mxu0 0.0
  %3275 = vmatprep.subr.mxu0 0.0
  %3276 = vmatpush2.xpose.msra.mxu0 0.0
  %3277 = vmatprep.subr.mxu0 0.0
  %3278 = vmatpush2.xpose.msra.mxu0 0.0
  %3279 = vmatprep.subr.mxu0 0.0
  %3280 = vmatpush2.xpose.msra.mxu0 0.0
  %3281 = vmatprep.mubr.f32.mxu0 0.0
  %3282 = vmatmul.mubr.f32.gmra.mxu0 %v3205
  %v3283 = vpop.f32.mrf.mxu0
  %v3284 = vadd.f32 0.0, %v3283
  %v3285 = vpop.f32.mrf.mxu0
  %3286 = vmatprep.mubr.f32.mxu0 0.0
  %3287 = vmatmul.mubr.f32.gmra.mxu0 %v3207
  %v3288 = vpop.f32.mrf.mxu0
  %v3289 = vadd.f32 0.0, %v3288
  %v3290 = vpop.f32.mrf.mxu0
  %3291 = vmatprep.mubr.f32.mxu0 0.0
  %3292 = vmatmul.mubr.f32.gmra.mxu0 %v3209
  %v3293 = vpop.f32.mrf.mxu0
  %v3294 = vadd.f32 0.0, %v3293
  %v3295 = vpop.f32.mrf.mxu0
  %3296 = vdwg.mxu0
  %v3297 = vmul.f32 %v3284, 0.35355338
  %v3298 = vmul.f32 %v3289, 0.35355338
  %v3299 = vmul.f32 %v3294, 0.35355338
  %v3300 = vadd.f32 %v3297, %v226
  %v3301 = vadd.f32 %v3298, %v247
  %v3302 = vadd.f32 %v3299, %v244
  %v3303 = vsel %vm519, %v3300, -inf
  %3304 = vmax.xlane.f32.xlu0 %v3303
  %v3305 = vpop.xlane.xlu0 %3304
  %v3306 = vsel %vm519, %v3301, -inf
  %3307 = vmax.xlane.f32.xlu0 %v3306
  %v3308 = vpop.xlane.xlu0 %3307
  %v3309 = vsel %vm526, %v3302, -inf
  %3310 = vmax.xlane.f32.xlu0 %v3309
  %v3311 = vpop.xlane.xlu0 %3310
  %v3312 = vsub.f32 %v3300, %v3305
  %v3313 = vsub.f32 %v3301, %v3308
  %v3314 = vsub.f32 %v3302, %v3311
  %v3315 = vmul.f32 %v3312, 1.442695
  %v3316 = vpow.pop %v3315
  %v3317 = vmul.f32 %v3313, 1.442695
  %v3318 = vpow.pop %v3317
  %v3319 = vmul.f32 %v3314, 1.442695
  %v3320 = vpow.pop %v3319
  %v3321 = vsel %vm519, %v3316, 0.0
  %3322 = vadd.xlane.f32.xlu0 %v3321
  %v3323 = vpop.xlane.xlu0 %3322
  %v3324 = vsel %vm519, %v3318, 0.0
  %3325 = vadd.xlane.f32.xlu0 %v3324
  %v3326 = vpop.xlane.xlu0 %3325
  %v3327 = vsel %vm526, %v3320, 0.0
  %3328 = vadd.xlane.f32.xlu0 %v3327
  %v3329 = vpop.xlane.xlu0 %3328
  %v3330 = vrcp.pop %v3323
  %v3331 = vrcp.pop %v3326
  %v3332 = vrcp.pop %v3329
  %v3333 = vmul.f32 %v3316, %v3330
  %v3334 = vmul.f32 %v3318, %v3331
  %v3335 = vmul.f32 %v3320, %v3332
  %3336 = vrot.lane.b32.xlu0 %v2215, 16
  %v3337 = vpop.permute.xlu0 %3336
  %3338 = vrot.lane.b32.xlu0 %v2220, 16
  %v3339 = vpop.permute.xlu0 %3338
  %3340 = vrot.lane.b32.xlu0 %v2225, 16
  %v3341 = vpop.permute.xlu0 %3340
  %v3345 = vsel %vm519, %v3333, 0
  %v3348 = vsel %vm519, %v3334, 0
  %v3351 = vsel %vm519, %v3335, 0
  %v3353 = vsel %vm571, %v3341, 0
  %3355 = vmatprep.subr.mxu0 0.0
  %3356 = vmatpush1.msra.mxu0 0.0
  %3357 = vmatprep.subr.mxu0 0.0
  %3358 = vmatpush1.msra.mxu0 0.0
  %3359 = vmatprep.subr.mxu0 0.0
  %3360 = vmatpush1.msra.mxu0 0.0
  %3361 = vmatprep.subr.mxu0 0.0
  %3362 = vmatpush1.msra.mxu0 0.0
  %3363 = vmatprep.subr.mxu0 0.0
  %3364 = vmatpush1.msra.mxu0 0.0
  %3365 = vmatprep.subr.mxu0 0.0
  %3366 = vmatpush1.msra.mxu0 0.0
  %3367 = vmatprep.subr.mxu0 0.0
  %3368 = vmatpush1.msra.mxu0 0.0
  %3369 = vmatprep.subr.mxu0 0.0
  %3370 = vmatpush1.msra.mxu0 0.0
  %3371 = vmatprep.subr.mxu0 0.0
  %3372 = vmatpush1.msra.mxu0 0.0
  %3373 = vmatprep.subr.mxu0 0.0
  %3374 = vmatpush1.msra.mxu0 0.0
  %3375 = vmatprep.subr.mxu0 0.0
  %3376 = vmatpush1.msra.mxu0 0.0
  %3377 = vmatprep.subr.mxu0 0.0
  %3378 = vmatpush1.msra.mxu0 0.0
  %3379 = vmatprep.subr.mxu0 0.0
  %3380 = vmatpush1.msra.mxu0 0.0
  %3381 = vmatprep.subr.mxu0 0.0
  %3382 = vmatpush1.msra.mxu0 %v3353
  %3383 = vmatprep.subr.mxu0 0.0
  %3384 = vmatpush1.msra.mxu0 %v3339
  %3385 = vmatprep.subr.mxu0 0.0
  %3386 = vmatpush1.msra.mxu0 %v3337
  %3387 = vmatprep.subr.mxu0 0.0
  %3388 = vmatpush2.msra.mxu0 0.0
  %3389 = vmatprep.subr.mxu0 0.0
  %3390 = vmatpush2.msra.mxu0 0.0
  %3391 = vmatprep.subr.mxu0 0.0
  %3392 = vmatpush2.msra.mxu0 0.0
  %3393 = vmatprep.subr.mxu0 0.0
  %3394 = vmatpush2.msra.mxu0 0.0
  %3395 = vmatprep.subr.mxu0 0.0
  %3396 = vmatpush2.msra.mxu0 0.0
  %3397 = vmatprep.subr.mxu0 0.0
  %3398 = vmatpush2.msra.mxu0 0.0
  %3399 = vmatprep.subr.mxu0 0.0
  %3400 = vmatpush2.msra.mxu0 0.0
  %3401 = vmatprep.subr.mxu0 0.0
  %3402 = vmatpush2.msra.mxu0 0.0
  %3403 = vmatprep.subr.mxu0 0.0
  %3404 = vmatpush2.msra.mxu0 0.0
  %3405 = vmatprep.subr.mxu0 0.0
  %3406 = vmatpush2.msra.mxu0 0.0
  %3407 = vmatprep.subr.mxu0 0.0
  %3408 = vmatpush2.msra.mxu0 0.0
  %3409 = vmatprep.subr.mxu0 0.0
  %3410 = vmatpush2.msra.mxu0 0.0
  %3411 = vmatprep.subr.mxu0 0.0
  %3412 = vmatpush2.msra.mxu0 0.0
  %3413 = vmatprep.subr.mxu0 0.0
  %3414 = vmatpush2.msra.mxu0 0.0
  %3415 = vmatprep.subr.mxu0 0.0
  %3416 = vmatpush2.msra.mxu0 0.0
  %3417 = vmatprep.subr.mxu0 0.0
  %3418 = vmatpush2.msra.mxu0 0.0
  %3419 = vmatprep.mubr.f32.mxu0 0.0
  %3420 = vmatmul.mubr.f32.gmra.mxu0 %v3345
  %v3421 = vpop.f32.mrf.mxu0
  %v3422 = vadd.f32 0.0, %v3421
  %v3423 = vpop.f32.mrf.mxu0
  %3424 = vmatprep.mubr.f32.mxu0 0.0
  %3425 = vmatmul.mubr.f32.gmra.mxu0 %v3348
  %v3426 = vpop.f32.mrf.mxu0
  %v3427 = vadd.f32 0.0, %v3426
  %v3428 = vpop.f32.mrf.mxu0
  %3429 = vmatprep.mubr.f32.mxu0 0.0
  %3430 = vmatmul.mubr.f32.gmra.mxu0 %v3351
  %v3431 = vpop.f32.mrf.mxu0
  %v3432 = vadd.f32 0.0, %v3431
  %v3433 = vpop.f32.mrf.mxu0
  %3434 = vdwg.mxu0
  %3438 = vrot.lane.b32.xlu0 %v2696, 8
  %v3439 = vpop.permute.xlu0 %3438
  %3440 = vrot.lane.b32.xlu0 %v2701, 8
  %v3441 = vpop.permute.xlu0 %3440
  %3442 = vrot.lane.b32.xlu0 %v2706, 8
  %v3443 = vpop.permute.xlu0 %3442
  %3450 = vrot.lane.b32.xlu0 %v2938, 16
  %v3451 = vpop.permute.xlu0 %3450
  %3452 = vrot.lane.b32.xlu0 %v2943, 16
  %v3453 = vpop.permute.xlu0 %3452
  %3454 = vrot.lane.b32.xlu0 %v2948, 16
  %v3455 = vpop.permute.xlu0 %3454
  %3462 = vrot.lane.b32.xlu0 %v3180, 24
  %v3463 = vpop.permute.xlu0 %3462
  %3464 = vrot.lane.b32.xlu0 %v3185, 24
  %v3465 = vpop.permute.xlu0 %3464
  %3466 = vrot.lane.b32.xlu0 %v3190, 24
  %v3467 = vpop.permute.xlu0 %3466
  %3474 = vrot.lane.b32.xlu0 %v3422, 32
  %v3475 = vpop.permute.xlu0 %3474
  %3476 = vrot.lane.b32.xlu0 %v3427, 32
  %v3477 = vpop.permute.xlu0 %3476
  %3478 = vrot.lane.b32.xlu0 %v3432, 32
  %v3479 = vpop.permute.xlu0 %3478
  %v3483 = vsel %vm420, %v2454, %v3439
  %v3484 = vsel %vm420, %v2459, %v3441
  %v3485 = vsel %vm420, %v2464, %v3443
  %v3486 = vsel %vm1673, %v3483, %v3451
  %v3487 = vsel %vm1673, %v3484, %v3453
  %v3488 = vsel %vm1673, %v3485, %v3455
  %v3489 = vsel %vm1677, %v3486, %v3463
  %v3490 = vsel %vm1677, %v3487, %v3465
  %v3491 = vsel %vm1677, %v3488, %v3467
  %v3492 = vsel %vm1681, %v3489, %v3475
  %v3493 = vsel %vm1681, %v3490, %v3477
  %v3494 = vsel %vm1681, %v3491, %v3479
  %s3495 = scalar_lea.vmem %s7, 40
  %v3496 = vld [vmem:[%s3495] sm:$0xff]
  %v3497 = vld [vmem:[%s3495 + $0x8] sm:$0xff]
  %v3498 = vld [vmem:[%s3495 + $0x10] sm:$0xff]
  %v3499 = vld [vmem:[%s3495 + $0x18] sm:$0xff]
  %v3500 = vld [vmem:[%s3495 + $0x20] sm:$0xff]
  %v3502 = vsel %vm250, %v3492, 0
  %v3505 = vsel %vm250, %v3493, 0
  %v3508 = vsel %vm250, %v3494, 0
  %3510 = vmatprep.subr.mxu0 0.0
  %3511 = vmatpush1.msra.mxu0 0.0
  %3512 = vmatprep.subr.mxu0 0.0
  %3513 = vmatpush1.msra.mxu0 0.0
  %3514 = vmatprep.subr.mxu0 0.0
  %3515 = vmatpush1.msra.mxu0 0.0
  %3516 = vmatprep.subr.mxu0 0.0
  %3517 = vmatpush1.msra.mxu0 0.0
  %3518 = vmatprep.subr.mxu0 0.0
  %3519 = vmatpush1.msra.mxu0 0.0
  %3520 = vmatprep.subr.mxu0 0.0
  %3521 = vmatpush1.msra.mxu0 0.0
  %3522 = vmatprep.subr.mxu0 0.0
  %3523 = vmatpush1.msra.mxu0 0.0
  %3524 = vmatprep.subr.mxu0 0.0
  %3525 = vmatpush1.msra.mxu0 0.0
  %3526 = vmatprep.subr.mxu0 0.0
  %3527 = vmatpush1.msra.mxu0 0.0
  %3528 = vmatprep.subr.mxu0 0.0
  %3529 = vmatpush1.msra.mxu0 0.0
  %3530 = vmatprep.subr.mxu0 0.0
  %3531 = vmatpush1.msra.mxu0 0.0
  %3532 = vmatprep.subr.mxu0 0.0
  %3533 = vmatpush1.msra.mxu0 %v3500
  %3534 = vmatprep.subr.mxu0 0.0
  %3535 = vmatpush1.msra.mxu0 %v3499
  %3536 = vmatprep.subr.mxu0 0.0
  %3537 = vmatpush1.msra.mxu0 %v3498
  %3538 = vmatprep.subr.mxu0 0.0
  %3539 = vmatpush1.msra.mxu0 %v3497
  %3540 = vmatprep.subr.mxu0 0.0
  %3541 = vmatpush1.msra.mxu0 %v3496
  %3542 = vmatprep.subr.mxu0 0.0
  %3543 = vmatpush2.msra.mxu0 0.0
  %3544 = vmatprep.subr.mxu0 0.0
  %3545 = vmatpush2.msra.mxu0 0.0
  %3546 = vmatprep.subr.mxu0 0.0
  %3547 = vmatpush2.msra.mxu0 0.0
  %3548 = vmatprep.subr.mxu0 0.0
  %3549 = vmatpush2.msra.mxu0 0.0
  %3550 = vmatprep.subr.mxu0 0.0
  %3551 = vmatpush2.msra.mxu0 0.0
  %3552 = vmatprep.subr.mxu0 0.0
  %3553 = vmatpush2.msra.mxu0 0.0
  %3554 = vmatprep.subr.mxu0 0.0
  %3555 = vmatpush2.msra.mxu0 0.0
  %3556 = vmatprep.subr.mxu0 0.0
  %3557 = vmatpush2.msra.mxu0 0.0
  %3558 = vmatprep.subr.mxu0 0.0
  %3559 = vmatpush2.msra.mxu0 0.0
  %3560 = vmatprep.subr.mxu0 0.0
  %3561 = vmatpush2.msra.mxu0 0.0
  %3562 = vmatprep.subr.mxu0 0.0
  %3563 = vmatpush2.msra.mxu0 0.0
  %3564 = vmatprep.subr.mxu0 0.0
  %3565 = vmatpush2.msra.mxu0 0.0
  %3566 = vmatprep.subr.mxu0 0.0
  %3567 = vmatpush2.msra.mxu0 0.0
  %3568 = vmatprep.subr.mxu0 0.0
  %3569 = vmatpush2.msra.mxu0 0.0
  %3570 = vmatprep.subr.mxu0 0.0
  %3571 = vmatpush2.msra.mxu0 0.0
  %3572 = vmatprep.subr.mxu0 0.0
  %3573 = vmatpush2.msra.mxu0 0.0
  %3574 = vmatprep.mubr.f32.mxu0 0.0
  %3575 = vmatmul.mubr.f32.gmra.mxu0 %v3502
  %v3576 = vpop.f32.mrf.mxu0
  %v3577 = vadd.f32 0.0, %v3576
  %v3578 = vpop.f32.mrf.mxu0
  %3579 = vmatprep.mubr.f32.mxu0 0.0
  %3580 = vmatmul.mubr.f32.gmra.mxu0 %v3505
  %v3581 = vpop.f32.mrf.mxu0
  %v3582 = vadd.f32 0.0, %v3581
  %v3583 = vpop.f32.mrf.mxu0
  %3584 = vmatprep.mubr.f32.mxu0 0.0
  %3585 = vmatmul.mubr.f32.gmra.mxu0 %v3508
  %v3586 = vpop.f32.mrf.mxu0
  %v3587 = vadd.f32 0.0, %v3586
  %v3588 = vpop.f32.mrf.mxu0
  %3589 = vdwg.mxu0
  %v3590 = vadd.f32 %v2061, %v3577
  %v3591 = vadd.f32 %v2062, %v3582
  %v3592 = vadd.f32 %v2063, %v3587
  %s3593 = scalar_lea.vmem %s8, 1
  %v3594 = vld [vmem:[%s3593] sm:$0x1]
  %v3596 = vlaneseq
  %v3597 = vshrl.u32 %v3596, 7
  %v3598 = vsub.s32 0, %v3597
  %v3599 = vrot.slane %v3594, %v3598
  %v3601 = vadd.f32 %v3590, %v3599
  %v3602 = vadd.f32 %v3591, %v3599
  %v3603 = vadd.f32 %v3592, %v3599
  %s3604 = scalar_lea.vmem %s11, 1
  %v3605 = vld [vmem:[%s3604] sm:$0x1]
  %s3606 = scalar_lea.vmem %s12, 1
  %v3607 = vld [vmem:[%s3606] sm:$0x1]
  %v3608 = vsel %vm250, %v3601, 0.0
  %3609 = vadd.xlane.f32.xlu0 %v3608
  %v3610 = vpop.xlane.xlu0 %3609
  %v3611 = vsel %vm250, %v3602, 0.0
  %3612 = vadd.xlane.f32.xlu0 %v3611
  %v3613 = vpop.xlane.xlu0 %3612
  %v3614 = vsel %vm257, %v3603, 0.0
  %3615 = vadd.xlane.f32.xlu0 %v3614
  %v3616 = vpop.xlane.xlu0 %3615
  %v3617 = vmul.f32 %v3610, %v261
  %v3618 = vmul.f32 %v3613, %v261
  %v3619 = vmul.f32 %v3616, %v261
  %v3620 = vsub.f32 %v3601, %v3617
  %v3621 = vsub.f32 %v3602, %v3618
  %v3622 = vsub.f32 %v3603, %v3619
  %v3623 = vmul.f32 %v3620, %v3620
  %v3624 = vmul.f32 %v3621, %v3621
  %v3625 = vmul.f32 %v3622, %v3622
  %v3626 = vsel %vm250, %v3623, 0.0
  %3627 = vadd.xlane.f32.xlu0 %v3626
  %v3628 = vpop.xlane.xlu0 %3627
  %v3629 = vsel %vm250, %v3624, 0.0
  %3630 = vadd.xlane.f32.xlu0 %v3629
  %v3631 = vpop.xlane.xlu0 %3630
  %v3632 = vsel %vm257, %v3625, 0.0
  %3633 = vadd.xlane.f32.xlu0 %v3632
  %v3634 = vpop.xlane.xlu0 %3633
  %v3635 = vmul.f32 %v3628, %v261
  %v3636 = vmul.f32 %v3631, %v261
  %v3637 = vmul.f32 %v3634, %v261
  %v3638 = vadd.f32 %v3635, 1e-05
  %v3639 = vadd.f32 %v3636, 1e-05
  %v3640 = vadd.f32 %v3637, 1e-05
  %v3641 = vrsqrt.pop %v3638
  %v3642 = vrsqrt.pop %v3639
  %v3643 = vrsqrt.pop %v3640
  %v3644 = vmul.f32 %v3620, %v3641
  %v3645 = vmul.f32 %v3621, %v3642
  %v3646 = vmul.f32 %v3622, %v3643
  %v3648 = vlaneseq
  %v3649 = vshrl.u32 %v3648, 7
  %v3650 = vsub.s32 0, %v3649
  %v3651 = vrot.slane %v3605, %v3650
  %v3653 = vmul.f32 %v3644, %v3651
  %v3654 = vmul.f32 %v3645, %v3651
  %v3655 = vmul.f32 %v3646, %v3651
  %v3657 = vlaneseq
  %v3658 = vshrl.u32 %v3657, 7
  %v3659 = vsub.s32 0, %v3658
  %v3660 = vrot.slane %v3607, %v3659
  %v3662 = vadd.f32 %v3653, %v3660
  %v3663 = vadd.f32 %v3654, %v3660
  %v3664 = vadd.f32 %v3655, %v3660
  %s3665 = scalar_lea.vmem %s13, 40
  %v3666 = vld [vmem:[%s3665] sm:$0xff]
  %v3667 = vld [vmem:[%s3665 + $0x8] sm:$0xff]
  %v3668 = vld [vmem:[%s3665 + $0x10] sm:$0xff]
  %v3669 = vld [vmem:[%s3665 + $0x18] sm:$0xff]
  %v3670 = vld [vmem:[%s3665 + $0x20] sm:$0xff]
  %s3671 = scalar_lea.vmem %s14, 1
  %v3672 = vld [vmem:[%s3671] sm:$0x1]
  %v3674 = vlaneseq
  %v3675 = vshrl.u32 %v3674, 7
  %v3676 = vsub.s32 0, %v3675
  %v3677 = vrot.slane %v3672, %v3676
  %v3680 = vsel %vm250, %v3662, 0
  %v3683 = vsel %vm250, %v3663, 0
  %v3686 = vsel %vm250, %v3664, 0
  %3688 = vmatprep.subr.mxu0 0.0
  %3689 = vmatpush1.msra.mxu0 0.0
  %3690 = vmatprep.subr.mxu0 0.0
  %3691 = vmatpush1.msra.mxu0 0.0
  %3692 = vmatprep.subr.mxu0 0.0
  %3693 = vmatpush1.msra.mxu0 0.0
  %3694 = vmatprep.subr.mxu0 0.0
  %3695 = vmatpush1.msra.mxu0 0.0
  %3696 = vmatprep.subr.mxu0 0.0
  %3697 = vmatpush1.msra.mxu0 0.0
  %3698 = vmatprep.subr.mxu0 0.0
  %3699 = vmatpush1.msra.mxu0 0.0
  %3700 = vmatprep.subr.mxu0 0.0
  %3701 = vmatpush1.msra.mxu0 0.0
  %3702 = vmatprep.subr.mxu0 0.0
  %3703 = vmatpush1.msra.mxu0 0.0
  %3704 = vmatprep.subr.mxu0 0.0
  %3705 = vmatpush1.msra.mxu0 0.0
  %3706 = vmatprep.subr.mxu0 0.0
  %3707 = vmatpush1.msra.mxu0 0.0
  %3708 = vmatprep.subr.mxu0 0.0
  %3709 = vmatpush1.msra.mxu0 0.0
  %3710 = vmatprep.subr.mxu0 0.0
  %3711 = vmatpush1.msra.mxu0 %v3670
  %3712 = vmatprep.subr.mxu0 0.0
  %3713 = vmatpush1.msra.mxu0 %v3669
  %3714 = vmatprep.subr.mxu0 0.0
  %3715 = vmatpush1.msra.mxu0 %v3668
  %3716 = vmatprep.subr.mxu0 0.0
  %3717 = vmatpush1.msra.mxu0 %v3667
  %3718 = vmatprep.subr.mxu0 0.0
  %3719 = vmatpush1.msra.mxu0 %v3666
  %3720 = vmatprep.subr.mxu0 0.0
  %3721 = vmatpush2.msra.mxu0 0.0
  %3722 = vmatprep.subr.mxu0 0.0
  %3723 = vmatpush2.msra.mxu0 0.0
  %3724 = vmatprep.subr.mxu0 0.0
  %3725 = vmatpush2.msra.mxu0 0.0
  %3726 = vmatprep.subr.mxu0 0.0
  %3727 = vmatpush2.msra.mxu0 0.0
  %3728 = vmatprep.subr.mxu0 0.0
  %3729 = vmatpush2.msra.mxu0 0.0
  %3730 = vmatprep.subr.mxu0 0.0
  %3731 = vmatpush2.msra.mxu0 0.0
  %3732 = vmatprep.subr.mxu0 0.0
  %3733 = vmatpush2.msra.mxu0 0.0
  %3734 = vmatprep.subr.mxu0 0.0
  %3735 = vmatpush2.msra.mxu0 0.0
  %3736 = vmatprep.subr.mxu0 0.0
  %3737 = vmatpush2.msra.mxu0 0.0
  %3738 = vmatprep.subr.mxu0 0.0
  %3739 = vmatpush2.msra.mxu0 0.0
  %3740 = vmatprep.subr.mxu0 0.0
  %3741 = vmatpush2.msra.mxu0 0.0
  %3742 = vmatprep.subr.mxu0 0.0
  %3743 = vmatpush2.msra.mxu0 0.0
  %3744 = vmatprep.subr.mxu0 0.0
  %3745 = vmatpush2.msra.mxu0 0.0
  %3746 = vmatprep.subr.mxu0 0.0
  %3747 = vmatpush2.msra.mxu0 0.0
  %3748 = vmatprep.subr.mxu0 0.0
  %3749 = vmatpush2.msra.mxu0 0.0
  %3750 = vmatprep.subr.mxu0 0.0
  %3751 = vmatpush2.msra.mxu0 0.0
  %3752 = vmatprep.mubr.f32.mxu0 0.0
  %3753 = vmatmul.mubr.f32.gmra.mxu0 %v3680
  %v3754 = vpop.f32.mrf.mxu0
  %v3755 = vadd.f32 %v3677, %v3754
  %v3756 = vpop.f32.mrf.mxu0
  %3757 = vmatprep.mubr.f32.mxu0 0.0
  %3758 = vmatmul.mubr.f32.gmra.mxu0 %v3683
  %v3759 = vpop.f32.mrf.mxu0
  %v3760 = vadd.f32 %v3677, %v3759
  %v3761 = vpop.f32.mrf.mxu0
  %3762 = vmatprep.mubr.f32.mxu0 0.0
  %3763 = vmatmul.mubr.f32.gmra.mxu0 %v3686
  %v3764 = vpop.f32.mrf.mxu0
  %v3765 = vadd.f32 %v3677, %v3764
  %v3766 = vpop.f32.mrf.mxu0
  %3767 = vdwg.mxu0
  %v3768 = vmax.f32 %v3755, 0.0
  %v3769 = vmax.f32 %v3760, 0.0
  %v3770 = vmax.f32 %v3765, 0.0
  %s3771 = scalar_lea.vmem %s15, 128
  %v3772 = vld [vmem:[%s3771] sm:$0xff]
  %v3773 = vld [vmem:[%s3771 + $0x8] sm:$0xff]
  %v3774 = vld [vmem:[%s3771 + $0x10] sm:$0xff]
  %v3775 = vld [vmem:[%s3771 + $0x18] sm:$0xff]
  %v3776 = vld [vmem:[%s3771 + $0x20] sm:$0xff]
  %v3777 = vld [vmem:[%s3771 + $0x28] sm:$0xff]
  %v3778 = vld [vmem:[%s3771 + $0x30] sm:$0xff]
  %v3779 = vld [vmem:[%s3771 + $0x38] sm:$0xff]
  %v3780 = vld [vmem:[%s3771 + $0x40] sm:$0xff]
  %v3781 = vld [vmem:[%s3771 + $0x48] sm:$0xff]
  %v3782 = vld [vmem:[%s3771 + $0x50] sm:$0xff]
  %v3783 = vld [vmem:[%s3771 + $0x58] sm:$0xff]
  %v3784 = vld [vmem:[%s3771 + $0x60] sm:$0xff]
  %v3785 = vld [vmem:[%s3771 + $0x68] sm:$0xff]
  %v3786 = vld [vmem:[%s3771 + $0x70] sm:$0xff]
  %v3787 = vld [vmem:[%s3771 + $0x78] sm:$0xff]
  %3788 = vmatprep.subr.mxu0 0.0
  %3789 = vmatpush1.msra.mxu0 %v3787
  %3790 = vmatprep.subr.mxu0 0.0
  %3791 = vmatpush1.msra.mxu0 %v3786
  %3792 = vmatprep.subr.mxu0 0.0
  %3793 = vmatpush1.msra.mxu0 %v3785
  %3794 = vmatprep.subr.mxu0 0.0
  %3795 = vmatpush1.msra.mxu0 %v3784
  %3796 = vmatprep.subr.mxu0 0.0
  %3797 = vmatpush1.msra.mxu0 %v3783
  %3798 = vmatprep.subr.mxu0 0.0
  %3799 = vmatpush1.msra.mxu0 %v3782
  %3800 = vmatprep.subr.mxu0 0.0
  %3801 = vmatpush1.msra.mxu0 %v3781
  %3802 = vmatprep.subr.mxu0 0.0
  %3803 = vmatpush1.msra.mxu0 %v3780
  %3804 = vmatprep.subr.mxu0 0.0
  %3805 = vmatpush1.msra.mxu0 %v3779
  %3806 = vmatprep.subr.mxu0 0.0
  %3807 = vmatpush1.msra.mxu0 %v3778
  %3808 = vmatprep.subr.mxu0 0.0
  %3809 = vmatpush1.msra.mxu0 %v3777
  %3810 = vmatprep.subr.mxu0 0.0
  %3811 = vmatpush1.msra.mxu0 %v3776
  %3812 = vmatprep.subr.mxu0 0.0
  %3813 = vmatpush1.msra.mxu0 %v3775
  %3814 = vmatprep.subr.mxu0 0.0
  %3815 = vmatpush1.msra.mxu0 %v3774
  %3816 = vmatprep.subr.mxu0 0.0
  %3817 = vmatpush1.msra.mxu0 %v3773
  %3818 = vmatprep.subr.mxu0 0.0
  %3819 = vmatpush1.msra.mxu0 %v3772
  %3820 = vmatprep.subr.mxu0 0.0
  %3821 = vmatpush2.msra.mxu0 0.0
  %3822 = vmatprep.subr.mxu0 0.0
  %3823 = vmatpush2.msra.mxu0 0.0
  %3824 = vmatprep.subr.mxu0 0.0
  %3825 = vmatpush2.msra.mxu0 0.0
  %3826 = vmatprep.subr.mxu0 0.0
  %3827 = vmatpush2.msra.mxu0 0.0
  %3828 = vmatprep.subr.mxu0 0.0
  %3829 = vmatpush2.msra.mxu0 0.0
  %3830 = vmatprep.subr.mxu0 0.0
  %3831 = vmatpush2.msra.mxu0 0.0
  %3832 = vmatprep.subr.mxu0 0.0
  %3833 = vmatpush2.msra.mxu0 0.0
  %3834 = vmatprep.subr.mxu0 0.0
  %3835 = vmatpush2.msra.mxu0 0.0
  %3836 = vmatprep.subr.mxu0 0.0
  %3837 = vmatpush2.msra.mxu0 0.0
  %3838 = vmatprep.subr.mxu0 0.0
  %3839 = vmatpush2.msra.mxu0 0.0
  %3840 = vmatprep.subr.mxu0 0.0
  %3841 = vmatpush2.msra.mxu0 0.0
  %3842 = vmatprep.subr.mxu0 0.0
  %3843 = vmatpush2.msra.mxu0 0.0
  %3844 = vmatprep.subr.mxu0 0.0
  %3845 = vmatpush2.msra.mxu0 0.0
  %3846 = vmatprep.subr.mxu0 0.0
  %3847 = vmatpush2.msra.mxu0 0.0
  %3848 = vmatprep.subr.mxu0 0.0
  %3849 = vmatpush2.msra.mxu0 0.0
  %3850 = vmatprep.subr.mxu0 0.0
  %3851 = vmatpush2.msra.mxu0 0.0
  %3852 = vmatprep.mubr.f32.mxu0 0.0
  %3853 = vmatmul.mubr.f32.gmra.mxu0 %v3768
  %v3854 = vpop.f32.mrf.mxu0
  %v3855 = vadd.f32 0.0, %v3854
  %v3856 = vpop.f32.mrf.mxu0
  %3857 = vmatprep.mubr.f32.mxu0 0.0
  %3858 = vmatmul.mubr.f32.gmra.mxu0 %v3769
  %v3859 = vpop.f32.mrf.mxu0
  %v3860 = vadd.f32 0.0, %v3859
  %v3861 = vpop.f32.mrf.mxu0
  %3862 = vmatprep.mubr.f32.mxu0 0.0
  %3863 = vmatmul.mubr.f32.gmra.mxu0 %v3770
  %v3864 = vpop.f32.mrf.mxu0
  %v3865 = vadd.f32 0.0, %v3864
  %v3866 = vpop.f32.mrf.mxu0
  %3867 = vdwg.mxu0
  %v3868 = vadd.f32 %v3601, %v3855
  %v3869 = vadd.f32 %v3602, %v3860
  %v3870 = vadd.f32 %v3603, %v3865
  %s3871 = scalar_lea.vmem %s16, 1
  %v3872 = vld [vmem:[%s3871] sm:$0x1]
  %v3874 = vlaneseq
  %v3875 = vshrl.u32 %v3874, 7
  %v3876 = vsub.s32 0, %v3875
  %v3877 = vrot.slane %v3872, %v3876
  %v3879 = vadd.f32 %v3868, %v3877
  %v3880 = vadd.f32 %v3869, %v3877
  %v3881 = vadd.f32 %v3870, %v3877
  %s3882 = scalar_lea.vmem %s9, 2
  %v3883 = vld [vmem:[%s3882] sm:$0x1]
  %s3884 = scalar_lea.vmem %s10, 2
  %v3885 = vld [vmem:[%s3884] sm:$0x1]
  %v3886 = vsel %vm250, %v3879, 0.0
  %3887 = vadd.xlane.f32.xlu0 %v3886
  %v3888 = vpop.xlane.xlu0 %3887
  %v3889 = vsel %vm250, %v3880, 0.0
  %3890 = vadd.xlane.f32.xlu0 %v3889
  %v3891 = vpop.xlane.xlu0 %3890
  %v3892 = vsel %vm257, %v3881, 0.0
  %3893 = vadd.xlane.f32.xlu0 %v3892
  %v3894 = vpop.xlane.xlu0 %3893
  %v3895 = vmul.f32 %v3888, %v261
  %v3896 = vmul.f32 %v3891, %v261
  %v3897 = vmul.f32 %v3894, %v261
  %v3898 = vsub.f32 %v3879, %v3895
  %v3899 = vsub.f32 %v3880, %v3896
  %v3900 = vsub.f32 %v3881, %v3897
  %v3901 = vmul.f32 %v3898, %v3898
  %v3902 = vmul.f32 %v3899, %v3899
  %v3903 = vmul.f32 %v3900, %v3900
  %v3904 = vsel %vm250, %v3901, 0.0
  %3905 = vadd.xlane.f32.xlu0 %v3904
  %v3906 = vpop.xlane.xlu0 %3905
  %v3907 = vsel %vm250, %v3902, 0.0
  %3908 = vadd.xlane.f32.xlu0 %v3907
  %v3909 = vpop.xlane.xlu0 %3908
  %v3910 = vsel %vm257, %v3903, 0.0
  %3911 = vadd.xlane.f32.xlu0 %v3910
  %v3912 = vpop.xlane.xlu0 %3911
  %v3913 = vmul.f32 %v3906, %v261
  %v3914 = vmul.f32 %v3909, %v261
  %v3915 = vmul.f32 %v3912, %v261
  %v3916 = vadd.f32 %v3913, 1e-05
  %v3917 = vadd.f32 %v3914, 1e-05
  %v3918 = vadd.f32 %v3915, 1e-05
  %v3919 = vrsqrt.pop %v3916
  %v3920 = vrsqrt.pop %v3917
  %v3921 = vrsqrt.pop %v3918
  %v3922 = vmul.f32 %v3898, %v3919
  %v3923 = vmul.f32 %v3899, %v3920
  %v3924 = vmul.f32 %v3900, %v3921
  %v3926 = vlaneseq
  %v3927 = vshrl.u32 %v3926, 7
  %v3928 = vsub.s32 0, %v3927
  %v3929 = vrot.slane %v3883, %v3928
  %v3931 = vmul.f32 %v3922, %v3929
  %v3932 = vmul.f32 %v3923, %v3929
  %v3933 = vmul.f32 %v3924, %v3929
  %v3935 = vlaneseq
  %v3936 = vshrl.u32 %v3935, 7
  %v3937 = vsub.s32 0, %v3936
  %v3938 = vrot.slane %v3885, %v3937
  %v3940 = vadd.f32 %v3931, %v3938
  %v3941 = vadd.f32 %v3932, %v3938
  %v3942 = vadd.f32 %v3933, %v3938
  %s3943 = scalar_lea.vmem %s5, 80
  %v3944 = vld [vmem:[%s3943] sm:$0xff]
  %v3945 = vld [vmem:[%s3943 + $0x8] sm:$0xff]
  %v3946 = vld [vmem:[%s3943 + $0x10] sm:$0xff]
  %v3947 = vld [vmem:[%s3943 + $0x18] sm:$0xff]
  %v3948 = vld [vmem:[%s3943 + $0x20] sm:$0xff]
  %s3949 = scalar_lea.vmem %s6, 2
  %v3950 = vld [vmem:[%s3949] sm:$0x1]
  %v3952 = vlaneseq
  %v3953 = vshrl.u32 %v3952, 7
  %v3954 = vsub.s32 0, %v3953
  %v3955 = vrot.slane %v3950, %v3954
  %v3958 = vsel %vm250, %v3940, 0
  %v3961 = vsel %vm250, %v3941, 0
  %v3964 = vsel %vm250, %v3942, 0
  %3966 = vmatprep.subr.mxu0 0.0
  %3967 = vmatpush1.msra.mxu0 0.0
  %3968 = vmatprep.subr.mxu0 0.0
  %3969 = vmatpush1.msra.mxu0 0.0
  %3970 = vmatprep.subr.mxu0 0.0
  %3971 = vmatpush1.msra.mxu0 0.0
  %3972 = vmatprep.subr.mxu0 0.0
  %3973 = vmatpush1.msra.mxu0 0.0
  %3974 = vmatprep.subr.mxu0 0.0
  %3975 = vmatpush1.msra.mxu0 0.0
  %3976 = vmatprep.subr.mxu0 0.0
  %3977 = vmatpush1.msra.mxu0 0.0
  %3978 = vmatprep.subr.mxu0 0.0
  %3979 = vmatpush1.msra.mxu0 0.0
  %3980 = vmatprep.subr.mxu0 0.0
  %3981 = vmatpush1.msra.mxu0 0.0
  %3982 = vmatprep.subr.mxu0 0.0
  %3983 = vmatpush1.msra.mxu0 0.0
  %3984 = vmatprep.subr.mxu0 0.0
  %3985 = vmatpush1.msra.mxu0 0.0
  %3986 = vmatprep.subr.mxu0 0.0
  %3987 = vmatpush1.msra.mxu0 0.0
  %3988 = vmatprep.subr.mxu0 0.0
  %3989 = vmatpush1.msra.mxu0 %v3948
  %3990 = vmatprep.subr.mxu0 0.0
  %3991 = vmatpush1.msra.mxu0 %v3947
  %3992 = vmatprep.subr.mxu0 0.0
  %3993 = vmatpush1.msra.mxu0 %v3946
  %3994 = vmatprep.subr.mxu0 0.0
  %3995 = vmatpush1.msra.mxu0 %v3945
  %3996 = vmatprep.subr.mxu0 0.0
  %3997 = vmatpush1.msra.mxu0 %v3944
  %3998 = vmatprep.subr.mxu0 0.0
  %3999 = vmatpush2.msra.mxu0 0.0
  %4000 = vmatprep.subr.mxu0 0.0
  %4001 = vmatpush2.msra.mxu0 0.0
  %4002 = vmatprep.subr.mxu0 0.0
  %4003 = vmatpush2.msra.mxu0 0.0
  %4004 = vmatprep.subr.mxu0 0.0
  %4005 = vmatpush2.msra.mxu0 0.0
  %4006 = vmatprep.subr.mxu0 0.0
  %4007 = vmatpush2.msra.mxu0 0.0
  %4008 = vmatprep.subr.mxu0 0.0
  %4009 = vmatpush2.msra.mxu0 0.0
  %4010 = vmatprep.subr.mxu0 0.0
  %4011 = vmatpush2.msra.mxu0 0.0
  %4012 = vmatprep.subr.mxu0 0.0
  %4013 = vmatpush2.msra.mxu0 0.0
  %4014 = vmatprep.subr.mxu0 0.0
  %4015 = vmatpush2.msra.mxu0 0.0
  %4016 = vmatprep.subr.mxu0 0.0
  %4017 = vmatpush2.msra.mxu0 0.0
  %4018 = vmatprep.subr.mxu0 0.0
  %4019 = vmatpush2.msra.mxu0 0.0
  %4020 = vmatprep.subr.mxu0 0.0
  %4021 = vmatpush2.msra.mxu0 0.0
  %4022 = vmatprep.subr.mxu0 0.0
  %4023 = vmatpush2.msra.mxu0 0.0
  %4024 = vmatprep.subr.mxu0 0.0
  %4025 = vmatpush2.msra.mxu0 0.0
  %4026 = vmatprep.subr.mxu0 0.0
  %4027 = vmatpush2.msra.mxu0 0.0
  %4028 = vmatprep.subr.mxu0 0.0
  %4029 = vmatpush2.msra.mxu0 0.0
  %4030 = vmatprep.mubr.f32.mxu0 0.0
  %4031 = vmatmul.mubr.f32.gmra.mxu0 %v3958
  %v4032 = vpop.f32.mrf.mxu0
  %v4033 = vadd.f32 %v3955, %v4032
  %v4034 = vpop.f32.mrf.mxu0
  %4035 = vmatprep.mubr.f32.mxu0 0.0
  %4036 = vmatmul.mubr.f32.gmra.mxu0 %v3961
  %v4037 = vpop.f32.mrf.mxu0
  %v4038 = vadd.f32 %v3955, %v4037
  %v4039 = vpop.f32.mrf.mxu0
  %4040 = vmatprep.mubr.f32.mxu0 0.0
  %4041 = vmatmul.mubr.f32.gmra.mxu0 %v3964
  %v4042 = vpop.f32.mrf.mxu0
  %v4043 = vadd.f32 %v3955, %v4042
  %v4044 = vpop.f32.mrf.mxu0
  %4045 = vdwg.mxu0
  %4049 = vrot.lane.b32.xlu0 %v4033, 88
  %v4050 = vpop.permute.xlu0 %4049
  %4051 = vrot.lane.b32.xlu0 %v4038, 88
  %v4052 = vpop.permute.xlu0 %4051
  %4053 = vrot.lane.b32.xlu0 %v4043, 88
  %v4054 = vpop.permute.xlu0 %4053
  %v4055 = vsel %vm420, %v4033, 0
  %v4057 = vsel %vm420, %v4038, 0
  %v4059 = vsel %vm420, %v4043, 0
  %v4061 = vsel %vm420, %v4050, 0
  %v4063 = vsel %vm420, %v4052, 0
  %v4065 = vsel %vm420, %v4054, 0
  %4067 = vmatprep.subr.mxu0 0.0
  %4068 = vmatpush1.xpose.msra.mxu0 0.0
  %4069 = vmatprep.subr.mxu0 0.0
  %4070 = vmatpush1.xpose.msra.mxu0 0.0
  %4071 = vmatprep.subr.mxu0 0.0
  %4072 = vmatpush1.xpose.msra.mxu0 0.0
  %4073 = vmatprep.subr.mxu0 0.0
  %4074 = vmatpush1.xpose.msra.mxu0 0.0
  %4075 = vmatprep.subr.mxu0 0.0
  %4076 = vmatpush1.xpose.msra.mxu0 0.0
  %4077 = vmatprep.subr.mxu0 0.0
  %4078 = vmatpush1.xpose.msra.mxu0 0.0
  %4079 = vmatprep.subr.mxu0 0.0
  %4080 = vmatpush1.xpose.msra.mxu0 0.0
  %4081 = vmatprep.subr.mxu0 0.0
  %4082 = vmatpush1.xpose.msra.mxu0 0.0
  %4083 = vmatprep.subr.mxu0 0.0
  %4084 = vmatpush1.xpose.msra.mxu0 0.0
  %4085 = vmatprep.subr.mxu0 0.0
  %4086 = vmatpush1.xpose.msra.mxu0 0.0
  %4087 = vmatprep.subr.mxu0 0.0
  %4088 = vmatpush1.xpose.msra.mxu0 0.0
  %4089 = vmatprep.subr.mxu0 0.0
  %4090 = vmatpush1.xpose.msra.mxu0 0.0
  %4091 = vmatprep.subr.mxu0 0.0
  %4092 = vmatpush1.xpose.msra.mxu0 0.0
  %4093 = vmatprep.subr.mxu0 0.0
  %4094 = vmatpush1.xpose.msra.mxu0 %v4065
  %4095 = vmatprep.subr.mxu0 0.0
  %4096 = vmatpush1.xpose.msra.mxu0 %v4063
  %4097 = vmatprep.subr.mxu0 0.0
  %4098 = vmatpush1.xpose.msra.mxu0 %v4061
  %4099 = vmatprep.subr.mxu0 0.0
  %4100 = vmatpush2.xpose.msra.mxu0 0.0
  %4101 = vmatprep.subr.mxu0 0.0
  %4102 = vmatpush2.xpose.msra.mxu0 0.0
  %4103 = vmatprep.subr.mxu0 0.0
  %4104 = vmatpush2.xpose.msra.mxu0 0.0
  %4105 = vmatprep.subr.mxu0 0.0
  %4106 = vmatpush2.xpose.msra.mxu0 0.0
  %4107 = vmatprep.subr.mxu0 0.0
  %4108 = vmatpush2.xpose.msra.mxu0 0.0
  %4109 = vmatprep.subr.mxu0 0.0
  %4110 = vmatpush2.xpose.msra.mxu0 0.0
  %4111 = vmatprep.subr.mxu0 0.0
  %4112 = vmatpush2.xpose.msra.mxu0 0.0
  %4113 = vmatprep.subr.mxu0 0.0
  %4114 = vmatpush2.xpose.msra.mxu0 0.0
  %4115 = vmatprep.subr.mxu0 0.0
  %4116 = vmatpush2.xpose.msra.mxu0 0.0
  %4117 = vmatprep.subr.mxu0 0.0
  %4118 = vmatpush2.xpose.msra.mxu0 0.0
  %4119 = vmatprep.subr.mxu0 0.0
  %4120 = vmatpush2.xpose.msra.mxu0 0.0
  %4121 = vmatprep.subr.mxu0 0.0
  %4122 = vmatpush2.xpose.msra.mxu0 0.0
  %4123 = vmatprep.subr.mxu0 0.0
  %4124 = vmatpush2.xpose.msra.mxu0 0.0
  %4125 = vmatprep.subr.mxu0 0.0
  %4126 = vmatpush2.xpose.msra.mxu0 0.0
  %4127 = vmatprep.subr.mxu0 0.0
  %4128 = vmatpush2.xpose.msra.mxu0 0.0
  %4129 = vmatprep.subr.mxu0 0.0
  %4130 = vmatpush2.xpose.msra.mxu0 0.0
  %4131 = vmatprep.mubr.f32.mxu0 0.0
  %4132 = vmatmul.mubr.f32.gmra.mxu0 %v4055
  %v4133 = vpop.f32.mrf.mxu0
  %v4134 = vadd.f32 0.0, %v4133
  %v4135 = vpop.f32.mrf.mxu0
  %4136 = vmatprep.mubr.f32.mxu0 0.0
  %4137 = vmatmul.mubr.f32.gmra.mxu0 %v4057
  %v4138 = vpop.f32.mrf.mxu0
  %v4139 = vadd.f32 0.0, %v4138
  %v4140 = vpop.f32.mrf.mxu0
  %4141 = vmatprep.mubr.f32.mxu0 0.0
  %4142 = vmatmul.mubr.f32.gmra.mxu0 %v4059
  %v4143 = vpop.f32.mrf.mxu0
  %v4144 = vadd.f32 0.0, %v4143
  %v4145 = vpop.f32.mrf.mxu0
  %4146 = vdwg.mxu0
  %v4147 = vmul.f32 %v4134, 0.35355338
  %v4148 = vmul.f32 %v4139, 0.35355338
  %v4149 = vmul.f32 %v4144, 0.35355338
  %v4150 = vadd.f32 %v4147, %v226
  %v4151 = vadd.f32 %v4148, %v247
  %v4152 = vadd.f32 %v4149, %v244
  %v4153 = vsel %vm519, %v4150, -inf
  %4154 = vmax.xlane.f32.xlu0 %v4153
  %v4155 = vpop.xlane.xlu0 %4154
  %v4156 = vsel %vm519, %v4151, -inf
  %4157 = vmax.xlane.f32.xlu0 %v4156
  %v4158 = vpop.xlane.xlu0 %4157
  %v4159 = vsel %vm526, %v4152, -inf
  %4160 = vmax.xlane.f32.xlu0 %v4159
  %v4161 = vpop.xlane.xlu0 %4160
  %v4162 = vsub.f32 %v4150, %v4155
  %v4163 = vsub.f32 %v4151, %v4158
  %v4164 = vsub.f32 %v4152, %v4161
  %v4165 = vmul.f32 %v4162, 1.442695
  %v4166 = vpow.pop %v4165
  %v4167 = vmul.f32 %v4163, 1.442695
  %v4168 = vpow.pop %v4167
  %v4169 = vmul.f32 %v4164, 1.442695
  %v4170 = vpow.pop %v4169
  %v4171 = vsel %vm519, %v4166, 0.0
  %4172 = vadd.xlane.f32.xlu0 %v4171
  %v4173 = vpop.xlane.xlu0 %4172
  %v4174 = vsel %vm519, %v4168, 0.0
  %4175 = vadd.xlane.f32.xlu0 %v4174
  %v4176 = vpop.xlane.xlu0 %4175
  %v4177 = vsel %vm526, %v4170, 0.0
  %4178 = vadd.xlane.f32.xlu0 %v4177
  %v4179 = vpop.xlane.xlu0 %4178
  %v4180 = vrcp.pop %v4173
  %v4181 = vrcp.pop %v4176
  %v4182 = vrcp.pop %v4179
  %v4183 = vmul.f32 %v4166, %v4180
  %v4184 = vmul.f32 %v4168, %v4181
  %v4185 = vmul.f32 %v4170, %v4182
  %4186 = vrot.lane.b32.xlu0 %v4033, 48
  %v4187 = vpop.permute.xlu0 %4186
  %4188 = vrot.lane.b32.xlu0 %v4038, 48
  %v4189 = vpop.permute.xlu0 %4188
  %4190 = vrot.lane.b32.xlu0 %v4043, 48
  %v4191 = vpop.permute.xlu0 %4190
  %v4195 = vsel %vm519, %v4183, 0
  %v4198 = vsel %vm519, %v4184, 0
  %v4201 = vsel %vm519, %v4185, 0
  %v4203 = vsel %vm571, %v4191, 0
  %4205 = vmatprep.subr.mxu0 0.0
  %4206 = vmatpush1.msra.mxu0 0.0
  %4207 = vmatprep.subr.mxu0 0.0
  %4208 = vmatpush1.msra.mxu0 0.0
  %4209 = vmatprep.subr.mxu0 0.0
  %4210 = vmatpush1.msra.mxu0 0.0
  %4211 = vmatprep.subr.mxu0 0.0
  %4212 = vmatpush1.msra.mxu0 0.0
  %4213 = vmatprep.subr.mxu0 0.0
  %4214 = vmatpush1.msra.mxu0 0.0
  %4215 = vmatprep.subr.mxu0 0.0
  %4216 = vmatpush1.msra.mxu0 0.0
  %4217 = vmatprep.subr.mxu0 0.0
  %4218 = vmatpush1.msra.mxu0 0.0
  %4219 = vmatprep.subr.mxu0 0.0
  %4220 = vmatpush1.msra.mxu0 0.0
  %4221 = vmatprep.subr.mxu0 0.0
  %4222 = vmatpush1.msra.mxu0 0.0
  %4223 = vmatprep.subr.mxu0 0.0
  %4224 = vmatpush1.msra.mxu0 0.0
  %4225 = vmatprep.subr.mxu0 0.0
  %4226 = vmatpush1.msra.mxu0 0.0
  %4227 = vmatprep.subr.mxu0 0.0
  %4228 = vmatpush1.msra.mxu0 0.0
  %4229 = vmatprep.subr.mxu0 0.0
  %4230 = vmatpush1.msra.mxu0 0.0
  %4231 = vmatprep.subr.mxu0 0.0
  %4232 = vmatpush1.msra.mxu0 %v4203
  %4233 = vmatprep.subr.mxu0 0.0
  %4234 = vmatpush1.msra.mxu0 %v4189
  %4235 = vmatprep.subr.mxu0 0.0
  %4236 = vmatpush1.msra.mxu0 %v4187
  %4237 = vmatprep.subr.mxu0 0.0
  %4238 = vmatpush2.msra.mxu0 0.0
  %4239 = vmatprep.subr.mxu0 0.0
  %4240 = vmatpush2.msra.mxu0 0.0
  %4241 = vmatprep.subr.mxu0 0.0
  %4242 = vmatpush2.msra.mxu0 0.0
  %4243 = vmatprep.subr.mxu0 0.0
  %4244 = vmatpush2.msra.mxu0 0.0
  %4245 = vmatprep.subr.mxu0 0.0
  %4246 = vmatpush2.msra.mxu0 0.0
  %4247 = vmatprep.subr.mxu0 0.0
  %4248 = vmatpush2.msra.mxu0 0.0
  %4249 = vmatprep.subr.mxu0 0.0
  %4250 = vmatpush2.msra.mxu0 0.0
  %4251 = vmatprep.subr.mxu0 0.0
  %4252 = vmatpush2.msra.mxu0 0.0
  %4253 = vmatprep.subr.mxu0 0.0
  %4254 = vmatpush2.msra.mxu0 0.0
  %4255 = vmatprep.subr.mxu0 0.0
  %4256 = vmatpush2.msra.mxu0 0.0
  %4257 = vmatprep.subr.mxu0 0.0
  %4258 = vmatpush2.msra.mxu0 0.0
  %4259 = vmatprep.subr.mxu0 0.0
  %4260 = vmatpush2.msra.mxu0 0.0
  %4261 = vmatprep.subr.mxu0 0.0
  %4262 = vmatpush2.msra.mxu0 0.0
  %4263 = vmatprep.subr.mxu0 0.0
  %4264 = vmatpush2.msra.mxu0 0.0
  %4265 = vmatprep.subr.mxu0 0.0
  %4266 = vmatpush2.msra.mxu0 0.0
  %4267 = vmatprep.subr.mxu0 0.0
  %4268 = vmatpush2.msra.mxu0 0.0
  %4269 = vmatprep.mubr.f32.mxu0 0.0
  %4270 = vmatmul.mubr.f32.gmra.mxu0 %v4195
  %v4271 = vpop.f32.mrf.mxu0
  %v4272 = vadd.f32 0.0, %v4271
  %v4273 = vpop.f32.mrf.mxu0
  %4274 = vmatprep.mubr.f32.mxu0 0.0
  %4275 = vmatmul.mubr.f32.gmra.mxu0 %v4198
  %v4276 = vpop.f32.mrf.mxu0
  %v4277 = vadd.f32 0.0, %v4276
  %v4278 = vpop.f32.mrf.mxu0
  %4279 = vmatprep.mubr.f32.mxu0 0.0
  %4280 = vmatmul.mubr.f32.gmra.mxu0 %v4201
  %v4281 = vpop.f32.mrf.mxu0
  %v4282 = vadd.f32 0.0, %v4281
  %v4283 = vpop.f32.mrf.mxu0
  %4284 = vdwg.mxu0
  %4285 = vrot.lane.b32.xlu0 %v4033, 120
  %v4286 = vpop.permute.xlu0 %4285
  %4287 = vrot.lane.b32.xlu0 %v4038, 120
  %v4288 = vpop.permute.xlu0 %4287
  %4289 = vrot.lane.b32.xlu0 %v4043, 120
  %v4290 = vpop.permute.xlu0 %4289
  %4291 = vrot.lane.b32.xlu0 %v4033, 80
  %v4292 = vpop.permute.xlu0 %4291
  %4293 = vrot.lane.b32.xlu0 %v4038, 80
  %v4294 = vpop.permute.xlu0 %4293
  %4295 = vrot.lane.b32.xlu0 %v4043, 80
  %v4296 = vpop.permute.xlu0 %4295
  %v4297 = vsel %vm420, %v4286, 0
  %v4299 = vsel %vm420, %v4288, 0
  %v4301 = vsel %vm420, %v4290, 0
  %v4303 = vsel %vm420, %v4292, 0
  %v4305 = vsel %vm420, %v4294, 0
  %v4307 = vsel %vm420, %v4296, 0
  %4309 = vmatprep.subr.mxu0 0.0
  %4310 = vmatpush1.xpose.msra.mxu0 0.0
  %4311 = vmatprep.subr.mxu0 0.0
  %4312 = vmatpush1.xpose.msra.mxu0 0.0
  %4313 = vmatprep.subr.mxu0 0.0
  %4314 = vmatpush1.xpose.msra.mxu0 0.0
  %4315 = vmatprep.subr.mxu0 0.0
  %4316 = vmatpush1.xpose.msra.mxu0 0.0
  %4317 = vmatprep.subr.mxu0 0.0
  %4318 = vmatpush1.xpose.msra.mxu0 0.0
  %4319 = vmatprep.subr.mxu0 0.0
  %4320 = vmatpush1.xpose.msra.mxu0 0.0
  %4321 = vmatprep.subr.mxu0 0.0
  %4322 = vmatpush1.xpose.msra.mxu0 0.0
  %4323 = vmatprep.subr.mxu0 0.0
  %4324 = vmatpush1.xpose.msra.mxu0 0.0
  %4325 = vmatprep.subr.mxu0 0.0
  %4326 = vmatpush1.xpose.msra.mxu0 0.0
  %4327 = vmatprep.subr.mxu0 0.0
  %4328 = vmatpush1.xpose.msra.mxu0 0.0
  %4329 = vmatprep.subr.mxu0 0.0
  %4330 = vmatpush1.xpose.msra.mxu0 0.0
  %4331 = vmatprep.subr.mxu0 0.0
  %4332 = vmatpush1.xpose.msra.mxu0 0.0
  %4333 = vmatprep.subr.mxu0 0.0
  %4334 = vmatpush1.xpose.msra.mxu0 0.0
  %4335 = vmatprep.subr.mxu0 0.0
  %4336 = vmatpush1.xpose.msra.mxu0 %v4307
  %4337 = vmatprep.subr.mxu0 0.0
  %4338 = vmatpush1.xpose.msra.mxu0 %v4305
  %4339 = vmatprep.subr.mxu0 0.0
  %4340 = vmatpush1.xpose.msra.mxu0 %v4303
  %4341 = vmatprep.subr.mxu0 0.0
  %4342 = vmatpush2.xpose.msra.mxu0 0.0
  %4343 = vmatprep.subr.mxu0 0.0
  %4344 = vmatpush2.xpose.msra.mxu0 0.0
  %4345 = vmatprep.subr.mxu0 0.0
  %4346 = vmatpush2.xpose.msra.mxu0 0.0
  %4347 = vmatprep.subr.mxu0 0.0
  %4348 = vmatpush2.xpose.msra.mxu0 0.0
  %4349 = vmatprep.subr.mxu0 0.0
  %4350 = vmatpush2.xpose.msra.mxu0 0.0
  %4351 = vmatprep.subr.mxu0 0.0
  %4352 = vmatpush2.xpose.msra.mxu0 0.0
  %4353 = vmatprep.subr.mxu0 0.0
  %4354 = vmatpush2.xpose.msra.mxu0 0.0
  %4355 = vmatprep.subr.mxu0 0.0
  %4356 = vmatpush2.xpose.msra.mxu0 0.0
  %4357 = vmatprep.subr.mxu0 0.0
  %4358 = vmatpush2.xpose.msra.mxu0 0.0
  %4359 = vmatprep.subr.mxu0 0.0
  %4360 = vmatpush2.xpose.msra.mxu0 0.0
  %4361 = vmatprep.subr.mxu0 0.0
  %4362 = vmatpush2.xpose.msra.mxu0 0.0
  %4363 = vmatprep.subr.mxu0 0.0
  %4364 = vmatpush2.xpose.msra.mxu0 0.0
  %4365 = vmatprep.subr.mxu0 0.0
  %4366 = vmatpush2.xpose.msra.mxu0 0.0
  %4367 = vmatprep.subr.mxu0 0.0
  %4368 = vmatpush2.xpose.msra.mxu0 0.0
  %4369 = vmatprep.subr.mxu0 0.0
  %4370 = vmatpush2.xpose.msra.mxu0 0.0
  %4371 = vmatprep.subr.mxu0 0.0
  %4372 = vmatpush2.xpose.msra.mxu0 0.0
  %4373 = vmatprep.mubr.f32.mxu0 0.0
  %4374 = vmatmul.mubr.f32.gmra.mxu0 %v4297
  %v4375 = vpop.f32.mrf.mxu0
  %v4376 = vadd.f32 0.0, %v4375
  %v4377 = vpop.f32.mrf.mxu0
  %4378 = vmatprep.mubr.f32.mxu0 0.0
  %4379 = vmatmul.mubr.f32.gmra.mxu0 %v4299
  %v4380 = vpop.f32.mrf.mxu0
  %v4381 = vadd.f32 0.0, %v4380
  %v4382 = vpop.f32.mrf.mxu0
  %4383 = vmatprep.mubr.f32.mxu0 0.0
  %4384 = vmatmul.mubr.f32.gmra.mxu0 %v4301
  %v4385 = vpop.f32.mrf.mxu0
  %v4386 = vadd.f32 0.0, %v4385
  %v4387 = vpop.f32.mrf.mxu0
  %4388 = vdwg.mxu0
  %v4389 = vmul.f32 %v4376, 0.35355338
  %v4390 = vmul.f32 %v4381, 0.35355338
  %v4391 = vmul.f32 %v4386, 0.35355338
  %v4392 = vadd.f32 %v4389, %v226
  %v4393 = vadd.f32 %v4390, %v247
  %v4394 = vadd.f32 %v4391, %v244
  %v4395 = vsel %vm519, %v4392, -inf
  %4396 = vmax.xlane.f32.xlu0 %v4395
  %v4397 = vpop.xlane.xlu0 %4396
  %v4398 = vsel %vm519, %v4393, -inf
  %4399 = vmax.xlane.f32.xlu0 %v4398
  %v4400 = vpop.xlane.xlu0 %4399
  %v4401 = vsel %vm526, %v4394, -inf
  %4402 = vmax.xlane.f32.xlu0 %v4401
  %v4403 = vpop.xlane.xlu0 %4402
  %v4404 = vsub.f32 %v4392, %v4397
  %v4405 = vsub.f32 %v4393, %v4400
  %v4406 = vsub.f32 %v4394, %v4403
  %v4407 = vmul.f32 %v4404, 1.442695
  %v4408 = vpow.pop %v4407
  %v4409 = vmul.f32 %v4405, 1.442695
  %v4410 = vpow.pop %v4409
  %v4411 = vmul.f32 %v4406, 1.442695
  %v4412 = vpow.pop %v4411
  %v4413 = vsel %vm519, %v4408, 0.0
  %4414 = vadd.xlane.f32.xlu0 %v4413
  %v4415 = vpop.xlane.xlu0 %4414
  %v4416 = vsel %vm519, %v4410, 0.0
  %4417 = vadd.xlane.f32.xlu0 %v4416
  %v4418 = vpop.xlane.xlu0 %4417
  %v4419 = vsel %vm526, %v4412, 0.0
  %4420 = vadd.xlane.f32.xlu0 %v4419
  %v4421 = vpop.xlane.xlu0 %4420
  %v4422 = vrcp.pop %v4415
  %v4423 = vrcp.pop %v4418
  %v4424 = vrcp.pop %v4421
  %v4425 = vmul.f32 %v4408, %v4422
  %v4426 = vmul.f32 %v4410, %v4423
  %v4427 = vmul.f32 %v4412, %v4424
  %4428 = vrot.lane.b32.xlu0 %v4033, 40
  %v4429 = vpop.permute.xlu0 %4428
  %4430 = vrot.lane.b32.xlu0 %v4038, 40
  %v4431 = vpop.permute.xlu0 %4430
  %4432 = vrot.lane.b32.xlu0 %v4043, 40
  %v4433 = vpop.permute.xlu0 %4432
  %v4437 = vsel %vm519, %v4425, 0
  %v4440 = vsel %vm519, %v4426, 0
  %v4443 = vsel %vm519, %v4427, 0
  %v4445 = vsel %vm571, %v4433, 0
  %4447 = vmatprep.subr.mxu0 0.0
  %4448 = vmatpush1.msra.mxu0 0.0
  %4449 = vmatprep.subr.mxu0 0.0
  %4450 = vmatpush1.msra.mxu0 0.0
  %4451 = vmatprep.subr.mxu0 0.0
  %4452 = vmatpush1.msra.mxu0 0.0
  %4453 = vmatprep.subr.mxu0 0.0
  %4454 = vmatpush1.msra.mxu0 0.0
  %4455 = vmatprep.subr.mxu0 0.0
  %4456 = vmatpush1.msra.mxu0 0.0
  %4457 = vmatprep.subr.mxu0 0.0
  %4458 = vmatpush1.msra.mxu0 0.0
  %4459 = vmatprep.subr.mxu0 0.0
  %4460 = vmatpush1.msra.mxu0 0.0
  %4461 = vmatprep.subr.mxu0 0.0
  %4462 = vmatpush1.msra.mxu0 0.0
  %4463 = vmatprep.subr.mxu0 0.0
  %4464 = vmatpush1.msra.mxu0 0.0
  %4465 = vmatprep.subr.mxu0 0.0
  %4466 = vmatpush1.msra.mxu0 0.0
  %4467 = vmatprep.subr.mxu0 0.0
  %4468 = vmatpush1.msra.mxu0 0.0
  %4469 = vmatprep.subr.mxu0 0.0
  %4470 = vmatpush1.msra.mxu0 0.0
  %4471 = vmatprep.subr.mxu0 0.0
  %4472 = vmatpush1.msra.mxu0 0.0
  %4473 = vmatprep.subr.mxu0 0.0
  %4474 = vmatpush1.msra.mxu0 %v4445
  %4475 = vmatprep.subr.mxu0 0.0
  %4476 = vmatpush1.msra.mxu0 %v4431
  %4477 = vmatprep.subr.mxu0 0.0
  %4478 = vmatpush1.msra.mxu0 %v4429
  %4479 = vmatprep.subr.mxu0 0.0
  %4480 = vmatpush2.msra.mxu0 0.0
  %4481 = vmatprep.subr.mxu0 0.0
  %4482 = vmatpush2.msra.mxu0 0.0
  %4483 = vmatprep.subr.mxu0 0.0
  %4484 = vmatpush2.msra.mxu0 0.0
  %4485 = vmatprep.subr.mxu0 0.0
  %4486 = vmatpush2.msra.mxu0 0.0
  %4487 = vmatprep.subr.mxu0 0.0
  %4488 = vmatpush2.msra.mxu0 0.0
  %4489 = vmatprep.subr.mxu0 0.0
  %4490 = vmatpush2.msra.mxu0 0.0
  %4491 = vmatprep.subr.mxu0 0.0
  %4492 = vmatpush2.msra.mxu0 0.0
  %4493 = vmatprep.subr.mxu0 0.0
  %4494 = vmatpush2.msra.mxu0 0.0
  %4495 = vmatprep.subr.mxu0 0.0
  %4496 = vmatpush2.msra.mxu0 0.0
  %4497 = vmatprep.subr.mxu0 0.0
  %4498 = vmatpush2.msra.mxu0 0.0
  %4499 = vmatprep.subr.mxu0 0.0
  %4500 = vmatpush2.msra.mxu0 0.0
  %4501 = vmatprep.subr.mxu0 0.0
  %4502 = vmatpush2.msra.mxu0 0.0
  %4503 = vmatprep.subr.mxu0 0.0
  %4504 = vmatpush2.msra.mxu0 0.0
  %4505 = vmatprep.subr.mxu0 0.0
  %4506 = vmatpush2.msra.mxu0 0.0
  %4507 = vmatprep.subr.mxu0 0.0
  %4508 = vmatpush2.msra.mxu0 0.0
  %4509 = vmatprep.subr.mxu0 0.0
  %4510 = vmatpush2.msra.mxu0 0.0
  %4511 = vmatprep.mubr.f32.mxu0 0.0
  %4512 = vmatmul.mubr.f32.gmra.mxu0 %v4437
  %v4513 = vpop.f32.mrf.mxu0
  %v4514 = vadd.f32 0.0, %v4513
  %v4515 = vpop.f32.mrf.mxu0
  %4516 = vmatprep.mubr.f32.mxu0 0.0
  %4517 = vmatmul.mubr.f32.gmra.mxu0 %v4440
  %v4518 = vpop.f32.mrf.mxu0
  %v4519 = vadd.f32 0.0, %v4518
  %v4520 = vpop.f32.mrf.mxu0
  %4521 = vmatprep.mubr.f32.mxu0 0.0
  %4522 = vmatmul.mubr.f32.gmra.mxu0 %v4443
  %v4523 = vpop.f32.mrf.mxu0
  %v4524 = vadd.f32 0.0, %v4523
  %v4525 = vpop.f32.mrf.mxu0
  %4526 = vdwg.mxu0
  %4527 = vrot.lane.b32.xlu0 %v4033, 112
  %v4528 = vpop.permute.xlu0 %4527
  %4529 = vrot.lane.b32.xlu0 %v4038, 112
  %v4530 = vpop.permute.xlu0 %4529
  %4531 = vrot.lane.b32.xlu0 %v4043, 112
  %v4532 = vpop.permute.xlu0 %4531
  %4533 = vrot.lane.b32.xlu0 %v4033, 72
  %v4534 = vpop.permute.xlu0 %4533
  %4535 = vrot.lane.b32.xlu0 %v4038, 72
  %v4536 = vpop.permute.xlu0 %4535
  %4537 = vrot.lane.b32.xlu0 %v4043, 72
  %v4538 = vpop.permute.xlu0 %4537
  %v4539 = vsel %vm420, %v4528, 0
  %v4541 = vsel %vm420, %v4530, 0
  %v4543 = vsel %vm420, %v4532, 0
  %v4545 = vsel %vm420, %v4534, 0
  %v4547 = vsel %vm420, %v4536, 0
  %v4549 = vsel %vm420, %v4538, 0
  %4551 = vmatprep.subr.mxu0 0.0
  %4552 = vmatpush1.xpose.msra.mxu0 0.0
  %4553 = vmatprep.subr.mxu0 0.0
  %4554 = vmatpush1.xpose.msra.mxu0 0.0
  %4555 = vmatprep.subr.mxu0 0.0
  %4556 = vmatpush1.xpose.msra.mxu0 0.0
  %4557 = vmatprep.subr.mxu0 0.0
  %4558 = vmatpush1.xpose.msra.mxu0 0.0
  %4559 = vmatprep.subr.mxu0 0.0
  %4560 = vmatpush1.xpose.msra.mxu0 0.0
  %4561 = vmatprep.subr.mxu0 0.0
  %4562 = vmatpush1.xpose.msra.mxu0 0.0
  %4563 = vmatprep.subr.mxu0 0.0
  %4564 = vmatpush1.xpose.msra.mxu0 0.0
  %4565 = vmatprep.subr.mxu0 0.0
  %4566 = vmatpush1.xpose.msra.mxu0 0.0
  %4567 = vmatprep.subr.mxu0 0.0
  %4568 = vmatpush1.xpose.msra.mxu0 0.0
  %4569 = vmatprep.subr.mxu0 0.0
  %4570 = vmatpush1.xpose.msra.mxu0 0.0
  %4571 = vmatprep.subr.mxu0 0.0
  %4572 = vmatpush1.xpose.msra.mxu0 0.0
  %4573 = vmatprep.subr.mxu0 0.0
  %4574 = vmatpush1.xpose.msra.mxu0 0.0
  %4575 = vmatprep.subr.mxu0 0.0
  %4576 = vmatpush1.xpose.msra.mxu0 0.0
  %4577 = vmatprep.subr.mxu0 0.0
  %4578 = vmatpush1.xpose.msra.mxu0 %v4549
  %4579 = vmatprep.subr.mxu0 0.0
  %4580 = vmatpush1.xpose.msra.mxu0 %v4547
  %4581 = vmatprep.subr.mxu0 0.0
  %4582 = vmatpush1.xpose.msra.mxu0 %v4545
  %4583 = vmatprep.subr.mxu0 0.0
  %4584 = vmatpush2.xpose.msra.mxu0 0.0
  %4585 = vmatprep.subr.mxu0 0.0
  %4586 = vmatpush2.xpose.msra.mxu0 0.0
  %4587 = vmatprep.subr.mxu0 0.0
  %4588 = vmatpush2.xpose.msra.mxu0 0.0
  %4589 = vmatprep.subr.mxu0 0.0
  %4590 = vmatpush2.xpose.msra.mxu0 0.0
  %4591 = vmatprep.subr.mxu0 0.0
  %4592 = vmatpush2.xpose.msra.mxu0 0.0
  %4593 = vmatprep.subr.mxu0 0.0
  %4594 = vmatpush2.xpose.msra.mxu0 0.0
  %4595 = vmatprep.subr.mxu0 0.0
  %4596 = vmatpush2.xpose.msra.mxu0 0.0
  %4597 = vmatprep.subr.mxu0 0.0
  %4598 = vmatpush2.xpose.msra.mxu0 0.0
  %4599 = vmatprep.subr.mxu0 0.0
  %4600 = vmatpush2.xpose.msra.mxu0 0.0
  %4601 = vmatprep.subr.mxu0 0.0
  %4602 = vmatpush2.xpose.msra.mxu0 0.0
  %4603 = vmatprep.subr.mxu0 0.0
  %4604 = vmatpush2.xpose.msra.mxu0 0.0
  %4605 = vmatprep.subr.mxu0 0.0
  %4606 = vmatpush2.xpose.msra.mxu0 0.0
  %4607 = vmatprep.subr.mxu0 0.0
  %4608 = vmatpush2.xpose.msra.mxu0 0.0
  %4609 = vmatprep.subr.mxu0 0.0
  %4610 = vmatpush2.xpose.msra.mxu0 0.0
  %4611 = vmatprep.subr.mxu0 0.0
  %4612 = vmatpush2.xpose.msra.mxu0 0.0
  %4613 = vmatprep.subr.mxu0 0.0
  %4614 = vmatpush2.xpose.msra.mxu0 0.0
  %4615 = vmatprep.mubr.f32.mxu0 0.0
  %4616 = vmatmul.mubr.f32.gmra.mxu0 %v4539
  %v4617 = vpop.f32.mrf.mxu0
  %v4618 = vadd.f32 0.0, %v4617
  %v4619 = vpop.f32.mrf.mxu0
  %4620 = vmatprep.mubr.f32.mxu0 0.0
  %4621 = vmatmul.mubr.f32.gmra.mxu0 %v4541
  %v4622 = vpop.f32.mrf.mxu0
  %v4623 = vadd.f32 0.0, %v4622
  %v4624 = vpop.f32.mrf.mxu0
  %4625 = vmatprep.mubr.f32.mxu0 0.0
  %4626 = vmatmul.mubr.f32.gmra.mxu0 %v4543
  %v4627 = vpop.f32.mrf.mxu0
  %v4628 = vadd.f32 0.0, %v4627
  %v4629 = vpop.f32.mrf.mxu0
  %4630 = vdwg.mxu0
  %v4631 = vmul.f32 %v4618, 0.35355338
  %v4632 = vmul.f32 %v4623, 0.35355338
  %v4633 = vmul.f32 %v4628, 0.35355338
  %v4634 = vadd.f32 %v4631, %v226
  %v4635 = vadd.f32 %v4632, %v247
  %v4636 = vadd.f32 %v4633, %v244
  %v4637 = vsel %vm519, %v4634, -inf
  %4638 = vmax.xlane.f32.xlu0 %v4637
  %v4639 = vpop.xlane.xlu0 %4638
  %v4640 = vsel %vm519, %v4635, -inf
  %4641 = vmax.xlane.f32.xlu0 %v4640
  %v4642 = vpop.xlane.xlu0 %4641
  %v4643 = vsel %vm526, %v4636, -inf
  %4644 = vmax.xlane.f32.xlu0 %v4643
  %v4645 = vpop.xlane.xlu0 %4644
  %v4646 = vsub.f32 %v4634, %v4639
  %v4647 = vsub.f32 %v4635, %v4642
  %v4648 = vsub.f32 %v4636, %v4645
  %v4649 = vmul.f32 %v4646, 1.442695
  %v4650 = vpow.pop %v4649
  %v4651 = vmul.f32 %v4647, 1.442695
  %v4652 = vpow.pop %v4651
  %v4653 = vmul.f32 %v4648, 1.442695
  %v4654 = vpow.pop %v4653
  %v4655 = vsel %vm519, %v4650, 0.0
  %4656 = vadd.xlane.f32.xlu0 %v4655
  %v4657 = vpop.xlane.xlu0 %4656
  %v4658 = vsel %vm519, %v4652, 0.0
  %4659 = vadd.xlane.f32.xlu0 %v4658
  %v4660 = vpop.xlane.xlu0 %4659
  %v4661 = vsel %vm526, %v4654, 0.0
  %4662 = vadd.xlane.f32.xlu0 %v4661
  %v4663 = vpop.xlane.xlu0 %4662
  %v4664 = vrcp.pop %v4657
  %v4665 = vrcp.pop %v4660
  %v4666 = vrcp.pop %v4663
  %v4667 = vmul.f32 %v4650, %v4664
  %v4668 = vmul.f32 %v4652, %v4665
  %v4669 = vmul.f32 %v4654, %v4666
  %4670 = vrot.lane.b32.xlu0 %v4033, 32
  %v4671 = vpop.permute.xlu0 %4670
  %4672 = vrot.lane.b32.xlu0 %v4038, 32
  %v4673 = vpop.permute.xlu0 %4672
  %4674 = vrot.lane.b32.xlu0 %v4043, 32
  %v4675 = vpop.permute.xlu0 %4674
  %v4679 = vsel %vm519, %v4667, 0
  %v4682 = vsel %vm519, %v4668, 0
  %v4685 = vsel %vm519, %v4669, 0
  %v4687 = vsel %vm571, %v4675, 0
  %4689 = vmatprep.subr.mxu0 0.0
  %4690 = vmatpush1.msra.mxu0 0.0
  %4691 = vmatprep.subr.mxu0 0.0
  %4692 = vmatpush1.msra.mxu0 0.0
  %4693 = vmatprep.subr.mxu0 0.0
  %4694 = vmatpush1.msra.mxu0 0.0
  %4695 = vmatprep.subr.mxu0 0.0
  %4696 = vmatpush1.msra.mxu0 0.0
  %4697 = vmatprep.subr.mxu0 0.0
  %4698 = vmatpush1.msra.mxu0 0.0
  %4699 = vmatprep.subr.mxu0 0.0
  %4700 = vmatpush1.msra.mxu0 0.0
  %4701 = vmatprep.subr.mxu0 0.0
  %4702 = vmatpush1.msra.mxu0 0.0
  %4703 = vmatprep.subr.mxu0 0.0
  %4704 = vmatpush1.msra.mxu0 0.0
  %4705 = vmatprep.subr.mxu0 0.0
  %4706 = vmatpush1.msra.mxu0 0.0
  %4707 = vmatprep.subr.mxu0 0.0
  %4708 = vmatpush1.msra.mxu0 0.0
  %4709 = vmatprep.subr.mxu0 0.0
  %4710 = vmatpush1.msra.mxu0 0.0
  %4711 = vmatprep.subr.mxu0 0.0
  %4712 = vmatpush1.msra.mxu0 0.0
  %4713 = vmatprep.subr.mxu0 0.0
  %4714 = vmatpush1.msra.mxu0 0.0
  %4715 = vmatprep.subr.mxu0 0.0
  %4716 = vmatpush1.msra.mxu0 %v4687
  %4717 = vmatprep.subr.mxu0 0.0
  %4718 = vmatpush1.msra.mxu0 %v4673
  %4719 = vmatprep.subr.mxu0 0.0
  %4720 = vmatpush1.msra.mxu0 %v4671
  %4721 = vmatprep.subr.mxu0 0.0
  %4722 = vmatpush2.msra.mxu0 0.0
  %4723 = vmatprep.subr.mxu0 0.0
  %4724 = vmatpush2.msra.mxu0 0.0
  %4725 = vmatprep.subr.mxu0 0.0
  %4726 = vmatpush2.msra.mxu0 0.0
  %4727 = vmatprep.subr.mxu0 0.0
  %4728 = vmatpush2.msra.mxu0 0.0
  %4729 = vmatprep.subr.mxu0 0.0
  %4730 = vmatpush2.msra.mxu0 0.0
  %4731 = vmatprep.subr.mxu0 0.0
  %4732 = vmatpush2.msra.mxu0 0.0
  %4733 = vmatprep.subr.mxu0 0.0
  %4734 = vmatpush2.msra.mxu0 0.0
  %4735 = vmatprep.subr.mxu0 0.0
  %4736 = vmatpush2.msra.mxu0 0.0
  %4737 = vmatprep.subr.mxu0 0.0
  %4738 = vmatpush2.msra.mxu0 0.0
  %4739 = vmatprep.subr.mxu0 0.0
  %4740 = vmatpush2.msra.mxu0 0.0
  %4741 = vmatprep.subr.mxu0 0.0
  %4742 = vmatpush2.msra.mxu0 0.0
  %4743 = vmatprep.subr.mxu0 0.0
  %4744 = vmatpush2.msra.mxu0 0.0
  %4745 = vmatprep.subr.mxu0 0.0
  %4746 = vmatpush2.msra.mxu0 0.0
  %4747 = vmatprep.subr.mxu0 0.0
  %4748 = vmatpush2.msra.mxu0 0.0
  %4749 = vmatprep.subr.mxu0 0.0
  %4750 = vmatpush2.msra.mxu0 0.0
  %4751 = vmatprep.subr.mxu0 0.0
  %4752 = vmatpush2.msra.mxu0 0.0
  %4753 = vmatprep.mubr.f32.mxu0 0.0
  %4754 = vmatmul.mubr.f32.gmra.mxu0 %v4679
  %v4755 = vpop.f32.mrf.mxu0
  %v4756 = vadd.f32 0.0, %v4755
  %v4757 = vpop.f32.mrf.mxu0
  %4758 = vmatprep.mubr.f32.mxu0 0.0
  %4759 = vmatmul.mubr.f32.gmra.mxu0 %v4682
  %v4760 = vpop.f32.mrf.mxu0
  %v4761 = vadd.f32 0.0, %v4760
  %v4762 = vpop.f32.mrf.mxu0
  %4763 = vmatprep.mubr.f32.mxu0 0.0
  %4764 = vmatmul.mubr.f32.gmra.mxu0 %v4685
  %v4765 = vpop.f32.mrf.mxu0
  %v4766 = vadd.f32 0.0, %v4765
  %v4767 = vpop.f32.mrf.mxu0
  %4768 = vdwg.mxu0
  %4769 = vrot.lane.b32.xlu0 %v4033, 104
  %v4770 = vpop.permute.xlu0 %4769
  %4771 = vrot.lane.b32.xlu0 %v4038, 104
  %v4772 = vpop.permute.xlu0 %4771
  %4773 = vrot.lane.b32.xlu0 %v4043, 104
  %v4774 = vpop.permute.xlu0 %4773
  %4775 = vrot.lane.b32.xlu0 %v4033, 64
  %v4776 = vpop.permute.xlu0 %4775
  %4777 = vrot.lane.b32.xlu0 %v4038, 64
  %v4778 = vpop.permute.xlu0 %4777
  %4779 = vrot.lane.b32.xlu0 %v4043, 64
  %v4780 = vpop.permute.xlu0 %4779
  %v4781 = vsel %vm420, %v4770, 0
  %v4783 = vsel %vm420, %v4772, 0
  %v4785 = vsel %vm420, %v4774, 0
  %v4787 = vsel %vm420, %v4776, 0
  %v4789 = vsel %vm420, %v4778, 0
  %v4791 = vsel %vm420, %v4780, 0
  %4793 = vmatprep.subr.mxu0 0.0
  %4794 = vmatpush1.xpose.msra.mxu0 0.0
  %4795 = vmatprep.subr.mxu0 0.0
  %4796 = vmatpush1.xpose.msra.mxu0 0.0
  %4797 = vmatprep.subr.mxu0 0.0
  %4798 = vmatpush1.xpose.msra.mxu0 0.0
  %4799 = vmatprep.subr.mxu0 0.0
  %4800 = vmatpush1.xpose.msra.mxu0 0.0
  %4801 = vmatprep.subr.mxu0 0.0
  %4802 = vmatpush1.xpose.msra.mxu0 0.0
  %4803 = vmatprep.subr.mxu0 0.0
  %4804 = vmatpush1.xpose.msra.mxu0 0.0
  %4805 = vmatprep.subr.mxu0 0.0
  %4806 = vmatpush1.xpose.msra.mxu0 0.0
  %4807 = vmatprep.subr.mxu0 0.0
  %4808 = vmatpush1.xpose.msra.mxu0 0.0
  %4809 = vmatprep.subr.mxu0 0.0
  %4810 = vmatpush1.xpose.msra.mxu0 0.0
  %4811 = vmatprep.subr.mxu0 0.0
  %4812 = vmatpush1.xpose.msra.mxu0 0.0
  %4813 = vmatprep.subr.mxu0 0.0
  %4814 = vmatpush1.xpose.msra.mxu0 0.0
  %4815 = vmatprep.subr.mxu0 0.0
  %4816 = vmatpush1.xpose.msra.mxu0 0.0
  %4817 = vmatprep.subr.mxu0 0.0
  %4818 = vmatpush1.xpose.msra.mxu0 0.0
  %4819 = vmatprep.subr.mxu0 0.0
  %4820 = vmatpush1.xpose.msra.mxu0 %v4791
  %4821 = vmatprep.subr.mxu0 0.0
  %4822 = vmatpush1.xpose.msra.mxu0 %v4789
  %4823 = vmatprep.subr.mxu0 0.0
  %4824 = vmatpush1.xpose.msra.mxu0 %v4787
  %4825 = vmatprep.subr.mxu0 0.0
  %4826 = vmatpush2.xpose.msra.mxu0 0.0
  %4827 = vmatprep.subr.mxu0 0.0
  %4828 = vmatpush2.xpose.msra.mxu0 0.0
  %4829 = vmatprep.subr.mxu0 0.0
  %4830 = vmatpush2.xpose.msra.mxu0 0.0
  %4831 = vmatprep.subr.mxu0 0.0
  %4832 = vmatpush2.xpose.msra.mxu0 0.0
  %4833 = vmatprep.subr.mxu0 0.0
  %4834 = vmatpush2.xpose.msra.mxu0 0.0
  %4835 = vmatprep.subr.mxu0 0.0
  %4836 = vmatpush2.xpose.msra.mxu0 0.0
  %4837 = vmatprep.subr.mxu0 0.0
  %4838 = vmatpush2.xpose.msra.mxu0 0.0
  %4839 = vmatprep.subr.mxu0 0.0
  %4840 = vmatpush2.xpose.msra.mxu0 0.0
  %4841 = vmatprep.subr.mxu0 0.0
  %4842 = vmatpush2.xpose.msra.mxu0 0.0
  %4843 = vmatprep.subr.mxu0 0.0
  %4844 = vmatpush2.xpose.msra.mxu0 0.0
  %4845 = vmatprep.subr.mxu0 0.0
  %4846 = vmatpush2.xpose.msra.mxu0 0.0
  %4847 = vmatprep.subr.mxu0 0.0
  %4848 = vmatpush2.xpose.msra.mxu0 0.0
  %4849 = vmatprep.subr.mxu0 0.0
  %4850 = vmatpush2.xpose.msra.mxu0 0.0
  %4851 = vmatprep.subr.mxu0 0.0
  %4852 = vmatpush2.xpose.msra.mxu0 0.0
  %4853 = vmatprep.subr.mxu0 0.0
  %4854 = vmatpush2.xpose.msra.mxu0 0.0
  %4855 = vmatprep.subr.mxu0 0.0
  %4856 = vmatpush2.xpose.msra.mxu0 0.0
  %4857 = vmatprep.mubr.f32.mxu0 0.0
  %4858 = vmatmul.mubr.f32.gmra.mxu0 %v4781
  %v4859 = vpop.f32.mrf.mxu0
  %v4860 = vadd.f32 0.0, %v4859
  %v4861 = vpop.f32.mrf.mxu0
  %4862 = vmatprep.mubr.f32.mxu0 0.0
  %4863 = vmatmul.mubr.f32.gmra.mxu0 %v4783
  %v4864 = vpop.f32.mrf.mxu0
  %v4865 = vadd.f32 0.0, %v4864
  %v4866 = vpop.f32.mrf.mxu0
  %4867 = vmatprep.mubr.f32.mxu0 0.0
  %4868 = vmatmul.mubr.f32.gmra.mxu0 %v4785
  %v4869 = vpop.f32.mrf.mxu0
  %v4870 = vadd.f32 0.0, %v4869
  %v4871 = vpop.f32.mrf.mxu0
  %4872 = vdwg.mxu0
  %v4873 = vmul.f32 %v4860, 0.35355338
  %v4874 = vmul.f32 %v4865, 0.35355338
  %v4875 = vmul.f32 %v4870, 0.35355338
  %v4876 = vadd.f32 %v4873, %v226
  %v4877 = vadd.f32 %v4874, %v247
  %v4878 = vadd.f32 %v4875, %v244
  %v4879 = vsel %vm519, %v4876, -inf
  %4880 = vmax.xlane.f32.xlu0 %v4879
  %v4881 = vpop.xlane.xlu0 %4880
  %v4882 = vsel %vm519, %v4877, -inf
  %4883 = vmax.xlane.f32.xlu0 %v4882
  %v4884 = vpop.xlane.xlu0 %4883
  %v4885 = vsel %vm526, %v4878, -inf
  %4886 = vmax.xlane.f32.xlu0 %v4885
  %v4887 = vpop.xlane.xlu0 %4886
  %v4888 = vsub.f32 %v4876, %v4881
  %v4889 = vsub.f32 %v4877, %v4884
  %v4890 = vsub.f32 %v4878, %v4887
  %v4891 = vmul.f32 %v4888, 1.442695
  %v4892 = vpow.pop %v4891
  %v4893 = vmul.f32 %v4889, 1.442695
  %v4894 = vpow.pop %v4893
  %v4895 = vmul.f32 %v4890, 1.442695
  %v4896 = vpow.pop %v4895
  %v4897 = vsel %vm519, %v4892, 0.0
  %4898 = vadd.xlane.f32.xlu0 %v4897
  %v4899 = vpop.xlane.xlu0 %4898
  %v4900 = vsel %vm519, %v4894, 0.0
  %4901 = vadd.xlane.f32.xlu0 %v4900
  %v4902 = vpop.xlane.xlu0 %4901
  %v4903 = vsel %vm526, %v4896, 0.0
  %4904 = vadd.xlane.f32.xlu0 %v4903
  %v4905 = vpop.xlane.xlu0 %4904
  %v4906 = vrcp.pop %v4899
  %v4907 = vrcp.pop %v4902
  %v4908 = vrcp.pop %v4905
  %v4909 = vmul.f32 %v4892, %v4906
  %v4910 = vmul.f32 %v4894, %v4907
  %v4911 = vmul.f32 %v4896, %v4908
  %4912 = vrot.lane.b32.xlu0 %v4033, 24
  %v4913 = vpop.permute.xlu0 %4912
  %4914 = vrot.lane.b32.xlu0 %v4038, 24
  %v4915 = vpop.permute.xlu0 %4914
  %4916 = vrot.lane.b32.xlu0 %v4043, 24
  %v4917 = vpop.permute.xlu0 %4916
  %v4921 = vsel %vm519, %v4909, 0
  %v4924 = vsel %vm519, %v4910, 0
  %v4927 = vsel %vm519, %v4911, 0
  %v4929 = vsel %vm571, %v4917, 0
  %4931 = vmatprep.subr.mxu0 0.0
  %4932 = vmatpush1.msra.mxu0 0.0
  %4933 = vmatprep.subr.mxu0 0.0
  %4934 = vmatpush1.msra.mxu0 0.0
  %4935 = vmatprep.subr.mxu0 0.0
  %4936 = vmatpush1.msra.mxu0 0.0
  %4937 = vmatprep.subr.mxu0 0.0
  %4938 = vmatpush1.msra.mxu0 0.0
  %4939 = vmatprep.subr.mxu0 0.0
  %4940 = vmatpush1.msra.mxu0 0.0
  %4941 = vmatprep.subr.mxu0 0.0
  %4942 = vmatpush1.msra.mxu0 0.0
  %4943 = vmatprep.subr.mxu0 0.0
  %4944 = vmatpush1.msra.mxu0 0.0
  %4945 = vmatprep.subr.mxu0 0.0
  %4946 = vmatpush1.msra.mxu0 0.0
  %4947 = vmatprep.subr.mxu0 0.0
  %4948 = vmatpush1.msra.mxu0 0.0
  %4949 = vmatprep.subr.mxu0 0.0
  %4950 = vmatpush1.msra.mxu0 0.0
  %4951 = vmatprep.subr.mxu0 0.0
  %4952 = vmatpush1.msra.mxu0 0.0
  %4953 = vmatprep.subr.mxu0 0.0
  %4954 = vmatpush1.msra.mxu0 0.0
  %4955 = vmatprep.subr.mxu0 0.0
  %4956 = vmatpush1.msra.mxu0 0.0
  %4957 = vmatprep.subr.mxu0 0.0
  %4958 = vmatpush1.msra.mxu0 %v4929
  %4959 = vmatprep.subr.mxu0 0.0
  %4960 = vmatpush1.msra.mxu0 %v4915
  %4961 = vmatprep.subr.mxu0 0.0
  %4962 = vmatpush1.msra.mxu0 %v4913
  %4963 = vmatprep.subr.mxu0 0.0
  %4964 = vmatpush2.msra.mxu0 0.0
  %4965 = vmatprep.subr.mxu0 0.0
  %4966 = vmatpush2.msra.mxu0 0.0
  %4967 = vmatprep.subr.mxu0 0.0
  %4968 = vmatpush2.msra.mxu0 0.0
  %4969 = vmatprep.subr.mxu0 0.0
  %4970 = vmatpush2.msra.mxu0 0.0
  %4971 = vmatprep.subr.mxu0 0.0
  %4972 = vmatpush2.msra.mxu0 0.0
  %4973 = vmatprep.subr.mxu0 0.0
  %4974 = vmatpush2.msra.mxu0 0.0
  %4975 = vmatprep.subr.mxu0 0.0
  %4976 = vmatpush2.msra.mxu0 0.0
  %4977 = vmatprep.subr.mxu0 0.0
  %4978 = vmatpush2.msra.mxu0 0.0
  %4979 = vmatprep.subr.mxu0 0.0
  %4980 = vmatpush2.msra.mxu0 0.0
  %4981 = vmatprep.subr.mxu0 0.0
  %4982 = vmatpush2.msra.mxu0 0.0
  %4983 = vmatprep.subr.mxu0 0.0
  %4984 = vmatpush2.msra.mxu0 0.0
  %4985 = vmatprep.subr.mxu0 0.0
  %4986 = vmatpush2.msra.mxu0 0.0
  %4987 = vmatprep.subr.mxu0 0.0
  %4988 = vmatpush2.msra.mxu0 0.0
  %4989 = vmatprep.subr.mxu0 0.0
  %4990 = vmatpush2.msra.mxu0 0.0
  %4991 = vmatprep.subr.mxu0 0.0
  %4992 = vmatpush2.msra.mxu0 0.0
  %4993 = vmatprep.subr.mxu0 0.0
  %4994 = vmatpush2.msra.mxu0 0.0
  %4995 = vmatprep.mubr.f32.mxu0 0.0
  %4996 = vmatmul.mubr.f32.gmra.mxu0 %v4921
  %v4997 = vpop.f32.mrf.mxu0
  %v4998 = vadd.f32 0.0, %v4997
  %v4999 = vpop.f32.mrf.mxu0
  %5000 = vmatprep.mubr.f32.mxu0 0.0
  %5001 = vmatmul.mubr.f32.gmra.mxu0 %v4924
  %v5002 = vpop.f32.mrf.mxu0
  %v5003 = vadd.f32 0.0, %v5002
  %v5004 = vpop.f32.mrf.mxu0
  %5005 = vmatprep.mubr.f32.mxu0 0.0
  %5006 = vmatmul.mubr.f32.gmra.mxu0 %v4927
  %v5007 = vpop.f32.mrf.mxu0
  %v5008 = vadd.f32 0.0, %v5007
  %v5009 = vpop.f32.mrf.mxu0
  %5010 = vdwg.mxu0
  %5011 = vrot.lane.b32.xlu0 %v4033, 96
  %v5012 = vpop.permute.xlu0 %5011
  %5013 = vrot.lane.b32.xlu0 %v4038, 96
  %v5014 = vpop.permute.xlu0 %5013
  %5015 = vrot.lane.b32.xlu0 %v4043, 96
  %v5016 = vpop.permute.xlu0 %5015
  %5017 = vrot.lane.b32.xlu0 %v4033, 56
  %v5018 = vpop.permute.xlu0 %5017
  %5019 = vrot.lane.b32.xlu0 %v4038, 56
  %v5020 = vpop.permute.xlu0 %5019
  %5021 = vrot.lane.b32.xlu0 %v4043, 56
  %v5022 = vpop.permute.xlu0 %5021
  %v5023 = vsel %vm420, %v5012, 0
  %v5025 = vsel %vm420, %v5014, 0
  %v5027 = vsel %vm420, %v5016, 0
  %v5029 = vsel %vm420, %v5018, 0
  %v5031 = vsel %vm420, %v5020, 0
  %v5033 = vsel %vm420, %v5022, 0
  %5035 = vmatprep.subr.mxu0 0.0
  %5036 = vmatpush1.xpose.msra.mxu0 0.0
  %5037 = vmatprep.subr.mxu0 0.0
  %5038 = vmatpush1.xpose.msra.mxu0 0.0
  %5039 = vmatprep.subr.mxu0 0.0
  %5040 = vmatpush1.xpose.msra.mxu0 0.0
  %5041 = vmatprep.subr.mxu0 0.0
  %5042 = vmatpush1.xpose.msra.mxu0 0.0
  %5043 = vmatprep.subr.mxu0 0.0
  %5044 = vmatpush1.xpose.msra.mxu0 0.0
  %5045 = vmatprep.subr.mxu0 0.0
  %5046 = vmatpush1.xpose.msra.mxu0 0.0
  %5047 = vmatprep.subr.mxu0 0.0
  %5048 = vmatpush1.xpose.msra.mxu0 0.0
  %5049 = vmatprep.subr.mxu0 0.0
  %5050 = vmatpush1.xpose.msra.mxu0 0.0
  %5051 = vmatprep.subr.mxu0 0.0
  %5052 = vmatpush1.xpose.msra.mxu0 0.0
  %5053 = vmatprep.subr.mxu0 0.0
  %5054 = vmatpush1.xpose.msra.mxu0 0.0
  %5055 = vmatprep.subr.mxu0 0.0
  %5056 = vmatpush1.xpose.msra.mxu0 0.0
  %5057 = vmatprep.subr.mxu0 0.0
  %5058 = vmatpush1.xpose.msra.mxu0 0.0
  %5059 = vmatprep.subr.mxu0 0.0
  %5060 = vmatpush1.xpose.msra.mxu0 0.0
  %5061 = vmatprep.subr.mxu0 0.0
  %5062 = vmatpush1.xpose.msra.mxu0 %v5033
  %5063 = vmatprep.subr.mxu0 0.0
  %5064 = vmatpush1.xpose.msra.mxu0 %v5031
  %5065 = vmatprep.subr.mxu0 0.0
  %5066 = vmatpush1.xpose.msra.mxu0 %v5029
  %5067 = vmatprep.subr.mxu0 0.0
  %5068 = vmatpush2.xpose.msra.mxu0 0.0
  %5069 = vmatprep.subr.mxu0 0.0
  %5070 = vmatpush2.xpose.msra.mxu0 0.0
  %5071 = vmatprep.subr.mxu0 0.0
  %5072 = vmatpush2.xpose.msra.mxu0 0.0
  %5073 = vmatprep.subr.mxu0 0.0
  %5074 = vmatpush2.xpose.msra.mxu0 0.0
  %5075 = vmatprep.subr.mxu0 0.0
  %5076 = vmatpush2.xpose.msra.mxu0 0.0
  %5077 = vmatprep.subr.mxu0 0.0
  %5078 = vmatpush2.xpose.msra.mxu0 0.0
  %5079 = vmatprep.subr.mxu0 0.0
  %5080 = vmatpush2.xpose.msra.mxu0 0.0
  %5081 = vmatprep.subr.mxu0 0.0
  %5082 = vmatpush2.xpose.msra.mxu0 0.0
  %5083 = vmatprep.subr.mxu0 0.0
  %5084 = vmatpush2.xpose.msra.mxu0 0.0
  %5085 = vmatprep.subr.mxu0 0.0
  %5086 = vmatpush2.xpose.msra.mxu0 0.0
  %5087 = vmatprep.subr.mxu0 0.0
  %5088 = vmatpush2.xpose.msra.mxu0 0.0
  %5089 = vmatprep.subr.mxu0 0.0
  %5090 = vmatpush2.xpose.msra.mxu0 0.0
  %5091 = vmatprep.subr.mxu0 0.0
  %5092 = vmatpush2.xpose.msra.mxu0 0.0
  %5093 = vmatprep.subr.mxu0 0.0
  %5094 = vmatpush2.xpose.msra.mxu0 0.0
  %5095 = vmatprep.subr.mxu0 0.0
  %5096 = vmatpush2.xpose.msra.mxu0 0.0
  %5097 = vmatprep.subr.mxu0 0.0
  %5098 = vmatpush2.xpose.msra.mxu0 0.0
  %5099 = vmatprep.mubr.f32.mxu0 0.0
  %5100 = vmatmul.mubr.f32.gmra.mxu0 %v5023
  %v5101 = vpop.f32.mrf.mxu0
  %v5102 = vadd.f32 0.0, %v5101
  %v5103 = vpop.f32.mrf.mxu0
  %5104 = vmatprep.mubr.f32.mxu0 0.0
  %5105 = vmatmul.mubr.f32.gmra.mxu0 %v5025
  %v5106 = vpop.f32.mrf.mxu0
  %v5107 = vadd.f32 0.0, %v5106
  %v5108 = vpop.f32.mrf.mxu0
  %5109 = vmatprep.mubr.f32.mxu0 0.0
  %5110 = vmatmul.mubr.f32.gmra.mxu0 %v5027
  %v5111 = vpop.f32.mrf.mxu0
  %v5112 = vadd.f32 0.0, %v5111
  %v5113 = vpop.f32.mrf.mxu0
  %5114 = vdwg.mxu0
  %v5115 = vmul.f32 %v5102, 0.35355338
  %v5116 = vmul.f32 %v5107, 0.35355338
  %v5117 = vmul.f32 %v5112, 0.35355338
  %v5118 = vadd.f32 %v5115, %v226
  %v5119 = vadd.f32 %v5116, %v247
  %v5120 = vadd.f32 %v5117, %v244
  %v5121 = vsel %vm519, %v5118, -inf
  %5122 = vmax.xlane.f32.xlu0 %v5121
  %v5123 = vpop.xlane.xlu0 %5122
  %v5124 = vsel %vm519, %v5119, -inf
  %5125 = vmax.xlane.f32.xlu0 %v5124
  %v5126 = vpop.xlane.xlu0 %5125
  %v5127 = vsel %vm526, %v5120, -inf
  %5128 = vmax.xlane.f32.xlu0 %v5127
  %v5129 = vpop.xlane.xlu0 %5128
  %v5130 = vsub.f32 %v5118, %v5123
  %v5131 = vsub.f32 %v5119, %v5126
  %v5132 = vsub.f32 %v5120, %v5129
  %v5133 = vmul.f32 %v5130, 1.442695
  %v5134 = vpow.pop %v5133
  %v5135 = vmul.f32 %v5131, 1.442695
  %v5136 = vpow.pop %v5135
  %v5137 = vmul.f32 %v5132, 1.442695
  %v5138 = vpow.pop %v5137
  %v5139 = vsel %vm519, %v5134, 0.0
  %5140 = vadd.xlane.f32.xlu0 %v5139
  %v5141 = vpop.xlane.xlu0 %5140
  %v5142 = vsel %vm519, %v5136, 0.0
  %5143 = vadd.xlane.f32.xlu0 %v5142
  %v5144 = vpop.xlane.xlu0 %5143
  %v5145 = vsel %vm526, %v5138, 0.0
  %5146 = vadd.xlane.f32.xlu0 %v5145
  %v5147 = vpop.xlane.xlu0 %5146
  %v5148 = vrcp.pop %v5141
  %v5149 = vrcp.pop %v5144
  %v5150 = vrcp.pop %v5147
  %v5151 = vmul.f32 %v5134, %v5148
  %v5152 = vmul.f32 %v5136, %v5149
  %v5153 = vmul.f32 %v5138, %v5150
  %5154 = vrot.lane.b32.xlu0 %v4033, 16
  %v5155 = vpop.permute.xlu0 %5154
  %5156 = vrot.lane.b32.xlu0 %v4038, 16
  %v5157 = vpop.permute.xlu0 %5156
  %5158 = vrot.lane.b32.xlu0 %v4043, 16
  %v5159 = vpop.permute.xlu0 %5158
  %v5163 = vsel %vm519, %v5151, 0
  %v5166 = vsel %vm519, %v5152, 0
  %v5169 = vsel %vm519, %v5153, 0
  %v5171 = vsel %vm571, %v5159, 0
  %5173 = vmatprep.subr.mxu0 0.0
  %5174 = vmatpush1.msra.mxu0 0.0
  %5175 = vmatprep.subr.mxu0 0.0
  %5176 = vmatpush1.msra.mxu0 0.0
  %5177 = vmatprep.subr.mxu0 0.0
  %5178 = vmatpush1.msra.mxu0 0.0
  %5179 = vmatprep.subr.mxu0 0.0
  %5180 = vmatpush1.msra.mxu0 0.0
  %5181 = vmatprep.subr.mxu0 0.0
  %5182 = vmatpush1.msra.mxu0 0.0
  %5183 = vmatprep.subr.mxu0 0.0
  %5184 = vmatpush1.msra.mxu0 0.0
  %5185 = vmatprep.subr.mxu0 0.0
  %5186 = vmatpush1.msra.mxu0 0.0
  %5187 = vmatprep.subr.mxu0 0.0
  %5188 = vmatpush1.msra.mxu0 0.0
  %5189 = vmatprep.subr.mxu0 0.0
  %5190 = vmatpush1.msra.mxu0 0.0
  %5191 = vmatprep.subr.mxu0 0.0
  %5192 = vmatpush1.msra.mxu0 0.0
  %5193 = vmatprep.subr.mxu0 0.0
  %5194 = vmatpush1.msra.mxu0 0.0
  %5195 = vmatprep.subr.mxu0 0.0
  %5196 = vmatpush1.msra.mxu0 0.0
  %5197 = vmatprep.subr.mxu0 0.0
  %5198 = vmatpush1.msra.mxu0 0.0
  %5199 = vmatprep.subr.mxu0 0.0
  %5200 = vmatpush1.msra.mxu0 %v5171
  %5201 = vmatprep.subr.mxu0 0.0
  %5202 = vmatpush1.msra.mxu0 %v5157
  %5203 = vmatprep.subr.mxu0 0.0
  %5204 = vmatpush1.msra.mxu0 %v5155
  %5205 = vmatprep.subr.mxu0 0.0
  %5206 = vmatpush2.msra.mxu0 0.0
  %5207 = vmatprep.subr.mxu0 0.0
  %5208 = vmatpush2.msra.mxu0 0.0
  %5209 = vmatprep.subr.mxu0 0.0
  %5210 = vmatpush2.msra.mxu0 0.0
  %5211 = vmatprep.subr.mxu0 0.0
  %5212 = vmatpush2.msra.mxu0 0.0
  %5213 = vmatprep.subr.mxu0 0.0
  %5214 = vmatpush2.msra.mxu0 0.0
  %5215 = vmatprep.subr.mxu0 0.0
  %5216 = vmatpush2.msra.mxu0 0.0
  %5217 = vmatprep.subr.mxu0 0.0
  %5218 = vmatpush2.msra.mxu0 0.0
  %5219 = vmatprep.subr.mxu0 0.0
  %5220 = vmatpush2.msra.mxu0 0.0
  %5221 = vmatprep.subr.mxu0 0.0
  %5222 = vmatpush2.msra.mxu0 0.0
  %5223 = vmatprep.subr.mxu0 0.0
  %5224 = vmatpush2.msra.mxu0 0.0
  %5225 = vmatprep.subr.mxu0 0.0
  %5226 = vmatpush2.msra.mxu0 0.0
  %5227 = vmatprep.subr.mxu0 0.0
  %5228 = vmatpush2.msra.mxu0 0.0
  %5229 = vmatprep.subr.mxu0 0.0
  %5230 = vmatpush2.msra.mxu0 0.0
  %5231 = vmatprep.subr.mxu0 0.0
  %5232 = vmatpush2.msra.mxu0 0.0
  %5233 = vmatprep.subr.mxu0 0.0
  %5234 = vmatpush2.msra.mxu0 0.0
  %5235 = vmatprep.subr.mxu0 0.0
  %5236 = vmatpush2.msra.mxu0 0.0
  %5237 = vmatprep.mubr.f32.mxu0 0.0
  %5238 = vmatmul.mubr.f32.gmra.mxu0 %v5163
  %v5239 = vpop.f32.mrf.mxu0
  %v5240 = vadd.f32 0.0, %v5239
  %v5241 = vpop.f32.mrf.mxu0
  %5242 = vmatprep.mubr.f32.mxu0 0.0
  %5243 = vmatmul.mubr.f32.gmra.mxu0 %v5166
  %v5244 = vpop.f32.mrf.mxu0
  %v5245 = vadd.f32 0.0, %v5244
  %v5246 = vpop.f32.mrf.mxu0
  %5247 = vmatprep.mubr.f32.mxu0 0.0
  %5248 = vmatmul.mubr.f32.gmra.mxu0 %v5169
  %v5249 = vpop.f32.mrf.mxu0
  %v5250 = vadd.f32 0.0, %v5249
  %v5251 = vpop.f32.mrf.mxu0
  %5252 = vdwg.mxu0
  %5256 = vrot.lane.b32.xlu0 %v4514, 8
  %v5257 = vpop.permute.xlu0 %5256
  %5258 = vrot.lane.b32.xlu0 %v4519, 8
  %v5259 = vpop.permute.xlu0 %5258
  %5260 = vrot.lane.b32.xlu0 %v4524, 8
  %v5261 = vpop.permute.xlu0 %5260
  %5268 = vrot.lane.b32.xlu0 %v4756, 16
  %v5269 = vpop.permute.xlu0 %5268
  %5270 = vrot.lane.b32.xlu0 %v4761, 16
  %v5271 = vpop.permute.xlu0 %5270
  %5272 = vrot.lane.b32.xlu0 %v4766, 16
  %v5273 = vpop.permute.xlu0 %5272
  %5280 = vrot.lane.b32.xlu0 %v4998, 24
  %v5281 = vpop.permute.xlu0 %5280
  %5282 = vrot.lane.b32.xlu0 %v5003, 24
  %v5283 = vpop.permute.xlu0 %5282
  %5284 = vrot.lane.b32.xlu0 %v5008, 24
  %v5285 = vpop.permute.xlu0 %5284
  %5292 = vrot.lane.b32.xlu0 %v5240, 32
  %v5293 = vpop.permute.xlu0 %5292
  %5294 = vrot.lane.b32.xlu0 %v5245, 32
  %v5295 = vpop.permute.xlu0 %5294
  %5296 = vrot.lane.b32.xlu0 %v5250, 32
  %v5297 = vpop.permute.xlu0 %5296
  %v5301 = vsel %vm420, %v4272, %v5257
  %v5302 = vsel %vm420, %v4277, %v5259
  %v5303 = vsel %vm420, %v4282, %v5261
  %v5304 = vsel %vm1673, %v5301, %v5269
  %v5305 = vsel %vm1673, %v5302, %v5271
  %v5306 = vsel %vm1673, %v5303, %v5273
  %v5307 = vsel %vm1677, %v5304, %v5281
  %v5308 = vsel %vm1677, %v5305, %v5283
  %v5309 = vsel %vm1677, %v5306, %v5285
  %v5310 = vsel %vm1681, %v5307, %v5293
  %v5311 = vsel %vm1681, %v5308, %v5295
  %v5312 = vsel %vm1681, %v5309, %v5297
  %s5313 = scalar_lea.vmem %s7, 80
  %v5314 = vld [vmem:[%s5313] sm:$0xff]
  %v5315 = vld [vmem:[%s5313 + $0x8] sm:$0xff]
  %v5316 = vld [vmem:[%s5313 + $0x10] sm:$0xff]
  %v5317 = vld [vmem:[%s5313 + $0x18] sm:$0xff]
  %v5318 = vld [vmem:[%s5313 + $0x20] sm:$0xff]
  %v5320 = vsel %vm250, %v5310, 0
  %v5323 = vsel %vm250, %v5311, 0
  %v5326 = vsel %vm250, %v5312, 0
  %5328 = vmatprep.subr.mxu0 0.0
  %5329 = vmatpush1.msra.mxu0 0.0
  %5330 = vmatprep.subr.mxu0 0.0
  %5331 = vmatpush1.msra.mxu0 0.0
  %5332 = vmatprep.subr.mxu0 0.0
  %5333 = vmatpush1.msra.mxu0 0.0
  %5334 = vmatprep.subr.mxu0 0.0
  %5335 = vmatpush1.msra.mxu0 0.0
  %5336 = vmatprep.subr.mxu0 0.0
  %5337 = vmatpush1.msra.mxu0 0.0
  %5338 = vmatprep.subr.mxu0 0.0
  %5339 = vmatpush1.msra.mxu0 0.0
  %5340 = vmatprep.subr.mxu0 0.0
  %5341 = vmatpush1.msra.mxu0 0.0
  %5342 = vmatprep.subr.mxu0 0.0
  %5343 = vmatpush1.msra.mxu0 0.0
  %5344 = vmatprep.subr.mxu0 0.0
  %5345 = vmatpush1.msra.mxu0 0.0
  %5346 = vmatprep.subr.mxu0 0.0
  %5347 = vmatpush1.msra.mxu0 0.0
  %5348 = vmatprep.subr.mxu0 0.0
  %5349 = vmatpush1.msra.mxu0 0.0
  %5350 = vmatprep.subr.mxu0 0.0
  %5351 = vmatpush1.msra.mxu0 %v5318
  %5352 = vmatprep.subr.mxu0 0.0
  %5353 = vmatpush1.msra.mxu0 %v5317
  %5354 = vmatprep.subr.mxu0 0.0
  %5355 = vmatpush1.msra.mxu0 %v5316
  %5356 = vmatprep.subr.mxu0 0.0
  %5357 = vmatpush1.msra.mxu0 %v5315
  %5358 = vmatprep.subr.mxu0 0.0
  %5359 = vmatpush1.msra.mxu0 %v5314
  %5360 = vmatprep.subr.mxu0 0.0
  %5361 = vmatpush2.msra.mxu0 0.0
  %5362 = vmatprep.subr.mxu0 0.0
  %5363 = vmatpush2.msra.mxu0 0.0
  %5364 = vmatprep.subr.mxu0 0.0
  %5365 = vmatpush2.msra.mxu0 0.0
  %5366 = vmatprep.subr.mxu0 0.0
  %5367 = vmatpush2.msra.mxu0 0.0
  %5368 = vmatprep.subr.mxu0 0.0
  %5369 = vmatpush2.msra.mxu0 0.0
  %5370 = vmatprep.subr.mxu0 0.0
  %5371 = vmatpush2.msra.mxu0 0.0
  %5372 = vmatprep.subr.mxu0 0.0
  %5373 = vmatpush2.msra.mxu0 0.0
  %5374 = vmatprep.subr.mxu0 0.0
  %5375 = vmatpush2.msra.mxu0 0.0
  %5376 = vmatprep.subr.mxu0 0.0
  %5377 = vmatpush2.msra.mxu0 0.0
  %5378 = vmatprep.subr.mxu0 0.0
  %5379 = vmatpush2.msra.mxu0 0.0
  %5380 = vmatprep.subr.mxu0 0.0
  %5381 = vmatpush2.msra.mxu0 0.0
  %5382 = vmatprep.subr.mxu0 0.0
  %5383 = vmatpush2.msra.mxu0 0.0
  %5384 = vmatprep.subr.mxu0 0.0
  %5385 = vmatpush2.msra.mxu0 0.0
  %5386 = vmatprep.subr.mxu0 0.0
  %5387 = vmatpush2.msra.mxu0 0.0
  %5388 = vmatprep.subr.mxu0 0.0
  %5389 = vmatpush2.msra.mxu0 0.0
  %5390 = vmatprep.subr.mxu0 0.0
  %5391 = vmatpush2.msra.mxu0 0.0
  %5392 = vmatprep.mubr.f32.mxu0 0.0
  %5393 = vmatmul.mubr.f32.gmra.mxu0 %v5320
  %v5394 = vpop.f32.mrf.mxu0
  %v5395 = vadd.f32 0.0, %v5394
  %v5396 = vpop.f32.mrf.mxu0
  %5397 = vmatprep.mubr.f32.mxu0 0.0
  %5398 = vmatmul.mubr.f32.gmra.mxu0 %v5323
  %v5399 = vpop.f32.mrf.mxu0
  %v5400 = vadd.f32 0.0, %v5399
  %v5401 = vpop.f32.mrf.mxu0
  %5402 = vmatprep.mubr.f32.mxu0 0.0
  %5403 = vmatmul.mubr.f32.gmra.mxu0 %v5326
  %v5404 = vpop.f32.mrf.mxu0
  %v5405 = vadd.f32 0.0, %v5404
  %v5406 = vpop.f32.mrf.mxu0
  %5407 = vdwg.mxu0
  %v5408 = vadd.f32 %v3879, %v5395
  %v5409 = vadd.f32 %v3880, %v5400
  %v5410 = vadd.f32 %v3881, %v5405
  %s5411 = scalar_lea.vmem %s8, 2
  %v5412 = vld [vmem:[%s5411] sm:$0x1]
  %v5414 = vlaneseq
  %v5415 = vshrl.u32 %v5414, 7
  %v5416 = vsub.s32 0, %v5415
  %v5417 = vrot.slane %v5412, %v5416
  %v5419 = vadd.f32 %v5408, %v5417
  %v5420 = vadd.f32 %v5409, %v5417
  %v5421 = vadd.f32 %v5410, %v5417
  %s5422 = scalar_lea.vmem %s11, 2
  %v5423 = vld [vmem:[%s5422] sm:$0x1]
  %s5424 = scalar_lea.vmem %s12, 2
  %v5425 = vld [vmem:[%s5424] sm:$0x1]
  %v5426 = vsel %vm250, %v5419, 0.0
  %5427 = vadd.xlane.f32.xlu0 %v5426
  %v5428 = vpop.xlane.xlu0 %5427
  %v5429 = vsel %vm250, %v5420, 0.0
  %5430 = vadd.xlane.f32.xlu0 %v5429
  %v5431 = vpop.xlane.xlu0 %5430
  %v5432 = vsel %vm257, %v5421, 0.0
  %5433 = vadd.xlane.f32.xlu0 %v5432
  %v5434 = vpop.xlane.xlu0 %5433
  %v5435 = vmul.f32 %v5428, %v261
  %v5436 = vmul.f32 %v5431, %v261
  %v5437 = vmul.f32 %v5434, %v261
  %v5438 = vsub.f32 %v5419, %v5435
  %v5439 = vsub.f32 %v5420, %v5436
  %v5440 = vsub.f32 %v5421, %v5437
  %v5441 = vmul.f32 %v5438, %v5438
  %v5442 = vmul.f32 %v5439, %v5439
  %v5443 = vmul.f32 %v5440, %v5440
  %v5444 = vsel %vm250, %v5441, 0.0
  %5445 = vadd.xlane.f32.xlu0 %v5444
  %v5446 = vpop.xlane.xlu0 %5445
  %v5447 = vsel %vm250, %v5442, 0.0
  %5448 = vadd.xlane.f32.xlu0 %v5447
  %v5449 = vpop.xlane.xlu0 %5448
  %v5450 = vsel %vm257, %v5443, 0.0
  %5451 = vadd.xlane.f32.xlu0 %v5450
  %v5452 = vpop.xlane.xlu0 %5451
  %v5453 = vmul.f32 %v5446, %v261
  %v5454 = vmul.f32 %v5449, %v261
  %v5455 = vmul.f32 %v5452, %v261
  %v5456 = vadd.f32 %v5453, 1e-05
  %v5457 = vadd.f32 %v5454, 1e-05
  %v5458 = vadd.f32 %v5455, 1e-05
  %v5459 = vrsqrt.pop %v5456
  %v5460 = vrsqrt.pop %v5457
  %v5461 = vrsqrt.pop %v5458
  %v5462 = vmul.f32 %v5438, %v5459
  %v5463 = vmul.f32 %v5439, %v5460
  %v5464 = vmul.f32 %v5440, %v5461
  %v5466 = vlaneseq
  %v5467 = vshrl.u32 %v5466, 7
  %v5468 = vsub.s32 0, %v5467
  %v5469 = vrot.slane %v5423, %v5468
  %v5471 = vmul.f32 %v5462, %v5469
  %v5472 = vmul.f32 %v5463, %v5469
  %v5473 = vmul.f32 %v5464, %v5469
  %v5475 = vlaneseq
  %v5476 = vshrl.u32 %v5475, 7
  %v5477 = vsub.s32 0, %v5476
  %v5478 = vrot.slane %v5425, %v5477
  %v5480 = vadd.f32 %v5471, %v5478
  %v5481 = vadd.f32 %v5472, %v5478
  %v5482 = vadd.f32 %v5473, %v5478
  %s5483 = scalar_lea.vmem %s13, 80
  %v5484 = vld [vmem:[%s5483] sm:$0xff]
  %v5485 = vld [vmem:[%s5483 + $0x8] sm:$0xff]
  %v5486 = vld [vmem:[%s5483 + $0x10] sm:$0xff]
  %v5487 = vld [vmem:[%s5483 + $0x18] sm:$0xff]
  %v5488 = vld [vmem:[%s5483 + $0x20] sm:$0xff]
  %s5489 = scalar_lea.vmem %s14, 2
  %v5490 = vld [vmem:[%s5489] sm:$0x1]
  %v5492 = vlaneseq
  %v5493 = vshrl.u32 %v5492, 7
  %v5494 = vsub.s32 0, %v5493
  %v5495 = vrot.slane %v5490, %v5494
  %v5498 = vsel %vm250, %v5480, 0
  %v5501 = vsel %vm250, %v5481, 0
  %v5504 = vsel %vm250, %v5482, 0
  %5506 = vmatprep.subr.mxu0 0.0
  %5507 = vmatpush1.msra.mxu0 0.0
  %5508 = vmatprep.subr.mxu0 0.0
  %5509 = vmatpush1.msra.mxu0 0.0
  %5510 = vmatprep.subr.mxu0 0.0
  %5511 = vmatpush1.msra.mxu0 0.0
  %5512 = vmatprep.subr.mxu0 0.0
  %5513 = vmatpush1.msra.mxu0 0.0
  %5514 = vmatprep.subr.mxu0 0.0
  %5515 = vmatpush1.msra.mxu0 0.0
  %5516 = vmatprep.subr.mxu0 0.0
  %5517 = vmatpush1.msra.mxu0 0.0
  %5518 = vmatprep.subr.mxu0 0.0
  %5519 = vmatpush1.msra.mxu0 0.0
  %5520 = vmatprep.subr.mxu0 0.0
  %5521 = vmatpush1.msra.mxu0 0.0
  %5522 = vmatprep.subr.mxu0 0.0
  %5523 = vmatpush1.msra.mxu0 0.0
  %5524 = vmatprep.subr.mxu0 0.0
  %5525 = vmatpush1.msra.mxu0 0.0
  %5526 = vmatprep.subr.mxu0 0.0
  %5527 = vmatpush1.msra.mxu0 0.0
  %5528 = vmatprep.subr.mxu0 0.0
  %5529 = vmatpush1.msra.mxu0 %v5488
  %5530 = vmatprep.subr.mxu0 0.0
  %5531 = vmatpush1.msra.mxu0 %v5487
  %5532 = vmatprep.subr.mxu0 0.0
  %5533 = vmatpush1.msra.mxu0 %v5486
  %5534 = vmatprep.subr.mxu0 0.0
  %5535 = vmatpush1.msra.mxu0 %v5485
  %5536 = vmatprep.subr.mxu0 0.0
  %5537 = vmatpush1.msra.mxu0 %v5484
  %5538 = vmatprep.subr.mxu0 0.0
  %5539 = vmatpush2.msra.mxu0 0.0
  %5540 = vmatprep.subr.mxu0 0.0
  %5541 = vmatpush2.msra.mxu0 0.0
  %5542 = vmatprep.subr.mxu0 0.0
  %5543 = vmatpush2.msra.mxu0 0.0
  %5544 = vmatprep.subr.mxu0 0.0
  %5545 = vmatpush2.msra.mxu0 0.0
  %5546 = vmatprep.subr.mxu0 0.0
  %5547 = vmatpush2.msra.mxu0 0.0
  %5548 = vmatprep.subr.mxu0 0.0
  %5549 = vmatpush2.msra.mxu0 0.0
  %5550 = vmatprep.subr.mxu0 0.0
  %5551 = vmatpush2.msra.mxu0 0.0
  %5552 = vmatprep.subr.mxu0 0.0
  %5553 = vmatpush2.msra.mxu0 0.0
  %5554 = vmatprep.subr.mxu0 0.0
  %5555 = vmatpush2.msra.mxu0 0.0
  %5556 = vmatprep.subr.mxu0 0.0
  %5557 = vmatpush2.msra.mxu0 0.0
  %5558 = vmatprep.subr.mxu0 0.0
  %5559 = vmatpush2.msra.mxu0 0.0
  %5560 = vmatprep.subr.mxu0 0.0
  %5561 = vmatpush2.msra.mxu0 0.0
  %5562 = vmatprep.subr.mxu0 0.0
  %5563 = vmatpush2.msra.mxu0 0.0
  %5564 = vmatprep.subr.mxu0 0.0
  %5565 = vmatpush2.msra.mxu0 0.0
  %5566 = vmatprep.subr.mxu0 0.0
  %5567 = vmatpush2.msra.mxu0 0.0
  %5568 = vmatprep.subr.mxu0 0.0
  %5569 = vmatpush2.msra.mxu0 0.0
  %5570 = vmatprep.mubr.f32.mxu0 0.0
  %5571 = vmatmul.mubr.f32.gmra.mxu0 %v5498
  %v5572 = vpop.f32.mrf.mxu0
  %v5573 = vadd.f32 %v5495, %v5572
  %v5574 = vpop.f32.mrf.mxu0
  %5575 = vmatprep.mubr.f32.mxu0 0.0
  %5576 = vmatmul.mubr.f32.gmra.mxu0 %v5501
  %v5577 = vpop.f32.mrf.mxu0
  %v5578 = vadd.f32 %v5495, %v5577
  %v5579 = vpop.f32.mrf.mxu0
  %5580 = vmatprep.mubr.f32.mxu0 0.0
  %5581 = vmatmul.mubr.f32.gmra.mxu0 %v5504
  %v5582 = vpop.f32.mrf.mxu0
  %v5583 = vadd.f32 %v5495, %v5582
  %v5584 = vpop.f32.mrf.mxu0
  %5585 = vdwg.mxu0
  %v5586 = vmax.f32 %v5573, 0.0
  %v5587 = vmax.f32 %v5578, 0.0
  %v5588 = vmax.f32 %v5583, 0.0
  %s5589 = scalar_lea.vmem %s15, 256
  %v5590 = vld [vmem:[%s5589] sm:$0xff]
  %v5591 = vld [vmem:[%s5589 + $0x8] sm:$0xff]
  %v5592 = vld [vmem:[%s5589 + $0x10] sm:$0xff]
  %v5593 = vld [vmem:[%s5589 + $0x18] sm:$0xff]
  %v5594 = vld [vmem:[%s5589 + $0x20] sm:$0xff]
  %v5595 = vld [vmem:[%s5589 + $0x28] sm:$0xff]
  %v5596 = vld [vmem:[%s5589 + $0x30] sm:$0xff]
  %v5597 = vld [vmem:[%s5589 + $0x38] sm:$0xff]
  %v5598 = vld [vmem:[%s5589 + $0x40] sm:$0xff]
  %v5599 = vld [vmem:[%s5589 + $0x48] sm:$0xff]
  %v5600 = vld [vmem:[%s5589 + $0x50] sm:$0xff]
  %v5601 = vld [vmem:[%s5589 + $0x58] sm:$0xff]
  %v5602 = vld [vmem:[%s5589 + $0x60] sm:$0xff]
  %v5603 = vld [vmem:[%s5589 + $0x68] sm:$0xff]
  %v5604 = vld [vmem:[%s5589 + $0x70] sm:$0xff]
  %v5605 = vld [vmem:[%s5589 + $0x78] sm:$0xff]
  %5606 = vmatprep.subr.mxu0 0.0
  %5607 = vmatpush1.msra.mxu0 %v5605
  %5608 = vmatprep.subr.mxu0 0.0
  %5609 = vmatpush1.msra.mxu0 %v5604
  %5610 = vmatprep.subr.mxu0 0.0
  %5611 = vmatpush1.msra.mxu0 %v5603
  %5612 = vmatprep.subr.mxu0 0.0
  %5613 = vmatpush1.msra.mxu0 %v5602
  %5614 = vmatprep.subr.mxu0 0.0
  %5615 = vmatpush1.msra.mxu0 %v5601
  %5616 = vmatprep.subr.mxu0 0.0
  %5617 = vmatpush1.msra.mxu0 %v5600
  %5618 = vmatprep.subr.mxu0 0.0
  %5619 = vmatpush1.msra.mxu0 %v5599
  %5620 = vmatprep.subr.mxu0 0.0
  %5621 = vmatpush1.msra.mxu0 %v5598
  %5622 = vmatprep.subr.mxu0 0.0
  %5623 = vmatpush1.msra.mxu0 %v5597
  %5624 = vmatprep.subr.mxu0 0.0
  %5625 = vmatpush1.msra.mxu0 %v5596
  %5626 = vmatprep.subr.mxu0 0.0
  %5627 = vmatpush1.msra.mxu0 %v5595
  %5628 = vmatprep.subr.mxu0 0.0
  %5629 = vmatpush1.msra.mxu0 %v5594
  %5630 = vmatprep.subr.mxu0 0.0
  %5631 = vmatpush1.msra.mxu0 %v5593
  %5632 = vmatprep.subr.mxu0 0.0
  %5633 = vmatpush1.msra.mxu0 %v5592
  %5634 = vmatprep.subr.mxu0 0.0
  %5635 = vmatpush1.msra.mxu0 %v5591
  %5636 = vmatprep.subr.mxu0 0.0
  %5637 = vmatpush1.msra.mxu0 %v5590
  %5638 = vmatprep.subr.mxu0 0.0
  %5639 = vmatpush2.msra.mxu0 0.0
  %5640 = vmatprep.subr.mxu0 0.0
  %5641 = vmatpush2.msra.mxu0 0.0
  %5642 = vmatprep.subr.mxu0 0.0
  %5643 = vmatpush2.msra.mxu0 0.0
  %5644 = vmatprep.subr.mxu0 0.0
  %5645 = vmatpush2.msra.mxu0 0.0
  %5646 = vmatprep.subr.mxu0 0.0
  %5647 = vmatpush2.msra.mxu0 0.0
  %5648 = vmatprep.subr.mxu0 0.0
  %5649 = vmatpush2.msra.mxu0 0.0
  %5650 = vmatprep.subr.mxu0 0.0
  %5651 = vmatpush2.msra.mxu0 0.0
  %5652 = vmatprep.subr.mxu0 0.0
  %5653 = vmatpush2.msra.mxu0 0.0
  %5654 = vmatprep.subr.mxu0 0.0
  %5655 = vmatpush2.msra.mxu0 0.0
  %5656 = vmatprep.subr.mxu0 0.0
  %5657 = vmatpush2.msra.mxu0 0.0
  %5658 = vmatprep.subr.mxu0 0.0
  %5659 = vmatpush2.msra.mxu0 0.0
  %5660 = vmatprep.subr.mxu0 0.0
  %5661 = vmatpush2.msra.mxu0 0.0
  %5662 = vmatprep.subr.mxu0 0.0
  %5663 = vmatpush2.msra.mxu0 0.0
  %5664 = vmatprep.subr.mxu0 0.0
  %5665 = vmatpush2.msra.mxu0 0.0
  %5666 = vmatprep.subr.mxu0 0.0
  %5667 = vmatpush2.msra.mxu0 0.0
  %5668 = vmatprep.subr.mxu0 0.0
  %5669 = vmatpush2.msra.mxu0 0.0
  %5670 = vmatprep.mubr.f32.mxu0 0.0
  %5671 = vmatmul.mubr.f32.gmra.mxu0 %v5586
  %v5672 = vpop.f32.mrf.mxu0
  %v5673 = vadd.f32 0.0, %v5672
  %v5674 = vpop.f32.mrf.mxu0
  %5675 = vmatprep.mubr.f32.mxu0 0.0
  %5676 = vmatmul.mubr.f32.gmra.mxu0 %v5587
  %v5677 = vpop.f32.mrf.mxu0
  %v5678 = vadd.f32 0.0, %v5677
  %v5679 = vpop.f32.mrf.mxu0
  %5680 = vmatprep.mubr.f32.mxu0 0.0
  %5681 = vmatmul.mubr.f32.gmra.mxu0 %v5588
  %v5682 = vpop.f32.mrf.mxu0
  %v5683 = vadd.f32 0.0, %v5682
  %v5684 = vpop.f32.mrf.mxu0
  %5685 = vdwg.mxu0
  %v5686 = vadd.f32 %v5419, %v5673
  %v5687 = vadd.f32 %v5420, %v5678
  %v5688 = vadd.f32 %v5421, %v5683
  %s5689 = scalar_lea.vmem %s16, 2
  %v5690 = vld [vmem:[%s5689] sm:$0x1]
  %v5692 = vlaneseq
  %v5693 = vshrl.u32 %v5692, 7
  %v5694 = vsub.s32 0, %v5693
  %v5695 = vrot.slane %v5690, %v5694
  %v5697 = vadd.f32 %v5686, %v5695
  %v5698 = vadd.f32 %v5687, %v5695
  %v5699 = vadd.f32 %v5688, %v5695
  %s5700 = scalar_lea.vmem %s9, 3
  %v5701 = vld [vmem:[%s5700] sm:$0x1]
  %s5702 = scalar_lea.vmem %s10, 3
  %v5703 = vld [vmem:[%s5702] sm:$0x1]
  %v5704 = vsel %vm250, %v5697, 0.0
  %5705 = vadd.xlane.f32.xlu0 %v5704
  %v5706 = vpop.xlane.xlu0 %5705
  %v5707 = vsel %vm250, %v5698, 0.0
  %5708 = vadd.xlane.f32.xlu0 %v5707
  %v5709 = vpop.xlane.xlu0 %5708
  %v5710 = vsel %vm257, %v5699, 0.0
  %5711 = vadd.xlane.f32.xlu0 %v5710
  %v5712 = vpop.xlane.xlu0 %5711
  %v5713 = vmul.f32 %v5706, %v261
  %v5714 = vmul.f32 %v5709, %v261
  %v5715 = vmul.f32 %v5712, %v261
  %v5716 = vsub.f32 %v5697, %v5713
  %v5717 = vsub.f32 %v5698, %v5714
  %v5718 = vsub.f32 %v5699, %v5715
  %v5719 = vmul.f32 %v5716, %v5716
  %v5720 = vmul.f32 %v5717, %v5717
  %v5721 = vmul.f32 %v5718, %v5718
  %v5722 = vsel %vm250, %v5719, 0.0
  %5723 = vadd.xlane.f32.xlu0 %v5722
  %v5724 = vpop.xlane.xlu0 %5723
  %v5725 = vsel %vm250, %v5720, 0.0
  %5726 = vadd.xlane.f32.xlu0 %v5725
  %v5727 = vpop.xlane.xlu0 %5726
  %v5728 = vsel %vm257, %v5721, 0.0
  %5729 = vadd.xlane.f32.xlu0 %v5728
  %v5730 = vpop.xlane.xlu0 %5729
  %v5731 = vmul.f32 %v5724, %v261
  %v5732 = vmul.f32 %v5727, %v261
  %v5733 = vmul.f32 %v5730, %v261
  %v5734 = vadd.f32 %v5731, 1e-05
  %v5735 = vadd.f32 %v5732, 1e-05
  %v5736 = vadd.f32 %v5733, 1e-05
  %v5737 = vrsqrt.pop %v5734
  %v5738 = vrsqrt.pop %v5735
  %v5739 = vrsqrt.pop %v5736
  %v5740 = vmul.f32 %v5716, %v5737
  %v5741 = vmul.f32 %v5717, %v5738
  %v5742 = vmul.f32 %v5718, %v5739
  %v5744 = vlaneseq
  %v5745 = vshrl.u32 %v5744, 7
  %v5746 = vsub.s32 0, %v5745
  %v5747 = vrot.slane %v5701, %v5746
  %v5749 = vmul.f32 %v5740, %v5747
  %v5750 = vmul.f32 %v5741, %v5747
  %v5751 = vmul.f32 %v5742, %v5747
  %v5753 = vlaneseq
  %v5754 = vshrl.u32 %v5753, 7
  %v5755 = vsub.s32 0, %v5754
  %v5756 = vrot.slane %v5703, %v5755
  %v5758 = vadd.f32 %v5749, %v5756
  %v5759 = vadd.f32 %v5750, %v5756
  %v5760 = vadd.f32 %v5751, %v5756
  %s5761 = scalar_lea.vmem %s5, 120
  %v5762 = vld [vmem:[%s5761] sm:$0xff]
  %v5763 = vld [vmem:[%s5761 + $0x8] sm:$0xff]
  %v5764 = vld [vmem:[%s5761 + $0x10] sm:$0xff]
  %v5765 = vld [vmem:[%s5761 + $0x18] sm:$0xff]
  %v5766 = vld [vmem:[%s5761 + $0x20] sm:$0xff]
  %s5767 = scalar_lea.vmem %s6, 3
  %v5768 = vld [vmem:[%s5767] sm:$0x1]
  %v5770 = vlaneseq
  %v5771 = vshrl.u32 %v5770, 7
  %v5772 = vsub.s32 0, %v5771
  %v5773 = vrot.slane %v5768, %v5772
  %v5776 = vsel %vm250, %v5758, 0
  %v5779 = vsel %vm250, %v5759, 0
  %v5782 = vsel %vm250, %v5760, 0
  %5784 = vmatprep.subr.mxu0 0.0
  %5785 = vmatpush1.msra.mxu0 0.0
  %5786 = vmatprep.subr.mxu0 0.0
  %5787 = vmatpush1.msra.mxu0 0.0
  %5788 = vmatprep.subr.mxu0 0.0
  %5789 = vmatpush1.msra.mxu0 0.0
  %5790 = vmatprep.subr.mxu0 0.0
  %5791 = vmatpush1.msra.mxu0 0.0
  %5792 = vmatprep.subr.mxu0 0.0
  %5793 = vmatpush1.msra.mxu0 0.0
  %5794 = vmatprep.subr.mxu0 0.0
  %5795 = vmatpush1.msra.mxu0 0.0
  %5796 = vmatprep.subr.mxu0 0.0
  %5797 = vmatpush1.msra.mxu0 0.0
  %5798 = vmatprep.subr.mxu0 0.0
  %5799 = vmatpush1.msra.mxu0 0.0
  %5800 = vmatprep.subr.mxu0 0.0
  %5801 = vmatpush1.msra.mxu0 0.0
  %5802 = vmatprep.subr.mxu0 0.0
  %5803 = vmatpush1.msra.mxu0 0.0
  %5804 = vmatprep.subr.mxu0 0.0
  %5805 = vmatpush1.msra.mxu0 0.0
  %5806 = vmatprep.subr.mxu0 0.0
  %5807 = vmatpush1.msra.mxu0 %v5766
  %5808 = vmatprep.subr.mxu0 0.0
  %5809 = vmatpush1.msra.mxu0 %v5765
  %5810 = vmatprep.subr.mxu0 0.0
  %5811 = vmatpush1.msra.mxu0 %v5764
  %5812 = vmatprep.subr.mxu0 0.0
  %5813 = vmatpush1.msra.mxu0 %v5763
  %5814 = vmatprep.subr.mxu0 0.0
  %5815 = vmatpush1.msra.mxu0 %v5762
  %5816 = vmatprep.subr.mxu0 0.0
  %5817 = vmatpush2.msra.mxu0 0.0
  %5818 = vmatprep.subr.mxu0 0.0
  %5819 = vmatpush2.msra.mxu0 0.0
  %5820 = vmatprep.subr.mxu0 0.0
  %5821 = vmatpush2.msra.mxu0 0.0
  %5822 = vmatprep.subr.mxu0 0.0
  %5823 = vmatpush2.msra.mxu0 0.0
  %5824 = vmatprep.subr.mxu0 0.0
  %5825 = vmatpush2.msra.mxu0 0.0
  %5826 = vmatprep.subr.mxu0 0.0
  %5827 = vmatpush2.msra.mxu0 0.0
  %5828 = vmatprep.subr.mxu0 0.0
  %5829 = vmatpush2.msra.mxu0 0.0
  %5830 = vmatprep.subr.mxu0 0.0
  %5831 = vmatpush2.msra.mxu0 0.0
  %5832 = vmatprep.subr.mxu0 0.0
  %5833 = vmatpush2.msra.mxu0 0.0
  %5834 = vmatprep.subr.mxu0 0.0
  %5835 = vmatpush2.msra.mxu0 0.0
  %5836 = vmatprep.subr.mxu0 0.0
  %5837 = vmatpush2.msra.mxu0 0.0
  %5838 = vmatprep.subr.mxu0 0.0
  %5839 = vmatpush2.msra.mxu0 0.0
  %5840 = vmatprep.subr.mxu0 0.0
  %5841 = vmatpush2.msra.mxu0 0.0
  %5842 = vmatprep.subr.mxu0 0.0
  %5843 = vmatpush2.msra.mxu0 0.0
  %5844 = vmatprep.subr.mxu0 0.0
  %5845 = vmatpush2.msra.mxu0 0.0
  %5846 = vmatprep.subr.mxu0 0.0
  %5847 = vmatpush2.msra.mxu0 0.0
  %5848 = vmatprep.mubr.f32.mxu0 0.0
  %5849 = vmatmul.mubr.f32.gmra.mxu0 %v5776
  %v5850 = vpop.f32.mrf.mxu0
  %v5851 = vadd.f32 %v5773, %v5850
  %v5852 = vpop.f32.mrf.mxu0
  %5853 = vmatprep.mubr.f32.mxu0 0.0
  %5854 = vmatmul.mubr.f32.gmra.mxu0 %v5779
  %v5855 = vpop.f32.mrf.mxu0
  %v5856 = vadd.f32 %v5773, %v5855
  %v5857 = vpop.f32.mrf.mxu0
  %5858 = vmatprep.mubr.f32.mxu0 0.0
  %5859 = vmatmul.mubr.f32.gmra.mxu0 %v5782
  %v5860 = vpop.f32.mrf.mxu0
  %v5861 = vadd.f32 %v5773, %v5860
  %v5862 = vpop.f32.mrf.mxu0
  %5863 = vdwg.mxu0
  %5867 = vrot.lane.b32.xlu0 %v5851, 88
  %v5868 = vpop.permute.xlu0 %5867
  %5869 = vrot.lane.b32.xlu0 %v5856, 88
  %v5870 = vpop.permute.xlu0 %5869
  %5871 = vrot.lane.b32.xlu0 %v5861, 88
  %v5872 = vpop.permute.xlu0 %5871
  %v5873 = vsel %vm420, %v5851, 0
  %v5875 = vsel %vm420, %v5856, 0
  %v5877 = vsel %vm420, %v5861, 0
  %v5879 = vsel %vm420, %v5868, 0
  %v5881 = vsel %vm420, %v5870, 0
  %v5883 = vsel %vm420, %v5872, 0
  %5885 = vmatprep.subr.mxu0 0.0
  %5886 = vmatpush1.xpose.msra.mxu0 0.0
  %5887 = vmatprep.subr.mxu0 0.0
  %5888 = vmatpush1.xpose.msra.mxu0 0.0
  %5889 = vmatprep.subr.mxu0 0.0
  %5890 = vmatpush1.xpose.msra.mxu0 0.0
  %5891 = vmatprep.subr.mxu0 0.0
  %5892 = vmatpush1.xpose.msra.mxu0 0.0
  %5893 = vmatprep.subr.mxu0 0.0
  %5894 = vmatpush1.xpose.msra.mxu0 0.0
  %5895 = vmatprep.subr.mxu0 0.0
  %5896 = vmatpush1.xpose.msra.mxu0 0.0
  %5897 = vmatprep.subr.mxu0 0.0
  %5898 = vmatpush1.xpose.msra.mxu0 0.0
  %5899 = vmatprep.subr.mxu0 0.0
  %5900 = vmatpush1.xpose.msra.mxu0 0.0
  %5901 = vmatprep.subr.mxu0 0.0
  %5902 = vmatpush1.xpose.msra.mxu0 0.0
  %5903 = vmatprep.subr.mxu0 0.0
  %5904 = vmatpush1.xpose.msra.mxu0 0.0
  %5905 = vmatprep.subr.mxu0 0.0
  %5906 = vmatpush1.xpose.msra.mxu0 0.0
  %5907 = vmatprep.subr.mxu0 0.0
  %5908 = vmatpush1.xpose.msra.mxu0 0.0
  %5909 = vmatprep.subr.mxu0 0.0
  %5910 = vmatpush1.xpose.msra.mxu0 0.0
  %5911 = vmatprep.subr.mxu0 0.0
  %5912 = vmatpush1.xpose.msra.mxu0 %v5883
  %5913 = vmatprep.subr.mxu0 0.0
  %5914 = vmatpush1.xpose.msra.mxu0 %v5881
  %5915 = vmatprep.subr.mxu0 0.0
  %5916 = vmatpush1.xpose.msra.mxu0 %v5879
  %5917 = vmatprep.subr.mxu0 0.0
  %5918 = vmatpush2.xpose.msra.mxu0 0.0
  %5919 = vmatprep.subr.mxu0 0.0
  %5920 = vmatpush2.xpose.msra.mxu0 0.0
  %5921 = vmatprep.subr.mxu0 0.0
  %5922 = vmatpush2.xpose.msra.mxu0 0.0
  %5923 = vmatprep.subr.mxu0 0.0
  %5924 = vmatpush2.xpose.msra.mxu0 0.0
  %5925 = vmatprep.subr.mxu0 0.0
  %5926 = vmatpush2.xpose.msra.mxu0 0.0
  %5927 = vmatprep.subr.mxu0 0.0
  %5928 = vmatpush2.xpose.msra.mxu0 0.0
  %5929 = vmatprep.subr.mxu0 0.0
  %5930 = vmatpush2.xpose.msra.mxu0 0.0
  %5931 = vmatprep.subr.mxu0 0.0
  %5932 = vmatpush2.xpose.msra.mxu0 0.0
  %5933 = vmatprep.subr.mxu0 0.0
  %5934 = vmatpush2.xpose.msra.mxu0 0.0
  %5935 = vmatprep.subr.mxu0 0.0
  %5936 = vmatpush2.xpose.msra.mxu0 0.0
  %5937 = vmatprep.subr.mxu0 0.0
  %5938 = vmatpush2.xpose.msra.mxu0 0.0
  %5939 = vmatprep.subr.mxu0 0.0
  %5940 = vmatpush2.xpose.msra.mxu0 0.0
  %5941 = vmatprep.subr.mxu0 0.0
  %5942 = vmatpush2.xpose.msra.mxu0 0.0
  %5943 = vmatprep.subr.mxu0 0.0
  %5944 = vmatpush2.xpose.msra.mxu0 0.0
  %5945 = vmatprep.subr.mxu0 0.0
  %5946 = vmatpush2.xpose.msra.mxu0 0.0
  %5947 = vmatprep.subr.mxu0 0.0
  %5948 = vmatpush2.xpose.msra.mxu0 0.0
  %5949 = vmatprep.mubr.f32.mxu0 0.0
  %5950 = vmatmul.mubr.f32.gmra.mxu0 %v5873
  %v5951 = vpop.f32.mrf.mxu0
  %v5952 = vadd.f32 0.0, %v5951
  %v5953 = vpop.f32.mrf.mxu0
  %5954 = vmatprep.mubr.f32.mxu0 0.0
  %5955 = vmatmul.mubr.f32.gmra.mxu0 %v5875
  %v5956 = vpop.f32.mrf.mxu0
  %v5957 = vadd.f32 0.0, %v5956
  %v5958 = vpop.f32.mrf.mxu0
  %5959 = vmatprep.mubr.f32.mxu0 0.0
  %5960 = vmatmul.mubr.f32.gmra.mxu0 %v5877
  %v5961 = vpop.f32.mrf.mxu0
  %v5962 = vadd.f32 0.0, %v5961
  %v5963 = vpop.f32.mrf.mxu0
  %5964 = vdwg.mxu0
  %v5965 = vmul.f32 %v5952, 0.35355338
  %v5966 = vmul.f32 %v5957, 0.35355338
  %v5967 = vmul.f32 %v5962, 0.35355338
  %v5968 = vadd.f32 %v5965, %v226
  %v5969 = vadd.f32 %v5966, %v247
  %v5970 = vadd.f32 %v5967, %v244
  %v5971 = vsel %vm519, %v5968, -inf
  %5972 = vmax.xlane.f32.xlu0 %v5971
  %v5973 = vpop.xlane.xlu0 %5972
  %v5974 = vsel %vm519, %v5969, -inf
  %5975 = vmax.xlane.f32.xlu0 %v5974
  %v5976 = vpop.xlane.xlu0 %5975
  %v5977 = vsel %vm526, %v5970, -inf
  %5978 = vmax.xlane.f32.xlu0 %v5977
  %v5979 = vpop.xlane.xlu0 %5978
  %v5980 = vsub.f32 %v5968, %v5973
  %v5981 = vsub.f32 %v5969, %v5976
  %v5982 = vsub.f32 %v5970, %v5979
  %v5983 = vmul.f32 %v5980, 1.442695
  %v5984 = vpow.pop %v5983
  %v5985 = vmul.f32 %v5981, 1.442695
  %v5986 = vpow.pop %v5985
  %v5987 = vmul.f32 %v5982, 1.442695
  %v5988 = vpow.pop %v5987
  %v5989 = vsel %vm519, %v5984, 0.0
  %5990 = vadd.xlane.f32.xlu0 %v5989
  %v5991 = vpop.xlane.xlu0 %5990
  %v5992 = vsel %vm519, %v5986, 0.0
  %5993 = vadd.xlane.f32.xlu0 %v5992
  %v5994 = vpop.xlane.xlu0 %5993
  %v5995 = vsel %vm526, %v5988, 0.0
  %5996 = vadd.xlane.f32.xlu0 %v5995
  %v5997 = vpop.xlane.xlu0 %5996
  %v5998 = vrcp.pop %v5991
  %v5999 = vrcp.pop %v5994
  %v6000 = vrcp.pop %v5997
  %v6001 = vmul.f32 %v5984, %v5998
  %v6002 = vmul.f32 %v5986, %v5999
  %v6003 = vmul.f32 %v5988, %v6000
  %6004 = vrot.lane.b32.xlu0 %v5851, 48
  %v6005 = vpop.permute.xlu0 %6004
  %6006 = vrot.lane.b32.xlu0 %v5856, 48
  %v6007 = vpop.permute.xlu0 %6006
  %6008 = vrot.lane.b32.xlu0 %v5861, 48
  %v6009 = vpop.permute.xlu0 %6008
  %v6013 = vsel %vm519, %v6001, 0
  %v6016 = vsel %vm519, %v6002, 0
  %v6019 = vsel %vm519, %v6003, 0
  %v6021 = vsel %vm571, %v6009, 0
  %6023 = vmatprep.subr.mxu0 0.0
  %6024 = vmatpush1.msra.mxu0 0.0
  %6025 = vmatprep.subr.mxu0 0.0
  %6026 = vmatpush1.msra.mxu0 0.0
  %6027 = vmatprep.subr.mxu0 0.0
  %6028 = vmatpush1.msra.mxu0 0.0
  %6029 = vmatprep.subr.mxu0 0.0
  %6030 = vmatpush1.msra.mxu0 0.0
  %6031 = vmatprep.subr.mxu0 0.0
  %6032 = vmatpush1.msra.mxu0 0.0
  %6033 = vmatprep.subr.mxu0 0.0
  %6034 = vmatpush1.msra.mxu0 0.0
  %6035 = vmatprep.subr.mxu0 0.0
  %6036 = vmatpush1.msra.mxu0 0.0
  %6037 = vmatprep.subr.mxu0 0.0
  %6038 = vmatpush1.msra.mxu0 0.0
  %6039 = vmatprep.subr.mxu0 0.0
  %6040 = vmatpush1.msra.mxu0 0.0
  %6041 = vmatprep.subr.mxu0 0.0
  %6042 = vmatpush1.msra.mxu0 0.0
  %6043 = vmatprep.subr.mxu0 0.0
  %6044 = vmatpush1.msra.mxu0 0.0
  %6045 = vmatprep.subr.mxu0 0.0
  %6046 = vmatpush1.msra.mxu0 0.0
  %6047 = vmatprep.subr.mxu0 0.0
  %6048 = vmatpush1.msra.mxu0 0.0
  %6049 = vmatprep.subr.mxu0 0.0
  %6050 = vmatpush1.msra.mxu0 %v6021
  %6051 = vmatprep.subr.mxu0 0.0
  %6052 = vmatpush1.msra.mxu0 %v6007
  %6053 = vmatprep.subr.mxu0 0.0
  %6054 = vmatpush1.msra.mxu0 %v6005
  %6055 = vmatprep.subr.mxu0 0.0
  %6056 = vmatpush2.msra.mxu0 0.0
  %6057 = vmatprep.subr.mxu0 0.0
  %6058 = vmatpush2.msra.mxu0 0.0
  %6059 = vmatprep.subr.mxu0 0.0
  %6060 = vmatpush2.msra.mxu0 0.0
  %6061 = vmatprep.subr.mxu0 0.0
  %6062 = vmatpush2.msra.mxu0 0.0
  %6063 = vmatprep.subr.mxu0 0.0
  %6064 = vmatpush2.msra.mxu0 0.0
  %6065 = vmatprep.subr.mxu0 0.0
  %6066 = vmatpush2.msra.mxu0 0.0
  %6067 = vmatprep.subr.mxu0 0.0
  %6068 = vmatpush2.msra.mxu0 0.0
  %6069 = vmatprep.subr.mxu0 0.0
  %6070 = vmatpush2.msra.mxu0 0.0
  %6071 = vmatprep.subr.mxu0 0.0
  %6072 = vmatpush2.msra.mxu0 0.0
  %6073 = vmatprep.subr.mxu0 0.0
  %6074 = vmatpush2.msra.mxu0 0.0
  %6075 = vmatprep.subr.mxu0 0.0
  %6076 = vmatpush2.msra.mxu0 0.0
  %6077 = vmatprep.subr.mxu0 0.0
  %6078 = vmatpush2.msra.mxu0 0.0
  %6079 = vmatprep.subr.mxu0 0.0
  %6080 = vmatpush2.msra.mxu0 0.0
  %6081 = vmatprep.subr.mxu0 0.0
  %6082 = vmatpush2.msra.mxu0 0.0
  %6083 = vmatprep.subr.mxu0 0.0
  %6084 = vmatpush2.msra.mxu0 0.0
  %6085 = vmatprep.subr.mxu0 0.0
  %6086 = vmatpush2.msra.mxu0 0.0
  %6087 = vmatprep.mubr.f32.mxu0 0.0
  %6088 = vmatmul.mubr.f32.gmra.mxu0 %v6013
  %v6089 = vpop.f32.mrf.mxu0
  %v6090 = vadd.f32 0.0, %v6089
  %v6091 = vpop.f32.mrf.mxu0
  %6092 = vmatprep.mubr.f32.mxu0 0.0
  %6093 = vmatmul.mubr.f32.gmra.mxu0 %v6016
  %v6094 = vpop.f32.mrf.mxu0
  %v6095 = vadd.f32 0.0, %v6094
  %v6096 = vpop.f32.mrf.mxu0
  %6097 = vmatprep.mubr.f32.mxu0 0.0
  %6098 = vmatmul.mubr.f32.gmra.mxu0 %v6019
  %v6099 = vpop.f32.mrf.mxu0
  %v6100 = vadd.f32 0.0, %v6099
  %v6101 = vpop.f32.mrf.mxu0
  %6102 = vdwg.mxu0
  %6103 = vrot.lane.b32.xlu0 %v5851, 120
  %v6104 = vpop.permute.xlu0 %6103
  %6105 = vrot.lane.b32.xlu0 %v5856, 120
  %v6106 = vpop.permute.xlu0 %6105
  %6107 = vrot.lane.b32.xlu0 %v5861, 120
  %v6108 = vpop.permute.xlu0 %6107
  %6109 = vrot.lane.b32.xlu0 %v5851, 80
  %v6110 = vpop.permute.xlu0 %6109
  %6111 = vrot.lane.b32.xlu0 %v5856, 80
  %v6112 = vpop.permute.xlu0 %6111
  %6113 = vrot.lane.b32.xlu0 %v5861, 80
  %v6114 = vpop.permute.xlu0 %6113
  %v6115 = vsel %vm420, %v6104, 0
  %v6117 = vsel %vm420, %v6106, 0
  %v6119 = vsel %vm420, %v6108, 0
  %v6121 = vsel %vm420, %v6110, 0
  %v6123 = vsel %vm420, %v6112, 0
  %v6125 = vsel %vm420, %v6114, 0
  %6127 = vmatprep.subr.mxu0 0.0
  %6128 = vmatpush1.xpose.msra.mxu0 0.0
  %6129 = vmatprep.subr.mxu0 0.0
  %6130 = vmatpush1.xpose.msra.mxu0 0.0
  %6131 = vmatprep.subr.mxu0 0.0
  %6132 = vmatpush1.xpose.msra.mxu0 0.0
  %6133 = vmatprep.subr.mxu0 0.0
  %6134 = vmatpush1.xpose.msra.mxu0 0.0
  %6135 = vmatprep.subr.mxu0 0.0
  %6136 = vmatpush1.xpose.msra.mxu0 0.0
  %6137 = vmatprep.subr.mxu0 0.0
  %6138 = vmatpush1.xpose.msra.mxu0 0.0
  %6139 = vmatprep.subr.mxu0 0.0
  %6140 = vmatpush1.xpose.msra.mxu0 0.0
  %6141 = vmatprep.subr.mxu0 0.0
  %6142 = vmatpush1.xpose.msra.mxu0 0.0
  %6143 = vmatprep.subr.mxu0 0.0
  %6144 = vmatpush1.xpose.msra.mxu0 0.0
  %6145 = vmatprep.subr.mxu0 0.0
  %6146 = vmatpush1.xpose.msra.mxu0 0.0
  %6147 = vmatprep.subr.mxu0 0.0
  %6148 = vmatpush1.xpose.msra.mxu0 0.0
  %6149 = vmatprep.subr.mxu0 0.0
  %6150 = vmatpush1.xpose.msra.mxu0 0.0
  %6151 = vmatprep.subr.mxu0 0.0
  %6152 = vmatpush1.xpose.msra.mxu0 0.0
  %6153 = vmatprep.subr.mxu0 0.0
  %6154 = vmatpush1.xpose.msra.mxu0 %v6125
  %6155 = vmatprep.subr.mxu0 0.0
  %6156 = vmatpush1.xpose.msra.mxu0 %v6123
  %6157 = vmatprep.subr.mxu0 0.0
  %6158 = vmatpush1.xpose.msra.mxu0 %v6121
  %6159 = vmatprep.subr.mxu0 0.0
  %6160 = vmatpush2.xpose.msra.mxu0 0.0
  %6161 = vmatprep.subr.mxu0 0.0
  %6162 = vmatpush2.xpose.msra.mxu0 0.0
  %6163 = vmatprep.subr.mxu0 0.0
  %6164 = vmatpush2.xpose.msra.mxu0 0.0
  %6165 = vmatprep.subr.mxu0 0.0
  %6166 = vmatpush2.xpose.msra.mxu0 0.0
  %6167 = vmatprep.subr.mxu0 0.0
  %6168 = vmatpush2.xpose.msra.mxu0 0.0
  %6169 = vmatprep.subr.mxu0 0.0
  %6170 = vmatpush2.xpose.msra.mxu0 0.0
  %6171 = vmatprep.subr.mxu0 0.0
  %6172 = vmatpush2.xpose.msra.mxu0 0.0
  %6173 = vmatprep.subr.mxu0 0.0
  %6174 = vmatpush2.xpose.msra.mxu0 0.0
  %6175 = vmatprep.subr.mxu0 0.0
  %6176 = vmatpush2.xpose.msra.mxu0 0.0
  %6177 = vmatprep.subr.mxu0 0.0
  %6178 = vmatpush2.xpose.msra.mxu0 0.0
  %6179 = vmatprep.subr.mxu0 0.0
  %6180 = vmatpush2.xpose.msra.mxu0 0.0
  %6181 = vmatprep.subr.mxu0 0.0
  %6182 = vmatpush2.xpose.msra.mxu0 0.0
  %6183 = vmatprep.subr.mxu0 0.0
  %6184 = vmatpush2.xpose.msra.mxu0 0.0
  %6185 = vmatprep.subr.mxu0 0.0
  %6186 = vmatpush2.xpose.msra.mxu0 0.0
  %6187 = vmatprep.subr.mxu0 0.0
  %6188 = vmatpush2.xpose.msra.mxu0 0.0
  %6189 = vmatprep.subr.mxu0 0.0
  %6190 = vmatpush2.xpose.msra.mxu0 0.0
  %6191 = vmatprep.mubr.f32.mxu0 0.0
  %6192 = vmatmul.mubr.f32.gmra.mxu0 %v6115
  %v6193 = vpop.f32.mrf.mxu0
  %v6194 = vadd.f32 0.0, %v6193
  %v6195 = vpop.f32.mrf.mxu0
  %6196 = vmatprep.mubr.f32.mxu0 0.0
  %6197 = vmatmul.mubr.f32.gmra.mxu0 %v6117
  %v6198 = vpop.f32.mrf.mxu0
  %v6199 = vadd.f32 0.0, %v6198
  %v6200 = vpop.f32.mrf.mxu0
  %6201 = vmatprep.mubr.f32.mxu0 0.0
  %6202 = vmatmul.mubr.f32.gmra.mxu0 %v6119
  %v6203 = vpop.f32.mrf.mxu0
  %v6204 = vadd.f32 0.0, %v6203
  %v6205 = vpop.f32.mrf.mxu0
  %6206 = vdwg.mxu0
  %v6207 = vmul.f32 %v6194, 0.35355338
  %v6208 = vmul.f32 %v6199, 0.35355338
  %v6209 = vmul.f32 %v6204, 0.35355338
  %v6210 = vadd.f32 %v6207, %v226
  %v6211 = vadd.f32 %v6208, %v247
  %v6212 = vadd.f32 %v6209, %v244
  %v6213 = vsel %vm519, %v6210, -inf
  %6214 = vmax.xlane.f32.xlu0 %v6213
  %v6215 = vpop.xlane.xlu0 %6214
  %v6216 = vsel %vm519, %v6211, -inf
  %6217 = vmax.xlane.f32.xlu0 %v6216
  %v6218 = vpop.xlane.xlu0 %6217
  %v6219 = vsel %vm526, %v6212, -inf
  %6220 = vmax.xlane.f32.xlu0 %v6219
  %v6221 = vpop.xlane.xlu0 %6220
  %v6222 = vsub.f32 %v6210, %v6215
  %v6223 = vsub.f32 %v6211, %v6218
  %v6224 = vsub.f32 %v6212, %v6221
  %v6225 = vmul.f32 %v6222, 1.442695
  %v6226 = vpow.pop %v6225
  %v6227 = vmul.f32 %v6223, 1.442695
  %v6228 = vpow.pop %v6227
  %v6229 = vmul.f32 %v6224, 1.442695
  %v6230 = vpow.pop %v6229
  %v6231 = vsel %vm519, %v6226, 0.0
  %6232 = vadd.xlane.f32.xlu0 %v6231
  %v6233 = vpop.xlane.xlu0 %6232
  %v6234 = vsel %vm519, %v6228, 0.0
  %6235 = vadd.xlane.f32.xlu0 %v6234
  %v6236 = vpop.xlane.xlu0 %6235
  %v6237 = vsel %vm526, %v6230, 0.0
  %6238 = vadd.xlane.f32.xlu0 %v6237
  %v6239 = vpop.xlane.xlu0 %6238
  %v6240 = vrcp.pop %v6233
  %v6241 = vrcp.pop %v6236
  %v6242 = vrcp.pop %v6239
  %v6243 = vmul.f32 %v6226, %v6240
  %v6244 = vmul.f32 %v6228, %v6241
  %v6245 = vmul.f32 %v6230, %v6242
  %6246 = vrot.lane.b32.xlu0 %v5851, 40
  %v6247 = vpop.permute.xlu0 %6246
  %6248 = vrot.lane.b32.xlu0 %v5856, 40
  %v6249 = vpop.permute.xlu0 %6248
  %6250 = vrot.lane.b32.xlu0 %v5861, 40
  %v6251 = vpop.permute.xlu0 %6250
  %v6255 = vsel %vm519, %v6243, 0
  %v6258 = vsel %vm519, %v6244, 0
  %v6261 = vsel %vm519, %v6245, 0
  %v6263 = vsel %vm571, %v6251, 0
  %6265 = vmatprep.subr.mxu0 0.0
  %6266 = vmatpush1.msra.mxu0 0.0
  %6267 = vmatprep.subr.mxu0 0.0
  %6268 = vmatpush1.msra.mxu0 0.0
  %6269 = vmatprep.subr.mxu0 0.0
  %6270 = vmatpush1.msra.mxu0 0.0
  %6271 = vmatprep.subr.mxu0 0.0
  %6272 = vmatpush1.msra.mxu0 0.0
  %6273 = vmatprep.subr.mxu0 0.0
  %6274 = vmatpush1.msra.mxu0 0.0
  %6275 = vmatprep.subr.mxu0 0.0
  %6276 = vmatpush1.msra.mxu0 0.0
  %6277 = vmatprep.subr.mxu0 0.0
  %6278 = vmatpush1.msra.mxu0 0.0
  %6279 = vmatprep.subr.mxu0 0.0
  %6280 = vmatpush1.msra.mxu0 0.0
  %6281 = vmatprep.subr.mxu0 0.0
  %6282 = vmatpush1.msra.mxu0 0.0
  %6283 = vmatprep.subr.mxu0 0.0
  %6284 = vmatpush1.msra.mxu0 0.0
  %6285 = vmatprep.subr.mxu0 0.0
  %6286 = vmatpush1.msra.mxu0 0.0
  %6287 = vmatprep.subr.mxu0 0.0
  %6288 = vmatpush1.msra.mxu0 0.0
  %6289 = vmatprep.subr.mxu0 0.0
  %6290 = vmatpush1.msra.mxu0 0.0
  %6291 = vmatprep.subr.mxu0 0.0
  %6292 = vmatpush1.msra.mxu0 %v6263
  %6293 = vmatprep.subr.mxu0 0.0
  %6294 = vmatpush1.msra.mxu0 %v6249
  %6295 = vmatprep.subr.mxu0 0.0
  %6296 = vmatpush1.msra.mxu0 %v6247
  %6297 = vmatprep.subr.mxu0 0.0
  %6298 = vmatpush2.msra.mxu0 0.0
  %6299 = vmatprep.subr.mxu0 0.0
  %6300 = vmatpush2.msra.mxu0 0.0
  %6301 = vmatprep.subr.mxu0 0.0
  %6302 = vmatpush2.msra.mxu0 0.0
  %6303 = vmatprep.subr.mxu0 0.0
  %6304 = vmatpush2.msra.mxu0 0.0
  %6305 = vmatprep.subr.mxu0 0.0
  %6306 = vmatpush2.msra.mxu0 0.0
  %6307 = vmatprep.subr.mxu0 0.0
  %6308 = vmatpush2.msra.mxu0 0.0
  %6309 = vmatprep.subr.mxu0 0.0
  %6310 = vmatpush2.msra.mxu0 0.0
  %6311 = vmatprep.subr.mxu0 0.0
  %6312 = vmatpush2.msra.mxu0 0.0
  %6313 = vmatprep.subr.mxu0 0.0
  %6314 = vmatpush2.msra.mxu0 0.0
  %6315 = vmatprep.subr.mxu0 0.0
  %6316 = vmatpush2.msra.mxu0 0.0
  %6317 = vmatprep.subr.mxu0 0.0
  %6318 = vmatpush2.msra.mxu0 0.0
  %6319 = vmatprep.subr.mxu0 0.0
  %6320 = vmatpush2.msra.mxu0 0.0
  %6321 = vmatprep.subr.mxu0 0.0
  %6322 = vmatpush2.msra.mxu0 0.0
  %6323 = vmatprep.subr.mxu0 0.0
  %6324 = vmatpush2.msra.mxu0 0.0
  %6325 = vmatprep.subr.mxu0 0.0
  %6326 = vmatpush2.msra.mxu0 0.0
  %6327 = vmatprep.subr.mxu0 0.0
  %6328 = vmatpush2.msra.mxu0 0.0
  %6329 = vmatprep.mubr.f32.mxu0 0.0
  %6330 = vmatmul.mubr.f32.gmra.mxu0 %v6255
  %v6331 = vpop.f32.mrf.mxu0
  %v6332 = vadd.f32 0.0, %v6331
  %v6333 = vpop.f32.mrf.mxu0
  %6334 = vmatprep.mubr.f32.mxu0 0.0
  %6335 = vmatmul.mubr.f32.gmra.mxu0 %v6258
  %v6336 = vpop.f32.mrf.mxu0
  %v6337 = vadd.f32 0.0, %v6336
  %v6338 = vpop.f32.mrf.mxu0
  %6339 = vmatprep.mubr.f32.mxu0 0.0
  %6340 = vmatmul.mubr.f32.gmra.mxu0 %v6261
  %v6341 = vpop.f32.mrf.mxu0
  %v6342 = vadd.f32 0.0, %v6341
  %v6343 = vpop.f32.mrf.mxu0
  %6344 = vdwg.mxu0
  %6345 = vrot.lane.b32.xlu0 %v5851, 112
  %v6346 = vpop.permute.xlu0 %6345
  %6347 = vrot.lane.b32.xlu0 %v5856, 112
  %v6348 = vpop.permute.xlu0 %6347
  %6349 = vrot.lane.b32.xlu0 %v5861, 112
  %v6350 = vpop.permute.xlu0 %6349
  %6351 = vrot.lane.b32.xlu0 %v5851, 72
  %v6352 = vpop.permute.xlu0 %6351
  %6353 = vrot.lane.b32.xlu0 %v5856, 72
  %v6354 = vpop.permute.xlu0 %6353
  %6355 = vrot.lane.b32.xlu0 %v5861, 72
  %v6356 = vpop.permute.xlu0 %6355
  %v6357 = vsel %vm420, %v6346, 0
  %v6359 = vsel %vm420, %v6348, 0
  %v6361 = vsel %vm420, %v6350, 0
  %v6363 = vsel %vm420, %v6352, 0
  %v6365 = vsel %vm420, %v6354, 0
  %v6367 = vsel %vm420, %v6356, 0
  %6369 = vmatprep.subr.mxu0 0.0
  %6370 = vmatpush1.xpose.msra.mxu0 0.0
  %6371 = vmatprep.subr.mxu0 0.0
  %6372 = vmatpush1.xpose.msra.mxu0 0.0
  %6373 = vmatprep.subr.mxu0 0.0
  %6374 = vmatpush1.xpose.msra.mxu0 0.0
  %6375 = vmatprep.subr.mxu0 0.0
  %6376 = vmatpush1.xpose.msra.mxu0 0.0
  %6377 = vmatprep.subr.mxu0 0.0
  %6378 = vmatpush1.xpose.msra.mxu0 0.0
  %6379 = vmatprep.subr.mxu0 0.0
  %6380 = vmatpush1.xpose.msra.mxu0 0.0
  %6381 = vmatprep.subr.mxu0 0.0
  %6382 = vmatpush1.xpose.msra.mxu0 0.0
  %6383 = vmatprep.subr.mxu0 0.0
  %6384 = vmatpush1.xpose.msra.mxu0 0.0
  %6385 = vmatprep.subr.mxu0 0.0
  %6386 = vmatpush1.xpose.msra.mxu0 0.0
  %6387 = vmatprep.subr.mxu0 0.0
  %6388 = vmatpush1.xpose.msra.mxu0 0.0
  %6389 = vmatprep.subr.mxu0 0.0
  %6390 = vmatpush1.xpose.msra.mxu0 0.0
  %6391 = vmatprep.subr.mxu0 0.0
  %6392 = vmatpush1.xpose.msra.mxu0 0.0
  %6393 = vmatprep.subr.mxu0 0.0
  %6394 = vmatpush1.xpose.msra.mxu0 0.0
  %6395 = vmatprep.subr.mxu0 0.0
  %6396 = vmatpush1.xpose.msra.mxu0 %v6367
  %6397 = vmatprep.subr.mxu0 0.0
  %6398 = vmatpush1.xpose.msra.mxu0 %v6365
  %6399 = vmatprep.subr.mxu0 0.0
  %6400 = vmatpush1.xpose.msra.mxu0 %v6363
  %6401 = vmatprep.subr.mxu0 0.0
  %6402 = vmatpush2.xpose.msra.mxu0 0.0
  %6403 = vmatprep.subr.mxu0 0.0
  %6404 = vmatpush2.xpose.msra.mxu0 0.0
  %6405 = vmatprep.subr.mxu0 0.0
  %6406 = vmatpush2.xpose.msra.mxu0 0.0
  %6407 = vmatprep.subr.mxu0 0.0
  %6408 = vmatpush2.xpose.msra.mxu0 0.0
  %6409 = vmatprep.subr.mxu0 0.0
  %6410 = vmatpush2.xpose.msra.mxu0 0.0
  %6411 = vmatprep.subr.mxu0 0.0
  %6412 = vmatpush2.xpose.msra.mxu0 0.0
  %6413 = vmatprep.subr.mxu0 0.0
  %6414 = vmatpush2.xpose.msra.mxu0 0.0
  %6415 = vmatprep.subr.mxu0 0.0
  %6416 = vmatpush2.xpose.msra.mxu0 0.0
  %6417 = vmatprep.subr.mxu0 0.0
  %6418 = vmatpush2.xpose.msra.mxu0 0.0
  %6419 = vmatprep.subr.mxu0 0.0
  %6420 = vmatpush2.xpose.msra.mxu0 0.0
  %6421 = vmatprep.subr.mxu0 0.0
  %6422 = vmatpush2.xpose.msra.mxu0 0.0
  %6423 = vmatprep.subr.mxu0 0.0
  %6424 = vmatpush2.xpose.msra.mxu0 0.0
  %6425 = vmatprep.subr.mxu0 0.0
  %6426 = vmatpush2.xpose.msra.mxu0 0.0
  %6427 = vmatprep.subr.mxu0 0.0
  %6428 = vmatpush2.xpose.msra.mxu0 0.0
  %6429 = vmatprep.subr.mxu0 0.0
  %6430 = vmatpush2.xpose.msra.mxu0 0.0
  %6431 = vmatprep.subr.mxu0 0.0
  %6432 = vmatpush2.xpose.msra.mxu0 0.0
  %6433 = vmatprep.mubr.f32.mxu0 0.0
  %6434 = vmatmul.mubr.f32.gmra.mxu0 %v6357
  %v6435 = vpop.f32.mrf.mxu0
  %v6436 = vadd.f32 0.0, %v6435
  %v6437 = vpop.f32.mrf.mxu0
  %6438 = vmatprep.mubr.f32.mxu0 0.0
  %6439 = vmatmul.mubr.f32.gmra.mxu0 %v6359
  %v6440 = vpop.f32.mrf.mxu0
  %v6441 = vadd.f32 0.0, %v6440
  %v6442 = vpop.f32.mrf.mxu0
  %6443 = vmatprep.mubr.f32.mxu0 0.0
  %6444 = vmatmul.mubr.f32.gmra.mxu0 %v6361
  %v6445 = vpop.f32.mrf.mxu0
  %v6446 = vadd.f32 0.0, %v6445
  %v6447 = vpop.f32.mrf.mxu0
  %6448 = vdwg.mxu0
  %v6449 = vmul.f32 %v6436, 0.35355338
  %v6450 = vmul.f32 %v6441, 0.35355338
  %v6451 = vmul.f32 %v6446, 0.35355338
  %v6452 = vadd.f32 %v6449, %v226
  %v6453 = vadd.f32 %v6450, %v247
  %v6454 = vadd.f32 %v6451, %v244
  %v6455 = vsel %vm519, %v6452, -inf
  %6456 = vmax.xlane.f32.xlu0 %v6455
  %v6457 = vpop.xlane.xlu0 %6456
  %v6458 = vsel %vm519, %v6453, -inf
  %6459 = vmax.xlane.f32.xlu0 %v6458
  %v6460 = vpop.xlane.xlu0 %6459
  %v6461 = vsel %vm526, %v6454, -inf
  %6462 = vmax.xlane.f32.xlu0 %v6461
  %v6463 = vpop.xlane.xlu0 %6462
  %v6464 = vsub.f32 %v6452, %v6457
  %v6465 = vsub.f32 %v6453, %v6460
  %v6466 = vsub.f32 %v6454, %v6463
  %v6467 = vmul.f32 %v6464, 1.442695
  %v6468 = vpow.pop %v6467
  %v6469 = vmul.f32 %v6465, 1.442695
  %v6470 = vpow.pop %v6469
  %v6471 = vmul.f32 %v6466, 1.442695
  %v6472 = vpow.pop %v6471
  %v6473 = vsel %vm519, %v6468, 0.0
  %6474 = vadd.xlane.f32.xlu0 %v6473
  %v6475 = vpop.xlane.xlu0 %6474
  %v6476 = vsel %vm519, %v6470, 0.0
  %6477 = vadd.xlane.f32.xlu0 %v6476
  %v6478 = vpop.xlane.xlu0 %6477
  %v6479 = vsel %vm526, %v6472, 0.0
  %6480 = vadd.xlane.f32.xlu0 %v6479
  %v6481 = vpop.xlane.xlu0 %6480
  %v6482 = vrcp.pop %v6475
  %v6483 = vrcp.pop %v6478
  %v6484 = vrcp.pop %v6481
  %v6485 = vmul.f32 %v6468, %v6482
  %v6486 = vmul.f32 %v6470, %v6483
  %v6487 = vmul.f32 %v6472, %v6484
  %6488 = vrot.lane.b32.xlu0 %v5851, 32
  %v6489 = vpop.permute.xlu0 %6488
  %6490 = vrot.lane.b32.xlu0 %v5856, 32
  %v6491 = vpop.permute.xlu0 %6490
  %6492 = vrot.lane.b32.xlu0 %v5861, 32
  %v6493 = vpop.permute.xlu0 %6492
  %v6497 = vsel %vm519, %v6485, 0
  %v6500 = vsel %vm519, %v6486, 0
  %v6503 = vsel %vm519, %v6487, 0
  %v6505 = vsel %vm571, %v6493, 0
  %6507 = vmatprep.subr.mxu0 0.0
  %6508 = vmatpush1.msra.mxu0 0.0
  %6509 = vmatprep.subr.mxu0 0.0
  %6510 = vmatpush1.msra.mxu0 0.0
  %6511 = vmatprep.subr.mxu0 0.0
  %6512 = vmatpush1.msra.mxu0 0.0
  %6513 = vmatprep.subr.mxu0 0.0
  %6514 = vmatpush1.msra.mxu0 0.0
  %6515 = vmatprep.subr.mxu0 0.0
  %6516 = vmatpush1.msra.mxu0 0.0
  %6517 = vmatprep.subr.mxu0 0.0
  %6518 = vmatpush1.msra.mxu0 0.0
  %6519 = vmatprep.subr.mxu0 0.0
  %6520 = vmatpush1.msra.mxu0 0.0
  %6521 = vmatprep.subr.mxu0 0.0
  %6522 = vmatpush1.msra.mxu0 0.0
  %6523 = vmatprep.subr.mxu0 0.0
  %6524 = vmatpush1.msra.mxu0 0.0
  %6525 = vmatprep.subr.mxu0 0.0
  %6526 = vmatpush1.msra.mxu0 0.0
  %6527 = vmatprep.subr.mxu0 0.0
  %6528 = vmatpush1.msra.mxu0 0.0
  %6529 = vmatprep.subr.mxu0 0.0
  %6530 = vmatpush1.msra.mxu0 0.0
  %6531 = vmatprep.subr.mxu0 0.0
  %6532 = vmatpush1.msra.mxu0 0.0
  %6533 = vmatprep.subr.mxu0 0.0
  %6534 = vmatpush1.msra.mxu0 %v6505
  %6535 = vmatprep.subr.mxu0 0.0
  %6536 = vmatpush1.msra.mxu0 %v6491
  %6537 = vmatprep.subr.mxu0 0.0
  %6538 = vmatpush1.msra.mxu0 %v6489
  %6539 = vmatprep.subr.mxu0 0.0
  %6540 = vmatpush2.msra.mxu0 0.0
  %6541 = vmatprep.subr.mxu0 0.0
  %6542 = vmatpush2.msra.mxu0 0.0
  %6543 = vmatprep.subr.mxu0 0.0
  %6544 = vmatpush2.msra.mxu0 0.0
  %6545 = vmatprep.subr.mxu0 0.0
  %6546 = vmatpush2.msra.mxu0 0.0
  %6547 = vmatprep.subr.mxu0 0.0
  %6548 = vmatpush2.msra.mxu0 0.0
  %6549 = vmatprep.subr.mxu0 0.0
  %6550 = vmatpush2.msra.mxu0 0.0
  %6551 = vmatprep.subr.mxu0 0.0
  %6552 = vmatpush2.msra.mxu0 0.0
  %6553 = vmatprep.subr.mxu0 0.0
  %6554 = vmatpush2.msra.mxu0 0.0
  %6555 = vmatprep.subr.mxu0 0.0
  %6556 = vmatpush2.msra.mxu0 0.0
  %6557 = vmatprep.subr.mxu0 0.0
  %6558 = vmatpush2.msra.mxu0 0.0
  %6559 = vmatprep.subr.mxu0 0.0
  %6560 = vmatpush2.msra.mxu0 0.0
  %6561 = vmatprep.subr.mxu0 0.0
  %6562 = vmatpush2.msra.mxu0 0.0
  %6563 = vmatprep.subr.mxu0 0.0
  %6564 = vmatpush2.msra.mxu0 0.0
  %6565 = vmatprep.subr.mxu0 0.0
  %6566 = vmatpush2.msra.mxu0 0.0
  %6567 = vmatprep.subr.mxu0 0.0
  %6568 = vmatpush2.msra.mxu0 0.0
  %6569 = vmatprep.subr.mxu0 0.0
  %6570 = vmatpush2.msra.mxu0 0.0
  %6571 = vmatprep.mubr.f32.mxu0 0.0
  %6572 = vmatmul.mubr.f32.gmra.mxu0 %v6497
  %v6573 = vpop.f32.mrf.mxu0
  %v6574 = vadd.f32 0.0, %v6573
  %v6575 = vpop.f32.mrf.mxu0
  %6576 = vmatprep.mubr.f32.mxu0 0.0
  %6577 = vmatmul.mubr.f32.gmra.mxu0 %v6500
  %v6578 = vpop.f32.mrf.mxu0
  %v6579 = vadd.f32 0.0, %v6578
  %v6580 = vpop.f32.mrf.mxu0
  %6581 = vmatprep.mubr.f32.mxu0 0.0
  %6582 = vmatmul.mubr.f32.gmra.mxu0 %v6503
  %v6583 = vpop.f32.mrf.mxu0
  %v6584 = vadd.f32 0.0, %v6583
  %v6585 = vpop.f32.mrf.mxu0
  %6586 = vdwg.mxu0
  %6587 = vrot.lane.b32.xlu0 %v5851, 104
  %v6588 = vpop.permute.xlu0 %6587
  %6589 = vrot.lane.b32.xlu0 %v5856, 104
  %v6590 = vpop.permute.xlu0 %6589
  %6591 = vrot.lane.b32.xlu0 %v5861, 104
  %v6592 = vpop.permute.xlu0 %6591
  %6593 = vrot.lane.b32.xlu0 %v5851, 64
  %v6594 = vpop.permute.xlu0 %6593
  %6595 = vrot.lane.b32.xlu0 %v5856, 64
  %v6596 = vpop.permute.xlu0 %6595
  %6597 = vrot.lane.b32.xlu0 %v5861, 64
  %v6598 = vpop.permute.xlu0 %6597
  %v6599 = vsel %vm420, %v6588, 0
  %v6601 = vsel %vm420, %v6590, 0
  %v6603 = vsel %vm420, %v6592, 0
  %v6605 = vsel %vm420, %v6594, 0
  %v6607 = vsel %vm420, %v6596, 0
  %v6609 = vsel %vm420, %v6598, 0
  %6611 = vmatprep.subr.mxu0 0.0
  %6612 = vmatpush1.xpose.msra.mxu0 0.0
  %6613 = vmatprep.subr.mxu0 0.0
  %6614 = vmatpush1.xpose.msra.mxu0 0.0
  %6615 = vmatprep.subr.mxu0 0.0
  %6616 = vmatpush1.xpose.msra.mxu0 0.0
  %6617 = vmatprep.subr.mxu0 0.0
  %6618 = vmatpush1.xpose.msra.mxu0 0.0
  %6619 = vmatprep.subr.mxu0 0.0
  %6620 = vmatpush1.xpose.msra.mxu0 0.0
  %6621 = vmatprep.subr.mxu0 0.0
  %6622 = vmatpush1.xpose.msra.mxu0 0.0
  %6623 = vmatprep.subr.mxu0 0.0
  %6624 = vmatpush1.xpose.msra.mxu0 0.0
  %6625 = vmatprep.subr.mxu0 0.0
  %6626 = vmatpush1.xpose.msra.mxu0 0.0
  %6627 = vmatprep.subr.mxu0 0.0
  %6628 = vmatpush1.xpose.msra.mxu0 0.0
  %6629 = vmatprep.subr.mxu0 0.0
  %6630 = vmatpush1.xpose.msra.mxu0 0.0
  %6631 = vmatprep.subr.mxu0 0.0
  %6632 = vmatpush1.xpose.msra.mxu0 0.0
  %6633 = vmatprep.subr.mxu0 0.0
  %6634 = vmatpush1.xpose.msra.mxu0 0.0
  %6635 = vmatprep.subr.mxu0 0.0
  %6636 = vmatpush1.xpose.msra.mxu0 0.0
  %6637 = vmatprep.subr.mxu0 0.0
  %6638 = vmatpush1.xpose.msra.mxu0 %v6609
  %6639 = vmatprep.subr.mxu0 0.0
  %6640 = vmatpush1.xpose.msra.mxu0 %v6607
  %6641 = vmatprep.subr.mxu0 0.0
  %6642 = vmatpush1.xpose.msra.mxu0 %v6605
  %6643 = vmatprep.subr.mxu0 0.0
  %6644 = vmatpush2.xpose.msra.mxu0 0.0
  %6645 = vmatprep.subr.mxu0 0.0
  %6646 = vmatpush2.xpose.msra.mxu0 0.0
  %6647 = vmatprep.subr.mxu0 0.0
  %6648 = vmatpush2.xpose.msra.mxu0 0.0
  %6649 = vmatprep.subr.mxu0 0.0
  %6650 = vmatpush2.xpose.msra.mxu0 0.0
  %6651 = vmatprep.subr.mxu0 0.0
  %6652 = vmatpush2.xpose.msra.mxu0 0.0
  %6653 = vmatprep.subr.mxu0 0.0
  %6654 = vmatpush2.xpose.msra.mxu0 0.0
  %6655 = vmatprep.subr.mxu0 0.0
  %6656 = vmatpush2.xpose.msra.mxu0 0.0
  %6657 = vmatprep.subr.mxu0 0.0
  %6658 = vmatpush2.xpose.msra.mxu0 0.0
  %6659 = vmatprep.subr.mxu0 0.0
  %6660 = vmatpush2.xpose.msra.mxu0 0.0
  %6661 = vmatprep.subr.mxu0 0.0
  %6662 = vmatpush2.xpose.msra.mxu0 0.0
  %6663 = vmatprep.subr.mxu0 0.0
  %6664 = vmatpush2.xpose.msra.mxu0 0.0
  %6665 = vmatprep.subr.mxu0 0.0
  %6666 = vmatpush2.xpose.msra.mxu0 0.0
  %6667 = vmatprep.subr.mxu0 0.0
  %6668 = vmatpush2.xpose.msra.mxu0 0.0
  %6669 = vmatprep.subr.mxu0 0.0
  %6670 = vmatpush2.xpose.msra.mxu0 0.0
  %6671 = vmatprep.subr.mxu0 0.0
  %6672 = vmatpush2.xpose.msra.mxu0 0.0
  %6673 = vmatprep.subr.mxu0 0.0
  %6674 = vmatpush2.xpose.msra.mxu0 0.0
  %6675 = vmatprep.mubr.f32.mxu0 0.0
  %6676 = vmatmul.mubr.f32.gmra.mxu0 %v6599
  %v6677 = vpop.f32.mrf.mxu0
  %v6678 = vadd.f32 0.0, %v6677
  %v6679 = vpop.f32.mrf.mxu0
  %6680 = vmatprep.mubr.f32.mxu0 0.0
  %6681 = vmatmul.mubr.f32.gmra.mxu0 %v6601
  %v6682 = vpop.f32.mrf.mxu0
  %v6683 = vadd.f32 0.0, %v6682
  %v6684 = vpop.f32.mrf.mxu0
  %6685 = vmatprep.mubr.f32.mxu0 0.0
  %6686 = vmatmul.mubr.f32.gmra.mxu0 %v6603
  %v6687 = vpop.f32.mrf.mxu0
  %v6688 = vadd.f32 0.0, %v6687
  %v6689 = vpop.f32.mrf.mxu0
  %6690 = vdwg.mxu0
  %v6691 = vmul.f32 %v6678, 0.35355338
  %v6692 = vmul.f32 %v6683, 0.35355338
  %v6693 = vmul.f32 %v6688, 0.35355338
  %v6694 = vadd.f32 %v6691, %v226
  %v6695 = vadd.f32 %v6692, %v247
  %v6696 = vadd.f32 %v6693, %v244
  %v6697 = vsel %vm519, %v6694, -inf
  %6698 = vmax.xlane.f32.xlu0 %v6697
  %v6699 = vpop.xlane.xlu0 %6698
  %v6700 = vsel %vm519, %v6695, -inf
  %6701 = vmax.xlane.f32.xlu0 %v6700
  %v6702 = vpop.xlane.xlu0 %6701
  %v6703 = vsel %vm526, %v6696, -inf
  %6704 = vmax.xlane.f32.xlu0 %v6703
  %v6705 = vpop.xlane.xlu0 %6704
  %v6706 = vsub.f32 %v6694, %v6699
  %v6707 = vsub.f32 %v6695, %v6702
  %v6708 = vsub.f32 %v6696, %v6705
  %v6709 = vmul.f32 %v6706, 1.442695
  %v6710 = vpow.pop %v6709
  %v6711 = vmul.f32 %v6707, 1.442695
  %v6712 = vpow.pop %v6711
  %v6713 = vmul.f32 %v6708, 1.442695
  %v6714 = vpow.pop %v6713
  %v6715 = vsel %vm519, %v6710, 0.0
  %6716 = vadd.xlane.f32.xlu0 %v6715
  %v6717 = vpop.xlane.xlu0 %6716
  %v6718 = vsel %vm519, %v6712, 0.0
  %6719 = vadd.xlane.f32.xlu0 %v6718
  %v6720 = vpop.xlane.xlu0 %6719
  %v6721 = vsel %vm526, %v6714, 0.0
  %6722 = vadd.xlane.f32.xlu0 %v6721
  %v6723 = vpop.xlane.xlu0 %6722
  %v6724 = vrcp.pop %v6717
  %v6725 = vrcp.pop %v6720
  %v6726 = vrcp.pop %v6723
  %v6727 = vmul.f32 %v6710, %v6724
  %v6728 = vmul.f32 %v6712, %v6725
  %v6729 = vmul.f32 %v6714, %v6726
  %6730 = vrot.lane.b32.xlu0 %v5851, 24
  %v6731 = vpop.permute.xlu0 %6730
  %6732 = vrot.lane.b32.xlu0 %v5856, 24
  %v6733 = vpop.permute.xlu0 %6732
  %6734 = vrot.lane.b32.xlu0 %v5861, 24
  %v6735 = vpop.permute.xlu0 %6734
  %v6739 = vsel %vm519, %v6727, 0
  %v6742 = vsel %vm519, %v6728, 0
  %v6745 = vsel %vm519, %v6729, 0
  %v6747 = vsel %vm571, %v6735, 0
  %6749 = vmatprep.subr.mxu0 0.0
  %6750 = vmatpush1.msra.mxu0 0.0
  %6751 = vmatprep.subr.mxu0 0.0
  %6752 = vmatpush1.msra.mxu0 0.0
  %6753 = vmatprep.subr.mxu0 0.0
  %6754 = vmatpush1.msra.mxu0 0.0
  %6755 = vmatprep.subr.mxu0 0.0
  %6756 = vmatpush1.msra.mxu0 0.0
  %6757 = vmatprep.subr.mxu0 0.0
  %6758 = vmatpush1.msra.mxu0 0.0
  %6759 = vmatprep.subr.mxu0 0.0
  %6760 = vmatpush1.msra.mxu0 0.0
  %6761 = vmatprep.subr.mxu0 0.0
  %6762 = vmatpush1.msra.mxu0 0.0
  %6763 = vmatprep.subr.mxu0 0.0
  %6764 = vmatpush1.msra.mxu0 0.0
  %6765 = vmatprep.subr.mxu0 0.0
  %6766 = vmatpush1.msra.mxu0 0.0
  %6767 = vmatprep.subr.mxu0 0.0
  %6768 = vmatpush1.msra.mxu0 0.0
  %6769 = vmatprep.subr.mxu0 0.0
  %6770 = vmatpush1.msra.mxu0 0.0
  %6771 = vmatprep.subr.mxu0 0.0
  %6772 = vmatpush1.msra.mxu0 0.0
  %6773 = vmatprep.subr.mxu0 0.0
  %6774 = vmatpush1.msra.mxu0 0.0
  %6775 = vmatprep.subr.mxu0 0.0
  %6776 = vmatpush1.msra.mxu0 %v6747
  %6777 = vmatprep.subr.mxu0 0.0
  %6778 = vmatpush1.msra.mxu0 %v6733
  %6779 = vmatprep.subr.mxu0 0.0
  %6780 = vmatpush1.msra.mxu0 %v6731
  %6781 = vmatprep.subr.mxu0 0.0
  %6782 = vmatpush2.msra.mxu0 0.0
  %6783 = vmatprep.subr.mxu0 0.0
  %6784 = vmatpush2.msra.mxu0 0.0
  %6785 = vmatprep.subr.mxu0 0.0
  %6786 = vmatpush2.msra.mxu0 0.0
  %6787 = vmatprep.subr.mxu0 0.0
  %6788 = vmatpush2.msra.mxu0 0.0
  %6789 = vmatprep.subr.mxu0 0.0
  %6790 = vmatpush2.msra.mxu0 0.0
  %6791 = vmatprep.subr.mxu0 0.0
  %6792 = vmatpush2.msra.mxu0 0.0
  %6793 = vmatprep.subr.mxu0 0.0
  %6794 = vmatpush2.msra.mxu0 0.0
  %6795 = vmatprep.subr.mxu0 0.0
  %6796 = vmatpush2.msra.mxu0 0.0
  %6797 = vmatprep.subr.mxu0 0.0
  %6798 = vmatpush2.msra.mxu0 0.0
  %6799 = vmatprep.subr.mxu0 0.0
  %6800 = vmatpush2.msra.mxu0 0.0
  %6801 = vmatprep.subr.mxu0 0.0
  %6802 = vmatpush2.msra.mxu0 0.0
  %6803 = vmatprep.subr.mxu0 0.0
  %6804 = vmatpush2.msra.mxu0 0.0
  %6805 = vmatprep.subr.mxu0 0.0
  %6806 = vmatpush2.msra.mxu0 0.0
  %6807 = vmatprep.subr.mxu0 0.0
  %6808 = vmatpush2.msra.mxu0 0.0
  %6809 = vmatprep.subr.mxu0 0.0
  %6810 = vmatpush2.msra.mxu0 0.0
  %6811 = vmatprep.subr.mxu0 0.0
  %6812 = vmatpush2.msra.mxu0 0.0
  %6813 = vmatprep.mubr.f32.mxu0 0.0
  %6814 = vmatmul.mubr.f32.gmra.mxu0 %v6739
  %v6815 = vpop.f32.mrf.mxu0
  %v6816 = vadd.f32 0.0, %v6815
  %v6817 = vpop.f32.mrf.mxu0
  %6818 = vmatprep.mubr.f32.mxu0 0.0
  %6819 = vmatmul.mubr.f32.gmra.mxu0 %v6742
  %v6820 = vpop.f32.mrf.mxu0
  %v6821 = vadd.f32 0.0, %v6820
  %v6822 = vpop.f32.mrf.mxu0
  %6823 = vmatprep.mubr.f32.mxu0 0.0
  %6824 = vmatmul.mubr.f32.gmra.mxu0 %v6745
  %v6825 = vpop.f32.mrf.mxu0
  %v6826 = vadd.f32 0.0, %v6825
  %v6827 = vpop.f32.mrf.mxu0
  %6828 = vdwg.mxu0
  %6829 = vrot.lane.b32.xlu0 %v5851, 96
  %v6830 = vpop.permute.xlu0 %6829
  %6831 = vrot.lane.b32.xlu0 %v5856, 96
  %v6832 = vpop.permute.xlu0 %6831
  %6833 = vrot.lane.b32.xlu0 %v5861, 96
  %v6834 = vpop.permute.xlu0 %6833
  %6835 = vrot.lane.b32.xlu0 %v5851, 56
  %v6836 = vpop.permute.xlu0 %6835
  %6837 = vrot.lane.b32.xlu0 %v5856, 56
  %v6838 = vpop.permute.xlu0 %6837
  %6839 = vrot.lane.b32.xlu0 %v5861, 56
  %v6840 = vpop.permute.xlu0 %6839
  %v6841 = vsel %vm420, %v6830, 0
  %v6843 = vsel %vm420, %v6832, 0
  %v6845 = vsel %vm420, %v6834, 0
  %v6847 = vsel %vm420, %v6836, 0
  %v6849 = vsel %vm420, %v6838, 0
  %v6851 = vsel %vm420, %v6840, 0
  %6853 = vmatprep.subr.mxu0 0.0
  %6854 = vmatpush1.xpose.msra.mxu0 0.0
  %6855 = vmatprep.subr.mxu0 0.0
  %6856 = vmatpush1.xpose.msra.mxu0 0.0
  %6857 = vmatprep.subr.mxu0 0.0
  %6858 = vmatpush1.xpose.msra.mxu0 0.0
  %6859 = vmatprep.subr.mxu0 0.0
  %6860 = vmatpush1.xpose.msra.mxu0 0.0
  %6861 = vmatprep.subr.mxu0 0.0
  %6862 = vmatpush1.xpose.msra.mxu0 0.0
  %6863 = vmatprep.subr.mxu0 0.0
  %6864 = vmatpush1.xpose.msra.mxu0 0.0
  %6865 = vmatprep.subr.mxu0 0.0
  %6866 = vmatpush1.xpose.msra.mxu0 0.0
  %6867 = vmatprep.subr.mxu0 0.0
  %6868 = vmatpush1.xpose.msra.mxu0 0.0
  %6869 = vmatprep.subr.mxu0 0.0
  %6870 = vmatpush1.xpose.msra.mxu0 0.0
  %6871 = vmatprep.subr.mxu0 0.0
  %6872 = vmatpush1.xpose.msra.mxu0 0.0
  %6873 = vmatprep.subr.mxu0 0.0
  %6874 = vmatpush1.xpose.msra.mxu0 0.0
  %6875 = vmatprep.subr.mxu0 0.0
  %6876 = vmatpush1.xpose.msra.mxu0 0.0
  %6877 = vmatprep.subr.mxu0 0.0
  %6878 = vmatpush1.xpose.msra.mxu0 0.0
  %6879 = vmatprep.subr.mxu0 0.0
  %6880 = vmatpush1.xpose.msra.mxu0 %v6851
  %6881 = vmatprep.subr.mxu0 0.0
  %6882 = vmatpush1.xpose.msra.mxu0 %v6849
  %6883 = vmatprep.subr.mxu0 0.0
  %6884 = vmatpush1.xpose.msra.mxu0 %v6847
  %6885 = vmatprep.subr.mxu0 0.0
  %6886 = vmatpush2.xpose.msra.mxu0 0.0
  %6887 = vmatprep.subr.mxu0 0.0
  %6888 = vmatpush2.xpose.msra.mxu0 0.0
  %6889 = vmatprep.subr.mxu0 0.0
  %6890 = vmatpush2.xpose.msra.mxu0 0.0
  %6891 = vmatprep.subr.mxu0 0.0
  %6892 = vmatpush2.xpose.msra.mxu0 0.0
  %6893 = vmatprep.subr.mxu0 0.0
  %6894 = vmatpush2.xpose.msra.mxu0 0.0
  %6895 = vmatprep.subr.mxu0 0.0
  %6896 = vmatpush2.xpose.msra.mxu0 0.0
  %6897 = vmatprep.subr.mxu0 0.0
  %6898 = vmatpush2.xpose.msra.mxu0 0.0
  %6899 = vmatprep.subr.mxu0 0.0
  %6900 = vmatpush2.xpose.msra.mxu0 0.0
  %6901 = vmatprep.subr.mxu0 0.0
  %6902 = vmatpush2.xpose.msra.mxu0 0.0
  %6903 = vmatprep.subr.mxu0 0.0
  %6904 = vmatpush2.xpose.msra.mxu0 0.0
  %6905 = vmatprep.subr.mxu0 0.0
  %6906 = vmatpush2.xpose.msra.mxu0 0.0
  %6907 = vmatprep.subr.mxu0 0.0
  %6908 = vmatpush2.xpose.msra.mxu0 0.0
  %6909 = vmatprep.subr.mxu0 0.0
  %6910 = vmatpush2.xpose.msra.mxu0 0.0
  %6911 = vmatprep.subr.mxu0 0.0
  %6912 = vmatpush2.xpose.msra.mxu0 0.0
  %6913 = vmatprep.subr.mxu0 0.0
  %6914 = vmatpush2.xpose.msra.mxu0 0.0
  %6915 = vmatprep.subr.mxu0 0.0
  %6916 = vmatpush2.xpose.msra.mxu0 0.0
  %6917 = vmatprep.mubr.f32.mxu0 0.0
  %6918 = vmatmul.mubr.f32.gmra.mxu0 %v6841
  %v6919 = vpop.f32.mrf.mxu0
  %v6920 = vadd.f32 0.0, %v6919
  %v6921 = vpop.f32.mrf.mxu0
  %6922 = vmatprep.mubr.f32.mxu0 0.0
  %6923 = vmatmul.mubr.f32.gmra.mxu0 %v6843
  %v6924 = vpop.f32.mrf.mxu0
  %v6925 = vadd.f32 0.0, %v6924
  %v6926 = vpop.f32.mrf.mxu0
  %6927 = vmatprep.mubr.f32.mxu0 0.0
  %6928 = vmatmul.mubr.f32.gmra.mxu0 %v6845
  %v6929 = vpop.f32.mrf.mxu0
  %v6930 = vadd.f32 0.0, %v6929
  %v6931 = vpop.f32.mrf.mxu0
  %6932 = vdwg.mxu0
  %v6933 = vmul.f32 %v6920, 0.35355338
  %v6934 = vmul.f32 %v6925, 0.35355338
  %v6935 = vmul.f32 %v6930, 0.35355338
  %v6936 = vadd.f32 %v6933, %v226
  %v6937 = vadd.f32 %v6934, %v247
  %v6938 = vadd.f32 %v6935, %v244
  %v6939 = vsel %vm519, %v6936, -inf
  %6940 = vmax.xlane.f32.xlu0 %v6939
  %v6941 = vpop.xlane.xlu0 %6940
  %v6942 = vsel %vm519, %v6937, -inf
  %6943 = vmax.xlane.f32.xlu0 %v6942
  %v6944 = vpop.xlane.xlu0 %6943
  %v6945 = vsel %vm526, %v6938, -inf
  %6946 = vmax.xlane.f32.xlu0 %v6945
  %v6947 = vpop.xlane.xlu0 %6946
  %v6948 = vsub.f32 %v6936, %v6941
  %v6949 = vsub.f32 %v6937, %v6944
  %v6950 = vsub.f32 %v6938, %v6947
  %v6951 = vmul.f32 %v6948, 1.442695
  %v6952 = vpow.pop %v6951
  %v6953 = vmul.f32 %v6949, 1.442695
  %v6954 = vpow.pop %v6953
  %v6955 = vmul.f32 %v6950, 1.442695
  %v6956 = vpow.pop %v6955
  %v6957 = vsel %vm519, %v6952, 0.0
  %6958 = vadd.xlane.f32.xlu0 %v6957
  %v6959 = vpop.xlane.xlu0 %6958
  %v6960 = vsel %vm519, %v6954, 0.0
  %6961 = vadd.xlane.f32.xlu0 %v6960
  %v6962 = vpop.xlane.xlu0 %6961
  %v6963 = vsel %vm526, %v6956, 0.0
  %6964 = vadd.xlane.f32.xlu0 %v6963
  %v6965 = vpop.xlane.xlu0 %6964
  %v6966 = vrcp.pop %v6959
  %v6967 = vrcp.pop %v6962
  %v6968 = vrcp.pop %v6965
  %v6969 = vmul.f32 %v6952, %v6966
  %v6970 = vmul.f32 %v6954, %v6967
  %v6971 = vmul.f32 %v6956, %v6968
  %6972 = vrot.lane.b32.xlu0 %v5851, 16
  %v6973 = vpop.permute.xlu0 %6972
  %6974 = vrot.lane.b32.xlu0 %v5856, 16
  %v6975 = vpop.permute.xlu0 %6974
  %6976 = vrot.lane.b32.xlu0 %v5861, 16
  %v6977 = vpop.permute.xlu0 %6976
  %v6981 = vsel %vm519, %v6969, 0
  %v6984 = vsel %vm519, %v6970, 0
  %v6987 = vsel %vm519, %v6971, 0
  %v6989 = vsel %vm571, %v6977, 0
  %6991 = vmatprep.subr.mxu0 0.0
  %6992 = vmatpush1.msra.mxu0 0.0
  %6993 = vmatprep.subr.mxu0 0.0
  %6994 = vmatpush1.msra.mxu0 0.0
  %6995 = vmatprep.subr.mxu0 0.0
  %6996 = vmatpush1.msra.mxu0 0.0
  %6997 = vmatprep.subr.mxu0 0.0
  %6998 = vmatpush1.msra.mxu0 0.0
  %6999 = vmatprep.subr.mxu0 0.0
  %7000 = vmatpush1.msra.mxu0 0.0
  %7001 = vmatprep.subr.mxu0 0.0
  %7002 = vmatpush1.msra.mxu0 0.0
  %7003 = vmatprep.subr.mxu0 0.0
  %7004 = vmatpush1.msra.mxu0 0.0
  %7005 = vmatprep.subr.mxu0 0.0
  %7006 = vmatpush1.msra.mxu0 0.0
  %7007 = vmatprep.subr.mxu0 0.0
  %7008 = vmatpush1.msra.mxu0 0.0
  %7009 = vmatprep.subr.mxu0 0.0
  %7010 = vmatpush1.msra.mxu0 0.0
  %7011 = vmatprep.subr.mxu0 0.0
  %7012 = vmatpush1.msra.mxu0 0.0
  %7013 = vmatprep.subr.mxu0 0.0
  %7014 = vmatpush1.msra.mxu0 0.0
  %7015 = vmatprep.subr.mxu0 0.0
  %7016 = vmatpush1.msra.mxu0 0.0
  %7017 = vmatprep.subr.mxu0 0.0
  %7018 = vmatpush1.msra.mxu0 %v6989
  %7019 = vmatprep.subr.mxu0 0.0
  %7020 = vmatpush1.msra.mxu0 %v6975
  %7021 = vmatprep.subr.mxu0 0.0
  %7022 = vmatpush1.msra.mxu0 %v6973
  %7023 = vmatprep.subr.mxu0 0.0
  %7024 = vmatpush2.msra.mxu0 0.0
  %7025 = vmatprep.subr.mxu0 0.0
  %7026 = vmatpush2.msra.mxu0 0.0
  %7027 = vmatprep.subr.mxu0 0.0
  %7028 = vmatpush2.msra.mxu0 0.0
  %7029 = vmatprep.subr.mxu0 0.0
  %7030 = vmatpush2.msra.mxu0 0.0
  %7031 = vmatprep.subr.mxu0 0.0
  %7032 = vmatpush2.msra.mxu0 0.0
  %7033 = vmatprep.subr.mxu0 0.0
  %7034 = vmatpush2.msra.mxu0 0.0
  %7035 = vmatprep.subr.mxu0 0.0
  %7036 = vmatpush2.msra.mxu0 0.0
  %7037 = vmatprep.subr.mxu0 0.0
  %7038 = vmatpush2.msra.mxu0 0.0
  %7039 = vmatprep.subr.mxu0 0.0
  %7040 = vmatpush2.msra.mxu0 0.0
  %7041 = vmatprep.subr.mxu0 0.0
  %7042 = vmatpush2.msra.mxu0 0.0
  %7043 = vmatprep.subr.mxu0 0.0
  %7044 = vmatpush2.msra.mxu0 0.0
  %7045 = vmatprep.subr.mxu0 0.0
  %7046 = vmatpush2.msra.mxu0 0.0
  %7047 = vmatprep.subr.mxu0 0.0
  %7048 = vmatpush2.msra.mxu0 0.0
  %7049 = vmatprep.subr.mxu0 0.0
  %7050 = vmatpush2.msra.mxu0 0.0
  %7051 = vmatprep.subr.mxu0 0.0
  %7052 = vmatpush2.msra.mxu0 0.0
  %7053 = vmatprep.subr.mxu0 0.0
  %7054 = vmatpush2.msra.mxu0 0.0
  %7055 = vmatprep.mubr.f32.mxu0 0.0
  %7056 = vmatmul.mubr.f32.gmra.mxu0 %v6981
  %v7057 = vpop.f32.mrf.mxu0
  %v7058 = vadd.f32 0.0, %v7057
  %v7059 = vpop.f32.mrf.mxu0
  %7060 = vmatprep.mubr.f32.mxu0 0.0
  %7061 = vmatmul.mubr.f32.gmra.mxu0 %v6984
  %v7062 = vpop.f32.mrf.mxu0
  %v7063 = vadd.f32 0.0, %v7062
  %v7064 = vpop.f32.mrf.mxu0
  %7065 = vmatprep.mubr.f32.mxu0 0.0
  %7066 = vmatmul.mubr.f32.gmra.mxu0 %v6987
  %v7067 = vpop.f32.mrf.mxu0
  %v7068 = vadd.f32 0.0, %v7067
  %v7069 = vpop.f32.mrf.mxu0
  %7070 = vdwg.mxu0
  %7074 = vrot.lane.b32.xlu0 %v6332, 8
  %v7075 = vpop.permute.xlu0 %7074
  %7076 = vrot.lane.b32.xlu0 %v6337, 8
  %v7077 = vpop.permute.xlu0 %7076
  %7078 = vrot.lane.b32.xlu0 %v6342, 8
  %v7079 = vpop.permute.xlu0 %7078
  %7086 = vrot.lane.b32.xlu0 %v6574, 16
  %v7087 = vpop.permute.xlu0 %7086
  %7088 = vrot.lane.b32.xlu0 %v6579, 16
  %v7089 = vpop.permute.xlu0 %7088
  %7090 = vrot.lane.b32.xlu0 %v6584, 16
  %v7091 = vpop.permute.xlu0 %7090
  %7098 = vrot.lane.b32.xlu0 %v6816, 24
  %v7099 = vpop.permute.xlu0 %7098
  %7100 = vrot.lane.b32.xlu0 %v6821, 24
  %v7101 = vpop.permute.xlu0 %7100
  %7102 = vrot.lane.b32.xlu0 %v6826, 24
  %v7103 = vpop.permute.xlu0 %7102
  %7110 = vrot.lane.b32.xlu0 %v7058, 32
  %v7111 = vpop.permute.xlu0 %7110
  %7112 = vrot.lane.b32.xlu0 %v7063, 32
  %v7113 = vpop.permute.xlu0 %7112
  %7114 = vrot.lane.b32.xlu0 %v7068, 32
  %v7115 = vpop.permute.xlu0 %7114
  %v7119 = vsel %vm420, %v6090, %v7075
  %v7120 = vsel %vm420, %v6095, %v7077
  %v7121 = vsel %vm420, %v6100, %v7079
  %v7122 = vsel %vm1673, %v7119, %v7087
  %v7123 = vsel %vm1673, %v7120, %v7089
  %v7124 = vsel %vm1673, %v7121, %v7091
  %v7125 = vsel %vm1677, %v7122, %v7099
  %v7126 = vsel %vm1677, %v7123, %v7101
  %v7127 = vsel %vm1677, %v7124, %v7103
  %v7128 = vsel %vm1681, %v7125, %v7111
  %v7129 = vsel %vm1681, %v7126, %v7113
  %v7130 = vsel %vm1681, %v7127, %v7115
  %s7131 = scalar_lea.vmem %s7, 120
  %v7132 = vld [vmem:[%s7131] sm:$0xff]
  %v7133 = vld [vmem:[%s7131 + $0x8] sm:$0xff]
  %v7134 = vld [vmem:[%s7131 + $0x10] sm:$0xff]
  %v7135 = vld [vmem:[%s7131 + $0x18] sm:$0xff]
  %v7136 = vld [vmem:[%s7131 + $0x20] sm:$0xff]
  %v7138 = vsel %vm250, %v7128, 0
  %v7141 = vsel %vm250, %v7129, 0
  %v7144 = vsel %vm250, %v7130, 0
  %7146 = vmatprep.subr.mxu0 0.0
  %7147 = vmatpush1.msra.mxu0 0.0
  %7148 = vmatprep.subr.mxu0 0.0
  %7149 = vmatpush1.msra.mxu0 0.0
  %7150 = vmatprep.subr.mxu0 0.0
  %7151 = vmatpush1.msra.mxu0 0.0
  %7152 = vmatprep.subr.mxu0 0.0
  %7153 = vmatpush1.msra.mxu0 0.0
  %7154 = vmatprep.subr.mxu0 0.0
  %7155 = vmatpush1.msra.mxu0 0.0
  %7156 = vmatprep.subr.mxu0 0.0
  %7157 = vmatpush1.msra.mxu0 0.0
  %7158 = vmatprep.subr.mxu0 0.0
  %7159 = vmatpush1.msra.mxu0 0.0
  %7160 = vmatprep.subr.mxu0 0.0
  %7161 = vmatpush1.msra.mxu0 0.0
  %7162 = vmatprep.subr.mxu0 0.0
  %7163 = vmatpush1.msra.mxu0 0.0
  %7164 = vmatprep.subr.mxu0 0.0
  %7165 = vmatpush1.msra.mxu0 0.0
  %7166 = vmatprep.subr.mxu0 0.0
  %7167 = vmatpush1.msra.mxu0 0.0
  %7168 = vmatprep.subr.mxu0 0.0
  %7169 = vmatpush1.msra.mxu0 %v7136
  %7170 = vmatprep.subr.mxu0 0.0
  %7171 = vmatpush1.msra.mxu0 %v7135
  %7172 = vmatprep.subr.mxu0 0.0
  %7173 = vmatpush1.msra.mxu0 %v7134
  %7174 = vmatprep.subr.mxu0 0.0
  %7175 = vmatpush1.msra.mxu0 %v7133
  %7176 = vmatprep.subr.mxu0 0.0
  %7177 = vmatpush1.msra.mxu0 %v7132
  %7178 = vmatprep.subr.mxu0 0.0
  %7179 = vmatpush2.msra.mxu0 0.0
  %7180 = vmatprep.subr.mxu0 0.0
  %7181 = vmatpush2.msra.mxu0 0.0
  %7182 = vmatprep.subr.mxu0 0.0
  %7183 = vmatpush2.msra.mxu0 0.0
  %7184 = vmatprep.subr.mxu0 0.0
  %7185 = vmatpush2.msra.mxu0 0.0
  %7186 = vmatprep.subr.mxu0 0.0
  %7187 = vmatpush2.msra.mxu0 0.0
  %7188 = vmatprep.subr.mxu0 0.0
  %7189 = vmatpush2.msra.mxu0 0.0
  %7190 = vmatprep.subr.mxu0 0.0
  %7191 = vmatpush2.msra.mxu0 0.0
  %7192 = vmatprep.subr.mxu0 0.0
  %7193 = vmatpush2.msra.mxu0 0.0
  %7194 = vmatprep.subr.mxu0 0.0
  %7195 = vmatpush2.msra.mxu0 0.0
  %7196 = vmatprep.subr.mxu0 0.0
  %7197 = vmatpush2.msra.mxu0 0.0
  %7198 = vmatprep.subr.mxu0 0.0
  %7199 = vmatpush2.msra.mxu0 0.0
  %7200 = vmatprep.subr.mxu0 0.0
  %7201 = vmatpush2.msra.mxu0 0.0
  %7202 = vmatprep.subr.mxu0 0.0
  %7203 = vmatpush2.msra.mxu0 0.0
  %7204 = vmatprep.subr.mxu0 0.0
  %7205 = vmatpush2.msra.mxu0 0.0
  %7206 = vmatprep.subr.mxu0 0.0
  %7207 = vmatpush2.msra.mxu0 0.0
  %7208 = vmatprep.subr.mxu0 0.0
  %7209 = vmatpush2.msra.mxu0 0.0
  %7210 = vmatprep.mubr.f32.mxu0 0.0
  %7211 = vmatmul.mubr.f32.gmra.mxu0 %v7138
  %v7212 = vpop.f32.mrf.mxu0
  %v7213 = vadd.f32 0.0, %v7212
  %v7214 = vpop.f32.mrf.mxu0
  %7215 = vmatprep.mubr.f32.mxu0 0.0
  %7216 = vmatmul.mubr.f32.gmra.mxu0 %v7141
  %v7217 = vpop.f32.mrf.mxu0
  %v7218 = vadd.f32 0.0, %v7217
  %v7219 = vpop.f32.mrf.mxu0
  %7220 = vmatprep.mubr.f32.mxu0 0.0
  %7221 = vmatmul.mubr.f32.gmra.mxu0 %v7144
  %v7222 = vpop.f32.mrf.mxu0
  %v7223 = vadd.f32 0.0, %v7222
  %v7224 = vpop.f32.mrf.mxu0
  %7225 = vdwg.mxu0
  %v7226 = vadd.f32 %v5697, %v7213
  %v7227 = vadd.f32 %v5698, %v7218
  %v7228 = vadd.f32 %v5699, %v7223
  %s7229 = scalar_lea.vmem %s8, 3
  %v7230 = vld [vmem:[%s7229] sm:$0x1]
  %v7232 = vlaneseq
  %v7233 = vshrl.u32 %v7232, 7
  %v7234 = vsub.s32 0, %v7233
  %v7235 = vrot.slane %v7230, %v7234
  %v7237 = vadd.f32 %v7226, %v7235
  %v7238 = vadd.f32 %v7227, %v7235
  %v7239 = vadd.f32 %v7228, %v7235
  %s7240 = scalar_lea.vmem %s11, 3
  %v7241 = vld [vmem:[%s7240] sm:$0x1]
  %s7242 = scalar_lea.vmem %s12, 3
  %v7243 = vld [vmem:[%s7242] sm:$0x1]
  %v7244 = vsel %vm250, %v7237, 0.0
  %7245 = vadd.xlane.f32.xlu0 %v7244
  %v7246 = vpop.xlane.xlu0 %7245
  %v7247 = vsel %vm250, %v7238, 0.0
  %7248 = vadd.xlane.f32.xlu0 %v7247
  %v7249 = vpop.xlane.xlu0 %7248
  %v7250 = vsel %vm257, %v7239, 0.0
  %7251 = vadd.xlane.f32.xlu0 %v7250
  %v7252 = vpop.xlane.xlu0 %7251
  %v7253 = vmul.f32 %v7246, %v261
  %v7254 = vmul.f32 %v7249, %v261
  %v7255 = vmul.f32 %v7252, %v261
  %v7256 = vsub.f32 %v7237, %v7253
  %v7257 = vsub.f32 %v7238, %v7254
  %v7258 = vsub.f32 %v7239, %v7255
  %v7259 = vmul.f32 %v7256, %v7256
  %v7260 = vmul.f32 %v7257, %v7257
  %v7261 = vmul.f32 %v7258, %v7258
  %v7262 = vsel %vm250, %v7259, 0.0
  %7263 = vadd.xlane.f32.xlu0 %v7262
  %v7264 = vpop.xlane.xlu0 %7263
  %v7265 = vsel %vm250, %v7260, 0.0
  %7266 = vadd.xlane.f32.xlu0 %v7265
  %v7267 = vpop.xlane.xlu0 %7266
  %v7268 = vsel %vm257, %v7261, 0.0
  %7269 = vadd.xlane.f32.xlu0 %v7268
  %v7270 = vpop.xlane.xlu0 %7269
  %v7271 = vmul.f32 %v7264, %v261
  %v7272 = vmul.f32 %v7267, %v261
  %v7273 = vmul.f32 %v7270, %v261
  %v7274 = vadd.f32 %v7271, 1e-05
  %v7275 = vadd.f32 %v7272, 1e-05
  %v7276 = vadd.f32 %v7273, 1e-05
  %v7277 = vrsqrt.pop %v7274
  %v7278 = vrsqrt.pop %v7275
  %v7279 = vrsqrt.pop %v7276
  %v7280 = vmul.f32 %v7256, %v7277
  %v7281 = vmul.f32 %v7257, %v7278
  %v7282 = vmul.f32 %v7258, %v7279
  %v7284 = vlaneseq
  %v7285 = vshrl.u32 %v7284, 7
  %v7286 = vsub.s32 0, %v7285
  %v7287 = vrot.slane %v7241, %v7286
  %v7289 = vmul.f32 %v7280, %v7287
  %v7290 = vmul.f32 %v7281, %v7287
  %v7291 = vmul.f32 %v7282, %v7287
  %v7293 = vlaneseq
  %v7294 = vshrl.u32 %v7293, 7
  %v7295 = vsub.s32 0, %v7294
  %v7296 = vrot.slane %v7243, %v7295
  %v7298 = vadd.f32 %v7289, %v7296
  %v7299 = vadd.f32 %v7290, %v7296
  %v7300 = vadd.f32 %v7291, %v7296
  %s7301 = scalar_lea.vmem %s13, 120
  %v7302 = vld [vmem:[%s7301] sm:$0xff]
  %v7303 = vld [vmem:[%s7301 + $0x8] sm:$0xff]
  %v7304 = vld [vmem:[%s7301 + $0x10] sm:$0xff]
  %v7305 = vld [vmem:[%s7301 + $0x18] sm:$0xff]
  %v7306 = vld [vmem:[%s7301 + $0x20] sm:$0xff]
  %s7307 = scalar_lea.vmem %s14, 3
  %v7308 = vld [vmem:[%s7307] sm:$0x1]
  %v7310 = vlaneseq
  %v7311 = vshrl.u32 %v7310, 7
  %v7312 = vsub.s32 0, %v7311
  %v7313 = vrot.slane %v7308, %v7312
  %v7316 = vsel %vm250, %v7298, 0
  %v7319 = vsel %vm250, %v7299, 0
  %v7322 = vsel %vm250, %v7300, 0
  %7324 = vmatprep.subr.mxu0 0.0
  %7325 = vmatpush1.msra.mxu0 0.0
  %7326 = vmatprep.subr.mxu0 0.0
  %7327 = vmatpush1.msra.mxu0 0.0
  %7328 = vmatprep.subr.mxu0 0.0
  %7329 = vmatpush1.msra.mxu0 0.0
  %7330 = vmatprep.subr.mxu0 0.0
  %7331 = vmatpush1.msra.mxu0 0.0
  %7332 = vmatprep.subr.mxu0 0.0
  %7333 = vmatpush1.msra.mxu0 0.0
  %7334 = vmatprep.subr.mxu0 0.0
  %7335 = vmatpush1.msra.mxu0 0.0
  %7336 = vmatprep.subr.mxu0 0.0
  %7337 = vmatpush1.msra.mxu0 0.0
  %7338 = vmatprep.subr.mxu0 0.0
  %7339 = vmatpush1.msra.mxu0 0.0
  %7340 = vmatprep.subr.mxu0 0.0
  %7341 = vmatpush1.msra.mxu0 0.0
  %7342 = vmatprep.subr.mxu0 0.0
  %7343 = vmatpush1.msra.mxu0 0.0
  %7344 = vmatprep.subr.mxu0 0.0
  %7345 = vmatpush1.msra.mxu0 0.0
  %7346 = vmatprep.subr.mxu0 0.0
  %7347 = vmatpush1.msra.mxu0 %v7306
  %7348 = vmatprep.subr.mxu0 0.0
  %7349 = vmatpush1.msra.mxu0 %v7305
  %7350 = vmatprep.subr.mxu0 0.0
  %7351 = vmatpush1.msra.mxu0 %v7304
  %7352 = vmatprep.subr.mxu0 0.0
  %7353 = vmatpush1.msra.mxu0 %v7303
  %7354 = vmatprep.subr.mxu0 0.0
  %7355 = vmatpush1.msra.mxu0 %v7302
  %7356 = vmatprep.subr.mxu0 0.0
  %7357 = vmatpush2.msra.mxu0 0.0
  %7358 = vmatprep.subr.mxu0 0.0
  %7359 = vmatpush2.msra.mxu0 0.0
  %7360 = vmatprep.subr.mxu0 0.0
  %7361 = vmatpush2.msra.mxu0 0.0
  %7362 = vmatprep.subr.mxu0 0.0
  %7363 = vmatpush2.msra.mxu0 0.0
  %7364 = vmatprep.subr.mxu0 0.0
  %7365 = vmatpush2.msra.mxu0 0.0
  %7366 = vmatprep.subr.mxu0 0.0
  %7367 = vmatpush2.msra.mxu0 0.0
  %7368 = vmatprep.subr.mxu0 0.0
  %7369 = vmatpush2.msra.mxu0 0.0
  %7370 = vmatprep.subr.mxu0 0.0
  %7371 = vmatpush2.msra.mxu0 0.0
  %7372 = vmatprep.subr.mxu0 0.0
  %7373 = vmatpush2.msra.mxu0 0.0
  %7374 = vmatprep.subr.mxu0 0.0
  %7375 = vmatpush2.msra.mxu0 0.0
  %7376 = vmatprep.subr.mxu0 0.0
  %7377 = vmatpush2.msra.mxu0 0.0
  %7378 = vmatprep.subr.mxu0 0.0
  %7379 = vmatpush2.msra.mxu0 0.0
  %7380 = vmatprep.subr.mxu0 0.0
  %7381 = vmatpush2.msra.mxu0 0.0
  %7382 = vmatprep.subr.mxu0 0.0
  %7383 = vmatpush2.msra.mxu0 0.0
  %7384 = vmatprep.subr.mxu0 0.0
  %7385 = vmatpush2.msra.mxu0 0.0
  %7386 = vmatprep.subr.mxu0 0.0
  %7387 = vmatpush2.msra.mxu0 0.0
  %7388 = vmatprep.mubr.f32.mxu0 0.0
  %7389 = vmatmul.mubr.f32.gmra.mxu0 %v7316
  %v7390 = vpop.f32.mrf.mxu0
  %v7391 = vadd.f32 %v7313, %v7390
  %v7392 = vpop.f32.mrf.mxu0
  %7393 = vmatprep.mubr.f32.mxu0 0.0
  %7394 = vmatmul.mubr.f32.gmra.mxu0 %v7319
  %v7395 = vpop.f32.mrf.mxu0
  %v7396 = vadd.f32 %v7313, %v7395
  %v7397 = vpop.f32.mrf.mxu0
  %7398 = vmatprep.mubr.f32.mxu0 0.0
  %7399 = vmatmul.mubr.f32.gmra.mxu0 %v7322
  %v7400 = vpop.f32.mrf.mxu0
  %v7401 = vadd.f32 %v7313, %v7400
  %v7402 = vpop.f32.mrf.mxu0
  %7403 = vdwg.mxu0
  %v7404 = vmax.f32 %v7391, 0.0
  %v7405 = vmax.f32 %v7396, 0.0
  %v7406 = vmax.f32 %v7401, 0.0
  %s7407 = scalar_lea.vmem %s15, 384
  %v7408 = vld [vmem:[%s7407] sm:$0xff]
  %v7409 = vld [vmem:[%s7407 + $0x8] sm:$0xff]
  %v7410 = vld [vmem:[%s7407 + $0x10] sm:$0xff]
  %v7411 = vld [vmem:[%s7407 + $0x18] sm:$0xff]
  %v7412 = vld [vmem:[%s7407 + $0x20] sm:$0xff]
  %v7413 = vld [vmem:[%s7407 + $0x28] sm:$0xff]
  %v7414 = vld [vmem:[%s7407 + $0x30] sm:$0xff]
  %v7415 = vld [vmem:[%s7407 + $0x38] sm:$0xff]
  %v7416 = vld [vmem:[%s7407 + $0x40] sm:$0xff]
  %v7417 = vld [vmem:[%s7407 + $0x48] sm:$0xff]
  %v7418 = vld [vmem:[%s7407 + $0x50] sm:$0xff]
  %v7419 = vld [vmem:[%s7407 + $0x58] sm:$0xff]
  %v7420 = vld [vmem:[%s7407 + $0x60] sm:$0xff]
  %v7421 = vld [vmem:[%s7407 + $0x68] sm:$0xff]
  %v7422 = vld [vmem:[%s7407 + $0x70] sm:$0xff]
  %v7423 = vld [vmem:[%s7407 + $0x78] sm:$0xff]
  %7424 = vmatprep.subr.mxu0 0.0
  %7425 = vmatpush1.msra.mxu0 %v7423
  %7426 = vmatprep.subr.mxu0 0.0
  %7427 = vmatpush1.msra.mxu0 %v7422
  %7428 = vmatprep.subr.mxu0 0.0
  %7429 = vmatpush1.msra.mxu0 %v7421
  %7430 = vmatprep.subr.mxu0 0.0
  %7431 = vmatpush1.msra.mxu0 %v7420
  %7432 = vmatprep.subr.mxu0 0.0
  %7433 = vmatpush1.msra.mxu0 %v7419
  %7434 = vmatprep.subr.mxu0 0.0
  %7435 = vmatpush1.msra.mxu0 %v7418
  %7436 = vmatprep.subr.mxu0 0.0
  %7437 = vmatpush1.msra.mxu0 %v7417
  %7438 = vmatprep.subr.mxu0 0.0
  %7439 = vmatpush1.msra.mxu0 %v7416
  %7440 = vmatprep.subr.mxu0 0.0
  %7441 = vmatpush1.msra.mxu0 %v7415
  %7442 = vmatprep.subr.mxu0 0.0
  %7443 = vmatpush1.msra.mxu0 %v7414
  %7444 = vmatprep.subr.mxu0 0.0
  %7445 = vmatpush1.msra.mxu0 %v7413
  %7446 = vmatprep.subr.mxu0 0.0
  %7447 = vmatpush1.msra.mxu0 %v7412
  %7448 = vmatprep.subr.mxu0 0.0
  %7449 = vmatpush1.msra.mxu0 %v7411
  %7450 = vmatprep.subr.mxu0 0.0
  %7451 = vmatpush1.msra.mxu0 %v7410
  %7452 = vmatprep.subr.mxu0 0.0
  %7453 = vmatpush1.msra.mxu0 %v7409
  %7454 = vmatprep.subr.mxu0 0.0
  %7455 = vmatpush1.msra.mxu0 %v7408
  %7456 = vmatprep.subr.mxu0 0.0
  %7457 = vmatpush2.msra.mxu0 0.0
  %7458 = vmatprep.subr.mxu0 0.0
  %7459 = vmatpush2.msra.mxu0 0.0
  %7460 = vmatprep.subr.mxu0 0.0
  %7461 = vmatpush2.msra.mxu0 0.0
  %7462 = vmatprep.subr.mxu0 0.0
  %7463 = vmatpush2.msra.mxu0 0.0
  %7464 = vmatprep.subr.mxu0 0.0
  %7465 = vmatpush2.msra.mxu0 0.0
  %7466 = vmatprep.subr.mxu0 0.0
  %7467 = vmatpush2.msra.mxu0 0.0
  %7468 = vmatprep.subr.mxu0 0.0
  %7469 = vmatpush2.msra.mxu0 0.0
  %7470 = vmatprep.subr.mxu0 0.0
  %7471 = vmatpush2.msra.mxu0 0.0
  %7472 = vmatprep.subr.mxu0 0.0
  %7473 = vmatpush2.msra.mxu0 0.0
  %7474 = vmatprep.subr.mxu0 0.0
  %7475 = vmatpush2.msra.mxu0 0.0
  %7476 = vmatprep.subr.mxu0 0.0
  %7477 = vmatpush2.msra.mxu0 0.0
  %7478 = vmatprep.subr.mxu0 0.0
  %7479 = vmatpush2.msra.mxu0 0.0
  %7480 = vmatprep.subr.mxu0 0.0
  %7481 = vmatpush2.msra.mxu0 0.0
  %7482 = vmatprep.subr.mxu0 0.0
  %7483 = vmatpush2.msra.mxu0 0.0
  %7484 = vmatprep.subr.mxu0 0.0
  %7485 = vmatpush2.msra.mxu0 0.0
  %7486 = vmatprep.subr.mxu0 0.0
  %7487 = vmatpush2.msra.mxu0 0.0
  %7488 = vmatprep.mubr.f32.mxu0 0.0
  %7489 = vmatmul.mubr.f32.gmra.mxu0 %v7404
  %v7490 = vpop.f32.mrf.mxu0
  %v7491 = vadd.f32 0.0, %v7490
  %v7492 = vpop.f32.mrf.mxu0
  %7493 = vmatprep.mubr.f32.mxu0 0.0
  %7494 = vmatmul.mubr.f32.gmra.mxu0 %v7405
  %v7495 = vpop.f32.mrf.mxu0
  %v7496 = vadd.f32 0.0, %v7495
  %v7497 = vpop.f32.mrf.mxu0
  %7498 = vmatprep.mubr.f32.mxu0 0.0
  %7499 = vmatmul.mubr.f32.gmra.mxu0 %v7406
  %v7500 = vpop.f32.mrf.mxu0
  %v7501 = vpop.f32.mrf.mxu0
  %7502 = vdwg.mxu0
  %v7503 = vadd.f32 %v7237, %v7491
  %v7504 = vadd.f32 %v7238, %v7496
  %s7505 = scalar_lea.vmem %s16, 3
  %v7506 = vld [vmem:[%s7505] sm:$0x1]
  %v7508 = vlaneseq
  %v7509 = vshrl.u32 %v7508, 7
  %v7510 = vsub.s32 0, %v7509
  %v7511 = vrot.slane %v7506, %v7510
  %v7513 = vadd.f32 %v7503, %v7511
  %v7514 = vadd.f32 %v7504, %v7511
  %v7515 = vsel %vm177, %v7513, %v7514
  %v7516 = vld [vmem:[%s17] sm:$0x1]
  %v7517 = vld [vmem:[%s18] sm:$0x1]
  %v7518 = vsel %vm257, %v7515, 0.0
  %7519 = vadd.xlane.f32.xlu0 %v7518
  %v7520 = vpop.xlane.xlu0 %7519
  %v7521 = vmul.f32 %v7520, %v261
  %v7522 = vsub.f32 %v7515, %v7521
  %v7523 = vmul.f32 %v7522, %v7522
  %v7524 = vsel %vm257, %v7523, 0.0
  %7525 = vadd.xlane.f32.xlu0 %v7524
  %v7526 = vpop.xlane.xlu0 %7525
  %v7527 = vmul.f32 %v7526, %v261
  %v7528 = vadd.f32 %v7527, 1e-05
  %v7529 = vrsqrt.pop %v7528
  %v7530 = vmul.f32 %v7522, %v7529
  %v7532 = vlaneseq
  %v7533 = vshrl.u32 %v7532, 7
  %v7534 = vsub.s32 0, %v7533
  %v7535 = vrot.slane %v7516, %v7534
  %v7537 = vmul.f32 %v7530, %v7535
  %v7539 = vlaneseq
  %v7540 = vshrl.u32 %v7539, 7
  %v7541 = vsub.s32 0, %v7540
  %v7542 = vrot.slane %v7517, %v7541
  %v7544 = vadd.f32 %v7537, %v7542
  %v7545 = vld [vmem:[%s19] sm:$0xff]
  %v7546 = vld [vmem:[%s19 + $0x8] sm:$0xff]
  %v7547 = vld [vmem:[%s19 + $0x10] sm:$0xff]
  %v7548 = vld [vmem:[%s19 + $0x18] sm:$0xff]
  %v7549 = vld [vmem:[%s19 + $0x20] sm:$0xff]
  %v7550 = vld [vmem:[%s20] sm:$0x1]
  %v7552 = vlaneseq
  %v7553 = vshrl.u32 %v7552, 7
  %v7554 = vsub.s32 0, %v7553
  %v7555 = vrot.slane %v7550, %v7554
  %v7558 = vsel %vm250, %v7544, 0
  %7560 = vmatprep.subr.mxu0 0.0
  %7561 = vmatpush1.msra.mxu0 0.0
  %7562 = vmatprep.subr.mxu0 0.0
  %7563 = vmatpush1.msra.mxu0 0.0
  %7564 = vmatprep.subr.mxu0 0.0
  %7565 = vmatpush1.msra.mxu0 0.0
  %7566 = vmatprep.subr.mxu0 0.0
  %7567 = vmatpush1.msra.mxu0 0.0
  %7568 = vmatprep.subr.mxu0 0.0
  %7569 = vmatpush1.msra.mxu0 0.0
  %7570 = vmatprep.subr.mxu0 0.0
  %7571 = vmatpush1.msra.mxu0 0.0
  %7572 = vmatprep.subr.mxu0 0.0
  %7573 = vmatpush1.msra.mxu0 0.0
  %7574 = vmatprep.subr.mxu0 0.0
  %7575 = vmatpush1.msra.mxu0 0.0
  %7576 = vmatprep.subr.mxu0 0.0
  %7577 = vmatpush1.msra.mxu0 0.0
  %7578 = vmatprep.subr.mxu0 0.0
  %7579 = vmatpush1.msra.mxu0 0.0
  %7580 = vmatprep.subr.mxu0 0.0
  %7581 = vmatpush1.msra.mxu0 0.0
  %7582 = vmatprep.subr.mxu0 0.0
  %7583 = vmatpush1.msra.mxu0 %v7549
  %7584 = vmatprep.subr.mxu0 0.0
  %7585 = vmatpush1.msra.mxu0 %v7548
  %7586 = vmatprep.subr.mxu0 0.0
  %7587 = vmatpush1.msra.mxu0 %v7547
  %7588 = vmatprep.subr.mxu0 0.0
  %7589 = vmatpush1.msra.mxu0 %v7546
  %7590 = vmatprep.subr.mxu0 0.0
  %7591 = vmatpush1.msra.mxu0 %v7545
  %7592 = vmatprep.subr.mxu0 0.0
  %7593 = vmatpush2.msra.mxu0 0.0
  %7594 = vmatprep.subr.mxu0 0.0
  %7595 = vmatpush2.msra.mxu0 0.0
  %7596 = vmatprep.subr.mxu0 0.0
  %7597 = vmatpush2.msra.mxu0 0.0
  %7598 = vmatprep.subr.mxu0 0.0
  %7599 = vmatpush2.msra.mxu0 0.0
  %7600 = vmatprep.subr.mxu0 0.0
  %7601 = vmatpush2.msra.mxu0 0.0
  %7602 = vmatprep.subr.mxu0 0.0
  %7603 = vmatpush2.msra.mxu0 0.0
  %7604 = vmatprep.subr.mxu0 0.0
  %7605 = vmatpush2.msra.mxu0 0.0
  %7606 = vmatprep.subr.mxu0 0.0
  %7607 = vmatpush2.msra.mxu0 0.0
  %7608 = vmatprep.subr.mxu0 0.0
  %7609 = vmatpush2.msra.mxu0 0.0
  %7610 = vmatprep.subr.mxu0 0.0
  %7611 = vmatpush2.msra.mxu0 0.0
  %7612 = vmatprep.subr.mxu0 0.0
  %7613 = vmatpush2.msra.mxu0 0.0
  %7614 = vmatprep.subr.mxu0 0.0
  %7615 = vmatpush2.msra.mxu0 0.0
  %7616 = vmatprep.subr.mxu0 0.0
  %7617 = vmatpush2.msra.mxu0 0.0
  %7618 = vmatprep.subr.mxu0 0.0
  %7619 = vmatpush2.msra.mxu0 0.0
  %7620 = vmatprep.subr.mxu0 0.0
  %7621 = vmatpush2.msra.mxu0 0.0
  %7622 = vmatprep.subr.mxu0 0.0
  %7623 = vmatpush2.msra.mxu0 0.0
  %7624 = vmatprep.mubr.f32.mxu0 0.0
  %7625 = vmatmul.mubr.f32.gmra.mxu0 %v7558
  %v7626 = vpop.f32.mrf.mxu0
  %v7627 = vadd.f32 %v7555, %v7626
  %v7628 = vpop.f32.mrf.mxu0
  %7629 = vdwg.mxu0
  %7630 = vst [vmem:[%s21] sm:$0x3] %v7627
  // Predicated region
  $region86: #{forward_pallas.1} parent=0 // pred_check
    _
  $region87: #{forward_pallas.1} parent=0 // pred_check_branch
    %7632 = sbr.rel (0) target = $region89
  $region88: #{forward_pallas.1} parent=0 // pred_region
    _
  $region89: #{forward_pallas.1} parent=0 // pred_fallthru
    _
  // Predicated region
  $region90: #{forward_pallas.1} parent=0 // pred_check
    _
  $region91: #{forward_pallas.1} parent=0 // pred_check_branch
    %7634 = sbr.rel (0) target = $region93
  $region92: #{forward_pallas.1} parent=0 // pred_region
    _
  $region93: #{forward_pallas.1} parent=0 // pred_fallthru
    _

</llo_original>
